<compile_context>
chip_gen: v6e
topology: v6e:2x2x1
jax: 0.10.0
libtpu: 0.0.40
codegen_flags: <defaults>
</compile_context>

<pallas_src>
import functools

import jax
import jax.numpy as jnp
from jax.experimental import pallas as pl
from jax.experimental.pallas import tpu as pltpu

LANE = 128        # f32 lane width
PAIR_TILE = 8     # f32 sublane count: pairs processed per vector tile
NBUF = 4          # gather prefetch depth (buffer slots)


def _round_up(x, m):
    return ((x + m - 1) // m) * m


# ----------------------------------------------------------------------------
# Fused Pallas kernel:
#   out = mean_i( ent_sc[i] * ||E_ent[e1_i] - E_ent[e2_i]||^2 )
#       + mean_j( rel_sc[j] * ||E_rel[r1_j] - E_rel[r2_j]||^2 )
# ----------------------------------------------------------------------------
def _constraint_kernel(ent_e1, ent_e2, ent_sc, rel_e1, rel_e2, rel_sc,
                       ent_emb, rel_emb, out_ref,
                       rows_buf, sem, acc,
                       *, n_ent_tiles, n_rel_tiles, inv_n_ent, inv_n_rel):
    # ent_e1/ent_e2/rel_e1/rel_e2 : SMEM int32 [N_pad]           (pair indices)
    # ent_sc/rel_sc               : VMEM f32   [N_pad, 1]        (pair scores)
    # ent_emb/rel_emb             : HBM (ANY)  f32 [V, D_pad]    (embedding tables)
    # out_ref                     : SMEM f32   [1, 1]            (scalar loss)
    # rows_buf                    : VMEM f32   [NBUF, 2, 8, D_pad] gather buffers
    # sem                         : DMA sems   [NBUF]            (one per slot)
    # acc                         : VMEM f32   [8, D_pad]        (vector accumulator)

    def fetch_tile(e1_idx, e2_idx, emb_hbm, tile, slot):
        base = tile * PAIR_TILE
        for j in range(PAIR_TILE):
            i1 = e1_idx[base + j]
            i2 = e2_idx[base + j]
            pltpu.make_async_copy(emb_hbm.at[pl.ds(i1, 1), :],
                                  rows_buf.at[slot, 0, pl.ds(j, 1), :],
                                  sem.at[slot]).start()
            pltpu.make_async_copy(emb_hbm.at[pl.ds(i2, 1), :],
                                  rows_buf.at[slot, 1, pl.ds(j, 1), :],
                                  sem.at[slot]).start()

    def wait_tile(emb_hbm, slot):
        # All copies to a slot have identical byte counts and share one
        # semaphore, so 2*PAIR_TILE waits drain exactly the bytes issued.
        for j in range(PAIR_TILE):
            pltpu.make_async_copy(emb_hbm.at[pl.ds(0, 1), :],
                                  rows_buf.at[slot, 0, pl.ds(j, 1), :],
                                  sem.at[slot]).wait()
            pltpu.make_async_copy(emb_hbm.at[pl.ds(0, 1), :],
                                  rows_buf.at[slot, 1, pl.ds(j, 1), :],
                                  sem.at[slot]).wait()

    def process_group(e1_idx, e2_idx, sc_ref, emb_hbm, n_tiles, inv_n):
        if n_tiles == 0:                       # static guard (empty group)
            return jnp.float32(0.0)
        acc[...] = jnp.zeros_like(acc)
        # Prime up to NBUF-1 tiles of gather DMAs.
        n_prime = min(NBUF - 1, n_tiles)
        for t in range(n_prime):
            fetch_tile(e1_idx, e2_idx, emb_hbm, t, t % NBUF)
        for t in range(n_tiles):               # static, fully unrolled
            nxt = t + NBUF - 1
            if nxt < n_tiles:                  # keep NBUF-1 tiles in flight
                fetch_tile(e1_idx, e2_idx, emb_hbm, nxt, nxt % NBUF)
            slot = t % NBUF
            wait_tile(emb_hbm, slot)
            d = rows_buf[slot, 0] - rows_buf[slot, 1]             # (8, D_pad) VPU
            sc = sc_ref[pl.ds(t * PAIR_TILE, PAIR_TILE), :]       # (8, 1)
            acc[...] += sc * (d * d)                              # VPU only
        # One cross-lane (XLU) reduction per group; 1/N is a trace-time constant.
        return jnp.sum(acc[...]) * jnp.float32(inv_n)

    total = process_group(ent_e1, ent_e2, ent_sc, ent_emb,
                          n_ent_tiles, inv_n_ent)
    total = total + process_group(rel_e1, rel_e2, rel_sc, rel_emb,
                                  n_rel_tiles, inv_n_rel)
    out_ref[0, 0] = total


# ----------------------------------------------------------------------------
# Wrapper
# ----------------------------------------------------------------------------
def _prep_pairs(instance_pairs, vocab_size):
    """Split (idx1, idx2, score), clamp indices, pad to a multiple of PAIR_TILE."""
    n = int(instance_pairs.shape[0])
    e1 = jnp.clip(instance_pairs[:, 0].astype(jnp.int32), 0, vocab_size - 1)
    e2 = jnp.clip(instance_pairs[:, 1].astype(jnp.int32), 0, vocab_size - 1)
    sc = instance_pairs[:, 2].astype(jnp.float32)
    n_pad = _round_up(max(n, 1), PAIR_TILE)
    pad = n_pad - n
    e1 = jnp.pad(e1, (0, pad))                 # padded rows gather row 0 ...
    e2 = jnp.pad(e2, (0, pad))
    sc = jnp.pad(sc, (0, pad))                 # ... with zero score => no effect
    return e1, e2, sc.reshape(n_pad, 1), n


def fused_constraint_loss(ent_pairs, ent_emb, rel_pairs, rel_emb):
    """Fused Pallas equivalent of the two constraint_loss_mse calls."""
    assert ent_emb.shape[1] == rel_emb.shape[1]
    d_pad = ent_emb.shape[1]
    assert d_pad % LANE == 0, "embedding tables must be lane-padded"

    ent_e1, ent_e2, ent_sc, n_ent = _prep_pairs(ent_pairs, ent_emb.shape[0])
    rel_e1, rel_e2, rel_sc, n_rel = _prep_pairs(rel_pairs, rel_emb.shape[0])

    kernel = functools.partial(
        _constraint_kernel,
        n_ent_tiles=ent_e1.shape[0] // PAIR_TILE,
        n_rel_tiles=rel_e1.shape[0] // PAIR_TILE,
        inv_n_ent=1.0 / max(n_ent, 1),
        inv_n_rel=1.0 / max(n_rel, 1))

    out = pl.pallas_call(
        kernel,
        out_shape=jax.ShapeDtypeStruct((1, 1), jnp.float32),
        in_specs=[
            pl.BlockSpec(memory_space=pltpu.MemorySpace.SMEM),   # ent e1 idx
            pl.BlockSpec(memory_space=pltpu.MemorySpace.SMEM),   # ent e2 idx
            pl.BlockSpec(memory_space=pltpu.MemorySpace.VMEM),   # ent scores
            pl.BlockSpec(memory_space=pltpu.MemorySpace.SMEM),   # rel e1 idx
            pl.BlockSpec(memory_space=pltpu.MemorySpace.SMEM),   # rel e2 idx
            pl.BlockSpec(memory_space=pltpu.MemorySpace.VMEM),   # rel scores
            pl.BlockSpec(memory_space=pl.ANY),                   # ent table (HBM)
            pl.BlockSpec(memory_space=pl.ANY),                   # rel table (HBM)
        ],
        out_specs=pl.BlockSpec(memory_space=pltpu.MemorySpace.SMEM),
        scratch_shapes=[
            pltpu.VMEM((NBUF, 2, PAIR_TILE, d_pad), jnp.float32),  # gathered rows
            pltpu.SemaphoreType.DMA((NBUF,)),                      # one sem / slot
            pltpu.VMEM((PAIR_TILE, d_pad), jnp.float32),           # f32 accumulator
        ],
        # Tiny VMEM footprint (tens of KiB): explicit limit fits the scoped
        # default on every generation, including v7x's 64 MiB total VMEM.
        compiler_params=pltpu.CompilerParams(vmem_limit_bytes=8 * 1024 * 1024),
    )(ent_e1, ent_e2, ent_sc, rel_e1, rel_e2, rel_sc, ent_emb, rel_emb)
    return out[0, 0]


# ----------------------------------------------------------------------------
# Module wrapper (glue in plain JAX)
# ----------------------------------------------------------------------------
class OpenKGCanonicalizationPallas:
    def __init__(self, n_ent_vocab, n_rel_vocab, input_dims, key):
        k1, k2 = jax.random.split(key)
        self.input_dims = input_dims
        d_pad = _round_up(input_dims, LANE)
        # Deterministic synthetic embedding tables (stand-ins for the GLOVE-
        # initialized nn.Embedding word_embedding inside ent_vae / rel_vae).
        # Stored lane-padded (zero columns beyond input_dims) so gathered rows
        # are lane-dense; zero padding does not change squared distances.
        ent = 0.1 * jax.random.normal(k1, (n_ent_vocab, input_dims), jnp.float32)
        rel = 0.1 * jax.random.normal(k2, (n_rel_vocab, input_dims), jnp.float32)
        self.ent_word_embedding = jnp.pad(ent, ((0, 0), (0, d_pad - input_dims)))
        self.rel_word_embedding = jnp.pad(rel, ((0, 0), (0, d_pad - input_dims)))

    def forward(self, batch):
        hrt_triples, similar_ent_triples, similar_rel_triples = batch

        # glue: index selection exactly as the torch forward does
        rel_idxs = hrt_triples[:, 1]
        ent_idxs = jnp.concatenate((hrt_triples[:, 0], hrt_triples[:, 2]), axis=-1)
        del rel_idxs, ent_idxs  # consumed only by the VAE path (see TODO below)

        # TODO(synk): VAE_GMM (ent_vae / rel_vae) forward + stage losses and
        # KGEModels hole/transe losses are not reproducible here (their source
        # is not part of this module); vae_loss / kbc_loss are placeholders.
        vae_loss = jnp.float32(0.0)
        kbc_loss = jnp.float32(0.0)

        constraint_loss = fused_constraint_loss(
            similar_ent_triples, self.ent_word_embedding,
            similar_rel_triples, self.rel_word_embedding)

        return vae_loss, kbc_loss, constraint_loss


# ----------------------------------------------------------------------------
# Reference (plain JAX) for correctness checking
# ----------------------------------------------------------------------------
def _ref_constraint_loss(instance_pairs, word_embedding):
    e1 = instance_pairs[:, 0].astype(jnp.int32)
    e2 = instance_pairs[:, 1].astype(jnp.int32)
    scores = instance_pairs[:, 2]
    d = word_embedding[e1] - word_embedding[e2]
    return jnp.mean(scores * jnp.sum(d * d, axis=-1))


if __name__ == "__main__":
    key = jax.random.PRNGKey(0)
    k_model, k_hrt, k_eidx, k_escore, k_ridx, k_rscore = jax.random.split(key, 6)

    V_ENT, V_REL, D_IN = 32, 16, 32     # small vocab sizes, input embedding dim
    B, N_PAIRS = 8, 16                  # triple batch, similarity-pair batch

    model = OpenKGCanonicalizationPallas(V_ENT, V_REL, D_IN, k_model)

    # hrt triples: (h, r, t) integer ids
    h = jax.random.randint(k_hrt, (B,), 0, V_ENT)
    r = jax.random.randint(jax.random.fold_in(k_hrt, 1), (B,), 0, V_REL)
    t = jax.random.randint(jax.random.fold_in(k_hrt, 2), (B,), 0, V_ENT)
    hrt_triples = jnp.stack([h, r, t], axis=1).astype(jnp.int32)

    # similarity triples: (idx1, idx2, score) stored as float (as in collate)
    ent_i1 = jax.random.randint(k_eidx, (N_PAIRS,), 0, V_ENT).astype(jnp.float32)
    ent_i2 = jax.random.randint(jax.random.fold_in(k_eidx, 1), (N_PAIRS,), 0, V_ENT).astype(jnp.float32)
    ent_sc = jax.random.uniform(k_escore, (N_PAIRS,), jnp.float32)
    similar_ent_triples = jnp.stack([ent_i1, ent_i2, ent_sc], axis=1)

    rel_i1 = jax.random.randint(k_ridx, (N_PAIRS,), 0, V_REL).astype(jnp.float32)
    rel_i2 = jax.random.randint(jax.random.fold_in(k_ridx, 1), (N_PAIRS,), 0, V_REL).astype(jnp.float32)
    rel_sc = jax.random.uniform(k_rscore, (N_PAIRS,), jnp.float32)
    similar_rel_triples = jnp.stack([rel_i1, rel_i2, rel_sc], axis=1)

    batch = (hrt_triples, similar_ent_triples, similar_rel_triples)

    vae_loss, kbc_loss, constraint_loss = model.forward(batch)
    constraint_loss = jax.block_until_ready(constraint_loss)

    # correctness check against plain-JAX reference (zero-padded columns do
    # not change squared distances, so the padded tables are equivalent)
    ref = (_ref_constraint_loss(similar_ent_triples, model.ent_word_embedding)
           + _ref_constraint_loss(similar_rel_triples, model.rel_word_embedding))
    ref = jax.block_until_ready(ref)
    assert jnp.allclose(constraint_loss, ref, rtol=1e-3, atol=1e-5), (
        constraint_loss, ref)

    print("KERNEL_OK")
</pallas_src>

<mosaic_0001>
module attributes {stable_mosaic.version = 11 : i64} {
  func.func @_constraint_kernel(%arg0: memref<16xi32, #tpu.memory_space<smem>>, %arg1: memref<16xi32, #tpu.memory_space<smem>>, %arg2: memref<16x1xf32, #tpu.memory_space<vmem>>, %arg3: memref<16xi32, #tpu.memory_space<smem>>, %arg4: memref<16xi32, #tpu.memory_space<smem>>, %arg5: memref<16x1xf32, #tpu.memory_space<vmem>>, %arg6: memref<32x128xf32, #tpu.memory_space<any>>, %arg7: memref<16x128xf32, #tpu.memory_space<any>>, %arg8: memref<1x1xf32, #tpu.memory_space<smem>>, %arg9: memref<4x2x8x128xf32, #tpu.memory_space<vmem>>, %arg10: memref<4x!tpu.dma_semaphore, #tpu.memory_space<semaphore_mem>>, %arg11: memref<8x128xf32, #tpu.memory_space<vmem>>) attributes {dimension_semantics = [], scalar_prefetch = 0 : i64, scratch_operands = 3 : i64, tpu.core_type = #tpu.core_type<tc>} {
    %cst = arith.constant 0.000000e+00 : f32
    %0 = vector.broadcast %cst : f32 to vector<8x128xf32>
    %c0 = arith.constant 0 : index
    %c0_0 = arith.constant 0 : index
    %1 = vector.load %arg11[%c0, %c0_0] : memref<8x128xf32, #tpu.memory_space<vmem>>, vector<8x128xf32>
    tpu.vector_store %arg11[%c0, %c0_0], %0 {strides = array<i32>} : memref<8x128xf32, #tpu.memory_space<vmem>>, vector<8x128xf32>,
    %c0_1 = arith.constant 0 : index
    %2 = memref.load %arg0[%c0_1] : memref<16xi32, #tpu.memory_space<smem>>
    %c0_2 = arith.constant 0 : index
    %3 = memref.load %arg1[%c0_2] : memref<16xi32, #tpu.memory_space<smem>>
    %c0_i32 = arith.constant 0 : i32
    %c0_i32_3 = arith.constant 0 : i32
    %c0_i32_4 = arith.constant 0 : i32
    %c0_i32_5 = arith.constant 0 : i32
    %4 = tpu.memref_slice %arg6[%2, %c0_i32_5] : memref<32x128xf32, #tpu.memory_space<any>> -> memref<1x128xf32, #tpu.memory_space<any>>
    %c0_i32_6 = arith.constant 0 : i32
    %c0_i32_7 = arith.constant 0 : i32
    %5 = tpu.memref_slice %arg9[%c0_i32, %c0_i32_3, %c0_i32_6, %c0_i32_7] : memref<4x2x8x128xf32, #tpu.memory_space<vmem>> -> memref<1x1x1x128xf32, #tpu.memory_space<vmem>>
    %6 = tpu.memref_squeeze %5 : memref<1x1x1x128xf32, #tpu.memory_space<vmem>> -> memref<1x128xf32, #tpu.memory_space<vmem>>
    %7 = tpu.memref_slice %arg10[%c0_i32_4] : memref<4x!tpu.dma_semaphore, #tpu.memory_space<semaphore_mem>> -> memref<1x!tpu.dma_semaphore, #tpu.memory_space<semaphore_mem>>
    %8 = tpu.memref_squeeze %7 : memref<1x!tpu.dma_semaphore, #tpu.memory_space<semaphore_mem>> -> memref<!tpu.dma_semaphore, #tpu.memory_space<semaphore_mem>>
    tpu.enqueue_dma source(%4 : memref<1x128xf32, #tpu.memory_space<any>>) target(%6 : memref<1x128xf32, #tpu.memory_space<vmem>>) target_semaphore(%8 : memref<!tpu.dma_semaphore, #tpu.memory_space<semaphore_mem>>)
    %c0_i32_8 = arith.constant 0 : i32
    %c1_i32 = arith.constant 1 : i32
    %c0_i32_9 = arith.constant 0 : i32
    %c0_i32_10 = arith.constant 0 : i32
    %9 = tpu.memref_slice %arg6[%3, %c0_i32_10] : memref<32x128xf32, #tpu.memory_space<any>> -> memref<1x128xf32, #tpu.memory_space<any>>
    %c0_i32_11 = arith.constant 0 : i32
    %c0_i32_12 = arith.constant 0 : i32
    %10 = tpu.memref_slice %arg9[%c0_i32_8, %c1_i32, %c0_i32_11, %c0_i32_12] : memref<4x2x8x128xf32, #tpu.memory_space<vmem>> -> memref<1x1x1x128xf32, #tpu.memory_space<vmem>>
    %11 = tpu.memref_squeeze %10 : memref<1x1x1x128xf32, #tpu.memory_space<vmem>> -> memref<1x128xf32, #tpu.memory_space<vmem>>
    %12 = tpu.memref_slice %arg10[%c0_i32_9] : memref<4x!tpu.dma_semaphore, #tpu.memory_space<semaphore_mem>> -> memref<1x!tpu.dma_semaphore, #tpu.memory_space<semaphore_mem>>
    %13 = tpu.memref_squeeze %12 : memref<1x!tpu.dma_semaphore, #tpu.memory_space<semaphore_mem>> -> memref<!tpu.dma_semaphore, #tpu.memory_space<semaphore_mem>>
    tpu.enqueue_dma source(%9 : memref<1x128xf32, #tpu.memory_space<any>>) target(%11 : memref<1x128xf32, #tpu.memory_space<vmem>>) target_semaphore(%13 : memref<!tpu.dma_semaphore, #tpu.memory_space<semaphore_mem>>)
    %c1 = arith.constant 1 : index
    %14 = memref.load %arg0[%c1] : memref<16xi32, #tpu.memory_space<smem>>
    %c1_13 = arith.constant 1 : index
    %15 = memref.load %arg1[%c1_13] : memref<16xi32, #tpu.memory_space<smem>>
    %c0_i32_14 = arith.constant 0 : i32
    %c0_i32_15 = arith.constant 0 : i32
    %c0_i32_16 = arith.constant 0 : i32
    %c0_i32_17 = arith.constant 0 : i32
    %16 = tpu.memref_slice %arg6[%14, %c0_i32_17] : memref<32x128xf32, #tpu.memory_space<any>> -> memref<1x128xf32, #tpu.memory_space<any>>
    %c1_i32_18 = arith.constant 1 : i32
    %c0_i32_19 = arith.constant 0 : i32
    %17 = tpu.memref_slice %arg9[%c0_i32_14, %c0_i32_15, %c1_i32_18, %c0_i32_19] : memref<4x2x8x128xf32, #tpu.memory_space<vmem>> -> memref<1x1x1x128xf32, #tpu.memory_space<vmem>>
    %18 = tpu.memref_squeeze %17 : memref<1x1x1x128xf32, #tpu.memory_space<vmem>> -> memref<1x128xf32, #tpu.memory_space<vmem>>
    %19 = tpu.memref_slice %arg10[%c0_i32_16] : memref<4x!tpu.dma_semaphore, #tpu.memory_space<semaphore_mem>> -> memref<1x!tpu.dma_semaphore, #tpu.memory_space<semaphore_mem>>
    %20 = tpu.memref_squeeze %19 : memref<1x!tpu.dma_semaphore, #tpu.memory_space<semaphore_mem>> -> memref<!tpu.dma_semaphore, #tpu.memory_space<semaphore_mem>>
    tpu.enqueue_dma source(%16 : memref<1x128xf32, #tpu.memory_space<any>>) target(%18 : memref<1x128xf32, #tpu.memory_space<vmem>>) target_semaphore(%20 : memref<!tpu.dma_semaphore, #tpu.memory_space<semaphore_mem>>)
    %c0_i32_20 = arith.constant 0 : i32
    %c1_i32_21 = arith.constant 1 : i32
    %c0_i32_22 = arith.constant 0 : i32
    %c0_i32_23 = arith.constant 0 : i32
    %21 = tpu.memref_slice %arg6[%15, %c0_i32_23] : memref<32x128xf32, #tpu.memory_space<any>> -> memref<1x128xf32, #tpu.memory_space<any>>
    %c1_i32_24 = arith.constant 1 : i32
    %c0_i32_25 = arith.constant 0 : i32
    %22 = tpu.memref_slice %arg9[%c0_i32_20, %c1_i32_21, %c1_i32_24, %c0_i32_25] : memref<4x2x8x128xf32, #tpu.memory_space<vmem>> -> memref<1x1x1x128xf32, #tpu.memory_space<vmem>>
    %23 = tpu.memref_squeeze %22 : memref<1x1x1x128xf32, #tpu.memory_space<vmem>> -> memref<1x128xf32, #tpu.memory_space<vmem>>
    %24 = tpu.memref_slice %arg10[%c0_i32_22] : memref<4x!tpu.dma_semaphore, #tpu.memory_space<semaphore_mem>> -> memref<1x!tpu.dma_semaphore, #tpu.memory_space<semaphore_mem>>
    %25 = tpu.memref_squeeze %24 : memref<1x!tpu.dma_semaphore, #tpu.memory_space<semaphore_mem>> -> memref<!tpu.dma_semaphore, #tpu.memory_space<semaphore_mem>>
    tpu.enqueue_dma source(%21 : memref<1x128xf32, #tpu.memory_space<any>>) target(%23 : memref<1x128xf32, #tpu.memory_space<vmem>>) target_semaphore(%25 : memref<!tpu.dma_semaphore, #tpu.memory_space<semaphore_mem>>)
    %c2 = arith.constant 2 : index
    %26 = memref.load %arg0[%c2] : memref<16xi32, #tpu.memory_space<smem>>
    %c2_26 = arith.constant 2 : index
    %27 = memref.load %arg1[%c2_26] : memref<16xi32, #tpu.memory_space<smem>>
    %c0_i32_27 = arith.constant 0 : i32
    %c0_i32_28 = arith.constant 0 : i32
    %c0_i32_29 = arith.constant 0 : i32
    %c0_i32_30 = arith.constant 0 : i32
    %28 = tpu.memref_slice %arg6[%26, %c0_i32_30] : memref<32x128xf32, #tpu.memory_space<any>> -> memref<1x128xf32, #tpu.memory_space<any>>
    %c2_i32 = arith.constant 2 : i32
    %c0_i32_31 = arith.constant 0 : i32
    %29 = tpu.memref_slice %arg9[%c0_i32_27, %c0_i32_28, %c2_i32, %c0_i32_31] : memref<4x2x8x128xf32, #tpu.memory_space<vmem>> -> memref<1x1x1x128xf32, #tpu.memory_space<vmem>>
    %30 = tpu.memref_squeeze %29 : memref<1x1x1x128xf32, #tpu.memory_space<vmem>> -> memref<1x128xf32, #tpu.memory_space<vmem>>
    %31 = tpu.memref_slice %arg10[%c0_i32_29] : memref<4x!tpu.dma_semaphore, #tpu.memory_space<semaphore_mem>> -> memref<1x!tpu.dma_semaphore, #tpu.memory_space<semaphore_mem>>
    %32 = tpu.memref_squeeze %31 : memref<1x!tpu.dma_semaphore, #tpu.memory_space<semaphore_mem>> -> memref<!tpu.dma_semaphore, #tpu.memory_space<semaphore_mem>>
    tpu.enqueue_dma source(%28 : memref<1x128xf32, #tpu.memory_space<any>>) target(%30 : memref<1x128xf32, #tpu.memory_space<vmem>>) target_semaphore(%32 : memref<!tpu.dma_semaphore, #tpu.memory_space<semaphore_mem>>)
    %c0_i32_32 = arith.constant 0 : i32
    %c1_i32_33 = arith.constant 1 : i32
    %c0_i32_34 = arith.constant 0 : i32
    %c0_i32_35 = arith.constant 0 : i32
    %33 = tpu.memref_slice %arg6[%27, %c0_i32_35] : memref<32x128xf32, #tpu.memory_space<any>> -> memref<1x128xf32, #tpu.memory_space<any>>
    %c2_i32_36 = arith.constant 2 : i32
    %c0_i32_37 = arith.constant 0 : i32
    %34 = tpu.memref_slice %arg9[%c0_i32_32, %c1_i32_33, %c2_i32_36, %c0_i32_37] : memref<4x2x8x128xf32, #tpu.memory_space<vmem>> -> memref<1x1x1x128xf32, #tpu.memory_space<vmem>>
    %35 = tpu.memref_squeeze %34 : memref<1x1x1x128xf32, #tpu.memory_space<vmem>> -> memref<1x128xf32, #tpu.memory_space<vmem>>
    %36 = tpu.memref_slice %arg10[%c0_i32_34] : memref<4x!tpu.dma_semaphore, #tpu.memory_space<semaphore_mem>> -> memref<1x!tpu.dma_semaphore, #tpu.memory_space<semaphore_mem>>
    %37 = tpu.memref_squeeze %36 : memref<1x!tpu.dma_semaphore, #tpu.memory_space<semaphore_mem>> -> memref<!tpu.dma_semaphore, #tpu.memory_space<semaphore_mem>>
    tpu.enqueue_dma source(%33 : memref<1x128xf32, #tpu.memory_space<any>>) target(%35 : memref<1x128xf32, #tpu.memory_space<vmem>>) target_semaphore(%37 : memref<!tpu.dma_semaphore, #tpu.memory_space<semaphore_mem>>)
    %c3 = arith.constant 3 : index
    %38 = memref.load %arg0[%c3] : memref<16xi32, #tpu.memory_space<smem>>
    %c3_38 = arith.constant 3 : index
    %39 = memref.load %arg1[%c3_38] : memref<16xi32, #tpu.memory_space<smem>>
    %c0_i32_39 = arith.constant 0 : i32
    %c0_i32_40 = arith.constant 0 : i32
    %c0_i32_41 = arith.constant 0 : i32
    %c0_i32_42 = arith.constant 0 : i32
    %40 = tpu.memref_slice %arg6[%38, %c0_i32_42] : memref<32x128xf32, #tpu.memory_space<any>> -> memref<1x128xf32, #tpu.memory_space<any>>
    %c3_i32 = arith.constant 3 : i32
    %c0_i32_43 = arith.constant 0 : i32
    %41 = tpu.memref_slice %arg9[%c0_i32_39, %c0_i32_40, %c3_i32, %c0_i32_43] : memref<4x2x8x128xf32, #tpu.memory_space<vmem>> -> memref<1x1x1x128xf32, #tpu.memory_space<vmem>>
    %42 = tpu.memref_squeeze %41 : memref<1x1x1x128xf32, #tpu.memory_space<vmem>> -> memref<1x128xf32, #tpu.memory_space<vmem>>
    %43 = tpu.memref_slice %arg10[%c0_i32_41] : memref<4x!tpu.dma_semaphore, #tpu.memory_space<semaphore_mem>> -> memref<1x!tpu.dma_semaphore, #tpu.memory_space<semaphore_mem>>
    %44 = tpu.memref_squeeze %43 : memref<1x!tpu.dma_semaphore, #tpu.memory_space<semaphore_mem>> -> memref<!tpu.dma_semaphore, #tpu.memory_space<semaphore_mem>>
    tpu.enqueue_dma source(%40 : memref<1x128xf32, #tpu.memory_space<any>>) target(%42 : memref<1x128xf32, #tpu.memory_space<vmem>>) target_semaphore(%44 : memref<!tpu.dma_semaphore, #tpu.memory_space<semaphore_mem>>)
    %c0_i32_44 = arith.constant 0 : i32
    %c1_i32_45 = arith.constant 1 : i32
    %c0_i32_46 = arith.constant 0 : i32
    %c0_i32_47 = arith.constant 0 : i32
    %45 = tpu.memref_slice %arg6[%39, %c0_i32_47] : memref<32x128xf32, #tpu.memory_space<any>> -> memref<1x128xf32, #tpu.memory_space<any>>
    %c3_i32_48 = arith.constant 3 : i32
    %c0_i32_49 = arith.constant 0 : i32
    %46 = tpu.memref_slice %arg9[%c0_i32_44, %c1_i32_45, %c3_i32_48, %c0_i32_49] : memref<4x2x8x128xf32, #tpu.memory_space<vmem>> -> memref<1x1x1x128xf32, #tpu.memory_space<vmem>>
    %47 = tpu.memref_squeeze %46 : memref<1x1x1x128xf32, #tpu.memory_space<vmem>> -> memref<1x128xf32, #tpu.memory_space<vmem>>
    %48 = tpu.memref_slice %arg10[%c0_i32_46] : memref<4x!tpu.dma_semaphore, #tpu.memory_space<semaphore_mem>> -> memref<1x!tpu.dma_semaphore, #tpu.memory_space<semaphore_mem>>
    %49 = tpu.memref_squeeze %48 : memref<1x!tpu.dma_semaphore, #tpu.memory_space<semaphore_mem>> -> memref<!tpu.dma_semaphore, #tpu.memory_space<semaphore_mem>>
    tpu.enqueue_dma source(%45 : memref<1x128xf32, #tpu.memory_space<any>>) target(%47 : memref<1x128xf32, #tpu.memory_space<vmem>>) target_semaphore(%49 : memref<!tpu.dma_semaphore, #tpu.memory_space<semaphore_mem>>)
    %c4 = arith.constant 4 : index
    %50 = memref.load %arg0[%c4] : memref<16xi32, #tpu.memory_space<smem>>
    %c4_50 = arith.constant 4 : index
    %51 = memref.load %arg1[%c4_50] : memref<16xi32, #tpu.memory_space<smem>>
    %c0_i32_51 = arith.constant 0 : i32
    %c0_i32_52 = arith.constant 0 : i32
    %c0_i32_53 = arith.constant 0 : i32
    %c0_i32_54 = arith.constant 0 : i32
    %52 = tpu.memref_slice %arg6[%50, %c0_i32_54] : memref<32x128xf32, #tpu.memory_space<any>> -> memref<1x128xf32, #tpu.memory_space<any>>
    %c4_i32 = arith.constant 4 : i32
    %c0_i32_55 = arith.constant 0 : i32
    %53 = tpu.memref_slice %arg9[%c0_i32_51, %c0_i32_52, %c4_i32, %c0_i32_55] : memref<4x2x8x128xf32, #tpu.memory_space<vmem>> -> memref<1x1x1x128xf32, #tpu.memory_space<vmem>>
    %54 = tpu.memref_squeeze %53 : memref<1x1x1x128xf32, #tpu.memory_space<vmem>> -> memref<1x128xf32, #tpu.memory_space<vmem>>
    %55 = tpu.memref_slice %arg10[%c0_i32_53] : memref<4x!tpu.dma_semaphore, #tpu.memory_space<semaphore_mem>> -> memref<1x!tpu.dma_semaphore, #tpu.memory_space<semaphore_mem>>
    %56 = tpu.memref_squeeze %55 : memref<1x!tpu.dma_semaphore, #tpu.memory_space<semaphore_mem>> -> memref<!tpu.dma_semaphore, #tpu.memory_space<semaphore_mem>>
    tpu.enqueue_dma source(%52 : memref<1x128xf32, #tpu.memory_space<any>>) target(%54 : memref<1x128xf32, #tpu.memory_space<vmem>>) target_semaphore(%56 : memref<!tpu.dma_semaphore, #tpu.memory_space<semaphore_mem>>)
    %c0_i32_56 = arith.constant 0 : i32
    %c1_i32_57 = arith.constant 1 : i32
    %c0_i32_58 = arith.constant 0 : i32
    %c0_i32_59 = arith.constant 0 : i32
    %57 = tpu.memref_slice %arg6[%51, %c0_i32_59] : memref<32x128xf32, #tpu.memory_space<any>> -> memref<1x128xf32, #tpu.memory_space<any>>
    %c4_i32_60 = arith.constant 4 : i32
    %c0_i32_61 = arith.constant 0 : i32
    %58 = tpu.memref_slice %arg9[%c0_i32_56, %c1_i32_57, %c4_i32_60, %c0_i32_61] : memref<4x2x8x128xf32, #tpu.memory_space<vmem>> -> memref<1x1x1x128xf32, #tpu.memory_space<vmem>>
    %59 = tpu.memref_squeeze %58 : memref<1x1x1x128xf32, #tpu.memory_space<vmem>> -> memref<1x128xf32, #tpu.memory_space<vmem>>
    %60 = tpu.memref_slice %arg10[%c0_i32_58] : memref<4x!tpu.dma_semaphore, #tpu.memory_space<semaphore_mem>> -> memref<1x!tpu.dma_semaphore, #tpu.memory_space<semaphore_mem>>
    %61 = tpu.memref_squeeze %60 : memref<1x!tpu.dma_semaphore, #tpu.memory_space<semaphore_mem>> -> memref<!tpu.dma_semaphore, #tpu.memory_space<semaphore_mem>>
    tpu.enqueue_dma source(%57 : memref<1x128xf32, #tpu.memory_space<any>>) target(%59 : memref<1x128xf32, #tpu.memory_space<vmem>>) target_semaphore(%61 : memref<!tpu.dma_semaphore, #tpu.memory_space<semaphore_mem>>)
    %c5 = arith.constant 5 : index
    %62 = memref.load %arg0[%c5] : memref<16xi32, #tpu.memory_space<smem>>
    %c5_62 = arith.constant 5 : index
    %63 = memref.load %arg1[%c5_62] : memref<16xi32, #tpu.memory_space<smem>>
    %c0_i32_63 = arith.constant 0 : i32
    %c0_i32_64 = arith.constant 0 : i32
    %c0_i32_65 = arith.constant 0 : i32
    %c0_i32_66 = arith.constant 0 : i32
    %64 = tpu.memref_slice %arg6[%62, %c0_i32_66] : memref<32x128xf32, #tpu.memory_space<any>> -> memref<1x128xf32, #tpu.memory_space<any>>
    %c5_i32 = arith.constant 5 : i32
    %c0_i32_67 = arith.constant 0 : i32
    %65 = tpu.memref_slice %arg9[%c0_i32_63, %c0_i32_64, %c5_i32, %c0_i32_67] : memref<4x2x8x128xf32, #tpu.memory_space<vmem>> -> memref<1x1x1x128xf32, #tpu.memory_space<vmem>>
    %66 = tpu.memref_squeeze %65 : memref<1x1x1x128xf32, #tpu.memory_space<vmem>> -> memref<1x128xf32, #tpu.memory_space<vmem>>
    %67 = tpu.memref_slice %arg10[%c0_i32_65] : memref<4x!tpu.dma_semaphore, #tpu.memory_space<semaphore_mem>> -> memref<1x!tpu.dma_semaphore, #tpu.memory_space<semaphore_mem>>
    %68 = tpu.memref_squeeze %67 : memref<1x!tpu.dma_semaphore, #tpu.memory_space<semaphore_mem>> -> memref<!tpu.dma_semaphore, #tpu.memory_space<semaphore_mem>>
    tpu.enqueue_dma source(%64 : memref<1x128xf32, #tpu.memory_space<any>>) target(%66 : memref<1x128xf32, #tpu.memory_space<vmem>>) target_semaphore(%68 : memref<!tpu.dma_semaphore, #tpu.memory_space<semaphore_mem>>)
    %c0_i32_68 = arith.constant 0 : i32
    %c1_i32_69 = arith.constant 1 : i32
    %c0_i32_70 = arith.constant 0 : i32
    %c0_i32_71 = arith.constant 0 : i32
    %69 = tpu.memref_slice %arg6[%63, %c0_i32_71] : memref<32x128xf32, #tpu.memory_space<any>> -> memref<1x128xf32, #tpu.memory_space<any>>
    %c5_i32_72 = arith.constant 5 : i32
    %c0_i32_73 = arith.constant 0 : i32
    %70 = tpu.memref_slice %arg9[%c0_i32_68, %c1_i32_69, %c5_i32_72, %c0_i32_73] : memref<4x2x8x128xf32, #tpu.memory_space<vmem>> -> memref<1x1x1x128xf32, #tpu.memory_space<vmem>>
    %71 = tpu.memref_squeeze %70 : memref<1x1x1x128xf32, #tpu.memory_space<vmem>> -> memref<1x128xf32, #tpu.memory_space<vmem>>
    %72 = tpu.memref_slice %arg10[%c0_i32_70] : memref<4x!tpu.dma_semaphore, #tpu.memory_space<semaphore_mem>> -> memref<1x!tpu.dma_semaphore, #tpu.memory_space<semaphore_mem>>
    %73 = tpu.memref_squeeze %72 : memref<1x!tpu.dma_semaphore, #tpu.memory_space<semaphore_mem>> -> memref<!tpu.dma_semaphore, #tpu.memory_space<semaphore_mem>>
    tpu.enqueue_dma source(%69 : memref<1x128xf32, #tpu.memory_space<any>>) target(%71 : memref<1x128xf32, #tpu.memory_space<vmem>>) target_semaphore(%73 : memref<!tpu.dma_semaphore, #tpu.memory_space<semaphore_mem>>)
    %c6 = arith.constant 6 : index
    %74 = memref.load %arg0[%c6] : memref<16xi32, #tpu.memory_space<smem>>
    %c6_74 = arith.constant 6 : index
    %75 = memref.load %arg1[%c6_74] : memref<16xi32, #tpu.memory_space<smem>>
    %c0_i32_75 = arith.constant 0 : i32
    %c0_i32_76 = arith.constant 0 : i32
    %c0_i32_77 = arith.constant 0 : i32
    %c0_i32_78 = arith.constant 0 : i32
    %76 = tpu.memref_slice %arg6[%74, %c0_i32_78] : memref<32x128xf32, #tpu.memory_space<any>> -> memref<1x128xf32, #tpu.memory_space<any>>
    %c6_i32 = arith.constant 6 : i32
    %c0_i32_79 = arith.constant 0 : i32
    %77 = tpu.memref_slice %arg9[%c0_i32_75, %c0_i32_76, %c6_i32, %c0_i32_79] : memref<4x2x8x128xf32, #tpu.memory_space<vmem>> -> memref<1x1x1x128xf32, #tpu.memory_space<vmem>>
    %78 = tpu.memref_squeeze %77 : memref<1x1x1x128xf32, #tpu.memory_space<vmem>> -> memref<1x128xf32, #tpu.memory_space<vmem>>
    %79 = tpu.memref_slice %arg10[%c0_i32_77] : memref<4x!tpu.dma_semaphore, #tpu.memory_space<semaphore_mem>> -> memref<1x!tpu.dma_semaphore, #tpu.memory_space<semaphore_mem>>
    %80 = tpu.memref_squeeze %79 : memref<1x!tpu.dma_semaphore, #tpu.memory_space<semaphore_mem>> -> memref<!tpu.dma_semaphore, #tpu.memory_space<semaphore_mem>>
    tpu.enqueue_dma source(%76 : memref<1x128xf32, #tpu.memory_space<any>>) target(%78 : memref<1x128xf32, #tpu.memory_space<vmem>>) target_semaphore(%80 : memref<!tpu.dma_semaphore, #tpu.memory_space<semaphore_mem>>)
    %c0_i32_80 = arith.constant 0 : i32
    %c1_i32_81 = arith.constant 1 : i32
    %c0_i32_82 = arith.constant 0 : i32
    %c0_i32_83 = arith.constant 0 : i32
    %81 = tpu.memref_slice %arg6[%75, %c0_i32_83] : memref<32x128xf32, #tpu.memory_space<any>> -> memref<1x128xf32, #tpu.memory_space<any>>
    %c6_i32_84 = arith.constant 6 : i32
    %c0_i32_85 = arith.constant 0 : i32
    %82 = tpu.memref_slice %arg9[%c0_i32_80, %c1_i32_81, %c6_i32_84, %c0_i32_85] : memref<4x2x8x128xf32, #tpu.memory_space<vmem>> -> memref<1x1x1x128xf32, #tpu.memory_space<vmem>>
    %83 = tpu.memref_squeeze %82 : memref<1x1x1x128xf32, #tpu.memory_space<vmem>> -> memref<1x128xf32, #tpu.memory_space<vmem>>
    %84 = tpu.memref_slice %arg10[%c0_i32_82] : memref<4x!tpu.dma_semaphore, #tpu.memory_space<semaphore_mem>> -> memref<1x!tpu.dma_semaphore, #tpu.memory_space<semaphore_mem>>
    %85 = tpu.memref_squeeze %84 : memref<1x!tpu.dma_semaphore, #tpu.memory_space<semaphore_mem>> -> memref<!tpu.dma_semaphore, #tpu.memory_space<semaphore_mem>>
    tpu.enqueue_dma source(%81 : memref<1x128xf32, #tpu.memory_space<any>>) target(%83 : memref<1x128xf32, #tpu.memory_space<vmem>>) target_semaphore(%85 : memref<!tpu.dma_semaphore, #tpu.memory_space<semaphore_mem>>)
    %c7 = arith.constant 7 : index
    %86 = memref.load %arg0[%c7] : memref<16xi32, #tpu.memory_space<smem>>
    %c7_86 = arith.constant 7 : index
    %87 = memref.load %arg1[%c7_86] : memref<16xi32, #tpu.memory_space<smem>>
    %c0_i32_87 = arith.constant 0 : i32
    %c0_i32_88 = arith.constant 0 : i32
    %c0_i32_89 = arith.constant 0 : i32
    %c0_i32_90 = arith.constant 0 : i32
    %88 = tpu.memref_slice %arg6[%86, %c0_i32_90] : memref<32x128xf32, #tpu.memory_space<any>> -> memref<1x128xf32, #tpu.memory_space<any>>
    %c7_i32 = arith.constant 7 : i32
    %c0_i32_91 = arith.constant 0 : i32
    %89 = tpu.memref_slice %arg9[%c0_i32_87, %c0_i32_88, %c7_i32, %c0_i32_91] : memref<4x2x8x128xf32, #tpu.memory_space<vmem>> -> memref<1x1x1x128xf32, #tpu.memory_space<vmem>>
    %90 = tpu.memref_squeeze %89 : memref<1x1x1x128xf32, #tpu.memory_space<vmem>> -> memref<1x128xf32, #tpu.memory_space<vmem>>
    %91 = tpu.memref_slice %arg10[%c0_i32_89] : memref<4x!tpu.dma_semaphore, #tpu.memory_space<semaphore_mem>> -> memref<1x!tpu.dma_semaphore, #tpu.memory_space<semaphore_mem>>
    %92 = tpu.memref_squeeze %91 : memref<1x!tpu.dma_semaphore, #tpu.memory_space<semaphore_mem>> -> memref<!tpu.dma_semaphore, #tpu.memory_space<semaphore_mem>>
    tpu.enqueue_dma source(%88 : memref<1x128xf32, #tpu.memory_space<any>>) target(%90 : memref<1x128xf32, #tpu.memory_space<vmem>>) target_semaphore(%92 : memref<!tpu.dma_semaphore, #tpu.memory_space<semaphore_mem>>)
    %c0_i32_92 = arith.constant 0 : i32
    %c1_i32_93 = arith.constant 1 : i32
    %c0_i32_94 = arith.constant 0 : i32
    %c0_i32_95 = arith.constant 0 : i32
    %93 = tpu.memref_slice %arg6[%87, %c0_i32_95] : memref<32x128xf32, #tpu.memory_space<any>> -> memref<1x128xf32, #tpu.memory_space<any>>
    %c7_i32_96 = arith.constant 7 : i32
    %c0_i32_97 = arith.constant 0 : i32
    %94 = tpu.memref_slice %arg9[%c0_i32_92, %c1_i32_93, %c7_i32_96, %c0_i32_97] : memref<4x2x8x128xf32, #tpu.memory_space<vmem>> -> memref<1x1x1x128xf32, #tpu.memory_space<vmem>>
    %95 = tpu.memref_squeeze %94 : memref<1x1x1x128xf32, #tpu.memory_space<vmem>> -> memref<1x128xf32, #tpu.memory_space<vmem>>
    %96 = tpu.memref_slice %arg10[%c0_i32_94] : memref<4x!tpu.dma_semaphore, #tpu.memory_space<semaphore_mem>> -> memref<1x!tpu.dma_semaphore, #tpu.memory_space<semaphore_mem>>
    %97 = tpu.memref_squeeze %96 : memref<1x!tpu.dma_semaphore, #tpu.memory_space<semaphore_mem>> -> memref<!tpu.dma_semaphore, #tpu.memory_space<semaphore_mem>>
    tpu.enqueue_dma source(%93 : memref<1x128xf32, #tpu.memory_space<any>>) target(%95 : memref<1x128xf32, #tpu.memory_space<vmem>>) target_semaphore(%97 : memref<!tpu.dma_semaphore, #tpu.memory_space<semaphore_mem>>)
    %c8 = arith.constant 8 : index
    %98 = memref.load %arg0[%c8] : memref<16xi32, #tpu.memory_space<smem>>
    %c8_98 = arith.constant 8 : index
    %99 = memref.load %arg1[%c8_98] : memref<16xi32, #tpu.memory_space<smem>>
    %c1_i32_99 = arith.constant 1 : i32
    %c0_i32_100 = arith.constant 0 : i32
    %c1_i32_101 = arith.constant 1 : i32
    %c0_i32_102 = arith.constant 0 : i32
    %100 = tpu.memref_slice %arg6[%98, %c0_i32_102] : memref<32x128xf32, #tpu.memory_space<any>> -> memref<1x128xf32, #tpu.memory_space<any>>
    %c0_i32_103 = arith.constant 0 : i32
    %c0_i32_104 = arith.constant 0 : i32
    %101 = tpu.memref_slice %arg9[%c1_i32_99, %c0_i32_100, %c0_i32_103, %c0_i32_104] : memref<4x2x8x128xf32, #tpu.memory_space<vmem>> -> memref<1x1x1x128xf32, #tpu.memory_space<vmem>>
    %102 = tpu.memref_squeeze %101 : memref<1x1x1x128xf32, #tpu.memory_space<vmem>> -> memref<1x128xf32, #tpu.memory_space<vmem>>
    %103 = tpu.memref_slice %arg10[%c1_i32_101] : memref<4x!tpu.dma_semaphore, #tpu.memory_space<semaphore_mem>> -> memref<1x!tpu.dma_semaphore, #tpu.memory_space<semaphore_mem>>
    %104 = tpu.memref_squeeze %103 : memref<1x!tpu.dma_semaphore, #tpu.memory_space<semaphore_mem>> -> memref<!tpu.dma_semaphore, #tpu.memory_space<semaphore_mem>>
    tpu.enqueue_dma source(%100 : memref<1x128xf32, #tpu.memory_space<any>>) target(%102 : memref<1x128xf32, #tpu.memory_space<vmem>>) target_semaphore(%104 : memref<!tpu.dma_semaphore, #tpu.memory_space<semaphore_mem>>)
    %c1_i32_105 = arith.constant 1 : i32
    %c1_i32_106 = arith.constant 1 : i32
    %c1_i32_107 = arith.constant 1 : i32
    %c0_i32_108 = arith.constant 0 : i32
    %105 = tpu.memref_slice %arg6[%99, %c0_i32_108] : memref<32x128xf32, #tpu.memory_space<any>> -> memref<1x128xf32, #tpu.memory_space<any>>
    %c0_i32_109 = arith.constant 0 : i32
    %c0_i32_110 = arith.constant 0 : i32
    %106 = tpu.memref_slice %arg9[%c1_i32_105, %c1_i32_106, %c0_i32_109, %c0_i32_110] : memref<4x2x8x128xf32, #tpu.memory_space<vmem>> -> memref<1x1x1x128xf32, #tpu.memory_space<vmem>>
    %107 = tpu.memref_squeeze %106 : memref<1x1x1x128xf32, #tpu.memory_space<vmem>> -> memref<1x128xf32, #tpu.memory_space<vmem>>
    %108 = tpu.memref_slice %arg10[%c1_i32_107] : memref<4x!tpu.dma_semaphore, #tpu.memory_space<semaphore_mem>> -> memref<1x!tpu.dma_semaphore, #tpu.memory_space<semaphore_mem>>
    %109 = tpu.memref_squeeze %108 : memref<1x!tpu.dma_semaphore, #tpu.memory_space<semaphore_mem>> -> memref<!tpu.dma_semaphore, #tpu.memory_space<semaphore_mem>>
    tpu.enqueue_dma source(%105 : memref<1x128xf32, #tpu.memory_space<any>>) target(%107 : memref<1x128xf32, #tpu.memory_space<vmem>>) target_semaphore(%109 : memref<!tpu.dma_semaphore, #tpu.memory_space<semaphore_mem>>)
    %c9 = arith.constant 9 : index
    %110 = memref.load %arg0[%c9] : memref<16xi32, #tpu.memory_space<smem>>
    %c9_111 = arith.constant 9 : index
    %111 = memref.load %arg1[%c9_111] : memref<16xi32, #tpu.memory_space<smem>>
    %c1_i32_112 = arith.constant 1 : i32
    %c0_i32_113 = arith.constant 0 : i32
    %c1_i32_114 = arith.constant 1 : i32
    %c0_i32_115 = arith.constant 0 : i32
    %112 = tpu.memref_slice %arg6[%110, %c0_i32_115] : memref<32x128xf32, #tpu.memory_space<any>> -> memref<1x128xf32, #tpu.memory_space<any>>
    %c1_i32_116 = arith.constant 1 : i32
    %c0_i32_117 = arith.constant 0 : i32
    %113 = tpu.memref_slice %arg9[%c1_i32_112, %c0_i32_113, %c1_i32_116, %c0_i32_117] : memref<4x2x8x128xf32, #tpu.memory_space<vmem>> -> memref<1x1x1x128xf32, #tpu.memory_space<vmem>>
    %114 = tpu.memref_squeeze %113 : memref<1x1x1x128xf32, #tpu.memory_space<vmem>> -> memref<1x128xf32, #tpu.memory_space<vmem>>
    %115 = tpu.memref_slice %arg10[%c1_i32_114] : memref<4x!tpu.dma_semaphore, #tpu.memory_space<semaphore_mem>> -> memref<1x!tpu.dma_semaphore, #tpu.memory_space<semaphore_mem>>
    %116 = tpu.memref_squeeze %115 : memref<1x!tpu.dma_semaphore, #tpu.memory_space<semaphore_mem>> -> memref<!tpu.dma_semaphore, #tpu.memory_space<semaphore_mem>>
    tpu.enqueue_dma source(%112 : memref<1x128xf32, #tpu.memory_space<any>>) target(%114 : memref<1x128xf32, #tpu.memory_space<vmem>>) target_semaphore(%116 : memref<!tpu.dma_semaphore, #tpu.memory_space<semaphore_mem>>)
    %c1_i32_118 = arith.constant 1 : i32
    %c1_i32_119 = arith.constant 1 : i32
    %c1_i32_120 = arith.constant 1 : i32
    %c0_i32_121 = arith.constant 0 : i32
    %117 = tpu.memref_slice %arg6[%111, %c0_i32_121] : memref<32x128xf32, #tpu.memory_space<any>> -> memref<1x128xf32, #tpu.memory_space<any>>
    %c1_i32_122 = arith.constant 1 : i32
    %c0_i32_123 = arith.constant 0 : i32
    %118 = tpu.memref_slice %arg9[%c1_i32_118, %c1_i32_119, %c1_i32_122, %c0_i32_123] : memref<4x2x8x128xf32, #tpu.memory_space<vmem>> -> memref<1x1x1x128xf32, #tpu.memory_space<vmem>>
    %119 = tpu.memref_squeeze %118 : memref<1x1x1x128xf32, #tpu.memory_space<vmem>> -> memref<1x128xf32, #tpu.memory_space<vmem>>
    %120 = tpu.memref_slice %arg10[%c1_i32_120] : memref<4x!tpu.dma_semaphore, #tpu.memory_space<semaphore_mem>> -> memref<1x!tpu.dma_semaphore, #tpu.memory_space<semaphore_mem>>
    %121 = tpu.memref_squeeze %120 : memref<1x!tpu.dma_semaphore, #tpu.memory_space<semaphore_mem>> -> memref<!tpu.dma_semaphore, #tpu.memory_space<semaphore_mem>>
    tpu.enqueue_dma source(%117 : memref<1x128xf32, #tpu.memory_space<any>>) target(%119 : memref<1x128xf32, #tpu.memory_space<vmem>>) target_semaphore(%121 : memref<!tpu.dma_semaphore, #tpu.memory_space<semaphore_mem>>)
    %c10 = arith.constant 10 : index
    %122 = memref.load %arg0[%c10] : memref<16xi32, #tpu.memory_space<smem>>
    %c10_124 = arith.constant 10 : index
    %123 = memref.load %arg1[%c10_124] : memref<16xi32, #tpu.memory_space<smem>>
    %c1_i32_125 = arith.constant 1 : i32
    %c0_i32_126 = arith.constant 0 : i32
    %c1_i32_127 = arith.constant 1 : i32
    %c0_i32_128 = arith.constant 0 : i32
    %124 = tpu.memref_slice %arg6[%122, %c0_i32_128] : memref<32x128xf32, #tpu.memory_space<any>> -> memref<1x128xf32, #tpu.memory_space<any>>
    %c2_i32_129 = arith.constant 2 : i32
    %c0_i32_130 = arith.constant 0 : i32
    %125 = tpu.memref_slice %arg9[%c1_i32_125, %c0_i32_126, %c2_i32_129, %c0_i32_130] : memref<4x2x8x128xf32, #tpu.memory_space<vmem>> -> memref<1x1x1x128xf32, #tpu.memory_space<vmem>>
    %126 = tpu.memref_squeeze %125 : memref<1x1x1x128xf32, #tpu.memory_space<vmem>> -> memref<1x128xf32, #tpu.memory_space<vmem>>
    %127 = tpu.memref_slice %arg10[%c1_i32_127] : memref<4x!tpu.dma_semaphore, #tpu.memory_space<semaphore_mem>> -> memref<1x!tpu.dma_semaphore, #tpu.memory_space<semaphore_mem>>
    %128 = tpu.memref_squeeze %127 : memref<1x!tpu.dma_semaphore, #tpu.memory_space<semaphore_mem>> -> memref<!tpu.dma_semaphore, #tpu.memory_space<semaphore_mem>>
    tpu.enqueue_dma source(%124 : memref<1x128xf32, #tpu.memory_space<any>>) target(%126 : memref<1x128xf32, #tpu.memory_space<vmem>>) target_semaphore(%128 : memref<!tpu.dma_semaphore, #tpu.memory_space<semaphore_mem>>)
    %c1_i32_131 = arith.constant 1 : i32
    %c1_i32_132 = arith.constant 1 : i32
    %c1_i32_133 = arith.constant 1 : i32
    %c0_i32_134 = arith.constant 0 : i32
    %129 = tpu.memref_slice %arg6[%123, %c0_i32_134] : memref<32x128xf32, #tpu.memory_space<any>> -> memref<1x128xf32, #tpu.memory_space<any>>
    %c2_i32_135 = arith.constant 2 : i32
    %c0_i32_136 = arith.constant 0 : i32
    %130 = tpu.memref_slice %arg9[%c1_i32_131, %c1_i32_132, %c2_i32_135, %c0_i32_136] : memref<4x2x8x128xf32, #tpu.memory_space<vmem>> -> memref<1x1x1x128xf32, #tpu.memory_space<vmem>>
    %131 = tpu.memref_squeeze %130 : memref<1x1x1x128xf32, #tpu.memory_space<vmem>> -> memref<1x128xf32, #tpu.memory_space<vmem>>
    %132 = tpu.memref_slice %arg10[%c1_i32_133] : memref<4x!tpu.dma_semaphore, #tpu.memory_space<semaphore_mem>> -> memref<1x!tpu.dma_semaphore, #tpu.memory_space<semaphore_mem>>
    %133 = tpu.memref_squeeze %132 : memref<1x!tpu.dma_semaphore, #tpu.memory_space<semaphore_mem>> -> memref<!tpu.dma_semaphore, #tpu.memory_space<semaphore_mem>>
    tpu.enqueue_dma source(%129 : memref<1x128xf32, #tpu.memory_space<any>>) target(%131 : memref<1x128xf32, #tpu.memory_space<vmem>>) target_semaphore(%133 : memref<!tpu.dma_semaphore, #tpu.memory_space<semaphore_mem>>)
    %c11 = arith.constant 11 : index
    %134 = memref.load %arg0[%c11] : memref<16xi32, #tpu.memory_space<smem>>
    %c11_137 = arith.constant 11 : index
    %135 = memref.load %arg1[%c11_137] : memref<16xi32, #tpu.memory_space<smem>>
    %c1_i32_138 = arith.constant 1 : i32
    %c0_i32_139 = arith.constant 0 : i32
    %c1_i32_140 = arith.constant 1 : i32
    %c0_i32_141 = arith.constant 0 : i32
    %136 = tpu.memref_slice %arg6[%134, %c0_i32_141] : memref<32x128xf32, #tpu.memory_space<any>> -> memref<1x128xf32, #tpu.memory_space<any>>
    %c3_i32_142 = arith.constant 3 : i32
    %c0_i32_143 = arith.constant 0 : i32
    %137 = tpu.memref_slice %arg9[%c1_i32_138, %c0_i32_139, %c3_i32_142, %c0_i32_143] : memref<4x2x8x128xf32, #tpu.memory_space<vmem>> -> memref<1x1x1x128xf32, #tpu.memory_space<vmem>>
    %138 = tpu.memref_squeeze %137 : memref<1x1x1x128xf32, #tpu.memory_space<vmem>> -> memref<1x128xf32, #tpu.memory_space<vmem>>
    %139 = tpu.memref_slice %arg10[%c1_i32_140] : memref<4x!tpu.dma_semaphore, #tpu.memory_space<semaphore_mem>> -> memref<1x!tpu.dma_semaphore, #tpu.memory_space<semaphore_mem>>
    %140 = tpu.memref_squeeze %139 : memref<1x!tpu.dma_semaphore, #tpu.memory_space<semaphore_mem>> -> memref<!tpu.dma_semaphore, #tpu.memory_space<semaphore_mem>>
    tpu.enqueue_dma source(%136 : memref<1x128xf32, #tpu.memory_space<any>>) target(%138 : memref<1x128xf32, #tpu.memory_space<vmem>>) target_semaphore(%140 : memref<!tpu.dma_semaphore, #tpu.memory_space<semaphore_mem>>)
    %c1_i32_144 = arith.constant 1 : i32
    %c1_i32_145 = arith.constant 1 : i32
    %c1_i32_146 = arith.constant 1 : i32
    %c0_i32_147 = arith.constant 0 : i32
    %141 = tpu.memref_slice %arg6[%135, %c0_i32_147] : memref<32x128xf32, #tpu.memory_space<any>> -> memref<1x128xf32, #tpu.memory_space<any>>
    %c3_i32_148 = arith.constant 3 : i32
    %c0_i32_149 = arith.constant 0 : i32
    %142 = tpu.memref_slice %arg9[%c1_i32_144, %c1_i32_145, %c3_i32_148, %c0_i32_149] : memref<4x2x8x128xf32, #tpu.memory_space<vmem>> -> memref<1x1x1x128xf32, #tpu.memory_space<vmem>>
    %143 = tpu.memref_squeeze %142 : memref<1x1x1x128xf32, #tpu.memory_space<vmem>> -> memref<1x128xf32, #tpu.memory_space<vmem>>
    %144 = tpu.memref_slice %arg10[%c1_i32_146] : memref<4x!tpu.dma_semaphore, #tpu.memory_space<semaphore_mem>> -> memref<1x!tpu.dma_semaphore, #tpu.memory_space<semaphore_mem>>
    %145 = tpu.memref_squeeze %144 : memref<1x!tpu.dma_semaphore, #tpu.memory_space<semaphore_mem>> -> memref<!tpu.dma_semaphore, #tpu.memory_space<semaphore_mem>>
    tpu.enqueue_dma source(%141 : memref<1x128xf32, #tpu.memory_space<any>>) target(%143 : memref<1x128xf32, #tpu.memory_space<vmem>>) target_semaphore(%145 : memref<!tpu.dma_semaphore, #tpu.memory_space<semaphore_mem>>)
    %c12 = arith.constant 12 : index
    %146 = memref.load %arg0[%c12] : memref<16xi32, #tpu.memory_space<smem>>
    %c12_150 = arith.constant 12 : index
    %147 = memref.load %arg1[%c12_150] : memref<16xi32, #tpu.memory_space<smem>>
    %c1_i32_151 = arith.constant 1 : i32
    %c0_i32_152 = arith.constant 0 : i32
    %c1_i32_153 = arith.constant 1 : i32
    %c0_i32_154 = arith.constant 0 : i32
    %148 = tpu.memref_slice %arg6[%146, %c0_i32_154] : memref<32x128xf32, #tpu.memory_space<any>> -> memref<1x128xf32, #tpu.memory_space<any>>
    %c4_i32_155 = arith.constant 4 : i32
    %c0_i32_156 = arith.constant 0 : i32
    %149 = tpu.memref_slice %arg9[%c1_i32_151, %c0_i32_152, %c4_i32_155, %c0_i32_156] : memref<4x2x8x128xf32, #tpu.memory_space<vmem>> -> memref<1x1x1x128xf32, #tpu.memory_space<vmem>>
    %150 = tpu.memref_squeeze %149 : memref<1x1x1x128xf32, #tpu.memory_space<vmem>> -> memref<1x128xf32, #tpu.memory_space<vmem>>
    %151 = tpu.memref_slice %arg10[%c1_i32_153] : memref<4x!tpu.dma_semaphore, #tpu.memory_space<semaphore_mem>> -> memref<1x!tpu.dma_semaphore, #tpu.memory_space<semaphore_mem>>
    %152 = tpu.memref_squeeze %151 : memref<1x!tpu.dma_semaphore, #tpu.memory_space<semaphore_mem>> -> memref<!tpu.dma_semaphore, #tpu.memory_space<semaphore_mem>>
    tpu.enqueue_dma source(%148 : memref<1x128xf32, #tpu.memory_space<any>>) target(%150 : memref<1x128xf32, #tpu.memory_space<vmem>>) target_semaphore(%152 : memref<!tpu.dma_semaphore, #tpu.memory_space<semaphore_mem>>)
    %c1_i32_157 = arith.constant 1 : i32
    %c1_i32_158 = arith.constant 1 : i32
    %c1_i32_159 = arith.constant 1 : i32
    %c0_i32_160 = arith.constant 0 : i32
    %153 = tpu.memref_slice %arg6[%147, %c0_i32_160] : memref<32x128xf32, #tpu.memory_space<any>> -> memref<1x128xf32, #tpu.memory_space<any>>
    %c4_i32_161 = arith.constant 4 : i32
    %c0_i32_162 = arith.constant 0 : i32
    %154 = tpu.memref_slice %arg9[%c1_i32_157, %c1_i32_158, %c4_i32_161, %c0_i32_162] : memref<4x2x8x128xf32, #tpu.memory_space<vmem>> -> memref<1x1x1x128xf32, #tpu.memory_space<vmem>>
    %155 = tpu.memref_squeeze %154 : memref<1x1x1x128xf32, #tpu.memory_space<vmem>> -> memref<1x128xf32, #tpu.memory_space<vmem>>
    %156 = tpu.memref_slice %arg10[%c1_i32_159] : memref<4x!tpu.dma_semaphore, #tpu.memory_space<semaphore_mem>> -> memref<1x!tpu.dma_semaphore, #tpu.memory_space<semaphore_mem>>
    %157 = tpu.memref_squeeze %156 : memref<1x!tpu.dma_semaphore, #tpu.memory_space<semaphore_mem>> -> memref<!tpu.dma_semaphore, #tpu.memory_space<semaphore_mem>>
    tpu.enqueue_dma source(%153 : memref<1x128xf32, #tpu.memory_space<any>>) target(%155 : memref<1x128xf32, #tpu.memory_space<vmem>>) target_semaphore(%157 : memref<!tpu.dma_semaphore, #tpu.memory_space<semaphore_mem>>)
    %c13 = arith.constant 13 : index
    %158 = memref.load %arg0[%c13] : memref<16xi32, #tpu.memory_space<smem>>
    %c13_163 = arith.constant 13 : index
    %159 = memref.load %arg1[%c13_163] : memref<16xi32, #tpu.memory_space<smem>>
    %c1_i32_164 = arith.constant 1 : i32
    %c0_i32_165 = arith.constant 0 : i32
    %c1_i32_166 = arith.constant 1 : i32
    %c0_i32_167 = arith.constant 0 : i32
    %160 = tpu.memref_slice %arg6[%158, %c0_i32_167] : memref<32x128xf32, #tpu.memory_space<any>> -> memref<1x128xf32, #tpu.memory_space<any>>
    %c5_i32_168 = arith.constant 5 : i32
    %c0_i32_169 = arith.constant 0 : i32
    %161 = tpu.memref_slice %arg9[%c1_i32_164, %c0_i32_165, %c5_i32_168, %c0_i32_169] : memref<4x2x8x128xf32, #tpu.memory_space<vmem>> -> memref<1x1x1x128xf32, #tpu.memory_space<vmem>>
    %162 = tpu.memref_squeeze %161 : memref<1x1x1x128xf32, #tpu.memory_space<vmem>> -> memref<1x128xf32, #tpu.memory_space<vmem>>
    %163 = tpu.memref_slice %arg10[%c1_i32_166] : memref<4x!tpu.dma_semaphore, #tpu.memory_space<semaphore_mem>> -> memref<1x!tpu.dma_semaphore, #tpu.memory_space<semaphore_mem>>
    %164 = tpu.memref_squeeze %163 : memref<1x!tpu.dma_semaphore, #tpu.memory_space<semaphore_mem>> -> memref<!tpu.dma_semaphore, #tpu.memory_space<semaphore_mem>>
    tpu.enqueue_dma source(%160 : memref<1x128xf32, #tpu.memory_space<any>>) target(%162 : memref<1x128xf32, #tpu.memory_space<vmem>>) target_semaphore(%164 : memref<!tpu.dma_semaphore, #tpu.memory_space<semaphore_mem>>)
    %c1_i32_170 = arith.constant 1 : i32
    %c1_i32_171 = arith.constant 1 : i32
    %c1_i32_172 = arith.constant 1 : i32
    %c0_i32_173 = arith.constant 0 : i32
    %165 = tpu.memref_slice %arg6[%159, %c0_i32_173] : memref<32x128xf32, #tpu.memory_space<any>> -> memref<1x128xf32, #tpu.memory_space<any>>
    %c5_i32_174 = arith.constant 5 : i32
    %c0_i32_175 = arith.constant 0 : i32
    %166 = tpu.memref_slice %arg9[%c1_i32_170, %c1_i32_171, %c5_i32_174, %c0_i32_175] : memref<4x2x8x128xf32, #tpu.memory_space<vmem>> -> memref<1x1x1x128xf32, #tpu.memory_space<vmem>>
    %167 = tpu.memref_squeeze %166 : memref<1x1x1x128xf32, #tpu.memory_space<vmem>> -> memref<1x128xf32, #tpu.memory_space<vmem>>
    %168 = tpu.memref_slice %arg10[%c1_i32_172] : memref<4x!tpu.dma_semaphore, #tpu.memory_space<semaphore_mem>> -> memref<1x!tpu.dma_semaphore, #tpu.memory_space<semaphore_mem>>
    %169 = tpu.memref_squeeze %168 : memref<1x!tpu.dma_semaphore, #tpu.memory_space<semaphore_mem>> -> memref<!tpu.dma_semaphore, #tpu.memory_space<semaphore_mem>>
    tpu.enqueue_dma source(%165 : memref<1x128xf32, #tpu.memory_space<any>>) target(%167 : memref<1x128xf32, #tpu.memory_space<vmem>>) target_semaphore(%169 : memref<!tpu.dma_semaphore, #tpu.memory_space<semaphore_mem>>)
    %c14 = arith.constant 14 : index
    %170 = memref.load %arg0[%c14] : memref<16xi32, #tpu.memory_space<smem>>
    %c14_176 = arith.constant 14 : index
    %171 = memref.load %arg1[%c14_176] : memref<16xi32, #tpu.memory_space<smem>>
    %c1_i32_177 = arith.constant 1 : i32
    %c0_i32_178 = arith.constant 0 : i32
    %c1_i32_179 = arith.constant 1 : i32
    %c0_i32_180 = arith.constant 0 : i32
    %172 = tpu.memref_slice %arg6[%170, %c0_i32_180] : memref<32x128xf32, #tpu.memory_space<any>> -> memref<1x128xf32, #tpu.memory_space<any>>
    %c6_i32_181 = arith.constant 6 : i32
    %c0_i32_182 = arith.constant 0 : i32
    %173 = tpu.memref_slice %arg9[%c1_i32_177, %c0_i32_178, %c6_i32_181, %c0_i32_182] : memref<4x2x8x128xf32, #tpu.memory_space<vmem>> -> memref<1x1x1x128xf32, #tpu.memory_space<vmem>>
    %174 = tpu.memref_squeeze %173 : memref<1x1x1x128xf32, #tpu.memory_space<vmem>> -> memref<1x128xf32, #tpu.memory_space<vmem>>
    %175 = tpu.memref_slice %arg10[%c1_i32_179] : memref<4x!tpu.dma_semaphore, #tpu.memory_space<semaphore_mem>> -> memref<1x!tpu.dma_semaphore, #tpu.memory_space<semaphore_mem>>
    %176 = tpu.memref_squeeze %175 : memref<1x!tpu.dma_semaphore, #tpu.memory_space<semaphore_mem>> -> memref<!tpu.dma_semaphore, #tpu.memory_space<semaphore_mem>>
    tpu.enqueue_dma source(%172 : memref<1x128xf32, #tpu.memory_space<any>>) target(%174 : memref<1x128xf32, #tpu.memory_space<vmem>>) target_semaphore(%176 : memref<!tpu.dma_semaphore, #tpu.memory_space<semaphore_mem>>)
    %c1_i32_183 = arith.constant 1 : i32
    %c1_i32_184 = arith.constant 1 : i32
    %c1_i32_185 = arith.constant 1 : i32
    %c0_i32_186 = arith.constant 0 : i32
    %177 = tpu.memref_slice %arg6[%171, %c0_i32_186] : memref<32x128xf32, #tpu.memory_space<any>> -> memref<1x128xf32, #tpu.memory_space<any>>
    %c6_i32_187 = arith.constant 6 : i32
    %c0_i32_188 = arith.constant 0 : i32
    %178 = tpu.memref_slice %arg9[%c1_i32_183, %c1_i32_184, %c6_i32_187, %c0_i32_188] : memref<4x2x8x128xf32, #tpu.memory_space<vmem>> -> memref<1x1x1x128xf32, #tpu.memory_space<vmem>>
    %179 = tpu.memref_squeeze %178 : memref<1x1x1x128xf32, #tpu.memory_space<vmem>> -> memref<1x128xf32, #tpu.memory_space<vmem>>
    %180 = tpu.memref_slice %arg10[%c1_i32_185] : memref<4x!tpu.dma_semaphore, #tpu.memory_space<semaphore_mem>> -> memref<1x!tpu.dma_semaphore, #tpu.memory_space<semaphore_mem>>
    %181 = tpu.memref_squeeze %180 : memref<1x!tpu.dma_semaphore, #tpu.memory_space<semaphore_mem>> -> memref<!tpu.dma_semaphore, #tpu.memory_space<semaphore_mem>>
    tpu.enqueue_dma source(%177 : memref<1x128xf32, #tpu.memory_space<any>>) target(%179 : memref<1x128xf32, #tpu.memory_space<vmem>>) target_semaphore(%181 : memref<!tpu.dma_semaphore, #tpu.memory_space<semaphore_mem>>)
    %c15 = arith.constant 15 : index
    %182 = memref.load %arg0[%c15] : memref<16xi32, #tpu.memory_space<smem>>
    %c15_189 = arith.constant 15 : index
    %183 = memref.load %arg1[%c15_189] : memref<16xi32, #tpu.memory_space<smem>>
    %c1_i32_190 = arith.constant 1 : i32
    %c0_i32_191 = arith.constant 0 : i32
    %c1_i32_192 = arith.constant 1 : i32
    %c0_i32_193 = arith.constant 0 : i32
    %184 = tpu.memref_slice %arg6[%182, %c0_i32_193] : memref<32x128xf32, #tpu.memory_space<any>> -> memref<1x128xf32, #tpu.memory_space<any>>
    %c7_i32_194 = arith.constant 7 : i32
    %c0_i32_195 = arith.constant 0 : i32
    %185 = tpu.memref_slice %arg9[%c1_i32_190, %c0_i32_191, %c7_i32_194, %c0_i32_195] : memref<4x2x8x128xf32, #tpu.memory_space<vmem>> -> memref<1x1x1x128xf32, #tpu.memory_space<vmem>>
    %186 = tpu.memref_squeeze %185 : memref<1x1x1x128xf32, #tpu.memory_space<vmem>> -> memref<1x128xf32, #tpu.memory_space<vmem>>
    %187 = tpu.memref_slice %arg10[%c1_i32_192] : memref<4x!tpu.dma_semaphore, #tpu.memory_space<semaphore_mem>> -> memref<1x!tpu.dma_semaphore, #tpu.memory_space<semaphore_mem>>
    %188 = tpu.memref_squeeze %187 : memref<1x!tpu.dma_semaphore, #tpu.memory_space<semaphore_mem>> -> memref<!tpu.dma_semaphore, #tpu.memory_space<semaphore_mem>>
    tpu.enqueue_dma source(%184 : memref<1x128xf32, #tpu.memory_space<any>>) target(%186 : memref<1x128xf32, #tpu.memory_space<vmem>>) target_semaphore(%188 : memref<!tpu.dma_semaphore, #tpu.memory_space<semaphore_mem>>)
    %c1_i32_196 = arith.constant 1 : i32
    %c1_i32_197 = arith.constant 1 : i32
    %c1_i32_198 = arith.constant 1 : i32
    %c0_i32_199 = arith.constant 0 : i32
    %189 = tpu.memref_slice %arg6[%183, %c0_i32_199] : memref<32x128xf32, #tpu.memory_space<any>> -> memref<1x128xf32, #tpu.memory_space<any>>
    %c7_i32_200 = arith.constant 7 : i32
    %c0_i32_201 = arith.constant 0 : i32
    %190 = tpu.memref_slice %arg9[%c1_i32_196, %c1_i32_197, %c7_i32_200, %c0_i32_201] : memref<4x2x8x128xf32, #tpu.memory_space<vmem>> -> memref<1x1x1x128xf32, #tpu.memory_space<vmem>>
    %191 = tpu.memref_squeeze %190 : memref<1x1x1x128xf32, #tpu.memory_space<vmem>> -> memref<1x128xf32, #tpu.memory_space<vmem>>
    %192 = tpu.memref_slice %arg10[%c1_i32_198] : memref<4x!tpu.dma_semaphore, #tpu.memory_space<semaphore_mem>> -> memref<1x!tpu.dma_semaphore, #tpu.memory_space<semaphore_mem>>
    %193 = tpu.memref_squeeze %192 : memref<1x!tpu.dma_semaphore, #tpu.memory_space<semaphore_mem>> -> memref<!tpu.dma_semaphore, #tpu.memory_space<semaphore_mem>>
    tpu.enqueue_dma source(%189 : memref<1x128xf32, #tpu.memory_space<any>>) target(%191 : memref<1x128xf32, #tpu.memory_space<vmem>>) target_semaphore(%193 : memref<!tpu.dma_semaphore, #tpu.memory_space<semaphore_mem>>)
    %c0_i32_202 = arith.constant 0 : i32
    %c0_i32_203 = arith.constant 0 : i32
    %c0_i32_204 = arith.constant 0 : i32
    %c0_i32_205 = arith.constant 0 : i32
    %c0_i32_206 = arith.constant 0 : i32
    %194 = tpu.memref_slice %arg6[%c0_i32_205, %c0_i32_206] : memref<32x128xf32, #tpu.memory_space<any>> -> memref<1x128xf32, #tpu.memory_space<any>>
    %c0_i32_207 = arith.constant 0 : i32
    %c0_i32_208 = arith.constant 0 : i32
    %195 = tpu.memref_slice %arg9[%c0_i32_202, %c0_i32_203, %c0_i32_207, %c0_i32_208] : memref<4x2x8x128xf32, #tpu.memory_space<vmem>> -> memref<1x1x1x128xf32, #tpu.memory_space<vmem>>
    %196 = tpu.memref_squeeze %195 : memref<1x1x1x128xf32, #tpu.memory_space<vmem>> -> memref<1x128xf32, #tpu.memory_space<vmem>>
    %197 = tpu.memref_slice %arg10[%c0_i32_204] : memref<4x!tpu.dma_semaphore, #tpu.memory_space<semaphore_mem>> -> memref<1x!tpu.dma_semaphore, #tpu.memory_space<semaphore_mem>>
    %198 = tpu.memref_squeeze %197 : memref<1x!tpu.dma_semaphore, #tpu.memory_space<semaphore_mem>> -> memref<!tpu.dma_semaphore, #tpu.memory_space<semaphore_mem>>
    tpu.wait_dma2 semaphore(%198 : memref<!tpu.dma_semaphore, #tpu.memory_space<semaphore_mem>>) src(%194 : memref<1x128xf32, #tpu.memory_space<any>>) dst(%196 : memref<1x128xf32, #tpu.memory_space<vmem>>)
    %c0_i32_209 = arith.constant 0 : i32
    %c1_i32_210 = arith.constant 1 : i32
    %c0_i32_211 = arith.constant 0 : i32
    %c0_i32_212 = arith.constant 0 : i32
    %c0_i32_213 = arith.constant 0 : i32
    %199 = tpu.memref_slice %arg6[%c0_i32_212, %c0_i32_213] : memref<32x128xf32, #tpu.memory_space<any>> -> memref<1x128xf32, #tpu.memory_space<any>>
    %c0_i32_214 = arith.constant 0 : i32
    %c0_i32_215 = arith.constant 0 : i32
    %200 = tpu.memref_slice %arg9[%c0_i32_209, %c1_i32_210, %c0_i32_214, %c0_i32_215] : memref<4x2x8x128xf32, #tpu.memory_space<vmem>> -> memref<1x1x1x128xf32, #tpu.memory_space<vmem>>
    %201 = tpu.memref_squeeze %200 : memref<1x1x1x128xf32, #tpu.memory_space<vmem>> -> memref<1x128xf32, #tpu.memory_space<vmem>>
    %202 = tpu.memref_slice %arg10[%c0_i32_211] : memref<4x!tpu.dma_semaphore, #tpu.memory_space<semaphore_mem>> -> memref<1x!tpu.dma_semaphore, #tpu.memory_space<semaphore_mem>>
    %203 = tpu.memref_squeeze %202 : memref<1x!tpu.dma_semaphore, #tpu.memory_space<semaphore_mem>> -> memref<!tpu.dma_semaphore, #tpu.memory_space<semaphore_mem>>
    tpu.wait_dma2 semaphore(%203 : memref<!tpu.dma_semaphore, #tpu.memory_space<semaphore_mem>>) src(%199 : memref<1x128xf32, #tpu.memory_space<any>>) dst(%201 : memref<1x128xf32, #tpu.memory_space<vmem>>)
    %c0_i32_216 = arith.constant 0 : i32
    %c0_i32_217 = arith.constant 0 : i32
    %c0_i32_218 = arith.constant 0 : i32
    %c0_i32_219 = arith.constant 0 : i32
    %c0_i32_220 = arith.constant 0 : i32
    %204 = tpu.memref_slice %arg6[%c0_i32_219, %c0_i32_220] : memref<32x128xf32, #tpu.memory_space<any>> -> memref<1x128xf32, #tpu.memory_space<any>>
    %c1_i32_221 = arith.constant 1 : i32
    %c0_i32_222 = arith.constant 0 : i32
    %205 = tpu.memref_slice %arg9[%c0_i32_216, %c0_i32_217, %c1_i32_221, %c0_i32_222] : memref<4x2x8x128xf32, #tpu.memory_space<vmem>> -> memref<1x1x1x128xf32, #tpu.memory_space<vmem>>
    %206 = tpu.memref_squeeze %205 : memref<1x1x1x128xf32, #tpu.memory_space<vmem>> -> memref<1x128xf32, #tpu.memory_space<vmem>>
    %207 = tpu.memref_slice %arg10[%c0_i32_218] : memref<4x!tpu.dma_semaphore, #tpu.memory_space<semaphore_mem>> -> memref<1x!tpu.dma_semaphore, #tpu.memory_space<semaphore_mem>>
    %208 = tpu.memref_squeeze %207 : memref<1x!tpu.dma_semaphore, #tpu.memory_space<semaphore_mem>> -> memref<!tpu.dma_semaphore, #tpu.memory_space<semaphore_mem>>
    tpu.wait_dma2 semaphore(%208 : memref<!tpu.dma_semaphore, #tpu.memory_space<semaphore_mem>>) src(%204 : memref<1x128xf32, #tpu.memory_space<any>>) dst(%206 : memref<1x128xf32, #tpu.memory_space<vmem>>)
    %c0_i32_223 = arith.constant 0 : i32
    %c1_i32_224 = arith.constant 1 : i32
    %c0_i32_225 = arith.constant 0 : i32
    %c0_i32_226 = arith.constant 0 : i32
    %c0_i32_227 = arith.constant 0 : i32
    %209 = tpu.memref_slice %arg6[%c0_i32_226, %c0_i32_227] : memref<32x128xf32, #tpu.memory_space<any>> -> memref<1x128xf32, #tpu.memory_space<any>>
    %c1_i32_228 = arith.constant 1 : i32
    %c0_i32_229 = arith.constant 0 : i32
    %210 = tpu.memref_slice %arg9[%c0_i32_223, %c1_i32_224, %c1_i32_228, %c0_i32_229] : memref<4x2x8x128xf32, #tpu.memory_space<vmem>> -> memref<1x1x1x128xf32, #tpu.memory_space<vmem>>
    %211 = tpu.memref_squeeze %210 : memref<1x1x1x128xf32, #tpu.memory_space<vmem>> -> memref<1x128xf32, #tpu.memory_space<vmem>>
    %212 = tpu.memref_slice %arg10[%c0_i32_225] : memref<4x!tpu.dma_semaphore, #tpu.memory_space<semaphore_mem>> -> memref<1x!tpu.dma_semaphore, #tpu.memory_space<semaphore_mem>>
    %213 = tpu.memref_squeeze %212 : memref<1x!tpu.dma_semaphore, #tpu.memory_space<semaphore_mem>> -> memref<!tpu.dma_semaphore, #tpu.memory_space<semaphore_mem>>
    tpu.wait_dma2 semaphore(%213 : memref<!tpu.dma_semaphore, #tpu.memory_space<semaphore_mem>>) src(%209 : memref<1x128xf32, #tpu.memory_space<any>>) dst(%211 : memref<1x128xf32, #tpu.memory_space<vmem>>)
    %c0_i32_230 = arith.constant 0 : i32
    %c0_i32_231 = arith.constant 0 : i32
    %c0_i32_232 = arith.constant 0 : i32
    %c0_i32_233 = arith.constant 0 : i32
    %c0_i32_234 = arith.constant 0 : i32
    %214 = tpu.memref_slice %arg6[%c0_i32_233, %c0_i32_234] : memref<32x128xf32, #tpu.memory_space<any>> -> memref<1x128xf32, #tpu.memory_space<any>>
    %c2_i32_235 = arith.constant 2 : i32
    %c0_i32_236 = arith.constant 0 : i32
    %215 = tpu.memref_slice %arg9[%c0_i32_230, %c0_i32_231, %c2_i32_235, %c0_i32_236] : memref<4x2x8x128xf32, #tpu.memory_space<vmem>> -> memref<1x1x1x128xf32, #tpu.memory_space<vmem>>
    %216 = tpu.memref_squeeze %215 : memref<1x1x1x128xf32, #tpu.memory_space<vmem>> -> memref<1x128xf32, #tpu.memory_space<vmem>>
    %217 = tpu.memref_slice %arg10[%c0_i32_232] : memref<4x!tpu.dma_semaphore, #tpu.memory_space<semaphore_mem>> -> memref<1x!tpu.dma_semaphore, #tpu.memory_space<semaphore_mem>>
    %218 = tpu.memref_squeeze %217 : memref<1x!tpu.dma_semaphore, #tpu.memory_space<semaphore_mem>> -> memref<!tpu.dma_semaphore, #tpu.memory_space<semaphore_mem>>
    tpu.wait_dma2 semaphore(%218 : memref<!tpu.dma_semaphore, #tpu.memory_space<semaphore_mem>>) src(%214 : memref<1x128xf32, #tpu.memory_space<any>>) dst(%216 : memref<1x128xf32, #tpu.memory_space<vmem>>)
    %c0_i32_237 = arith.constant 0 : i32
    %c1_i32_238 = arith.constant 1 : i32
    %c0_i32_239 = arith.constant 0 : i32
    %c0_i32_240 = arith.constant 0 : i32
    %c0_i32_241 = arith.constant 0 : i32
    %219 = tpu.memref_slice %arg6[%c0_i32_240, %c0_i32_241] : memref<32x128xf32, #tpu.memory_space<any>> -> memref<1x128xf32, #tpu.memory_space<any>>
    %c2_i32_242 = arith.constant 2 : i32
    %c0_i32_243 = arith.constant 0 : i32
    %220 = tpu.memref_slice %arg9[%c0_i32_237, %c1_i32_238, %c2_i32_242, %c0_i32_243] : memref<4x2x8x128xf32, #tpu.memory_space<vmem>> -> memref<1x1x1x128xf32, #tpu.memory_space<vmem>>
    %221 = tpu.memref_squeeze %220 : memref<1x1x1x128xf32, #tpu.memory_space<vmem>> -> memref<1x128xf32, #tpu.memory_space<vmem>>
    %222 = tpu.memref_slice %arg10[%c0_i32_239] : memref<4x!tpu.dma_semaphore, #tpu.memory_space<semaphore_mem>> -> memref<1x!tpu.dma_semaphore, #tpu.memory_space<semaphore_mem>>
    %223 = tpu.memref_squeeze %222 : memref<1x!tpu.dma_semaphore, #tpu.memory_space<semaphore_mem>> -> memref<!tpu.dma_semaphore, #tpu.memory_space<semaphore_mem>>
    tpu.wait_dma2 semaphore(%223 : memref<!tpu.dma_semaphore, #tpu.memory_space<semaphore_mem>>) src(%219 : memref<1x128xf32, #tpu.memory_space<any>>) dst(%221 : memref<1x128xf32, #tpu.memory_space<vmem>>)
    %c0_i32_244 = arith.constant 0 : i32
    %c0_i32_245 = arith.constant 0 : i32
    %c0_i32_246 = arith.constant 0 : i32
    %c0_i32_247 = arith.constant 0 : i32
    %c0_i32_248 = arith.constant 0 : i32
    %224 = tpu.memref_slice %arg6[%c0_i32_247, %c0_i32_248] : memref<32x128xf32, #tpu.memory_space<any>> -> memref<1x128xf32, #tpu.memory_space<any>>
    %c3_i32_249 = arith.constant 3 : i32
    %c0_i32_250 = arith.constant 0 : i32
    %225 = tpu.memref_slice %arg9[%c0_i32_244, %c0_i32_245, %c3_i32_249, %c0_i32_250] : memref<4x2x8x128xf32, #tpu.memory_space<vmem>> -> memref<1x1x1x128xf32, #tpu.memory_space<vmem>>
    %226 = tpu.memref_squeeze %225 : memref<1x1x1x128xf32, #tpu.memory_space<vmem>> -> memref<1x128xf32, #tpu.memory_space<vmem>>
    %227 = tpu.memref_slice %arg10[%c0_i32_246] : memref<4x!tpu.dma_semaphore, #tpu.memory_space<semaphore_mem>> -> memref<1x!tpu.dma_semaphore, #tpu.memory_space<semaphore_mem>>
    %228 = tpu.memref_squeeze %227 : memref<1x!tpu.dma_semaphore, #tpu.memory_space<semaphore_mem>> -> memref<!tpu.dma_semaphore, #tpu.memory_space<semaphore_mem>>
    tpu.wait_dma2 semaphore(%228 : memref<!tpu.dma_semaphore, #tpu.memory_space<semaphore_mem>>) src(%224 : memref<1x128xf32, #tpu.memory_space<any>>) dst(%226 : memref<1x128xf32, #tpu.memory_space<vmem>>)
    %c0_i32_251 = arith.constant 0 : i32
    %c1_i32_252 = arith.constant 1 : i32
    %c0_i32_253 = arith.constant 0 : i32
    %c0_i32_254 = arith.constant 0 : i32
    %c0_i32_255 = arith.constant 0 : i32
    %229 = tpu.memref_slice %arg6[%c0_i32_254, %c0_i32_255] : memref<32x128xf32, #tpu.memory_space<any>> -> memref<1x128xf32, #tpu.memory_space<any>>
    %c3_i32_256 = arith.constant 3 : i32
    %c0_i32_257 = arith.constant 0 : i32
    %230 = tpu.memref_slice %arg9[%c0_i32_251, %c1_i32_252, %c3_i32_256, %c0_i32_257] : memref<4x2x8x128xf32, #tpu.memory_space<vmem>> -> memref<1x1x1x128xf32, #tpu.memory_space<vmem>>
    %231 = tpu.memref_squeeze %230 : memref<1x1x1x128xf32, #tpu.memory_space<vmem>> -> memref<1x128xf32, #tpu.memory_space<vmem>>
    %232 = tpu.memref_slice %arg10[%c0_i32_253] : memref<4x!tpu.dma_semaphore, #tpu.memory_space<semaphore_mem>> -> memref<1x!tpu.dma_semaphore, #tpu.memory_space<semaphore_mem>>
    %233 = tpu.memref_squeeze %232 : memref<1x!tpu.dma_semaphore, #tpu.memory_space<semaphore_mem>> -> memref<!tpu.dma_semaphore, #tpu.memory_space<semaphore_mem>>
    tpu.wait_dma2 semaphore(%233 : memref<!tpu.dma_semaphore, #tpu.memory_space<semaphore_mem>>) src(%229 : memref<1x128xf32, #tpu.memory_space<any>>) dst(%231 : memref<1x128xf32, #tpu.memory_space<vmem>>)
    %c0_i32_258 = arith.constant 0 : i32
    %c0_i32_259 = arith.constant 0 : i32
    %c0_i32_260 = arith.constant 0 : i32
    %c0_i32_261 = arith.constant 0 : i32
    %c0_i32_262 = arith.constant 0 : i32
    %234 = tpu.memref_slice %arg6[%c0_i32_261, %c0_i32_262] : memref<32x128xf32, #tpu.memory_space<any>> -> memref<1x128xf32, #tpu.memory_space<any>>
    %c4_i32_263 = arith.constant 4 : i32
    %c0_i32_264 = arith.constant 0 : i32
    %235 = tpu.memref_slice %arg9[%c0_i32_258, %c0_i32_259, %c4_i32_263, %c0_i32_264] : memref<4x2x8x128xf32, #tpu.memory_space<vmem>> -> memref<1x1x1x128xf32, #tpu.memory_space<vmem>>
    %236 = tpu.memref_squeeze %235 : memref<1x1x1x128xf32, #tpu.memory_space<vmem>> -> memref<1x128xf32, #tpu.memory_space<vmem>>
    %237 = tpu.memref_slice %arg10[%c0_i32_260] : memref<4x!tpu.dma_semaphore, #tpu.memory_space<semaphore_mem>> -> memref<1x!tpu.dma_semaphore, #tpu.memory_space<semaphore_mem>>
    %238 = tpu.memref_squeeze %237 : memref<1x!tpu.dma_semaphore, #tpu.memory_space<semaphore_mem>> -> memref<!tpu.dma_semaphore, #tpu.memory_space<semaphore_mem>>
    tpu.wait_dma2 semaphore(%238 : memref<!tpu.dma_semaphore, #tpu.memory_space<semaphore_mem>>) src(%234 : memref<1x128xf32, #tpu.memory_space<any>>) dst(%236 : memref<1x128xf32, #tpu.memory_space<vmem>>)
    %c0_i32_265 = arith.constant 0 : i32
    %c1_i32_266 = arith.constant 1 : i32
    %c0_i32_267 = arith.constant 0 : i32
    %c0_i32_268 = arith.constant 0 : i32
    %c0_i32_269 = arith.constant 0 : i32
    %239 = tpu.memref_slice %arg6[%c0_i32_268, %c0_i32_269] : memref<32x128xf32, #tpu.memory_space<any>> -> memref<1x128xf32, #tpu.memory_space<any>>
    %c4_i32_270 = arith.constant 4 : i32
    %c0_i32_271 = arith.constant 0 : i32
    %240 = tpu.memref_slice %arg9[%c0_i32_265, %c1_i32_266, %c4_i32_270, %c0_i32_271] : memref<4x2x8x128xf32, #tpu.memory_space<vmem>> -> memref<1x1x1x128xf32, #tpu.memory_space<vmem>>
    %241 = tpu.memref_squeeze %240 : memref<1x1x1x128xf32, #tpu.memory_space<vmem>> -> memref<1x128xf32, #tpu.memory_space<vmem>>
    %242 = tpu.memref_slice %arg10[%c0_i32_267] : memref<4x!tpu.dma_semaphore, #tpu.memory_space<semaphore_mem>> -> memref<1x!tpu.dma_semaphore, #tpu.memory_space<semaphore_mem>>
    %243 = tpu.memref_squeeze %242 : memref<1x!tpu.dma_semaphore, #tpu.memory_space<semaphore_mem>> -> memref<!tpu.dma_semaphore, #tpu.memory_space<semaphore_mem>>
    tpu.wait_dma2 semaphore(%243 : memref<!tpu.dma_semaphore, #tpu.memory_space<semaphore_mem>>) src(%239 : memref<1x128xf32, #tpu.memory_space<any>>) dst(%241 : memref<1x128xf32, #tpu.memory_space<vmem>>)
    %c0_i32_272 = arith.constant 0 : i32
    %c0_i32_273 = arith.constant 0 : i32
    %c0_i32_274 = arith.constant 0 : i32
    %c0_i32_275 = arith.constant 0 : i32
    %c0_i32_276 = arith.constant 0 : i32
    %244 = tpu.memref_slice %arg6[%c0_i32_275, %c0_i32_276] : memref<32x128xf32, #tpu.memory_space<any>> -> memref<1x128xf32, #tpu.memory_space<any>>
    %c5_i32_277 = arith.constant 5 : i32
    %c0_i32_278 = arith.constant 0 : i32
    %245 = tpu.memref_slice %arg9[%c0_i32_272, %c0_i32_273, %c5_i32_277, %c0_i32_278] : memref<4x2x8x128xf32, #tpu.memory_space<vmem>> -> memref<1x1x1x128xf32, #tpu.memory_space<vmem>>
    %246 = tpu.memref_squeeze %245 : memref<1x1x1x128xf32, #tpu.memory_space<vmem>> -> memref<1x128xf32, #tpu.memory_space<vmem>>
    %247 = tpu.memref_slice %arg10[%c0_i32_274] : memref<4x!tpu.dma_semaphore, #tpu.memory_space<semaphore_mem>> -> memref<1x!tpu.dma_semaphore, #tpu.memory_space<semaphore_mem>>
    %248 = tpu.memref_squeeze %247 : memref<1x!tpu.dma_semaphore, #tpu.memory_space<semaphore_mem>> -> memref<!tpu.dma_semaphore, #tpu.memory_space<semaphore_mem>>
    tpu.wait_dma2 semaphore(%248 : memref<!tpu.dma_semaphore, #tpu.memory_space<semaphore_mem>>) src(%244 : memref<1x128xf32, #tpu.memory_space<any>>) dst(%246 : memref<1x128xf32, #tpu.memory_space<vmem>>)
    %c0_i32_279 = arith.constant 0 : i32
    %c1_i32_280 = arith.constant 1 : i32
    %c0_i32_281 = arith.constant 0 : i32
    %c0_i32_282 = arith.constant 0 : i32
    %c0_i32_283 = arith.constant 0 : i32
    %249 = tpu.memref_slice %arg6[%c0_i32_282, %c0_i32_283] : memref<32x128xf32, #tpu.memory_space<any>> -> memref<1x128xf32, #tpu.memory_space<any>>
    %c5_i32_284 = arith.constant 5 : i32
    %c0_i32_285 = arith.constant 0 : i32
    %250 = tpu.memref_slice %arg9[%c0_i32_279, %c1_i32_280, %c5_i32_284, %c0_i32_285] : memref<4x2x8x128xf32, #tpu.memory_space<vmem>> -> memref<1x1x1x128xf32, #tpu.memory_space<vmem>>
    %251 = tpu.memref_squeeze %250 : memref<1x1x1x128xf32, #tpu.memory_space<vmem>> -> memref<1x128xf32, #tpu.memory_space<vmem>>
    %252 = tpu.memref_slice %arg10[%c0_i32_281] : memref<4x!tpu.dma_semaphore, #tpu.memory_space<semaphore_mem>> -> memref<1x!tpu.dma_semaphore, #tpu.memory_space<semaphore_mem>>
    %253 = tpu.memref_squeeze %252 : memref<1x!tpu.dma_semaphore, #tpu.memory_space<semaphore_mem>> -> memref<!tpu.dma_semaphore, #tpu.memory_space<semaphore_mem>>
    tpu.wait_dma2 semaphore(%253 : memref<!tpu.dma_semaphore, #tpu.memory_space<semaphore_mem>>) src(%249 : memref<1x128xf32, #tpu.memory_space<any>>) dst(%251 : memref<1x128xf32, #tpu.memory_space<vmem>>)
    %c0_i32_286 = arith.constant 0 : i32
    %c0_i32_287 = arith.constant 0 : i32
    %c0_i32_288 = arith.constant 0 : i32
    %c0_i32_289 = arith.constant 0 : i32
    %c0_i32_290 = arith.constant 0 : i32
    %254 = tpu.memref_slice %arg6[%c0_i32_289, %c0_i32_290] : memref<32x128xf32, #tpu.memory_space<any>> -> memref<1x128xf32, #tpu.memory_space<any>>
    %c6_i32_291 = arith.constant 6 : i32
    %c0_i32_292 = arith.constant 0 : i32
    %255 = tpu.memref_slice %arg9[%c0_i32_286, %c0_i32_287, %c6_i32_291, %c0_i32_292] : memref<4x2x8x128xf32, #tpu.memory_space<vmem>> -> memref<1x1x1x128xf32, #tpu.memory_space<vmem>>
    %256 = tpu.memref_squeeze %255 : memref<1x1x1x128xf32, #tpu.memory_space<vmem>> -> memref<1x128xf32, #tpu.memory_space<vmem>>
    %257 = tpu.memref_slice %arg10[%c0_i32_288] : memref<4x!tpu.dma_semaphore, #tpu.memory_space<semaphore_mem>> -> memref<1x!tpu.dma_semaphore, #tpu.memory_space<semaphore_mem>>
    %258 = tpu.memref_squeeze %257 : memref<1x!tpu.dma_semaphore, #tpu.memory_space<semaphore_mem>> -> memref<!tpu.dma_semaphore, #tpu.memory_space<semaphore_mem>>
    tpu.wait_dma2 semaphore(%258 : memref<!tpu.dma_semaphore, #tpu.memory_space<semaphore_mem>>) src(%254 : memref<1x128xf32, #tpu.memory_space<any>>) dst(%256 : memref<1x128xf32, #tpu.memory_space<vmem>>)
    %c0_i32_293 = arith.constant 0 : i32
    %c1_i32_294 = arith.constant 1 : i32
    %c0_i32_295 = arith.constant 0 : i32
    %c0_i32_296 = arith.constant 0 : i32
    %c0_i32_297 = arith.constant 0 : i32
    %259 = tpu.memref_slice %arg6[%c0_i32_296, %c0_i32_297] : memref<32x128xf32, #tpu.memory_space<any>> -> memref<1x128xf32, #tpu.memory_space<any>>
    %c6_i32_298 = arith.constant 6 : i32
    %c0_i32_299 = arith.constant 0 : i32
    %260 = tpu.memref_slice %arg9[%c0_i32_293, %c1_i32_294, %c6_i32_298, %c0_i32_299] : memref<4x2x8x128xf32, #tpu.memory_space<vmem>> -> memref<1x1x1x128xf32, #tpu.memory_space<vmem>>
    %261 = tpu.memref_squeeze %260 : memref<1x1x1x128xf32, #tpu.memory_space<vmem>> -> memref<1x128xf32, #tpu.memory_space<vmem>>
    %262 = tpu.memref_slice %arg10[%c0_i32_295] : memref<4x!tpu.dma_semaphore, #tpu.memory_space<semaphore_mem>> -> memref<1x!tpu.dma_semaphore, #tpu.memory_space<semaphore_mem>>
    %263 = tpu.memref_squeeze %262 : memref<1x!tpu.dma_semaphore, #tpu.memory_space<semaphore_mem>> -> memref<!tpu.dma_semaphore, #tpu.memory_space<semaphore_mem>>
    tpu.wait_dma2 semaphore(%263 : memref<!tpu.dma_semaphore, #tpu.memory_space<semaphore_mem>>) src(%259 : memref<1x128xf32, #tpu.memory_space<any>>) dst(%261 : memref<1x128xf32, #tpu.memory_space<vmem>>)
    %c0_i32_300 = arith.constant 0 : i32
    %c0_i32_301 = arith.constant 0 : i32
    %c0_i32_302 = arith.constant 0 : i32
    %c0_i32_303 = arith.constant 0 : i32
    %c0_i32_304 = arith.constant 0 : i32
    %264 = tpu.memref_slice %arg6[%c0_i32_303, %c0_i32_304] : memref<32x128xf32, #tpu.memory_space<any>> -> memref<1x128xf32, #tpu.memory_space<any>>
    %c7_i32_305 = arith.constant 7 : i32
    %c0_i32_306 = arith.constant 0 : i32
    %265 = tpu.memref_slice %arg9[%c0_i32_300, %c0_i32_301, %c7_i32_305, %c0_i32_306] : memref<4x2x8x128xf32, #tpu.memory_space<vmem>> -> memref<1x1x1x128xf32, #tpu.memory_space<vmem>>
    %266 = tpu.memref_squeeze %265 : memref<1x1x1x128xf32, #tpu.memory_space<vmem>> -> memref<1x128xf32, #tpu.memory_space<vmem>>
    %267 = tpu.memref_slice %arg10[%c0_i32_302] : memref<4x!tpu.dma_semaphore, #tpu.memory_space<semaphore_mem>> -> memref<1x!tpu.dma_semaphore, #tpu.memory_space<semaphore_mem>>
    %268 = tpu.memref_squeeze %267 : memref<1x!tpu.dma_semaphore, #tpu.memory_space<semaphore_mem>> -> memref<!tpu.dma_semaphore, #tpu.memory_space<semaphore_mem>>
    tpu.wait_dma2 semaphore(%268 : memref<!tpu.dma_semaphore, #tpu.memory_space<semaphore_mem>>) src(%264 : memref<1x128xf32, #tpu.memory_space<any>>) dst(%266 : memref<1x128xf32, #tpu.memory_space<vmem>>)
    %c0_i32_307 = arith.constant 0 : i32
    %c1_i32_308 = arith.constant 1 : i32
    %c0_i32_309 = arith.constant 0 : i32
    %c0_i32_310 = arith.constant 0 : i32
    %c0_i32_311 = arith.constant 0 : i32
    %269 = tpu.memref_slice %arg6[%c0_i32_310, %c0_i32_311] : memref<32x128xf32, #tpu.memory_space<any>> -> memref<1x128xf32, #tpu.memory_space<any>>
    %c7_i32_312 = arith.constant 7 : i32
    %c0_i32_313 = arith.constant 0 : i32
    %270 = tpu.memref_slice %arg9[%c0_i32_307, %c1_i32_308, %c7_i32_312, %c0_i32_313] : memref<4x2x8x128xf32, #tpu.memory_space<vmem>> -> memref<1x1x1x128xf32, #tpu.memory_space<vmem>>
    %271 = tpu.memref_squeeze %270 : memref<1x1x1x128xf32, #tpu.memory_space<vmem>> -> memref<1x128xf32, #tpu.memory_space<vmem>>
    %272 = tpu.memref_slice %arg10[%c0_i32_309] : memref<4x!tpu.dma_semaphore, #tpu.memory_space<semaphore_mem>> -> memref<1x!tpu.dma_semaphore, #tpu.memory_space<semaphore_mem>>
    %273 = tpu.memref_squeeze %272 : memref<1x!tpu.dma_semaphore, #tpu.memory_space<semaphore_mem>> -> memref<!tpu.dma_semaphore, #tpu.memory_space<semaphore_mem>>
    tpu.wait_dma2 semaphore(%273 : memref<!tpu.dma_semaphore, #tpu.memory_space<semaphore_mem>>) src(%269 : memref<1x128xf32, #tpu.memory_space<any>>) dst(%271 : memref<1x128xf32, #tpu.memory_space<vmem>>)
    %c0_314 = arith.constant 0 : index
    %c0_315 = arith.constant 0 : index
    %c0_316 = arith.constant 0 : index
    %c0_317 = arith.constant 0 : index
    %274 = vector.load %arg9[%c0_314, %c0_315, %c0_316, %c0_317] : memref<4x2x8x128xf32, #tpu.memory_space<vmem>>, vector<1x1x8x128xf32>
    %275 = vector.shape_cast %274 : vector<1x1x8x128xf32> to vector<8x128xf32>
    %c0_318 = arith.constant 0 : index
    %c1_319 = arith.constant 1 : index
    %c0_320 = arith.constant 0 : index
    %c0_321 = arith.constant 0 : index
    %276 = vector.load %arg9[%c0_318, %c1_319, %c0_320, %c0_321] : memref<4x2x8x128xf32, #tpu.memory_space<vmem>>, vector<1x1x8x128xf32>
    %277 = vector.shape_cast %276 : vector<1x1x8x128xf32> to vector<8x128xf32>
    %278 = arith.subf %275, %277 : vector<8x128xf32>
    %c0_322 = arith.constant 0 : index
    %c0_323 = arith.constant 0 : index
    %279 = vector.load %arg2[%c0_322, %c0_323] : memref<16x1xf32, #tpu.memory_space<vmem>>, vector<8x1xf32>
    %c0_324 = arith.constant 0 : index
    %c0_325 = arith.constant 0 : index
    %280 = vector.load %arg11[%c0_324, %c0_325] : memref<8x128xf32, #tpu.memory_space<vmem>>, vector<8x128xf32>
    %281 = arith.mulf %278, %278 : vector<8x128xf32>
    %282 = vector.broadcast %279 : vector<8x1xf32> to vector<8x128xf32>
    %283 = arith.mulf %282, %281 : vector<8x128xf32>
    %284 = arith.addf %280, %283 : vector<8x128xf32>
    %c0_326 = arith.constant 0 : index
    %c0_327 = arith.constant 0 : index
    %285 = vector.load %arg11[%c0_326, %c0_327] : memref<8x128xf32, #tpu.memory_space<vmem>>, vector<8x128xf32>
    tpu.vector_store %arg11[%c0_326, %c0_327], %284 {strides = array<i32>} : memref<8x128xf32, #tpu.memory_space<vmem>>, vector<8x128xf32>,
    %c1_i32_328 = arith.constant 1 : i32
    %c0_i32_329 = arith.constant 0 : i32
    %c1_i32_330 = arith.constant 1 : i32
    %c0_i32_331 = arith.constant 0 : i32
    %c0_i32_332 = arith.constant 0 : i32
    %286 = tpu.memref_slice %arg6[%c0_i32_331, %c0_i32_332] : memref<32x128xf32, #tpu.memory_space<any>> -> memref<1x128xf32, #tpu.memory_space<any>>
    %c0_i32_333 = arith.constant 0 : i32
    %c0_i32_334 = arith.constant 0 : i32
    %287 = tpu.memref_slice %arg9[%c1_i32_328, %c0_i32_329, %c0_i32_333, %c0_i32_334] : memref<4x2x8x128xf32, #tpu.memory_space<vmem>> -> memref<1x1x1x128xf32, #tpu.memory_space<vmem>>
    %288 = tpu.memref_squeeze %287 : memref<1x1x1x128xf32, #tpu.memory_space<vmem>> -> memref<1x128xf32, #tpu.memory_space<vmem>>
    %289 = tpu.memref_slice %arg10[%c1_i32_330] : memref<4x!tpu.dma_semaphore, #tpu.memory_space<semaphore_mem>> -> memref<1x!tpu.dma_semaphore, #tpu.memory_space<semaphore_mem>>
    %290 = tpu.memref_squeeze %289 : memref<1x!tpu.dma_semaphore, #tpu.memory_space<semaphore_mem>> -> memref<!tpu.dma_semaphore, #tpu.memory_space<semaphore_mem>>
    tpu.wait_dma2 semaphore(%290 : memref<!tpu.dma_semaphore, #tpu.memory_space<semaphore_mem>>) src(%286 : memref<1x128xf32, #tpu.memory_space<any>>) dst(%288 : memref<1x128xf32, #tpu.memory_space<vmem>>)
    %c1_i32_335 = arith.constant 1 : i32
    %c1_i32_336 = arith.constant 1 : i32
    %c1_i32_337 = arith.constant 1 : i32
    %c0_i32_338 = arith.constant 0 : i32
    %c0_i32_339 = arith.constant 0 : i32
    %291 = tpu.memref_slice %arg6[%c0_i32_338, %c0_i32_339] : memref<32x128xf32, #tpu.memory_space<any>> -> memref<1x128xf32, #tpu.memory_space<any>>
    %c0_i32_340 = arith.constant 0 : i32
    %c0_i32_341 = arith.constant 0 : i32
    %292 = tpu.memref_slice %arg9[%c1_i32_335, %c1_i32_336, %c0_i32_340, %c0_i32_341] : memref<4x2x8x128xf32, #tpu.memory_space<vmem>> -> memref<1x1x1x128xf32, #tpu.memory_space<vmem>>
    %293 = tpu.memref_squeeze %292 : memref<1x1x1x128xf32, #tpu.memory_space<vmem>> -> memref<1x128xf32, #tpu.memory_space<vmem>>
    %294 = tpu.memref_slice %arg10[%c1_i32_337] : memref<4x!tpu.dma_semaphore, #tpu.memory_space<semaphore_mem>> -> memref<1x!tpu.dma_semaphore, #tpu.memory_space<semaphore_mem>>
    %295 = tpu.memref_squeeze %294 : memref<1x!tpu.dma_semaphore, #tpu.memory_space<semaphore_mem>> -> memref<!tpu.dma_semaphore, #tpu.memory_space<semaphore_mem>>
    tpu.wait_dma2 semaphore(%295 : memref<!tpu.dma_semaphore, #tpu.memory_space<semaphore_mem>>) src(%291 : memref<1x128xf32, #tpu.memory_space<any>>) dst(%293 : memref<1x128xf32, #tpu.memory_space<vmem>>)
    %c1_i32_342 = arith.constant 1 : i32
    %c0_i32_343 = arith.constant 0 : i32
    %c1_i32_344 = arith.constant 1 : i32
    %c0_i32_345 = arith.constant 0 : i32
    %c0_i32_346 = arith.constant 0 : i32
    %296 = tpu.memref_slice %arg6[%c0_i32_345, %c0_i32_346] : memref<32x128xf32, #tpu.memory_space<any>> -> memref<1x128xf32, #tpu.memory_space<any>>
    %c1_i32_347 = arith.constant 1 : i32
    %c0_i32_348 = arith.constant 0 : i32
    %297 = tpu.memref_slice %arg9[%c1_i32_342, %c0_i32_343, %c1_i32_347, %c0_i32_348] : memref<4x2x8x128xf32, #tpu.memory_space<vmem>> -> memref<1x1x1x128xf32, #tpu.memory_space<vmem>>
    %298 = tpu.memref_squeeze %297 : memref<1x1x1x128xf32, #tpu.memory_space<vmem>> -> memref<1x128xf32, #tpu.memory_space<vmem>>
    %299 = tpu.memref_slice %arg10[%c1_i32_344] : memref<4x!tpu.dma_semaphore, #tpu.memory_space<semaphore_mem>> -> memref<1x!tpu.dma_semaphore, #tpu.memory_space<semaphore_mem>>
    %300 = tpu.memref_squeeze %299 : memref<1x!tpu.dma_semaphore, #tpu.memory_space<semaphore_mem>> -> memref<!tpu.dma_semaphore, #tpu.memory_space<semaphore_mem>>
    tpu.wait_dma2 semaphore(%300 : memref<!tpu.dma_semaphore, #tpu.memory_space<semaphore_mem>>) src(%296 : memref<1x128xf32, #tpu.memory_space<any>>) dst(%298 : memref<1x128xf32, #tpu.memory_space<vmem>>)
    %c1_i32_349 = arith.constant 1 : i32
    %c1_i32_350 = arith.constant 1 : i32
    %c1_i32_351 = arith.constant 1 : i32
    %c0_i32_352 = arith.constant 0 : i32
    %c0_i32_353 = arith.constant 0 : i32
    %301 = tpu.memref_slice %arg6[%c0_i32_352, %c0_i32_353] : memref<32x128xf32, #tpu.memory_space<any>> -> memref<1x128xf32, #tpu.memory_space<any>>
    %c1_i32_354 = arith.constant 1 : i32
    %c0_i32_355 = arith.constant 0 : i32
    %302 = tpu.memref_slice %arg9[%c1_i32_349, %c1_i32_350, %c1_i32_354, %c0_i32_355] : memref<4x2x8x128xf32, #tpu.memory_space<vmem>> -> memref<1x1x1x128xf32, #tpu.memory_space<vmem>>
    %303 = tpu.memref_squeeze %302 : memref<1x1x1x128xf32, #tpu.memory_space<vmem>> -> memref<1x128xf32, #tpu.memory_space<vmem>>
    %304 = tpu.memref_slice %arg10[%c1_i32_351] : memref<4x!tpu.dma_semaphore, #tpu.memory_space<semaphore_mem>> -> memref<1x!tpu.dma_semaphore, #tpu.memory_space<semaphore_mem>>
    %305 = tpu.memref_squeeze %304 : memref<1x!tpu.dma_semaphore, #tpu.memory_space<semaphore_mem>> -> memref<!tpu.dma_semaphore, #tpu.memory_space<semaphore_mem>>
    tpu.wait_dma2 semaphore(%305 : memref<!tpu.dma_semaphore, #tpu.memory_space<semaphore_mem>>) src(%301 : memref<1x128xf32, #tpu.memory_space<any>>) dst(%303 : memref<1x128xf32, #tpu.memory_space<vmem>>)
    %c1_i32_356 = arith.constant 1 : i32
    %c0_i32_357 = arith.constant 0 : i32
    %c1_i32_358 = arith.constant 1 : i32
    %c0_i32_359 = arith.constant 0 : i32
    %c0_i32_360 = arith.constant 0 : i32
    %306 = tpu.memref_slice %arg6[%c0_i32_359, %c0_i32_360] : memref<32x128xf32, #tpu.memory_space<any>> -> memref<1x128xf32, #tpu.memory_space<any>>
    %c2_i32_361 = arith.constant 2 : i32
    %c0_i32_362 = arith.constant 0 : i32
    %307 = tpu.memref_slice %arg9[%c1_i32_356, %c0_i32_357, %c2_i32_361, %c0_i32_362] : memref<4x2x8x128xf32, #tpu.memory_space<vmem>> -> memref<1x1x1x128xf32, #tpu.memory_space<vmem>>
    %308 = tpu.memref_squeeze %307 : memref<1x1x1x128xf32, #tpu.memory_space<vmem>> -> memref<1x128xf32, #tpu.memory_space<vmem>>
    %309 = tpu.memref_slice %arg10[%c1_i32_358] : memref<4x!tpu.dma_semaphore, #tpu.memory_space<semaphore_mem>> -> memref<1x!tpu.dma_semaphore, #tpu.memory_space<semaphore_mem>>
    %310 = tpu.memref_squeeze %309 : memref<1x!tpu.dma_semaphore, #tpu.memory_space<semaphore_mem>> -> memref<!tpu.dma_semaphore, #tpu.memory_space<semaphore_mem>>
    tpu.wait_dma2 semaphore(%310 : memref<!tpu.dma_semaphore, #tpu.memory_space<semaphore_mem>>) src(%306 : memref<1x128xf32, #tpu.memory_space<any>>) dst(%308 : memref<1x128xf32, #tpu.memory_space<vmem>>)
    %c1_i32_363 = arith.constant 1 : i32
    %c1_i32_364 = arith.constant 1 : i32
    %c1_i32_365 = arith.constant 1 : i32
    %c0_i32_366 = arith.constant 0 : i32
    %c0_i32_367 = arith.constant 0 : i32
    %311 = tpu.memref_slice %arg6[%c0_i32_366, %c0_i32_367] : memref<32x128xf32, #tpu.memory_space<any>> -> memref<1x128xf32, #tpu.memory_space<any>>
    %c2_i32_368 = arith.constant 2 : i32
    %c0_i32_369 = arith.constant 0 : i32
    %312 = tpu.memref_slice %arg9[%c1_i32_363, %c1_i32_364, %c2_i32_368, %c0_i32_369] : memref<4x2x8x128xf32, #tpu.memory_space<vmem>> -> memref<1x1x1x128xf32, #tpu.memory_space<vmem>>
    %313 = tpu.memref_squeeze %312 : memref<1x1x1x128xf32, #tpu.memory_space<vmem>> -> memref<1x128xf32, #tpu.memory_space<vmem>>
    %314 = tpu.memref_slice %arg10[%c1_i32_365] : memref<4x!tpu.dma_semaphore, #tpu.memory_space<semaphore_mem>> -> memref<1x!tpu.dma_semaphore, #tpu.memory_space<semaphore_mem>>
    %315 = tpu.memref_squeeze %314 : memref<1x!tpu.dma_semaphore, #tpu.memory_space<semaphore_mem>> -> memref<!tpu.dma_semaphore, #tpu.memory_space<semaphore_mem>>
    tpu.wait_dma2 semaphore(%315 : memref<!tpu.dma_semaphore, #tpu.memory_space<semaphore_mem>>) src(%311 : memref<1x128xf32, #tpu.memory_space<any>>) dst(%313 : memref<1x128xf32, #tpu.memory_space<vmem>>)
    %c1_i32_370 = arith.constant 1 : i32
    %c0_i32_371 = arith.constant 0 : i32
    %c1_i32_372 = arith.constant 1 : i32
    %c0_i32_373 = arith.constant 0 : i32
    %c0_i32_374 = arith.constant 0 : i32
    %316 = tpu.memref_slice %arg6[%c0_i32_373, %c0_i32_374] : memref<32x128xf32, #tpu.memory_space<any>> -> memref<1x128xf32, #tpu.memory_space<any>>
    %c3_i32_375 = arith.constant 3 : i32
    %c0_i32_376 = arith.constant 0 : i32
    %317 = tpu.memref_slice %arg9[%c1_i32_370, %c0_i32_371, %c3_i32_375, %c0_i32_376] : memref<4x2x8x128xf32, #tpu.memory_space<vmem>> -> memref<1x1x1x128xf32, #tpu.memory_space<vmem>>
    %318 = tpu.memref_squeeze %317 : memref<1x1x1x128xf32, #tpu.memory_space<vmem>> -> memref<1x128xf32, #tpu.memory_space<vmem>>
    %319 = tpu.memref_slice %arg10[%c1_i32_372] : memref<4x!tpu.dma_semaphore, #tpu.memory_space<semaphore_mem>> -> memref<1x!tpu.dma_semaphore, #tpu.memory_space<semaphore_mem>>
    %320 = tpu.memref_squeeze %319 : memref<1x!tpu.dma_semaphore, #tpu.memory_space<semaphore_mem>> -> memref<!tpu.dma_semaphore, #tpu.memory_space<semaphore_mem>>
    tpu.wait_dma2 semaphore(%320 : memref<!tpu.dma_semaphore, #tpu.memory_space<semaphore_mem>>) src(%316 : memref<1x128xf32, #tpu.memory_space<any>>) dst(%318 : memref<1x128xf32, #tpu.memory_space<vmem>>)
    %c1_i32_377 = arith.constant 1 : i32
    %c1_i32_378 = arith.constant 1 : i32
    %c1_i32_379 = arith.constant 1 : i32
    %c0_i32_380 = arith.constant 0 : i32
    %c0_i32_381 = arith.constant 0 : i32
    %321 = tpu.memref_slice %arg6[%c0_i32_380, %c0_i32_381] : memref<32x128xf32, #tpu.memory_space<any>> -> memref<1x128xf32, #tpu.memory_space<any>>
    %c3_i32_382 = arith.constant 3 : i32
    %c0_i32_383 = arith.constant 0 : i32
    %322 = tpu.memref_slice %arg9[%c1_i32_377, %c1_i32_378, %c3_i32_382, %c0_i32_383] : memref<4x2x8x128xf32, #tpu.memory_space<vmem>> -> memref<1x1x1x128xf32, #tpu.memory_space<vmem>>
    %323 = tpu.memref_squeeze %322 : memref<1x1x1x128xf32, #tpu.memory_space<vmem>> -> memref<1x128xf32, #tpu.memory_space<vmem>>
    %324 = tpu.memref_slice %arg10[%c1_i32_379] : memref<4x!tpu.dma_semaphore, #tpu.memory_space<semaphore_mem>> -> memref<1x!tpu.dma_semaphore, #tpu.memory_space<semaphore_mem>>
    %325 = tpu.memref_squeeze %324 : memref<1x!tpu.dma_semaphore, #tpu.memory_space<semaphore_mem>> -> memref<!tpu.dma_semaphore, #tpu.memory_space<semaphore_mem>>
    tpu.wait_dma2 semaphore(%325 : memref<!tpu.dma_semaphore, #tpu.memory_space<semaphore_mem>>) src(%321 : memref<1x128xf32, #tpu.memory_space<any>>) dst(%323 : memref<1x128xf32, #tpu.memory_space<vmem>>)
    %c1_i32_384 = arith.constant 1 : i32
    %c0_i32_385 = arith.constant 0 : i32
    %c1_i32_386 = arith.constant 1 : i32
    %c0_i32_387 = arith.constant 0 : i32
    %c0_i32_388 = arith.constant 0 : i32
    %326 = tpu.memref_slice %arg6[%c0_i32_387, %c0_i32_388] : memref<32x128xf32, #tpu.memory_space<any>> -> memref<1x128xf32, #tpu.memory_space<any>>
    %c4_i32_389 = arith.constant 4 : i32
    %c0_i32_390 = arith.constant 0 : i32
    %327 = tpu.memref_slice %arg9[%c1_i32_384, %c0_i32_385, %c4_i32_389, %c0_i32_390] : memref<4x2x8x128xf32, #tpu.memory_space<vmem>> -> memref<1x1x1x128xf32, #tpu.memory_space<vmem>>
    %328 = tpu.memref_squeeze %327 : memref<1x1x1x128xf32, #tpu.memory_space<vmem>> -> memref<1x128xf32, #tpu.memory_space<vmem>>
    %329 = tpu.memref_slice %arg10[%c1_i32_386] : memref<4x!tpu.dma_semaphore, #tpu.memory_space<semaphore_mem>> -> memref<1x!tpu.dma_semaphore, #tpu.memory_space<semaphore_mem>>
    %330 = tpu.memref_squeeze %329 : memref<1x!tpu.dma_semaphore, #tpu.memory_space<semaphore_mem>> -> memref<!tpu.dma_semaphore, #tpu.memory_space<semaphore_mem>>
    tpu.wait_dma2 semaphore(%330 : memref<!tpu.dma_semaphore, #tpu.memory_space<semaphore_mem>>) src(%326 : memref<1x128xf32, #tpu.memory_space<any>>) dst(%328 : memref<1x128xf32, #tpu.memory_space<vmem>>)
    %c1_i32_391 = arith.constant 1 : i32
    %c1_i32_392 = arith.constant 1 : i32
    %c1_i32_393 = arith.constant 1 : i32
    %c0_i32_394 = arith.constant 0 : i32
    %c0_i32_395 = arith.constant 0 : i32
    %331 = tpu.memref_slice %arg6[%c0_i32_394, %c0_i32_395] : memref<32x128xf32, #tpu.memory_space<any>> -> memref<1x128xf32, #tpu.memory_space<any>>
    %c4_i32_396 = arith.constant 4 : i32
    %c0_i32_397 = arith.constant 0 : i32
    %332 = tpu.memref_slice %arg9[%c1_i32_391, %c1_i32_392, %c4_i32_396, %c0_i32_397] : memref<4x2x8x128xf32, #tpu.memory_space<vmem>> -> memref<1x1x1x128xf32, #tpu.memory_space<vmem>>
    %333 = tpu.memref_squeeze %332 : memref<1x1x1x128xf32, #tpu.memory_space<vmem>> -> memref<1x128xf32, #tpu.memory_space<vmem>>
    %334 = tpu.memref_slice %arg10[%c1_i32_393] : memref<4x!tpu.dma_semaphore, #tpu.memory_space<semaphore_mem>> -> memref<1x!tpu.dma_semaphore, #tpu.memory_space<semaphore_mem>>
    %335 = tpu.memref_squeeze %334 : memref<1x!tpu.dma_semaphore, #tpu.memory_space<semaphore_mem>> -> memref<!tpu.dma_semaphore, #tpu.memory_space<semaphore_mem>>
    tpu.wait_dma2 semaphore(%335 : memref<!tpu.dma_semaphore, #tpu.memory_space<semaphore_mem>>) src(%331 : memref<1x128xf32, #tpu.memory_space<any>>) dst(%333 : memref<1x128xf32, #tpu.memory_space<vmem>>)
    %c1_i32_398 = arith.constant 1 : i32
    %c0_i32_399 = arith.constant 0 : i32
    %c1_i32_400 = arith.constant 1 : i32
    %c0_i32_401 = arith.constant 0 : i32
    %c0_i32_402 = arith.constant 0 : i32
    %336 = tpu.memref_slice %arg6[%c0_i32_401, %c0_i32_402] : memref<32x128xf32, #tpu.memory_space<any>> -> memref<1x128xf32, #tpu.memory_space<any>>
    %c5_i32_403 = arith.constant 5 : i32
    %c0_i32_404 = arith.constant 0 : i32
    %337 = tpu.memref_slice %arg9[%c1_i32_398, %c0_i32_399, %c5_i32_403, %c0_i32_404] : memref<4x2x8x128xf32, #tpu.memory_space<vmem>> -> memref<1x1x1x128xf32, #tpu.memory_space<vmem>>
    %338 = tpu.memref_squeeze %337 : memref<1x1x1x128xf32, #tpu.memory_space<vmem>> -> memref<1x128xf32, #tpu.memory_space<vmem>>
    %339 = tpu.memref_slice %arg10[%c1_i32_400] : memref<4x!tpu.dma_semaphore, #tpu.memory_space<semaphore_mem>> -> memref<1x!tpu.dma_semaphore, #tpu.memory_space<semaphore_mem>>
    %340 = tpu.memref_squeeze %339 : memref<1x!tpu.dma_semaphore, #tpu.memory_space<semaphore_mem>> -> memref<!tpu.dma_semaphore, #tpu.memory_space<semaphore_mem>>
    tpu.wait_dma2 semaphore(%340 : memref<!tpu.dma_semaphore, #tpu.memory_space<semaphore_mem>>) src(%336 : memref<1x128xf32, #tpu.memory_space<any>>) dst(%338 : memref<1x128xf32, #tpu.memory_space<vmem>>)
    %c1_i32_405 = arith.constant 1 : i32
    %c1_i32_406 = arith.constant 1 : i32
    %c1_i32_407 = arith.constant 1 : i32
    %c0_i32_408 = arith.constant 0 : i32
    %c0_i32_409 = arith.constant 0 : i32
    %341 = tpu.memref_slice %arg6[%c0_i32_408, %c0_i32_409] : memref<32x128xf32, #tpu.memory_space<any>> -> memref<1x128xf32, #tpu.memory_space<any>>
    %c5_i32_410 = arith.constant 5 : i32
    %c0_i32_411 = arith.constant 0 : i32
    %342 = tpu.memref_slice %arg9[%c1_i32_405, %c1_i32_406, %c5_i32_410, %c0_i32_411] : memref<4x2x8x128xf32, #tpu.memory_space<vmem>> -> memref<1x1x1x128xf32, #tpu.memory_space<vmem>>
    %343 = tpu.memref_squeeze %342 : memref<1x1x1x128xf32, #tpu.memory_space<vmem>> -> memref<1x128xf32, #tpu.memory_space<vmem>>
    %344 = tpu.memref_slice %arg10[%c1_i32_407] : memref<4x!tpu.dma_semaphore, #tpu.memory_space<semaphore_mem>> -> memref<1x!tpu.dma_semaphore, #tpu.memory_space<semaphore_mem>>
    %345 = tpu.memref_squeeze %344 : memref<1x!tpu.dma_semaphore, #tpu.memory_space<semaphore_mem>> -> memref<!tpu.dma_semaphore, #tpu.memory_space<semaphore_mem>>
    tpu.wait_dma2 semaphore(%345 : memref<!tpu.dma_semaphore, #tpu.memory_space<semaphore_mem>>) src(%341 : memref<1x128xf32, #tpu.memory_space<any>>) dst(%343 : memref<1x128xf32, #tpu.memory_space<vmem>>)
    %c1_i32_412 = arith.constant 1 : i32
    %c0_i32_413 = arith.constant 0 : i32
    %c1_i32_414 = arith.constant 1 : i32
    %c0_i32_415 = arith.constant 0 : i32
    %c0_i32_416 = arith.constant 0 : i32
    %346 = tpu.memref_slice %arg6[%c0_i32_415, %c0_i32_416] : memref<32x128xf32, #tpu.memory_space<any>> -> memref<1x128xf32, #tpu.memory_space<any>>
    %c6_i32_417 = arith.constant 6 : i32
    %c0_i32_418 = arith.constant 0 : i32
    %347 = tpu.memref_slice %arg9[%c1_i32_412, %c0_i32_413, %c6_i32_417, %c0_i32_418] : memref<4x2x8x128xf32, #tpu.memory_space<vmem>> -> memref<1x1x1x128xf32, #tpu.memory_space<vmem>>
    %348 = tpu.memref_squeeze %347 : memref<1x1x1x128xf32, #tpu.memory_space<vmem>> -> memref<1x128xf32, #tpu.memory_space<vmem>>
    %349 = tpu.memref_slice %arg10[%c1_i32_414] : memref<4x!tpu.dma_semaphore, #tpu.memory_space<semaphore_mem>> -> memref<1x!tpu.dma_semaphore, #tpu.memory_space<semaphore_mem>>
    %350 = tpu.memref_squeeze %349 : memref<1x!tpu.dma_semaphore, #tpu.memory_space<semaphore_mem>> -> memref<!tpu.dma_semaphore, #tpu.memory_space<semaphore_mem>>
    tpu.wait_dma2 semaphore(%350 : memref<!tpu.dma_semaphore, #tpu.memory_space<semaphore_mem>>) src(%346 : memref<1x128xf32, #tpu.memory_space<any>>) dst(%348 : memref<1x128xf32, #tpu.memory_space<vmem>>)
    %c1_i32_419 = arith.constant 1 : i32
    %c1_i32_420 = arith.constant 1 : i32
    %c1_i32_421 = arith.constant 1 : i32
    %c0_i32_422 = arith.constant 0 : i32
    %c0_i32_423 = arith.constant 0 : i32
    %351 = tpu.memref_slice %arg6[%c0_i32_422, %c0_i32_423] : memref<32x128xf32, #tpu.memory_space<any>> -> memref<1x128xf32, #tpu.memory_space<any>>
    %c6_i32_424 = arith.constant 6 : i32
    %c0_i32_425 = arith.constant 0 : i32
    %352 = tpu.memref_slice %arg9[%c1_i32_419, %c1_i32_420, %c6_i32_424, %c0_i32_425] : memref<4x2x8x128xf32, #tpu.memory_space<vmem>> -> memref<1x1x1x128xf32, #tpu.memory_space<vmem>>
    %353 = tpu.memref_squeeze %352 : memref<1x1x1x128xf32, #tpu.memory_space<vmem>> -> memref<1x128xf32, #tpu.memory_space<vmem>>
    %354 = tpu.memref_slice %arg10[%c1_i32_421] : memref<4x!tpu.dma_semaphore, #tpu.memory_space<semaphore_mem>> -> memref<1x!tpu.dma_semaphore, #tpu.memory_space<semaphore_mem>>
    %355 = tpu.memref_squeeze %354 : memref<1x!tpu.dma_semaphore, #tpu.memory_space<semaphore_mem>> -> memref<!tpu.dma_semaphore, #tpu.memory_space<semaphore_mem>>
    tpu.wait_dma2 semaphore(%355 : memref<!tpu.dma_semaphore, #tpu.memory_space<semaphore_mem>>) src(%351 : memref<1x128xf32, #tpu.memory_space<any>>) dst(%353 : memref<1x128xf32, #tpu.memory_space<vmem>>)
    %c1_i32_426 = arith.constant 1 : i32
    %c0_i32_427 = arith.constant 0 : i32
    %c1_i32_428 = arith.constant 1 : i32
    %c0_i32_429 = arith.constant 0 : i32
    %c0_i32_430 = arith.constant 0 : i32
    %356 = tpu.memref_slice %arg6[%c0_i32_429, %c0_i32_430] : memref<32x128xf32, #tpu.memory_space<any>> -> memref<1x128xf32, #tpu.memory_space<any>>
    %c7_i32_431 = arith.constant 7 : i32
    %c0_i32_432 = arith.constant 0 : i32
    %357 = tpu.memref_slice %arg9[%c1_i32_426, %c0_i32_427, %c7_i32_431, %c0_i32_432] : memref<4x2x8x128xf32, #tpu.memory_space<vmem>> -> memref<1x1x1x128xf32, #tpu.memory_space<vmem>>
    %358 = tpu.memref_squeeze %357 : memref<1x1x1x128xf32, #tpu.memory_space<vmem>> -> memref<1x128xf32, #tpu.memory_space<vmem>>
    %359 = tpu.memref_slice %arg10[%c1_i32_428] : memref<4x!tpu.dma_semaphore, #tpu.memory_space<semaphore_mem>> -> memref<1x!tpu.dma_semaphore, #tpu.memory_space<semaphore_mem>>
    %360 = tpu.memref_squeeze %359 : memref<1x!tpu.dma_semaphore, #tpu.memory_space<semaphore_mem>> -> memref<!tpu.dma_semaphore, #tpu.memory_space<semaphore_mem>>
    tpu.wait_dma2 semaphore(%360 : memref<!tpu.dma_semaphore, #tpu.memory_space<semaphore_mem>>) src(%356 : memref<1x128xf32, #tpu.memory_space<any>>) dst(%358 : memref<1x128xf32, #tpu.memory_space<vmem>>)
    %c1_i32_433 = arith.constant 1 : i32
    %c1_i32_434 = arith.constant 1 : i32
    %c1_i32_435 = arith.constant 1 : i32
    %c0_i32_436 = arith.constant 0 : i32
    %c0_i32_437 = arith.constant 0 : i32
    %361 = tpu.memref_slice %arg6[%c0_i32_436, %c0_i32_437] : memref<32x128xf32, #tpu.memory_space<any>> -> memref<1x128xf32, #tpu.memory_space<any>>
    %c7_i32_438 = arith.constant 7 : i32
    %c0_i32_439 = arith.constant 0 : i32
    %362 = tpu.memref_slice %arg9[%c1_i32_433, %c1_i32_434, %c7_i32_438, %c0_i32_439] : memref<4x2x8x128xf32, #tpu.memory_space<vmem>> -> memref<1x1x1x128xf32, #tpu.memory_space<vmem>>
    %363 = tpu.memref_squeeze %362 : memref<1x1x1x128xf32, #tpu.memory_space<vmem>> -> memref<1x128xf32, #tpu.memory_space<vmem>>
    %364 = tpu.memref_slice %arg10[%c1_i32_435] : memref<4x!tpu.dma_semaphore, #tpu.memory_space<semaphore_mem>> -> memref<1x!tpu.dma_semaphore, #tpu.memory_space<semaphore_mem>>
    %365 = tpu.memref_squeeze %364 : memref<1x!tpu.dma_semaphore, #tpu.memory_space<semaphore_mem>> -> memref<!tpu.dma_semaphore, #tpu.memory_space<semaphore_mem>>
    tpu.wait_dma2 semaphore(%365 : memref<!tpu.dma_semaphore, #tpu.memory_space<semaphore_mem>>) src(%361 : memref<1x128xf32, #tpu.memory_space<any>>) dst(%363 : memref<1x128xf32, #tpu.memory_space<vmem>>)
    %c1_440 = arith.constant 1 : index
    %c0_441 = arith.constant 0 : index
    %c0_442 = arith.constant 0 : index
    %c0_443 = arith.constant 0 : index
    %366 = vector.load %arg9[%c1_440, %c0_441, %c0_442, %c0_443] : memref<4x2x8x128xf32, #tpu.memory_space<vmem>>, vector<1x1x8x128xf32>
    %367 = vector.shape_cast %366 : vector<1x1x8x128xf32> to vector<8x128xf32>
    %c1_444 = arith.constant 1 : index
    %c1_445 = arith.constant 1 : index
    %c0_446 = arith.constant 0 : index
    %c0_447 = arith.constant 0 : index
    %368 = vector.load %arg9[%c1_444, %c1_445, %c0_446, %c0_447] : memref<4x2x8x128xf32, #tpu.memory_space<vmem>>, vector<1x1x8x128xf32>
    %369 = vector.shape_cast %368 : vector<1x1x8x128xf32> to vector<8x128xf32>
    %370 = arith.subf %367, %369 : vector<8x128xf32>
    %c8_448 = arith.constant 8 : index
    %c0_449 = arith.constant 0 : index
    %371 = vector.load %arg2[%c8_448, %c0_449] : memref<16x1xf32, #tpu.memory_space<vmem>>, vector<8x1xf32>
    %c0_450 = arith.constant 0 : index
    %c0_451 = arith.constant 0 : index
    %372 = vector.load %arg11[%c0_450, %c0_451] : memref<8x128xf32, #tpu.memory_space<vmem>>, vector<8x128xf32>
    %373 = arith.mulf %370, %370 : vector<8x128xf32>
    %374 = vector.broadcast %371 : vector<8x1xf32> to vector<8x128xf32>
    %375 = arith.mulf %374, %373 : vector<8x128xf32>
    %376 = arith.addf %372, %375 : vector<8x128xf32>
    %c0_452 = arith.constant 0 : index
    %c0_453 = arith.constant 0 : index
    %377 = vector.load %arg11[%c0_452, %c0_453] : memref<8x128xf32, #tpu.memory_space<vmem>>, vector<8x128xf32>
    tpu.vector_store %arg11[%c0_452, %c0_453], %376 {strides = array<i32>} : memref<8x128xf32, #tpu.memory_space<vmem>>, vector<8x128xf32>,
    %c0_454 = arith.constant 0 : index
    %c0_455 = arith.constant 0 : index
    %378 = vector.load %arg11[%c0_454, %c0_455] : memref<8x128xf32, #tpu.memory_space<vmem>>, vector<8x128xf32>
    %379 = vector.shape_cast %378 : vector<8x128xf32> to vector<1x8x128xf32>
    %cst_456 = arith.constant dense<0.000000e+00> : vector<1xf32>
    %380 = vector.multi_reduction <add>, %379, %cst_456 [1, 2] : vector<1x8x128xf32> to vector<1xf32>
    %381 = vector.shape_cast %380 : vector<1xf32> to vector<1x1x1xf32>
    %382 = vector.extract %381[0, 0, 0] : f32 from vector<1x1x1xf32>
    %cst_457 = arith.constant 6.250000e-02 : f32
    %383 = arith.mulf %382, %cst_457 : f32
    %cst_458 = arith.constant 0.000000e+00 : f32
    %384 = vector.broadcast %cst_458 : f32 to vector<8x128xf32>
    %c0_459 = arith.constant 0 : index
    %c0_460 = arith.constant 0 : index
    %385 = vector.load %arg11[%c0_459, %c0_460] : memref<8x128xf32, #tpu.memory_space<vmem>>, vector<8x128xf32>
    tpu.vector_store %arg11[%c0_459, %c0_460], %384 {strides = array<i32>} : memref<8x128xf32, #tpu.memory_space<vmem>>, vector<8x128xf32>,
    %c0_461 = arith.constant 0 : index
    %386 = memref.load %arg3[%c0_461] : memref<16xi32, #tpu.memory_space<smem>>
    %c0_462 = arith.constant 0 : index
    %387 = memref.load %arg4[%c0_462] : memref<16xi32, #tpu.memory_space<smem>>
    %c0_i32_463 = arith.constant 0 : i32
    %c0_i32_464 = arith.constant 0 : i32
    %c0_i32_465 = arith.constant 0 : i32
    %c0_i32_466 = arith.constant 0 : i32
    %388 = tpu.memref_slice %arg7[%386, %c0_i32_466] : memref<16x128xf32, #tpu.memory_space<any>> -> memref<1x128xf32, #tpu.memory_space<any>>
    %c0_i32_467 = arith.constant 0 : i32
    %c0_i32_468 = arith.constant 0 : i32
    %389 = tpu.memref_slice %arg9[%c0_i32_463, %c0_i32_464, %c0_i32_467, %c0_i32_468] : memref<4x2x8x128xf32, #tpu.memory_space<vmem>> -> memref<1x1x1x128xf32, #tpu.memory_space<vmem>>
    %390 = tpu.memref_squeeze %389 : memref<1x1x1x128xf32, #tpu.memory_space<vmem>> -> memref<1x128xf32, #tpu.memory_space<vmem>>
    %391 = tpu.memref_slice %arg10[%c0_i32_465] : memref<4x!tpu.dma_semaphore, #tpu.memory_space<semaphore_mem>> -> memref<1x!tpu.dma_semaphore, #tpu.memory_space<semaphore_mem>>
    %392 = tpu.memref_squeeze %391 : memref<1x!tpu.dma_semaphore, #tpu.memory_space<semaphore_mem>> -> memref<!tpu.dma_semaphore, #tpu.memory_space<semaphore_mem>>
    tpu.enqueue_dma source(%388 : memref<1x128xf32, #tpu.memory_space<any>>) target(%390 : memref<1x128xf32, #tpu.memory_space<vmem>>) target_semaphore(%392 : memref<!tpu.dma_semaphore, #tpu.memory_space<semaphore_mem>>)
    %c0_i32_469 = arith.constant 0 : i32
    %c1_i32_470 = arith.constant 1 : i32
    %c0_i32_471 = arith.constant 0 : i32
    %c0_i32_472 = arith.constant 0 : i32
    %393 = tpu.memref_slice %arg7[%387, %c0_i32_472] : memref<16x128xf32, #tpu.memory_space<any>> -> memref<1x128xf32, #tpu.memory_space<any>>
    %c0_i32_473 = arith.constant 0 : i32
    %c0_i32_474 = arith.constant 0 : i32
    %394 = tpu.memref_slice %arg9[%c0_i32_469, %c1_i32_470, %c0_i32_473, %c0_i32_474] : memref<4x2x8x128xf32, #tpu.memory_space<vmem>> -> memref<1x1x1x128xf32, #tpu.memory_space<vmem>>
    %395 = tpu.memref_squeeze %394 : memref<1x1x1x128xf32, #tpu.memory_space<vmem>> -> memref<1x128xf32, #tpu.memory_space<vmem>>
    %396 = tpu.memref_slice %arg10[%c0_i32_471] : memref<4x!tpu.dma_semaphore, #tpu.memory_space<semaphore_mem>> -> memref<1x!tpu.dma_semaphore, #tpu.memory_space<semaphore_mem>>
    %397 = tpu.memref_squeeze %396 : memref<1x!tpu.dma_semaphore, #tpu.memory_space<semaphore_mem>> -> memref<!tpu.dma_semaphore, #tpu.memory_space<semaphore_mem>>
    tpu.enqueue_dma source(%393 : memref<1x128xf32, #tpu.memory_space<any>>) target(%395 : memref<1x128xf32, #tpu.memory_space<vmem>>) target_semaphore(%397 : memref<!tpu.dma_semaphore, #tpu.memory_space<semaphore_mem>>)
    %c1_475 = arith.constant 1 : index
    %398 = memref.load %arg3[%c1_475] : memref<16xi32, #tpu.memory_space<smem>>
    %c1_476 = arith.constant 1 : index
    %399 = memref.load %arg4[%c1_476] : memref<16xi32, #tpu.memory_space<smem>>
    %c0_i32_477 = arith.constant 0 : i32
    %c0_i32_478 = arith.constant 0 : i32
    %c0_i32_479 = arith.constant 0 : i32
    %c0_i32_480 = arith.constant 0 : i32
    %400 = tpu.memref_slice %arg7[%398, %c0_i32_480] : memref<16x128xf32, #tpu.memory_space<any>> -> memref<1x128xf32, #tpu.memory_space<any>>
    %c1_i32_481 = arith.constant 1 : i32
    %c0_i32_482 = arith.constant 0 : i32
    %401 = tpu.memref_slice %arg9[%c0_i32_477, %c0_i32_478, %c1_i32_481, %c0_i32_482] : memref<4x2x8x128xf32, #tpu.memory_space<vmem>> -> memref<1x1x1x128xf32, #tpu.memory_space<vmem>>
    %402 = tpu.memref_squeeze %401 : memref<1x1x1x128xf32, #tpu.memory_space<vmem>> -> memref<1x128xf32, #tpu.memory_space<vmem>>
    %403 = tpu.memref_slice %arg10[%c0_i32_479] : memref<4x!tpu.dma_semaphore, #tpu.memory_space<semaphore_mem>> -> memref<1x!tpu.dma_semaphore, #tpu.memory_space<semaphore_mem>>
    %404 = tpu.memref_squeeze %403 : memref<1x!tpu.dma_semaphore, #tpu.memory_space<semaphore_mem>> -> memref<!tpu.dma_semaphore, #tpu.memory_space<semaphore_mem>>
    tpu.enqueue_dma source(%400 : memref<1x128xf32, #tpu.memory_space<any>>) target(%402 : memref<1x128xf32, #tpu.memory_space<vmem>>) target_semaphore(%404 : memref<!tpu.dma_semaphore, #tpu.memory_space<semaphore_mem>>)
    %c0_i32_483 = arith.constant 0 : i32
    %c1_i32_484 = arith.constant 1 : i32
    %c0_i32_485 = arith.constant 0 : i32
    %c0_i32_486 = arith.constant 0 : i32
    %405 = tpu.memref_slice %arg7[%399, %c0_i32_486] : memref<16x128xf32, #tpu.memory_space<any>> -> memref<1x128xf32, #tpu.memory_space<any>>
    %c1_i32_487 = arith.constant 1 : i32
    %c0_i32_488 = arith.constant 0 : i32
    %406 = tpu.memref_slice %arg9[%c0_i32_483, %c1_i32_484, %c1_i32_487, %c0_i32_488] : memref<4x2x8x128xf32, #tpu.memory_space<vmem>> -> memref<1x1x1x128xf32, #tpu.memory_space<vmem>>
    %407 = tpu.memref_squeeze %406 : memref<1x1x1x128xf32, #tpu.memory_space<vmem>> -> memref<1x128xf32, #tpu.memory_space<vmem>>
    %408 = tpu.memref_slice %arg10[%c0_i32_485] : memref<4x!tpu.dma_semaphore, #tpu.memory_space<semaphore_mem>> -> memref<1x!tpu.dma_semaphore, #tpu.memory_space<semaphore_mem>>
    %409 = tpu.memref_squeeze %408 : memref<1x!tpu.dma_semaphore, #tpu.memory_space<semaphore_mem>> -> memref<!tpu.dma_semaphore, #tpu.memory_space<semaphore_mem>>
    tpu.enqueue_dma source(%405 : memref<1x128xf32, #tpu.memory_space<any>>) target(%407 : memref<1x128xf32, #tpu.memory_space<vmem>>) target_semaphore(%409 : memref<!tpu.dma_semaphore, #tpu.memory_space<semaphore_mem>>)
    %c2_489 = arith.constant 2 : index
    %410 = memref.load %arg3[%c2_489] : memref<16xi32, #tpu.memory_space<smem>>
    %c2_490 = arith.constant 2 : index
    %411 = memref.load %arg4[%c2_490] : memref<16xi32, #tpu.memory_space<smem>>
    %c0_i32_491 = arith.constant 0 : i32
    %c0_i32_492 = arith.constant 0 : i32
    %c0_i32_493 = arith.constant 0 : i32
    %c0_i32_494 = arith.constant 0 : i32
    %412 = tpu.memref_slice %arg7[%410, %c0_i32_494] : memref<16x128xf32, #tpu.memory_space<any>> -> memref<1x128xf32, #tpu.memory_space<any>>
    %c2_i32_495 = arith.constant 2 : i32
    %c0_i32_496 = arith.constant 0 : i32
    %413 = tpu.memref_slice %arg9[%c0_i32_491, %c0_i32_492, %c2_i32_495, %c0_i32_496] : memref<4x2x8x128xf32, #tpu.memory_space<vmem>> -> memref<1x1x1x128xf32, #tpu.memory_space<vmem>>
    %414 = tpu.memref_squeeze %413 : memref<1x1x1x128xf32, #tpu.memory_space<vmem>> -> memref<1x128xf32, #tpu.memory_space<vmem>>
    %415 = tpu.memref_slice %arg10[%c0_i32_493] : memref<4x!tpu.dma_semaphore, #tpu.memory_space<semaphore_mem>> -> memref<1x!tpu.dma_semaphore, #tpu.memory_space<semaphore_mem>>
    %416 = tpu.memref_squeeze %415 : memref<1x!tpu.dma_semaphore, #tpu.memory_space<semaphore_mem>> -> memref<!tpu.dma_semaphore, #tpu.memory_space<semaphore_mem>>
    tpu.enqueue_dma source(%412 : memref<1x128xf32, #tpu.memory_space<any>>) target(%414 : memref<1x128xf32, #tpu.memory_space<vmem>>) target_semaphore(%416 : memref<!tpu.dma_semaphore, #tpu.memory_space<semaphore_mem>>)
    %c0_i32_497 = arith.constant 0 : i32
    %c1_i32_498 = arith.constant 1 : i32
    %c0_i32_499 = arith.constant 0 : i32
    %c0_i32_500 = arith.constant 0 : i32
    %417 = tpu.memref_slice %arg7[%411, %c0_i32_500] : memref<16x128xf32, #tpu.memory_space<any>> -> memref<1x128xf32, #tpu.memory_space<any>>
    %c2_i32_501 = arith.constant 2 : i32
    %c0_i32_502 = arith.constant 0 : i32
    %418 = tpu.memref_slice %arg9[%c0_i32_497, %c1_i32_498, %c2_i32_501, %c0_i32_502] : memref<4x2x8x128xf32, #tpu.memory_space<vmem>> -> memref<1x1x1x128xf32, #tpu.memory_space<vmem>>
    %419 = tpu.memref_squeeze %418 : memref<1x1x1x128xf32, #tpu.memory_space<vmem>> -> memref<1x128xf32, #tpu.memory_space<vmem>>
    %420 = tpu.memref_slice %arg10[%c0_i32_499] : memref<4x!tpu.dma_semaphore, #tpu.memory_space<semaphore_mem>> -> memref<1x!tpu.dma_semaphore, #tpu.memory_space<semaphore_mem>>
    %421 = tpu.memref_squeeze %420 : memref<1x!tpu.dma_semaphore, #tpu.memory_space<semaphore_mem>> -> memref<!tpu.dma_semaphore, #tpu.memory_space<semaphore_mem>>
    tpu.enqueue_dma source(%417 : memref<1x128xf32, #tpu.memory_space<any>>) target(%419 : memref<1x128xf32, #tpu.memory_space<vmem>>) target_semaphore(%421 : memref<!tpu.dma_semaphore, #tpu.memory_space<semaphore_mem>>)
    %c3_503 = arith.constant 3 : index
    %422 = memref.load %arg3[%c3_503] : memref<16xi32, #tpu.memory_space<smem>>
    %c3_504 = arith.constant 3 : index
    %423 = memref.load %arg4[%c3_504] : memref<16xi32, #tpu.memory_space<smem>>
    %c0_i32_505 = arith.constant 0 : i32
    %c0_i32_506 = arith.constant 0 : i32
    %c0_i32_507 = arith.constant 0 : i32
    %c0_i32_508 = arith.constant 0 : i32
    %424 = tpu.memref_slice %arg7[%422, %c0_i32_508] : memref<16x128xf32, #tpu.memory_space<any>> -> memref<1x128xf32, #tpu.memory_space<any>>
    %c3_i32_509 = arith.constant 3 : i32
    %c0_i32_510 = arith.constant 0 : i32
    %425 = tpu.memref_slice %arg9[%c0_i32_505, %c0_i32_506, %c3_i32_509, %c0_i32_510] : memref<4x2x8x128xf32, #tpu.memory_space<vmem>> -> memref<1x1x1x128xf32, #tpu.memory_space<vmem>>
    %426 = tpu.memref_squeeze %425 : memref<1x1x1x128xf32, #tpu.memory_space<vmem>> -> memref<1x128xf32, #tpu.memory_space<vmem>>
    %427 = tpu.memref_slice %arg10[%c0_i32_507] : memref<4x!tpu.dma_semaphore, #tpu.memory_space<semaphore_mem>> -> memref<1x!tpu.dma_semaphore, #tpu.memory_space<semaphore_mem>>
    %428 = tpu.memref_squeeze %427 : memref<1x!tpu.dma_semaphore, #tpu.memory_space<semaphore_mem>> -> memref<!tpu.dma_semaphore, #tpu.memory_space<semaphore_mem>>
    tpu.enqueue_dma source(%424 : memref<1x128xf32, #tpu.memory_space<any>>) target(%426 : memref<1x128xf32, #tpu.memory_space<vmem>>) target_semaphore(%428 : memref<!tpu.dma_semaphore, #tpu.memory_space<semaphore_mem>>)
    %c0_i32_511 = arith.constant 0 : i32
    %c1_i32_512 = arith.constant 1 : i32
    %c0_i32_513 = arith.constant 0 : i32
    %c0_i32_514 = arith.constant 0 : i32
    %429 = tpu.memref_slice %arg7[%423, %c0_i32_514] : memref<16x128xf32, #tpu.memory_space<any>> -> memref<1x128xf32, #tpu.memory_space<any>>
    %c3_i32_515 = arith.constant 3 : i32
    %c0_i32_516 = arith.constant 0 : i32
    %430 = tpu.memref_slice %arg9[%c0_i32_511, %c1_i32_512, %c3_i32_515, %c0_i32_516] : memref<4x2x8x128xf32, #tpu.memory_space<vmem>> -> memref<1x1x1x128xf32, #tpu.memory_space<vmem>>
    %431 = tpu.memref_squeeze %430 : memref<1x1x1x128xf32, #tpu.memory_space<vmem>> -> memref<1x128xf32, #tpu.memory_space<vmem>>
    %432 = tpu.memref_slice %arg10[%c0_i32_513] : memref<4x!tpu.dma_semaphore, #tpu.memory_space<semaphore_mem>> -> memref<1x!tpu.dma_semaphore, #tpu.memory_space<semaphore_mem>>
    %433 = tpu.memref_squeeze %432 : memref<1x!tpu.dma_semaphore, #tpu.memory_space<semaphore_mem>> -> memref<!tpu.dma_semaphore, #tpu.memory_space<semaphore_mem>>
    tpu.enqueue_dma source(%429 : memref<1x128xf32, #tpu.memory_space<any>>) target(%431 : memref<1x128xf32, #tpu.memory_space<vmem>>) target_semaphore(%433 : memref<!tpu.dma_semaphore, #tpu.memory_space<semaphore_mem>>)
    %c4_517 = arith.constant 4 : index
    %434 = memref.load %arg3[%c4_517] : memref<16xi32, #tpu.memory_space<smem>>
    %c4_518 = arith.constant 4 : index
    %435 = memref.load %arg4[%c4_518] : memref<16xi32, #tpu.memory_space<smem>>
    %c0_i32_519 = arith.constant 0 : i32
    %c0_i32_520 = arith.constant 0 : i32
    %c0_i32_521 = arith.constant 0 : i32
    %c0_i32_522 = arith.constant 0 : i32
    %436 = tpu.memref_slice %arg7[%434, %c0_i32_522] : memref<16x128xf32, #tpu.memory_space<any>> -> memref<1x128xf32, #tpu.memory_space<any>>
    %c4_i32_523 = arith.constant 4 : i32
    %c0_i32_524 = arith.constant 0 : i32
    %437 = tpu.memref_slice %arg9[%c0_i32_519, %c0_i32_520, %c4_i32_523, %c0_i32_524] : memref<4x2x8x128xf32, #tpu.memory_space<vmem>> -> memref<1x1x1x128xf32, #tpu.memory_space<vmem>>
    %438 = tpu.memref_squeeze %437 : memref<1x1x1x128xf32, #tpu.memory_space<vmem>> -> memref<1x128xf32, #tpu.memory_space<vmem>>
    %439 = tpu.memref_slice %arg10[%c0_i32_521] : memref<4x!tpu.dma_semaphore, #tpu.memory_space<semaphore_mem>> -> memref<1x!tpu.dma_semaphore, #tpu.memory_space<semaphore_mem>>
    %440 = tpu.memref_squeeze %439 : memref<1x!tpu.dma_semaphore, #tpu.memory_space<semaphore_mem>> -> memref<!tpu.dma_semaphore, #tpu.memory_space<semaphore_mem>>
    tpu.enqueue_dma source(%436 : memref<1x128xf32, #tpu.memory_space<any>>) target(%438 : memref<1x128xf32, #tpu.memory_space<vmem>>) target_semaphore(%440 : memref<!tpu.dma_semaphore, #tpu.memory_space<semaphore_mem>>)
    %c0_i32_525 = arith.constant 0 : i32
    %c1_i32_526 = arith.constant 1 : i32
    %c0_i32_527 = arith.constant 0 : i32
    %c0_i32_528 = arith.constant 0 : i32
    %441 = tpu.memref_slice %arg7[%435, %c0_i32_528] : memref<16x128xf32, #tpu.memory_space<any>> -> memref<1x128xf32, #tpu.memory_space<any>>
    %c4_i32_529 = arith.constant 4 : i32
    %c0_i32_530 = arith.constant 0 : i32
    %442 = tpu.memref_slice %arg9[%c0_i32_525, %c1_i32_526, %c4_i32_529, %c0_i32_530] : memref<4x2x8x128xf32, #tpu.memory_space<vmem>> -> memref<1x1x1x128xf32, #tpu.memory_space<vmem>>
    %443 = tpu.memref_squeeze %442 : memref<1x1x1x128xf32, #tpu.memory_space<vmem>> -> memref<1x128xf32, #tpu.memory_space<vmem>>
    %444 = tpu.memref_slice %arg10[%c0_i32_527] : memref<4x!tpu.dma_semaphore, #tpu.memory_space<semaphore_mem>> -> memref<1x!tpu.dma_semaphore, #tpu.memory_space<semaphore_mem>>
    %445 = tpu.memref_squeeze %444 : memref<1x!tpu.dma_semaphore, #tpu.memory_space<semaphore_mem>> -> memref<!tpu.dma_semaphore, #tpu.memory_space<semaphore_mem>>
    tpu.enqueue_dma source(%441 : memref<1x128xf32, #tpu.memory_space<any>>) target(%443 : memref<1x128xf32, #tpu.memory_space<vmem>>) target_semaphore(%445 : memref<!tpu.dma_semaphore, #tpu.memory_space<semaphore_mem>>)
    %c5_531 = arith.constant 5 : index
    %446 = memref.load %arg3[%c5_531] : memref<16xi32, #tpu.memory_space<smem>>
    %c5_532 = arith.constant 5 : index
    %447 = memref.load %arg4[%c5_532] : memref<16xi32, #tpu.memory_space<smem>>
    %c0_i32_533 = arith.constant 0 : i32
    %c0_i32_534 = arith.constant 0 : i32
    %c0_i32_535 = arith.constant 0 : i32
    %c0_i32_536 = arith.constant 0 : i32
    %448 = tpu.memref_slice %arg7[%446, %c0_i32_536] : memref<16x128xf32, #tpu.memory_space<any>> -> memref<1x128xf32, #tpu.memory_space<any>>
    %c5_i32_537 = arith.constant 5 : i32
    %c0_i32_538 = arith.constant 0 : i32
    %449 = tpu.memref_slice %arg9[%c0_i32_533, %c0_i32_534, %c5_i32_537, %c0_i32_538] : memref<4x2x8x128xf32, #tpu.memory_space<vmem>> -> memref<1x1x1x128xf32, #tpu.memory_space<vmem>>
    %450 = tpu.memref_squeeze %449 : memref<1x1x1x128xf32, #tpu.memory_space<vmem>> -> memref<1x128xf32, #tpu.memory_space<vmem>>
    %451 = tpu.memref_slice %arg10[%c0_i32_535] : memref<4x!tpu.dma_semaphore, #tpu.memory_space<semaphore_mem>> -> memref<1x!tpu.dma_semaphore, #tpu.memory_space<semaphore_mem>>
    %452 = tpu.memref_squeeze %451 : memref<1x!tpu.dma_semaphore, #tpu.memory_space<semaphore_mem>> -> memref<!tpu.dma_semaphore, #tpu.memory_space<semaphore_mem>>
    tpu.enqueue_dma source(%448 : memref<1x128xf32, #tpu.memory_space<any>>) target(%450 : memref<1x128xf32, #tpu.memory_space<vmem>>) target_semaphore(%452 : memref<!tpu.dma_semaphore, #tpu.memory_space<semaphore_mem>>)
    %c0_i32_539 = arith.constant 0 : i32
    %c1_i32_540 = arith.constant 1 : i32
    %c0_i32_541 = arith.constant 0 : i32
    %c0_i32_542 = arith.constant 0 : i32
    %453 = tpu.memref_slice %arg7[%447, %c0_i32_542] : memref<16x128xf32, #tpu.memory_space<any>> -> memref<1x128xf32, #tpu.memory_space<any>>
    %c5_i32_543 = arith.constant 5 : i32
    %c0_i32_544 = arith.constant 0 : i32
    %454 = tpu.memref_slice %arg9[%c0_i32_539, %c1_i32_540, %c5_i32_543, %c0_i32_544] : memref<4x2x8x128xf32, #tpu.memory_space<vmem>> -> memref<1x1x1x128xf32, #tpu.memory_space<vmem>>
    %455 = tpu.memref_squeeze %454 : memref<1x1x1x128xf32, #tpu.memory_space<vmem>> -> memref<1x128xf32, #tpu.memory_space<vmem>>
    %456 = tpu.memref_slice %arg10[%c0_i32_541] : memref<4x!tpu.dma_semaphore, #tpu.memory_space<semaphore_mem>> -> memref<1x!tpu.dma_semaphore, #tpu.memory_space<semaphore_mem>>
    %457 = tpu.memref_squeeze %456 : memref<1x!tpu.dma_semaphore, #tpu.memory_space<semaphore_mem>> -> memref<!tpu.dma_semaphore, #tpu.memory_space<semaphore_mem>>
    tpu.enqueue_dma source(%453 : memref<1x128xf32, #tpu.memory_space<any>>) target(%455 : memref<1x128xf32, #tpu.memory_space<vmem>>) target_semaphore(%457 : memref<!tpu.dma_semaphore, #tpu.memory_space<semaphore_mem>>)
    %c6_545 = arith.constant 6 : index
    %458 = memref.load %arg3[%c6_545] : memref<16xi32, #tpu.memory_space<smem>>
    %c6_546 = arith.constant 6 : index
    %459 = memref.load %arg4[%c6_546] : memref<16xi32, #tpu.memory_space<smem>>
    %c0_i32_547 = arith.constant 0 : i32
    %c0_i32_548 = arith.constant 0 : i32
    %c0_i32_549 = arith.constant 0 : i32
    %c0_i32_550 = arith.constant 0 : i32
    %460 = tpu.memref_slice %arg7[%458, %c0_i32_550] : memref<16x128xf32, #tpu.memory_space<any>> -> memref<1x128xf32, #tpu.memory_space<any>>
    %c6_i32_551 = arith.constant 6 : i32
    %c0_i32_552 = arith.constant 0 : i32
    %461 = tpu.memref_slice %arg9[%c0_i32_547, %c0_i32_548, %c6_i32_551, %c0_i32_552] : memref<4x2x8x128xf32, #tpu.memory_space<vmem>> -> memref<1x1x1x128xf32, #tpu.memory_space<vmem>>
    %462 = tpu.memref_squeeze %461 : memref<1x1x1x128xf32, #tpu.memory_space<vmem>> -> memref<1x128xf32, #tpu.memory_space<vmem>>
    %463 = tpu.memref_slice %arg10[%c0_i32_549] : memref<4x!tpu.dma_semaphore, #tpu.memory_space<semaphore_mem>> -> memref<1x!tpu.dma_semaphore, #tpu.memory_space<semaphore_mem>>
    %464 = tpu.memref_squeeze %463 : memref<1x!tpu.dma_semaphore, #tpu.memory_space<semaphore_mem>> -> memref<!tpu.dma_semaphore, #tpu.memory_space<semaphore_mem>>
    tpu.enqueue_dma source(%460 : memref<1x128xf32, #tpu.memory_space<any>>) target(%462 : memref<1x128xf32, #tpu.memory_space<vmem>>) target_semaphore(%464 : memref<!tpu.dma_semaphore, #tpu.memory_space<semaphore_mem>>)
    %c0_i32_553 = arith.constant 0 : i32
    %c1_i32_554 = arith.constant 1 : i32
    %c0_i32_555 = arith.constant 0 : i32
    %c0_i32_556 = arith.constant 0 : i32
    %465 = tpu.memref_slice %arg7[%459, %c0_i32_556] : memref<16x128xf32, #tpu.memory_space<any>> -> memref<1x128xf32, #tpu.memory_space<any>>
    %c6_i32_557 = arith.constant 6 : i32
    %c0_i32_558 = arith.constant 0 : i32
    %466 = tpu.memref_slice %arg9[%c0_i32_553, %c1_i32_554, %c6_i32_557, %c0_i32_558] : memref<4x2x8x128xf32, #tpu.memory_space<vmem>> -> memref<1x1x1x128xf32, #tpu.memory_space<vmem>>
    %467 = tpu.memref_squeeze %466 : memref<1x1x1x128xf32, #tpu.memory_space<vmem>> -> memref<1x128xf32, #tpu.memory_space<vmem>>
    %468 = tpu.memref_slice %arg10[%c0_i32_555] : memref<4x!tpu.dma_semaphore, #tpu.memory_space<semaphore_mem>> -> memref<1x!tpu.dma_semaphore, #tpu.memory_space<semaphore_mem>>
    %469 = tpu.memref_squeeze %468 : memref<1x!tpu.dma_semaphore, #tpu.memory_space<semaphore_mem>> -> memref<!tpu.dma_semaphore, #tpu.memory_space<semaphore_mem>>
    tpu.enqueue_dma source(%465 : memref<1x128xf32, #tpu.memory_space<any>>) target(%467 : memref<1x128xf32, #tpu.memory_space<vmem>>) target_semaphore(%469 : memref<!tpu.dma_semaphore, #tpu.memory_space<semaphore_mem>>)
    %c7_559 = arith.constant 7 : index
    %470 = memref.load %arg3[%c7_559] : memref<16xi32, #tpu.memory_space<smem>>
    %c7_560 = arith.constant 7 : index
    %471 = memref.load %arg4[%c7_560] : memref<16xi32, #tpu.memory_space<smem>>
    %c0_i32_561 = arith.constant 0 : i32
    %c0_i32_562 = arith.constant 0 : i32
    %c0_i32_563 = arith.constant 0 : i32
    %c0_i32_564 = arith.constant 0 : i32
    %472 = tpu.memref_slice %arg7[%470, %c0_i32_564] : memref<16x128xf32, #tpu.memory_space<any>> -> memref<1x128xf32, #tpu.memory_space<any>>
    %c7_i32_565 = arith.constant 7 : i32
    %c0_i32_566 = arith.constant 0 : i32
    %473 = tpu.memref_slice %arg9[%c0_i32_561, %c0_i32_562, %c7_i32_565, %c0_i32_566] : memref<4x2x8x128xf32, #tpu.memory_space<vmem>> -> memref<1x1x1x128xf32, #tpu.memory_space<vmem>>
    %474 = tpu.memref_squeeze %473 : memref<1x1x1x128xf32, #tpu.memory_space<vmem>> -> memref<1x128xf32, #tpu.memory_space<vmem>>
    %475 = tpu.memref_slice %arg10[%c0_i32_563] : memref<4x!tpu.dma_semaphore, #tpu.memory_space<semaphore_mem>> -> memref<1x!tpu.dma_semaphore, #tpu.memory_space<semaphore_mem>>
    %476 = tpu.memref_squeeze %475 : memref<1x!tpu.dma_semaphore, #tpu.memory_space<semaphore_mem>> -> memref<!tpu.dma_semaphore, #tpu.memory_space<semaphore_mem>>
    tpu.enqueue_dma source(%472 : memref<1x128xf32, #tpu.memory_space<any>>) target(%474 : memref<1x128xf32, #tpu.memory_space<vmem>>) target_semaphore(%476 : memref<!tpu.dma_semaphore, #tpu.memory_space<semaphore_mem>>)
    %c0_i32_567 = arith.constant 0 : i32
    %c1_i32_568 = arith.constant 1 : i32
    %c0_i32_569 = arith.constant 0 : i32
    %c0_i32_570 = arith.constant 0 : i32
    %477 = tpu.memref_slice %arg7[%471, %c0_i32_570] : memref<16x128xf32, #tpu.memory_space<any>> -> memref<1x128xf32, #tpu.memory_space<any>>
    %c7_i32_571 = arith.constant 7 : i32
    %c0_i32_572 = arith.constant 0 : i32
    %478 = tpu.memref_slice %arg9[%c0_i32_567, %c1_i32_568, %c7_i32_571, %c0_i32_572] : memref<4x2x8x128xf32, #tpu.memory_space<vmem>> -> memref<1x1x1x128xf32, #tpu.memory_space<vmem>>
    %479 = tpu.memref_squeeze %478 : memref<1x1x1x128xf32, #tpu.memory_space<vmem>> -> memref<1x128xf32, #tpu.memory_space<vmem>>
    %480 = tpu.memref_slice %arg10[%c0_i32_569] : memref<4x!tpu.dma_semaphore, #tpu.memory_space<semaphore_mem>> -> memref<1x!tpu.dma_semaphore, #tpu.memory_space<semaphore_mem>>
    %481 = tpu.memref_squeeze %480 : memref<1x!tpu.dma_semaphore, #tpu.memory_space<semaphore_mem>> -> memref<!tpu.dma_semaphore, #tpu.memory_space<semaphore_mem>>
    tpu.enqueue_dma source(%477 : memref<1x128xf32, #tpu.memory_space<any>>) target(%479 : memref<1x128xf32, #tpu.memory_space<vmem>>) target_semaphore(%481 : memref<!tpu.dma_semaphore, #tpu.memory_space<semaphore_mem>>)
    %c8_573 = arith.constant 8 : index
    %482 = memref.load %arg3[%c8_573] : memref<16xi32, #tpu.memory_space<smem>>
    %c8_574 = arith.constant 8 : index
    %483 = memref.load %arg4[%c8_574] : memref<16xi32, #tpu.memory_space<smem>>
    %c1_i32_575 = arith.constant 1 : i32
    %c0_i32_576 = arith.constant 0 : i32
    %c1_i32_577 = arith.constant 1 : i32
    %c0_i32_578 = arith.constant 0 : i32
    %484 = tpu.memref_slice %arg7[%482, %c0_i32_578] : memref<16x128xf32, #tpu.memory_space<any>> -> memref<1x128xf32, #tpu.memory_space<any>>
    %c0_i32_579 = arith.constant 0 : i32
    %c0_i32_580 = arith.constant 0 : i32
    %485 = tpu.memref_slice %arg9[%c1_i32_575, %c0_i32_576, %c0_i32_579, %c0_i32_580] : memref<4x2x8x128xf32, #tpu.memory_space<vmem>> -> memref<1x1x1x128xf32, #tpu.memory_space<vmem>>
    %486 = tpu.memref_squeeze %485 : memref<1x1x1x128xf32, #tpu.memory_space<vmem>> -> memref<1x128xf32, #tpu.memory_space<vmem>>
    %487 = tpu.memref_slice %arg10[%c1_i32_577] : memref<4x!tpu.dma_semaphore, #tpu.memory_space<semaphore_mem>> -> memref<1x!tpu.dma_semaphore, #tpu.memory_space<semaphore_mem>>
    %488 = tpu.memref_squeeze %487 : memref<1x!tpu.dma_semaphore, #tpu.memory_space<semaphore_mem>> -> memref<!tpu.dma_semaphore, #tpu.memory_space<semaphore_mem>>
    tpu.enqueue_dma source(%484 : memref<1x128xf32, #tpu.memory_space<any>>) target(%486 : memref<1x128xf32, #tpu.memory_space<vmem>>) target_semaphore(%488 : memref<!tpu.dma_semaphore, #tpu.memory_space<semaphore_mem>>)
    %c1_i32_581 = arith.constant 1 : i32
    %c1_i32_582 = arith.constant 1 : i32
    %c1_i32_583 = arith.constant 1 : i32
    %c0_i32_584 = arith.constant 0 : i32
    %489 = tpu.memref_slice %arg7[%483, %c0_i32_584] : memref<16x128xf32, #tpu.memory_space<any>> -> memref<1x128xf32, #tpu.memory_space<any>>
    %c0_i32_585 = arith.constant 0 : i32
    %c0_i32_586 = arith.constant 0 : i32
    %490 = tpu.memref_slice %arg9[%c1_i32_581, %c1_i32_582, %c0_i32_585, %c0_i32_586] : memref<4x2x8x128xf32, #tpu.memory_space<vmem>> -> memref<1x1x1x128xf32, #tpu.memory_space<vmem>>
    %491 = tpu.memref_squeeze %490 : memref<1x1x1x128xf32, #tpu.memory_space<vmem>> -> memref<1x128xf32, #tpu.memory_space<vmem>>
    %492 = tpu.memref_slice %arg10[%c1_i32_583] : memref<4x!tpu.dma_semaphore, #tpu.memory_space<semaphore_mem>> -> memref<1x!tpu.dma_semaphore, #tpu.memory_space<semaphore_mem>>
    %493 = tpu.memref_squeeze %492 : memref<1x!tpu.dma_semaphore, #tpu.memory_space<semaphore_mem>> -> memref<!tpu.dma_semaphore, #tpu.memory_space<semaphore_mem>>
    tpu.enqueue_dma source(%489 : memref<1x128xf32, #tpu.memory_space<any>>) target(%491 : memref<1x128xf32, #tpu.memory_space<vmem>>) target_semaphore(%493 : memref<!tpu.dma_semaphore, #tpu.memory_space<semaphore_mem>>)
    %c9_587 = arith.constant 9 : index
    %494 = memref.load %arg3[%c9_587] : memref<16xi32, #tpu.memory_space<smem>>
    %c9_588 = arith.constant 9 : index
    %495 = memref.load %arg4[%c9_588] : memref<16xi32, #tpu.memory_space<smem>>
    %c1_i32_589 = arith.constant 1 : i32
    %c0_i32_590 = arith.constant 0 : i32
    %c1_i32_591 = arith.constant 1 : i32
    %c0_i32_592 = arith.constant 0 : i32
    %496 = tpu.memref_slice %arg7[%494, %c0_i32_592] : memref<16x128xf32, #tpu.memory_space<any>> -> memref<1x128xf32, #tpu.memory_space<any>>
    %c1_i32_593 = arith.constant 1 : i32
    %c0_i32_594 = arith.constant 0 : i32
    %497 = tpu.memref_slice %arg9[%c1_i32_589, %c0_i32_590, %c1_i32_593, %c0_i32_594] : memref<4x2x8x128xf32, #tpu.memory_space<vmem>> -> memref<1x1x1x128xf32, #tpu.memory_space<vmem>>
    %498 = tpu.memref_squeeze %497 : memref<1x1x1x128xf32, #tpu.memory_space<vmem>> -> memref<1x128xf32, #tpu.memory_space<vmem>>
    %499 = tpu.memref_slice %arg10[%c1_i32_591] : memref<4x!tpu.dma_semaphore, #tpu.memory_space<semaphore_mem>> -> memref<1x!tpu.dma_semaphore, #tpu.memory_space<semaphore_mem>>
    %500 = tpu.memref_squeeze %499 : memref<1x!tpu.dma_semaphore, #tpu.memory_space<semaphore_mem>> -> memref<!tpu.dma_semaphore, #tpu.memory_space<semaphore_mem>>
    tpu.enqueue_dma source(%496 : memref<1x128xf32, #tpu.memory_space<any>>) target(%498 : memref<1x128xf32, #tpu.memory_space<vmem>>) target_semaphore(%500 : memref<!tpu.dma_semaphore, #tpu.memory_space<semaphore_mem>>)
    %c1_i32_595 = arith.constant 1 : i32
    %c1_i32_596 = arith.constant 1 : i32
    %c1_i32_597 = arith.constant 1 : i32
    %c0_i32_598 = arith.constant 0 : i32
    %501 = tpu.memref_slice %arg7[%495, %c0_i32_598] : memref<16x128xf32, #tpu.memory_space<any>> -> memref<1x128xf32, #tpu.memory_space<any>>
    %c1_i32_599 = arith.constant 1 : i32
    %c0_i32_600 = arith.constant 0 : i32
    %502 = tpu.memref_slice %arg9[%c1_i32_595, %c1_i32_596, %c1_i32_599, %c0_i32_600] : memref<4x2x8x128xf32, #tpu.memory_space<vmem>> -> memref<1x1x1x128xf32, #tpu.memory_space<vmem>>
    %503 = tpu.memref_squeeze %502 : memref<1x1x1x128xf32, #tpu.memory_space<vmem>> -> memref<1x128xf32, #tpu.memory_space<vmem>>
    %504 = tpu.memref_slice %arg10[%c1_i32_597] : memref<4x!tpu.dma_semaphore, #tpu.memory_space<semaphore_mem>> -> memref<1x!tpu.dma_semaphore, #tpu.memory_space<semaphore_mem>>
    %505 = tpu.memref_squeeze %504 : memref<1x!tpu.dma_semaphore, #tpu.memory_space<semaphore_mem>> -> memref<!tpu.dma_semaphore, #tpu.memory_space<semaphore_mem>>
    tpu.enqueue_dma source(%501 : memref<1x128xf32, #tpu.memory_space<any>>) target(%503 : memref<1x128xf32, #tpu.memory_space<vmem>>) target_semaphore(%505 : memref<!tpu.dma_semaphore, #tpu.memory_space<semaphore_mem>>)
    %c10_601 = arith.constant 10 : index
    %506 = memref.load %arg3[%c10_601] : memref<16xi32, #tpu.memory_space<smem>>
    %c10_602 = arith.constant 10 : index
    %507 = memref.load %arg4[%c10_602] : memref<16xi32, #tpu.memory_space<smem>>
    %c1_i32_603 = arith.constant 1 : i32
    %c0_i32_604 = arith.constant 0 : i32
    %c1_i32_605 = arith.constant 1 : i32
    %c0_i32_606 = arith.constant 0 : i32
    %508 = tpu.memref_slice %arg7[%506, %c0_i32_606] : memref<16x128xf32, #tpu.memory_space<any>> -> memref<1x128xf32, #tpu.memory_space<any>>
    %c2_i32_607 = arith.constant 2 : i32
    %c0_i32_608 = arith.constant 0 : i32
    %509 = tpu.memref_slice %arg9[%c1_i32_603, %c0_i32_604, %c2_i32_607, %c0_i32_608] : memref<4x2x8x128xf32, #tpu.memory_space<vmem>> -> memref<1x1x1x128xf32, #tpu.memory_space<vmem>>
    %510 = tpu.memref_squeeze %509 : memref<1x1x1x128xf32, #tpu.memory_space<vmem>> -> memref<1x128xf32, #tpu.memory_space<vmem>>
    %511 = tpu.memref_slice %arg10[%c1_i32_605] : memref<4x!tpu.dma_semaphore, #tpu.memory_space<semaphore_mem>> -> memref<1x!tpu.dma_semaphore, #tpu.memory_space<semaphore_mem>>
    %512 = tpu.memref_squeeze %511 : memref<1x!tpu.dma_semaphore, #tpu.memory_space<semaphore_mem>> -> memref<!tpu.dma_semaphore, #tpu.memory_space<semaphore_mem>>
    tpu.enqueue_dma source(%508 : memref<1x128xf32, #tpu.memory_space<any>>) target(%510 : memref<1x128xf32, #tpu.memory_space<vmem>>) target_semaphore(%512 : memref<!tpu.dma_semaphore, #tpu.memory_space<semaphore_mem>>)
    %c1_i32_609 = arith.constant 1 : i32
    %c1_i32_610 = arith.constant 1 : i32
    %c1_i32_611 = arith.constant 1 : i32
    %c0_i32_612 = arith.constant 0 : i32
    %513 = tpu.memref_slice %arg7[%507, %c0_i32_612] : memref<16x128xf32, #tpu.memory_space<any>> -> memref<1x128xf32, #tpu.memory_space<any>>
    %c2_i32_613 = arith.constant 2 : i32
    %c0_i32_614 = arith.constant 0 : i32
    %514 = tpu.memref_slice %arg9[%c1_i32_609, %c1_i32_610, %c2_i32_613, %c0_i32_614] : memref<4x2x8x128xf32, #tpu.memory_space<vmem>> -> memref<1x1x1x128xf32, #tpu.memory_space<vmem>>
    %515 = tpu.memref_squeeze %514 : memref<1x1x1x128xf32, #tpu.memory_space<vmem>> -> memref<1x128xf32, #tpu.memory_space<vmem>>
    %516 = tpu.memref_slice %arg10[%c1_i32_611] : memref<4x!tpu.dma_semaphore, #tpu.memory_space<semaphore_mem>> -> memref<1x!tpu.dma_semaphore, #tpu.memory_space<semaphore_mem>>
    %517 = tpu.memref_squeeze %516 : memref<1x!tpu.dma_semaphore, #tpu.memory_space<semaphore_mem>> -> memref<!tpu.dma_semaphore, #tpu.memory_space<semaphore_mem>>
    tpu.enqueue_dma source(%513 : memref<1x128xf32, #tpu.memory_space<any>>) target(%515 : memref<1x128xf32, #tpu.memory_space<vmem>>) target_semaphore(%517 : memref<!tpu.dma_semaphore, #tpu.memory_space<semaphore_mem>>)
    %c11_615 = arith.constant 11 : index
    %518 = memref.load %arg3[%c11_615] : memref<16xi32, #tpu.memory_space<smem>>
    %c11_616 = arith.constant 11 : index
    %519 = memref.load %arg4[%c11_616] : memref<16xi32, #tpu.memory_space<smem>>
    %c1_i32_617 = arith.constant 1 : i32
    %c0_i32_618 = arith.constant 0 : i32
    %c1_i32_619 = arith.constant 1 : i32
    %c0_i32_620 = arith.constant 0 : i32
    %520 = tpu.memref_slice %arg7[%518, %c0_i32_620] : memref<16x128xf32, #tpu.memory_space<any>> -> memref<1x128xf32, #tpu.memory_space<any>>
    %c3_i32_621 = arith.constant 3 : i32
    %c0_i32_622 = arith.constant 0 : i32
    %521 = tpu.memref_slice %arg9[%c1_i32_617, %c0_i32_618, %c3_i32_621, %c0_i32_622] : memref<4x2x8x128xf32, #tpu.memory_space<vmem>> -> memref<1x1x1x128xf32, #tpu.memory_space<vmem>>
    %522 = tpu.memref_squeeze %521 : memref<1x1x1x128xf32, #tpu.memory_space<vmem>> -> memref<1x128xf32, #tpu.memory_space<vmem>>
    %523 = tpu.memref_slice %arg10[%c1_i32_619] : memref<4x!tpu.dma_semaphore, #tpu.memory_space<semaphore_mem>> -> memref<1x!tpu.dma_semaphore, #tpu.memory_space<semaphore_mem>>
    %524 = tpu.memref_squeeze %523 : memref<1x!tpu.dma_semaphore, #tpu.memory_space<semaphore_mem>> -> memref<!tpu.dma_semaphore, #tpu.memory_space<semaphore_mem>>
    tpu.enqueue_dma source(%520 : memref<1x128xf32, #tpu.memory_space<any>>) target(%522 : memref<1x128xf32, #tpu.memory_space<vmem>>) target_semaphore(%524 : memref<!tpu.dma_semaphore, #tpu.memory_space<semaphore_mem>>)
    %c1_i32_623 = arith.constant 1 : i32
    %c1_i32_624 = arith.constant 1 : i32
    %c1_i32_625 = arith.constant 1 : i32
    %c0_i32_626 = arith.constant 0 : i32
    %525 = tpu.memref_slice %arg7[%519, %c0_i32_626] : memref<16x128xf32, #tpu.memory_space<any>> -> memref<1x128xf32, #tpu.memory_space<any>>
    %c3_i32_627 = arith.constant 3 : i32
    %c0_i32_628 = arith.constant 0 : i32
    %526 = tpu.memref_slice %arg9[%c1_i32_623, %c1_i32_624, %c3_i32_627, %c0_i32_628] : memref<4x2x8x128xf32, #tpu.memory_space<vmem>> -> memref<1x1x1x128xf32, #tpu.memory_space<vmem>>
    %527 = tpu.memref_squeeze %526 : memref<1x1x1x128xf32, #tpu.memory_space<vmem>> -> memref<1x128xf32, #tpu.memory_space<vmem>>
    %528 = tpu.memref_slice %arg10[%c1_i32_625] : memref<4x!tpu.dma_semaphore, #tpu.memory_space<semaphore_mem>> -> memref<1x!tpu.dma_semaphore, #tpu.memory_space<semaphore_mem>>
    %529 = tpu.memref_squeeze %528 : memref<1x!tpu.dma_semaphore, #tpu.memory_space<semaphore_mem>> -> memref<!tpu.dma_semaphore, #tpu.memory_space<semaphore_mem>>
    tpu.enqueue_dma source(%525 : memref<1x128xf32, #tpu.memory_space<any>>) target(%527 : memref<1x128xf32, #tpu.memory_space<vmem>>) target_semaphore(%529 : memref<!tpu.dma_semaphore, #tpu.memory_space<semaphore_mem>>)
    %c12_629 = arith.constant 12 : index
    %530 = memref.load %arg3[%c12_629] : memref<16xi32, #tpu.memory_space<smem>>
    %c12_630 = arith.constant 12 : index
    %531 = memref.load %arg4[%c12_630] : memref<16xi32, #tpu.memory_space<smem>>
    %c1_i32_631 = arith.constant 1 : i32
    %c0_i32_632 = arith.constant 0 : i32
    %c1_i32_633 = arith.constant 1 : i32
    %c0_i32_634 = arith.constant 0 : i32
    %532 = tpu.memref_slice %arg7[%530, %c0_i32_634] : memref<16x128xf32, #tpu.memory_space<any>> -> memref<1x128xf32, #tpu.memory_space<any>>
    %c4_i32_635 = arith.constant 4 : i32
    %c0_i32_636 = arith.constant 0 : i32
    %533 = tpu.memref_slice %arg9[%c1_i32_631, %c0_i32_632, %c4_i32_635, %c0_i32_636] : memref<4x2x8x128xf32, #tpu.memory_space<vmem>> -> memref<1x1x1x128xf32, #tpu.memory_space<vmem>>
    %534 = tpu.memref_squeeze %533 : memref<1x1x1x128xf32, #tpu.memory_space<vmem>> -> memref<1x128xf32, #tpu.memory_space<vmem>>
    %535 = tpu.memref_slice %arg10[%c1_i32_633] : memref<4x!tpu.dma_semaphore, #tpu.memory_space<semaphore_mem>> -> memref<1x!tpu.dma_semaphore, #tpu.memory_space<semaphore_mem>>
    %536 = tpu.memref_squeeze %535 : memref<1x!tpu.dma_semaphore, #tpu.memory_space<semaphore_mem>> -> memref<!tpu.dma_semaphore, #tpu.memory_space<semaphore_mem>>
    tpu.enqueue_dma source(%532 : memref<1x128xf32, #tpu.memory_space<any>>) target(%534 : memref<1x128xf32, #tpu.memory_space<vmem>>) target_semaphore(%536 : memref<!tpu.dma_semaphore, #tpu.memory_space<semaphore_mem>>)
    %c1_i32_637 = arith.constant 1 : i32
    %c1_i32_638 = arith.constant 1 : i32
    %c1_i32_639 = arith.constant 1 : i32
    %c0_i32_640 = arith.constant 0 : i32
    %537 = tpu.memref_slice %arg7[%531, %c0_i32_640] : memref<16x128xf32, #tpu.memory_space<any>> -> memref<1x128xf32, #tpu.memory_space<any>>
    %c4_i32_641 = arith.constant 4 : i32
    %c0_i32_642 = arith.constant 0 : i32
    %538 = tpu.memref_slice %arg9[%c1_i32_637, %c1_i32_638, %c4_i32_641, %c0_i32_642] : memref<4x2x8x128xf32, #tpu.memory_space<vmem>> -> memref<1x1x1x128xf32, #tpu.memory_space<vmem>>
    %539 = tpu.memref_squeeze %538 : memref<1x1x1x128xf32, #tpu.memory_space<vmem>> -> memref<1x128xf32, #tpu.memory_space<vmem>>
    %540 = tpu.memref_slice %arg10[%c1_i32_639] : memref<4x!tpu.dma_semaphore, #tpu.memory_space<semaphore_mem>> -> memref<1x!tpu.dma_semaphore, #tpu.memory_space<semaphore_mem>>
    %541 = tpu.memref_squeeze %540 : memref<1x!tpu.dma_semaphore, #tpu.memory_space<semaphore_mem>> -> memref<!tpu.dma_semaphore, #tpu.memory_space<semaphore_mem>>
    tpu.enqueue_dma source(%537 : memref<1x128xf32, #tpu.memory_space<any>>) target(%539 : memref<1x128xf32, #tpu.memory_space<vmem>>) target_semaphore(%541 : memref<!tpu.dma_semaphore, #tpu.memory_space<semaphore_mem>>)
    %c13_643 = arith.constant 13 : index
    %542 = memref.load %arg3[%c13_643] : memref<16xi32, #tpu.memory_space<smem>>
    %c13_644 = arith.constant 13 : index
    %543 = memref.load %arg4[%c13_644] : memref<16xi32, #tpu.memory_space<smem>>
    %c1_i32_645 = arith.constant 1 : i32
    %c0_i32_646 = arith.constant 0 : i32
    %c1_i32_647 = arith.constant 1 : i32
    %c0_i32_648 = arith.constant 0 : i32
    %544 = tpu.memref_slice %arg7[%542, %c0_i32_648] : memref<16x128xf32, #tpu.memory_space<any>> -> memref<1x128xf32, #tpu.memory_space<any>>
    %c5_i32_649 = arith.constant 5 : i32
    %c0_i32_650 = arith.constant 0 : i32
    %545 = tpu.memref_slice %arg9[%c1_i32_645, %c0_i32_646, %c5_i32_649, %c0_i32_650] : memref<4x2x8x128xf32, #tpu.memory_space<vmem>> -> memref<1x1x1x128xf32, #tpu.memory_space<vmem>>
    %546 = tpu.memref_squeeze %545 : memref<1x1x1x128xf32, #tpu.memory_space<vmem>> -> memref<1x128xf32, #tpu.memory_space<vmem>>
    %547 = tpu.memref_slice %arg10[%c1_i32_647] : memref<4x!tpu.dma_semaphore, #tpu.memory_space<semaphore_mem>> -> memref<1x!tpu.dma_semaphore, #tpu.memory_space<semaphore_mem>>
    %548 = tpu.memref_squeeze %547 : memref<1x!tpu.dma_semaphore, #tpu.memory_space<semaphore_mem>> -> memref<!tpu.dma_semaphore, #tpu.memory_space<semaphore_mem>>
    tpu.enqueue_dma source(%544 : memref<1x128xf32, #tpu.memory_space<any>>) target(%546 : memref<1x128xf32, #tpu.memory_space<vmem>>) target_semaphore(%548 : memref<!tpu.dma_semaphore, #tpu.memory_space<semaphore_mem>>)
    %c1_i32_651 = arith.constant 1 : i32
    %c1_i32_652 = arith.constant 1 : i32
    %c1_i32_653 = arith.constant 1 : i32
    %c0_i32_654 = arith.constant 0 : i32
    %549 = tpu.memref_slice %arg7[%543, %c0_i32_654] : memref<16x128xf32, #tpu.memory_space<any>> -> memref<1x128xf32, #tpu.memory_space<any>>
    %c5_i32_655 = arith.constant 5 : i32
    %c0_i32_656 = arith.constant 0 : i32
    %550 = tpu.memref_slice %arg9[%c1_i32_651, %c1_i32_652, %c5_i32_655, %c0_i32_656] : memref<4x2x8x128xf32, #tpu.memory_space<vmem>> -> memref<1x1x1x128xf32, #tpu.memory_space<vmem>>
    %551 = tpu.memref_squeeze %550 : memref<1x1x1x128xf32, #tpu.memory_space<vmem>> -> memref<1x128xf32, #tpu.memory_space<vmem>>
    %552 = tpu.memref_slice %arg10[%c1_i32_653] : memref<4x!tpu.dma_semaphore, #tpu.memory_space<semaphore_mem>> -> memref<1x!tpu.dma_semaphore, #tpu.memory_space<semaphore_mem>>
    %553 = tpu.memref_squeeze %552 : memref<1x!tpu.dma_semaphore, #tpu.memory_space<semaphore_mem>> -> memref<!tpu.dma_semaphore, #tpu.memory_space<semaphore_mem>>
    tpu.enqueue_dma source(%549 : memref<1x128xf32, #tpu.memory_space<any>>) target(%551 : memref<1x128xf32, #tpu.memory_space<vmem>>) target_semaphore(%553 : memref<!tpu.dma_semaphore, #tpu.memory_space<semaphore_mem>>)
    %c14_657 = arith.constant 14 : index
    %554 = memref.load %arg3[%c14_657] : memref<16xi32, #tpu.memory_space<smem>>
    %c14_658 = arith.constant 14 : index
    %555 = memref.load %arg4[%c14_658] : memref<16xi32, #tpu.memory_space<smem>>
    %c1_i32_659 = arith.constant 1 : i32
    %c0_i32_660 = arith.constant 0 : i32
    %c1_i32_661 = arith.constant 1 : i32
    %c0_i32_662 = arith.constant 0 : i32
    %556 = tpu.memref_slice %arg7[%554, %c0_i32_662] : memref<16x128xf32, #tpu.memory_space<any>> -> memref<1x128xf32, #tpu.memory_space<any>>
    %c6_i32_663 = arith.constant 6 : i32
    %c0_i32_664 = arith.constant 0 : i32
    %557 = tpu.memref_slice %arg9[%c1_i32_659, %c0_i32_660, %c6_i32_663, %c0_i32_664] : memref<4x2x8x128xf32, #tpu.memory_space<vmem>> -> memref<1x1x1x128xf32, #tpu.memory_space<vmem>>
    %558 = tpu.memref_squeeze %557 : memref<1x1x1x128xf32, #tpu.memory_space<vmem>> -> memref<1x128xf32, #tpu.memory_space<vmem>>
    %559 = tpu.memref_slice %arg10[%c1_i32_661] : memref<4x!tpu.dma_semaphore, #tpu.memory_space<semaphore_mem>> -> memref<1x!tpu.dma_semaphore, #tpu.memory_space<semaphore_mem>>
    %560 = tpu.memref_squeeze %559 : memref<1x!tpu.dma_semaphore, #tpu.memory_space<semaphore_mem>> -> memref<!tpu.dma_semaphore, #tpu.memory_space<semaphore_mem>>
    tpu.enqueue_dma source(%556 : memref<1x128xf32, #tpu.memory_space<any>>) target(%558 : memref<1x128xf32, #tpu.memory_space<vmem>>) target_semaphore(%560 : memref<!tpu.dma_semaphore, #tpu.memory_space<semaphore_mem>>)
    %c1_i32_665 = arith.constant 1 : i32
    %c1_i32_666 = arith.constant 1 : i32
    %c1_i32_667 = arith.constant 1 : i32
    %c0_i32_668 = arith.constant 0 : i32
    %561 = tpu.memref_slice %arg7[%555, %c0_i32_668] : memref<16x128xf32, #tpu.memory_space<any>> -> memref<1x128xf32, #tpu.memory_space<any>>
    %c6_i32_669 = arith.constant 6 : i32
    %c0_i32_670 = arith.constant 0 : i32
    %562 = tpu.memref_slice %arg9[%c1_i32_665, %c1_i32_666, %c6_i32_669, %c0_i32_670] : memref<4x2x8x128xf32, #tpu.memory_space<vmem>> -> memref<1x1x1x128xf32, #tpu.memory_space<vmem>>
    %563 = tpu.memref_squeeze %562 : memref<1x1x1x128xf32, #tpu.memory_space<vmem>> -> memref<1x128xf32, #tpu.memory_space<vmem>>
    %564 = tpu.memref_slice %arg10[%c1_i32_667] : memref<4x!tpu.dma_semaphore, #tpu.memory_space<semaphore_mem>> -> memref<1x!tpu.dma_semaphore, #tpu.memory_space<semaphore_mem>>
    %565 = tpu.memref_squeeze %564 : memref<1x!tpu.dma_semaphore, #tpu.memory_space<semaphore_mem>> -> memref<!tpu.dma_semaphore, #tpu.memory_space<semaphore_mem>>
    tpu.enqueue_dma source(%561 : memref<1x128xf32, #tpu.memory_space<any>>) target(%563 : memref<1x128xf32, #tpu.memory_space<vmem>>) target_semaphore(%565 : memref<!tpu.dma_semaphore, #tpu.memory_space<semaphore_mem>>)
    %c15_671 = arith.constant 15 : index
    %566 = memref.load %arg3[%c15_671] : memref<16xi32, #tpu.memory_space<smem>>
    %c15_672 = arith.constant 15 : index
    %567 = memref.load %arg4[%c15_672] : memref<16xi32, #tpu.memory_space<smem>>
    %c1_i32_673 = arith.constant 1 : i32
    %c0_i32_674 = arith.constant 0 : i32
    %c1_i32_675 = arith.constant 1 : i32
    %c0_i32_676 = arith.constant 0 : i32
    %568 = tpu.memref_slice %arg7[%566, %c0_i32_676] : memref<16x128xf32, #tpu.memory_space<any>> -> memref<1x128xf32, #tpu.memory_space<any>>
    %c7_i32_677 = arith.constant 7 : i32
    %c0_i32_678 = arith.constant 0 : i32
    %569 = tpu.memref_slice %arg9[%c1_i32_673, %c0_i32_674, %c7_i32_677, %c0_i32_678] : memref<4x2x8x128xf32, #tpu.memory_space<vmem>> -> memref<1x1x1x128xf32, #tpu.memory_space<vmem>>
    %570 = tpu.memref_squeeze %569 : memref<1x1x1x128xf32, #tpu.memory_space<vmem>> -> memref<1x128xf32, #tpu.memory_space<vmem>>
    %571 = tpu.memref_slice %arg10[%c1_i32_675] : memref<4x!tpu.dma_semaphore, #tpu.memory_space<semaphore_mem>> -> memref<1x!tpu.dma_semaphore, #tpu.memory_space<semaphore_mem>>
    %572 = tpu.memref_squeeze %571 : memref<1x!tpu.dma_semaphore, #tpu.memory_space<semaphore_mem>> -> memref<!tpu.dma_semaphore, #tpu.memory_space<semaphore_mem>>
    tpu.enqueue_dma source(%568 : memref<1x128xf32, #tpu.memory_space<any>>) target(%570 : memref<1x128xf32, #tpu.memory_space<vmem>>) target_semaphore(%572 : memref<!tpu.dma_semaphore, #tpu.memory_space<semaphore_mem>>)
    %c1_i32_679 = arith.constant 1 : i32
    %c1_i32_680 = arith.constant 1 : i32
    %c1_i32_681 = arith.constant 1 : i32
    %c0_i32_682 = arith.constant 0 : i32
    %573 = tpu.memref_slice %arg7[%567, %c0_i32_682] : memref<16x128xf32, #tpu.memory_space<any>> -> memref<1x128xf32, #tpu.memory_space<any>>
    %c7_i32_683 = arith.constant 7 : i32
    %c0_i32_684 = arith.constant 0 : i32
    %574 = tpu.memref_slice %arg9[%c1_i32_679, %c1_i32_680, %c7_i32_683, %c0_i32_684] : memref<4x2x8x128xf32, #tpu.memory_space<vmem>> -> memref<1x1x1x128xf32, #tpu.memory_space<vmem>>
    %575 = tpu.memref_squeeze %574 : memref<1x1x1x128xf32, #tpu.memory_space<vmem>> -> memref<1x128xf32, #tpu.memory_space<vmem>>
    %576 = tpu.memref_slice %arg10[%c1_i32_681] : memref<4x!tpu.dma_semaphore, #tpu.memory_space<semaphore_mem>> -> memref<1x!tpu.dma_semaphore, #tpu.memory_space<semaphore_mem>>
    %577 = tpu.memref_squeeze %576 : memref<1x!tpu.dma_semaphore, #tpu.memory_space<semaphore_mem>> -> memref<!tpu.dma_semaphore, #tpu.memory_space<semaphore_mem>>
    tpu.enqueue_dma source(%573 : memref<1x128xf32, #tpu.memory_space<any>>) target(%575 : memref<1x128xf32, #tpu.memory_space<vmem>>) target_semaphore(%577 : memref<!tpu.dma_semaphore, #tpu.memory_space<semaphore_mem>>)
    %c0_i32_685 = arith.constant 0 : i32
    %c0_i32_686 = arith.constant 0 : i32
    %c0_i32_687 = arith.constant 0 : i32
    %c0_i32_688 = arith.constant 0 : i32
    %c0_i32_689 = arith.constant 0 : i32
    %578 = tpu.memref_slice %arg7[%c0_i32_688, %c0_i32_689] : memref<16x128xf32, #tpu.memory_space<any>> -> memref<1x128xf32, #tpu.memory_space<any>>
    %c0_i32_690 = arith.constant 0 : i32
    %c0_i32_691 = arith.constant 0 : i32
    %579 = tpu.memref_slice %arg9[%c0_i32_685, %c0_i32_686, %c0_i32_690, %c0_i32_691] : memref<4x2x8x128xf32, #tpu.memory_space<vmem>> -> memref<1x1x1x128xf32, #tpu.memory_space<vmem>>
    %580 = tpu.memref_squeeze %579 : memref<1x1x1x128xf32, #tpu.memory_space<vmem>> -> memref<1x128xf32, #tpu.memory_space<vmem>>
    %581 = tpu.memref_slice %arg10[%c0_i32_687] : memref<4x!tpu.dma_semaphore, #tpu.memory_space<semaphore_mem>> -> memref<1x!tpu.dma_semaphore, #tpu.memory_space<semaphore_mem>>
    %582 = tpu.memref_squeeze %581 : memref<1x!tpu.dma_semaphore, #tpu.memory_space<semaphore_mem>> -> memref<!tpu.dma_semaphore, #tpu.memory_space<semaphore_mem>>
    tpu.wait_dma2 semaphore(%582 : memref<!tpu.dma_semaphore, #tpu.memory_space<semaphore_mem>>) src(%578 : memref<1x128xf32, #tpu.memory_space<any>>) dst(%580 : memref<1x128xf32, #tpu.memory_space<vmem>>)
    %c0_i32_692 = arith.constant 0 : i32
    %c1_i32_693 = arith.constant 1 : i32
    %c0_i32_694 = arith.constant 0 : i32
    %c0_i32_695 = arith.constant 0 : i32
    %c0_i32_696 = arith.constant 0 : i32
    %583 = tpu.memref_slice %arg7[%c0_i32_695, %c0_i32_696] : memref<16x128xf32, #tpu.memory_space<any>> -> memref<1x128xf32, #tpu.memory_space<any>>
    %c0_i32_697 = arith.constant 0 : i32
    %c0_i32_698 = arith.constant 0 : i32
    %584 = tpu.memref_slice %arg9[%c0_i32_692, %c1_i32_693, %c0_i32_697, %c0_i32_698] : memref<4x2x8x128xf32, #tpu.memory_space<vmem>> -> memref<1x1x1x128xf32, #tpu.memory_space<vmem>>
    %585 = tpu.memref_squeeze %584 : memref<1x1x1x128xf32, #tpu.memory_space<vmem>> -> memref<1x128xf32, #tpu.memory_space<vmem>>
    %586 = tpu.memref_slice %arg10[%c0_i32_694] : memref<4x!tpu.dma_semaphore, #tpu.memory_space<semaphore_mem>> -> memref<1x!tpu.dma_semaphore, #tpu.memory_space<semaphore_mem>>
    %587 = tpu.memref_squeeze %586 : memref<1x!tpu.dma_semaphore, #tpu.memory_space<semaphore_mem>> -> memref<!tpu.dma_semaphore, #tpu.memory_space<semaphore_mem>>
    tpu.wait_dma2 semaphore(%587 : memref<!tpu.dma_semaphore, #tpu.memory_space<semaphore_mem>>) src(%583 : memref<1x128xf32, #tpu.memory_space<any>>) dst(%585 : memref<1x128xf32, #tpu.memory_space<vmem>>)
    %c0_i32_699 = arith.constant 0 : i32
    %c0_i32_700 = arith.constant 0 : i32
    %c0_i32_701 = arith.constant 0 : i32
    %c0_i32_702 = arith.constant 0 : i32
    %c0_i32_703 = arith.constant 0 : i32
    %588 = tpu.memref_slice %arg7[%c0_i32_702, %c0_i32_703] : memref<16x128xf32, #tpu.memory_space<any>> -> memref<1x128xf32, #tpu.memory_space<any>>
    %c1_i32_704 = arith.constant 1 : i32
    %c0_i32_705 = arith.constant 0 : i32
    %589 = tpu.memref_slice %arg9[%c0_i32_699, %c0_i32_700, %c1_i32_704, %c0_i32_705] : memref<4x2x8x128xf32, #tpu.memory_space<vmem>> -> memref<1x1x1x128xf32, #tpu.memory_space<vmem>>
    %590 = tpu.memref_squeeze %589 : memref<1x1x1x128xf32, #tpu.memory_space<vmem>> -> memref<1x128xf32, #tpu.memory_space<vmem>>
    %591 = tpu.memref_slice %arg10[%c0_i32_701] : memref<4x!tpu.dma_semaphore, #tpu.memory_space<semaphore_mem>> -> memref<1x!tpu.dma_semaphore, #tpu.memory_space<semaphore_mem>>
    %592 = tpu.memref_squeeze %591 : memref<1x!tpu.dma_semaphore, #tpu.memory_space<semaphore_mem>> -> memref<!tpu.dma_semaphore, #tpu.memory_space<semaphore_mem>>
    tpu.wait_dma2 semaphore(%592 : memref<!tpu.dma_semaphore, #tpu.memory_space<semaphore_mem>>) src(%588 : memref<1x128xf32, #tpu.memory_space<any>>) dst(%590 : memref<1x128xf32, #tpu.memory_space<vmem>>)
    %c0_i32_706 = arith.constant 0 : i32
    %c1_i32_707 = arith.constant 1 : i32
    %c0_i32_708 = arith.constant 0 : i32
    %c0_i32_709 = arith.constant 0 : i32
    %c0_i32_710 = arith.constant 0 : i32
    %593 = tpu.memref_slice %arg7[%c0_i32_709, %c0_i32_710] : memref<16x128xf32, #tpu.memory_space<any>> -> memref<1x128xf32, #tpu.memory_space<any>>
    %c1_i32_711 = arith.constant 1 : i32
    %c0_i32_712 = arith.constant 0 : i32
    %594 = tpu.memref_slice %arg9[%c0_i32_706, %c1_i32_707, %c1_i32_711, %c0_i32_712] : memref<4x2x8x128xf32, #tpu.memory_space<vmem>> -> memref<1x1x1x128xf32, #tpu.memory_space<vmem>>
    %595 = tpu.memref_squeeze %594 : memref<1x1x1x128xf32, #tpu.memory_space<vmem>> -> memref<1x128xf32, #tpu.memory_space<vmem>>
    %596 = tpu.memref_slice %arg10[%c0_i32_708] : memref<4x!tpu.dma_semaphore, #tpu.memory_space<semaphore_mem>> -> memref<1x!tpu.dma_semaphore, #tpu.memory_space<semaphore_mem>>
    %597 = tpu.memref_squeeze %596 : memref<1x!tpu.dma_semaphore, #tpu.memory_space<semaphore_mem>> -> memref<!tpu.dma_semaphore, #tpu.memory_space<semaphore_mem>>
    tpu.wait_dma2 semaphore(%597 : memref<!tpu.dma_semaphore, #tpu.memory_space<semaphore_mem>>) src(%593 : memref<1x128xf32, #tpu.memory_space<any>>) dst(%595 : memref<1x128xf32, #tpu.memory_space<vmem>>)
    %c0_i32_713 = arith.constant 0 : i32
    %c0_i32_714 = arith.constant 0 : i32
    %c0_i32_715 = arith.constant 0 : i32
    %c0_i32_716 = arith.constant 0 : i32
    %c0_i32_717 = arith.constant 0 : i32
    %598 = tpu.memref_slice %arg7[%c0_i32_716, %c0_i32_717] : memref<16x128xf32, #tpu.memory_space<any>> -> memref<1x128xf32, #tpu.memory_space<any>>
    %c2_i32_718 = arith.constant 2 : i32
    %c0_i32_719 = arith.constant 0 : i32
    %599 = tpu.memref_slice %arg9[%c0_i32_713, %c0_i32_714, %c2_i32_718, %c0_i32_719] : memref<4x2x8x128xf32, #tpu.memory_space<vmem>> -> memref<1x1x1x128xf32, #tpu.memory_space<vmem>>
    %600 = tpu.memref_squeeze %599 : memref<1x1x1x128xf32, #tpu.memory_space<vmem>> -> memref<1x128xf32, #tpu.memory_space<vmem>>
    %601 = tpu.memref_slice %arg10[%c0_i32_715] : memref<4x!tpu.dma_semaphore, #tpu.memory_space<semaphore_mem>> -> memref<1x!tpu.dma_semaphore, #tpu.memory_space<semaphore_mem>>
    %602 = tpu.memref_squeeze %601 : memref<1x!tpu.dma_semaphore, #tpu.memory_space<semaphore_mem>> -> memref<!tpu.dma_semaphore, #tpu.memory_space<semaphore_mem>>
    tpu.wait_dma2 semaphore(%602 : memref<!tpu.dma_semaphore, #tpu.memory_space<semaphore_mem>>) src(%598 : memref<1x128xf32, #tpu.memory_space<any>>) dst(%600 : memref<1x128xf32, #tpu.memory_space<vmem>>)
    %c0_i32_720 = arith.constant 0 : i32
    %c1_i32_721 = arith.constant 1 : i32
    %c0_i32_722 = arith.constant 0 : i32
    %c0_i32_723 = arith.constant 0 : i32
    %c0_i32_724 = arith.constant 0 : i32
    %603 = tpu.memref_slice %arg7[%c0_i32_723, %c0_i32_724] : memref<16x128xf32, #tpu.memory_space<any>> -> memref<1x128xf32, #tpu.memory_space<any>>
    %c2_i32_725 = arith.constant 2 : i32
    %c0_i32_726 = arith.constant 0 : i32
    %604 = tpu.memref_slice %arg9[%c0_i32_720, %c1_i32_721, %c2_i32_725, %c0_i32_726] : memref<4x2x8x128xf32, #tpu.memory_space<vmem>> -> memref<1x1x1x128xf32, #tpu.memory_space<vmem>>
    %605 = tpu.memref_squeeze %604 : memref<1x1x1x128xf32, #tpu.memory_space<vmem>> -> memref<1x128xf32, #tpu.memory_space<vmem>>
    %606 = tpu.memref_slice %arg10[%c0_i32_722] : memref<4x!tpu.dma_semaphore, #tpu.memory_space<semaphore_mem>> -> memref<1x!tpu.dma_semaphore, #tpu.memory_space<semaphore_mem>>
    %607 = tpu.memref_squeeze %606 : memref<1x!tpu.dma_semaphore, #tpu.memory_space<semaphore_mem>> -> memref<!tpu.dma_semaphore, #tpu.memory_space<semaphore_mem>>
    tpu.wait_dma2 semaphore(%607 : memref<!tpu.dma_semaphore, #tpu.memory_space<semaphore_mem>>) src(%603 : memref<1x128xf32, #tpu.memory_space<any>>) dst(%605 : memref<1x128xf32, #tpu.memory_space<vmem>>)
    %c0_i32_727 = arith.constant 0 : i32
    %c0_i32_728 = arith.constant 0 : i32
    %c0_i32_729 = arith.constant 0 : i32
    %c0_i32_730 = arith.constant 0 : i32
    %c0_i32_731 = arith.constant 0 : i32
    %608 = tpu.memref_slice %arg7[%c0_i32_730, %c0_i32_731] : memref<16x128xf32, #tpu.memory_space<any>> -> memref<1x128xf32, #tpu.memory_space<any>>
    %c3_i32_732 = arith.constant 3 : i32
    %c0_i32_733 = arith.constant 0 : i32
    %609 = tpu.memref_slice %arg9[%c0_i32_727, %c0_i32_728, %c3_i32_732, %c0_i32_733] : memref<4x2x8x128xf32, #tpu.memory_space<vmem>> -> memref<1x1x1x128xf32, #tpu.memory_space<vmem>>
    %610 = tpu.memref_squeeze %609 : memref<1x1x1x128xf32, #tpu.memory_space<vmem>> -> memref<1x128xf32, #tpu.memory_space<vmem>>
    %611 = tpu.memref_slice %arg10[%c0_i32_729] : memref<4x!tpu.dma_semaphore, #tpu.memory_space<semaphore_mem>> -> memref<1x!tpu.dma_semaphore, #tpu.memory_space<semaphore_mem>>
    %612 = tpu.memref_squeeze %611 : memref<1x!tpu.dma_semaphore, #tpu.memory_space<semaphore_mem>> -> memref<!tpu.dma_semaphore, #tpu.memory_space<semaphore_mem>>
    tpu.wait_dma2 semaphore(%612 : memref<!tpu.dma_semaphore, #tpu.memory_space<semaphore_mem>>) src(%608 : memref<1x128xf32, #tpu.memory_space<any>>) dst(%610 : memref<1x128xf32, #tpu.memory_space<vmem>>)
    %c0_i32_734 = arith.constant 0 : i32
    %c1_i32_735 = arith.constant 1 : i32
    %c0_i32_736 = arith.constant 0 : i32
    %c0_i32_737 = arith.constant 0 : i32
    %c0_i32_738 = arith.constant 0 : i32
    %613 = tpu.memref_slice %arg7[%c0_i32_737, %c0_i32_738] : memref<16x128xf32, #tpu.memory_space<any>> -> memref<1x128xf32, #tpu.memory_space<any>>
    %c3_i32_739 = arith.constant 3 : i32
    %c0_i32_740 = arith.constant 0 : i32
    %614 = tpu.memref_slice %arg9[%c0_i32_734, %c1_i32_735, %c3_i32_739, %c0_i32_740] : memref<4x2x8x128xf32, #tpu.memory_space<vmem>> -> memref<1x1x1x128xf32, #tpu.memory_space<vmem>>
    %615 = tpu.memref_squeeze %614 : memref<1x1x1x128xf32, #tpu.memory_space<vmem>> -> memref<1x128xf32, #tpu.memory_space<vmem>>
    %616 = tpu.memref_slice %arg10[%c0_i32_736] : memref<4x!tpu.dma_semaphore, #tpu.memory_space<semaphore_mem>> -> memref<1x!tpu.dma_semaphore, #tpu.memory_space<semaphore_mem>>
    %617 = tpu.memref_squeeze %616 : memref<1x!tpu.dma_semaphore, #tpu.memory_space<semaphore_mem>> -> memref<!tpu.dma_semaphore, #tpu.memory_space<semaphore_mem>>
    tpu.wait_dma2 semaphore(%617 : memref<!tpu.dma_semaphore, #tpu.memory_space<semaphore_mem>>) src(%613 : memref<1x128xf32, #tpu.memory_space<any>>) dst(%615 : memref<1x128xf32, #tpu.memory_space<vmem>>)
    %c0_i32_741 = arith.constant 0 : i32
    %c0_i32_742 = arith.constant 0 : i32
    %c0_i32_743 = arith.constant 0 : i32
    %c0_i32_744 = arith.constant 0 : i32
    %c0_i32_745 = arith.constant 0 : i32
    %618 = tpu.memref_slice %arg7[%c0_i32_744, %c0_i32_745] : memref<16x128xf32, #tpu.memory_space<any>> -> memref<1x128xf32, #tpu.memory_space<any>>
    %c4_i32_746 = arith.constant 4 : i32
    %c0_i32_747 = arith.constant 0 : i32
    %619 = tpu.memref_slice %arg9[%c0_i32_741, %c0_i32_742, %c4_i32_746, %c0_i32_747] : memref<4x2x8x128xf32, #tpu.memory_space<vmem>> -> memref<1x1x1x128xf32, #tpu.memory_space<vmem>>
    %620 = tpu.memref_squeeze %619 : memref<1x1x1x128xf32, #tpu.memory_space<vmem>> -> memref<1x128xf32, #tpu.memory_space<vmem>>
    %621 = tpu.memref_slice %arg10[%c0_i32_743] : memref<4x!tpu.dma_semaphore, #tpu.memory_space<semaphore_mem>> -> memref<1x!tpu.dma_semaphore, #tpu.memory_space<semaphore_mem>>
    %622 = tpu.memref_squeeze %621 : memref<1x!tpu.dma_semaphore, #tpu.memory_space<semaphore_mem>> -> memref<!tpu.dma_semaphore, #tpu.memory_space<semaphore_mem>>
    tpu.wait_dma2 semaphore(%622 : memref<!tpu.dma_semaphore, #tpu.memory_space<semaphore_mem>>) src(%618 : memref<1x128xf32, #tpu.memory_space<any>>) dst(%620 : memref<1x128xf32, #tpu.memory_space<vmem>>)
    %c0_i32_748 = arith.constant 0 : i32
    %c1_i32_749 = arith.constant 1 : i32
    %c0_i32_750 = arith.constant 0 : i32
    %c0_i32_751 = arith.constant 0 : i32
    %c0_i32_752 = arith.constant 0 : i32
    %623 = tpu.memref_slice %arg7[%c0_i32_751, %c0_i32_752] : memref<16x128xf32, #tpu.memory_space<any>> -> memref<1x128xf32, #tpu.memory_space<any>>
    %c4_i32_753 = arith.constant 4 : i32
    %c0_i32_754 = arith.constant 0 : i32
    %624 = tpu.memref_slice %arg9[%c0_i32_748, %c1_i32_749, %c4_i32_753, %c0_i32_754] : memref<4x2x8x128xf32, #tpu.memory_space<vmem>> -> memref<1x1x1x128xf32, #tpu.memory_space<vmem>>
    %625 = tpu.memref_squeeze %624 : memref<1x1x1x128xf32, #tpu.memory_space<vmem>> -> memref<1x128xf32, #tpu.memory_space<vmem>>
    %626 = tpu.memref_slice %arg10[%c0_i32_750] : memref<4x!tpu.dma_semaphore, #tpu.memory_space<semaphore_mem>> -> memref<1x!tpu.dma_semaphore, #tpu.memory_space<semaphore_mem>>
    %627 = tpu.memref_squeeze %626 : memref<1x!tpu.dma_semaphore, #tpu.memory_space<semaphore_mem>> -> memref<!tpu.dma_semaphore, #tpu.memory_space<semaphore_mem>>
    tpu.wait_dma2 semaphore(%627 : memref<!tpu.dma_semaphore, #tpu.memory_space<semaphore_mem>>) src(%623 : memref<1x128xf32, #tpu.memory_space<any>>) dst(%625 : memref<1x128xf32, #tpu.memory_space<vmem>>)
    %c0_i32_755 = arith.constant 0 : i32
    %c0_i32_756 = arith.constant 0 : i32
    %c0_i32_757 = arith.constant 0 : i32
    %c0_i32_758 = arith.constant 0 : i32
    %c0_i32_759 = arith.constant 0 : i32
    %628 = tpu.memref_slice %arg7[%c0_i32_758, %c0_i32_759] : memref<16x128xf32, #tpu.memory_space<any>> -> memref<1x128xf32, #tpu.memory_space<any>>
    %c5_i32_760 = arith.constant 5 : i32
    %c0_i32_761 = arith.constant 0 : i32
    %629 = tpu.memref_slice %arg9[%c0_i32_755, %c0_i32_756, %c5_i32_760, %c0_i32_761] : memref<4x2x8x128xf32, #tpu.memory_space<vmem>> -> memref<1x1x1x128xf32, #tpu.memory_space<vmem>>
    %630 = tpu.memref_squeeze %629 : memref<1x1x1x128xf32, #tpu.memory_space<vmem>> -> memref<1x128xf32, #tpu.memory_space<vmem>>
    %631 = tpu.memref_slice %arg10[%c0_i32_757] : memref<4x!tpu.dma_semaphore, #tpu.memory_space<semaphore_mem>> -> memref<1x!tpu.dma_semaphore, #tpu.memory_space<semaphore_mem>>
    %632 = tpu.memref_squeeze %631 : memref<1x!tpu.dma_semaphore, #tpu.memory_space<semaphore_mem>> -> memref<!tpu.dma_semaphore, #tpu.memory_space<semaphore_mem>>
    tpu.wait_dma2 semaphore(%632 : memref<!tpu.dma_semaphore, #tpu.memory_space<semaphore_mem>>) src(%628 : memref<1x128xf32, #tpu.memory_space<any>>) dst(%630 : memref<1x128xf32, #tpu.memory_space<vmem>>)
    %c0_i32_762 = arith.constant 0 : i32
    %c1_i32_763 = arith.constant 1 : i32
    %c0_i32_764 = arith.constant 0 : i32
    %c0_i32_765 = arith.constant 0 : i32
    %c0_i32_766 = arith.constant 0 : i32
    %633 = tpu.memref_slice %arg7[%c0_i32_765, %c0_i32_766] : memref<16x128xf32, #tpu.memory_space<any>> -> memref<1x128xf32, #tpu.memory_space<any>>
    %c5_i32_767 = arith.constant 5 : i32
    %c0_i32_768 = arith.constant 0 : i32
    %634 = tpu.memref_slice %arg9[%c0_i32_762, %c1_i32_763, %c5_i32_767, %c0_i32_768] : memref<4x2x8x128xf32, #tpu.memory_space<vmem>> -> memref<1x1x1x128xf32, #tpu.memory_space<vmem>>
    %635 = tpu.memref_squeeze %634 : memref<1x1x1x128xf32, #tpu.memory_space<vmem>> -> memref<1x128xf32, #tpu.memory_space<vmem>>
    %636 = tpu.memref_slice %arg10[%c0_i32_764] : memref<4x!tpu.dma_semaphore, #tpu.memory_space<semaphore_mem>> -> memref<1x!tpu.dma_semaphore, #tpu.memory_space<semaphore_mem>>
    %637 = tpu.memref_squeeze %636 : memref<1x!tpu.dma_semaphore, #tpu.memory_space<semaphore_mem>> -> memref<!tpu.dma_semaphore, #tpu.memory_space<semaphore_mem>>
    tpu.wait_dma2 semaphore(%637 : memref<!tpu.dma_semaphore, #tpu.memory_space<semaphore_mem>>) src(%633 : memref<1x128xf32, #tpu.memory_space<any>>) dst(%635 : memref<1x128xf32, #tpu.memory_space<vmem>>)
    %c0_i32_769 = arith.constant 0 : i32
    %c0_i32_770 = arith.constant 0 : i32
    %c0_i32_771 = arith.constant 0 : i32
    %c0_i32_772 = arith.constant 0 : i32
    %c0_i32_773 = arith.constant 0 : i32
    %638 = tpu.memref_slice %arg7[%c0_i32_772, %c0_i32_773] : memref<16x128xf32, #tpu.memory_space<any>> -> memref<1x128xf32, #tpu.memory_space<any>>
    %c6_i32_774 = arith.constant 6 : i32
    %c0_i32_775 = arith.constant 0 : i32
    %639 = tpu.memref_slice %arg9[%c0_i32_769, %c0_i32_770, %c6_i32_774, %c0_i32_775] : memref<4x2x8x128xf32, #tpu.memory_space<vmem>> -> memref<1x1x1x128xf32, #tpu.memory_space<vmem>>
    %640 = tpu.memref_squeeze %639 : memref<1x1x1x128xf32, #tpu.memory_space<vmem>> -> memref<1x128xf32, #tpu.memory_space<vmem>>
    %641 = tpu.memref_slice %arg10[%c0_i32_771] : memref<4x!tpu.dma_semaphore, #tpu.memory_space<semaphore_mem>> -> memref<1x!tpu.dma_semaphore, #tpu.memory_space<semaphore_mem>>
    %642 = tpu.memref_squeeze %641 : memref<1x!tpu.dma_semaphore, #tpu.memory_space<semaphore_mem>> -> memref<!tpu.dma_semaphore, #tpu.memory_space<semaphore_mem>>
    tpu.wait_dma2 semaphore(%642 : memref<!tpu.dma_semaphore, #tpu.memory_space<semaphore_mem>>) src(%638 : memref<1x128xf32, #tpu.memory_space<any>>) dst(%640 : memref<1x128xf32, #tpu.memory_space<vmem>>)
    %c0_i32_776 = arith.constant 0 : i32
    %c1_i32_777 = arith.constant 1 : i32
    %c0_i32_778 = arith.constant 0 : i32
    %c0_i32_779 = arith.constant 0 : i32
    %c0_i32_780 = arith.constant 0 : i32
    %643 = tpu.memref_slice %arg7[%c0_i32_779, %c0_i32_780] : memref<16x128xf32, #tpu.memory_space<any>> -> memref<1x128xf32, #tpu.memory_space<any>>
    %c6_i32_781 = arith.constant 6 : i32
    %c0_i32_782 = arith.constant 0 : i32
    %644 = tpu.memref_slice %arg9[%c0_i32_776, %c1_i32_777, %c6_i32_781, %c0_i32_782] : memref<4x2x8x128xf32, #tpu.memory_space<vmem>> -> memref<1x1x1x128xf32, #tpu.memory_space<vmem>>
    %645 = tpu.memref_squeeze %644 : memref<1x1x1x128xf32, #tpu.memory_space<vmem>> -> memref<1x128xf32, #tpu.memory_space<vmem>>
    %646 = tpu.memref_slice %arg10[%c0_i32_778] : memref<4x!tpu.dma_semaphore, #tpu.memory_space<semaphore_mem>> -> memref<1x!tpu.dma_semaphore, #tpu.memory_space<semaphore_mem>>
    %647 = tpu.memref_squeeze %646 : memref<1x!tpu.dma_semaphore, #tpu.memory_space<semaphore_mem>> -> memref<!tpu.dma_semaphore, #tpu.memory_space<semaphore_mem>>
    tpu.wait_dma2 semaphore(%647 : memref<!tpu.dma_semaphore, #tpu.memory_space<semaphore_mem>>) src(%643 : memref<1x128xf32, #tpu.memory_space<any>>) dst(%645 : memref<1x128xf32, #tpu.memory_space<vmem>>)
    %c0_i32_783 = arith.constant 0 : i32
    %c0_i32_784 = arith.constant 0 : i32
    %c0_i32_785 = arith.constant 0 : i32
    %c0_i32_786 = arith.constant 0 : i32
    %c0_i32_787 = arith.constant 0 : i32
    %648 = tpu.memref_slice %arg7[%c0_i32_786, %c0_i32_787] : memref<16x128xf32, #tpu.memory_space<any>> -> memref<1x128xf32, #tpu.memory_space<any>>
    %c7_i32_788 = arith.constant 7 : i32
    %c0_i32_789 = arith.constant 0 : i32
    %649 = tpu.memref_slice %arg9[%c0_i32_783, %c0_i32_784, %c7_i32_788, %c0_i32_789] : memref<4x2x8x128xf32, #tpu.memory_space<vmem>> -> memref<1x1x1x128xf32, #tpu.memory_space<vmem>>
    %650 = tpu.memref_squeeze %649 : memref<1x1x1x128xf32, #tpu.memory_space<vmem>> -> memref<1x128xf32, #tpu.memory_space<vmem>>
    %651 = tpu.memref_slice %arg10[%c0_i32_785] : memref<4x!tpu.dma_semaphore, #tpu.memory_space<semaphore_mem>> -> memref<1x!tpu.dma_semaphore, #tpu.memory_space<semaphore_mem>>
    %652 = tpu.memref_squeeze %651 : memref<1x!tpu.dma_semaphore, #tpu.memory_space<semaphore_mem>> -> memref<!tpu.dma_semaphore, #tpu.memory_space<semaphore_mem>>
    tpu.wait_dma2 semaphore(%652 : memref<!tpu.dma_semaphore, #tpu.memory_space<semaphore_mem>>) src(%648 : memref<1x128xf32, #tpu.memory_space<any>>) dst(%650 : memref<1x128xf32, #tpu.memory_space<vmem>>)
    %c0_i32_790 = arith.constant 0 : i32
    %c1_i32_791 = arith.constant 1 : i32
    %c0_i32_792 = arith.constant 0 : i32
    %c0_i32_793 = arith.constant 0 : i32
    %c0_i32_794 = arith.constant 0 : i32
    %653 = tpu.memref_slice %arg7[%c0_i32_793, %c0_i32_794] : memref<16x128xf32, #tpu.memory_space<any>> -> memref<1x128xf32, #tpu.memory_space<any>>
    %c7_i32_795 = arith.constant 7 : i32
    %c0_i32_796 = arith.constant 0 : i32
    %654 = tpu.memref_slice %arg9[%c0_i32_790, %c1_i32_791, %c7_i32_795, %c0_i32_796] : memref<4x2x8x128xf32, #tpu.memory_space<vmem>> -> memref<1x1x1x128xf32, #tpu.memory_space<vmem>>
    %655 = tpu.memref_squeeze %654 : memref<1x1x1x128xf32, #tpu.memory_space<vmem>> -> memref<1x128xf32, #tpu.memory_space<vmem>>
    %656 = tpu.memref_slice %arg10[%c0_i32_792] : memref<4x!tpu.dma_semaphore, #tpu.memory_space<semaphore_mem>> -> memref<1x!tpu.dma_semaphore, #tpu.memory_space<semaphore_mem>>
    %657 = tpu.memref_squeeze %656 : memref<1x!tpu.dma_semaphore, #tpu.memory_space<semaphore_mem>> -> memref<!tpu.dma_semaphore, #tpu.memory_space<semaphore_mem>>
    tpu.wait_dma2 semaphore(%657 : memref<!tpu.dma_semaphore, #tpu.memory_space<semaphore_mem>>) src(%653 : memref<1x128xf32, #tpu.memory_space<any>>) dst(%655 : memref<1x128xf32, #tpu.memory_space<vmem>>)
    %c0_797 = arith.constant 0 : index
    %c0_798 = arith.constant 0 : index
    %c0_799 = arith.constant 0 : index
    %c0_800 = arith.constant 0 : index
    %658 = vector.load %arg9[%c0_797, %c0_798, %c0_799, %c0_800] : memref<4x2x8x128xf32, #tpu.memory_space<vmem>>, vector<1x1x8x128xf32>
    %659 = vector.shape_cast %658 : vector<1x1x8x128xf32> to vector<8x128xf32>
    %c0_801 = arith.constant 0 : index
    %c1_802 = arith.constant 1 : index
    %c0_803 = arith.constant 0 : index
    %c0_804 = arith.constant 0 : index
    %660 = vector.load %arg9[%c0_801, %c1_802, %c0_803, %c0_804] : memref<4x2x8x128xf32, #tpu.memory_space<vmem>>, vector<1x1x8x128xf32>
    %661 = vector.shape_cast %660 : vector<1x1x8x128xf32> to vector<8x128xf32>
    %662 = arith.subf %659, %661 : vector<8x128xf32>
    %c0_805 = arith.constant 0 : index
    %c0_806 = arith.constant 0 : index
    %663 = vector.load %arg5[%c0_805, %c0_806] : memref<16x1xf32, #tpu.memory_space<vmem>>, vector<8x1xf32>
    %c0_807 = arith.constant 0 : index
    %c0_808 = arith.constant 0 : index
    %664 = vector.load %arg11[%c0_807, %c0_808] : memref<8x128xf32, #tpu.memory_space<vmem>>, vector<8x128xf32>
    %665 = arith.mulf %662, %662 : vector<8x128xf32>
    %666 = vector.broadcast %663 : vector<8x1xf32> to vector<8x128xf32>
    %667 = arith.mulf %666, %665 : vector<8x128xf32>
    %668 = arith.addf %664, %667 : vector<8x128xf32>
    %c0_809 = arith.constant 0 : index
    %c0_810 = arith.constant 0 : index
    %669 = vector.load %arg11[%c0_809, %c0_810] : memref<8x128xf32, #tpu.memory_space<vmem>>, vector<8x128xf32>
    tpu.vector_store %arg11[%c0_809, %c0_810], %668 {strides = array<i32>} : memref<8x128xf32, #tpu.memory_space<vmem>>, vector<8x128xf32>,
    %c1_i32_811 = arith.constant 1 : i32
    %c0_i32_812 = arith.constant 0 : i32
    %c1_i32_813 = arith.constant 1 : i32
    %c0_i32_814 = arith.constant 0 : i32
    %c0_i32_815 = arith.constant 0 : i32
    %670 = tpu.memref_slice %arg7[%c0_i32_814, %c0_i32_815] : memref<16x128xf32, #tpu.memory_space<any>> -> memref<1x128xf32, #tpu.memory_space<any>>
    %c0_i32_816 = arith.constant 0 : i32
    %c0_i32_817 = arith.constant 0 : i32
    %671 = tpu.memref_slice %arg9[%c1_i32_811, %c0_i32_812, %c0_i32_816, %c0_i32_817] : memref<4x2x8x128xf32, #tpu.memory_space<vmem>> -> memref<1x1x1x128xf32, #tpu.memory_space<vmem>>
    %672 = tpu.memref_squeeze %671 : memref<1x1x1x128xf32, #tpu.memory_space<vmem>> -> memref<1x128xf32, #tpu.memory_space<vmem>>
    %673 = tpu.memref_slice %arg10[%c1_i32_813] : memref<4x!tpu.dma_semaphore, #tpu.memory_space<semaphore_mem>> -> memref<1x!tpu.dma_semaphore, #tpu.memory_space<semaphore_mem>>
    %674 = tpu.memref_squeeze %673 : memref<1x!tpu.dma_semaphore, #tpu.memory_space<semaphore_mem>> -> memref<!tpu.dma_semaphore, #tpu.memory_space<semaphore_mem>>
    tpu.wait_dma2 semaphore(%674 : memref<!tpu.dma_semaphore, #tpu.memory_space<semaphore_mem>>) src(%670 : memref<1x128xf32, #tpu.memory_space<any>>) dst(%672 : memref<1x128xf32, #tpu.memory_space<vmem>>)
    %c1_i32_818 = arith.constant 1 : i32
    %c1_i32_819 = arith.constant 1 : i32
    %c1_i32_820 = arith.constant 1 : i32
    %c0_i32_821 = arith.constant 0 : i32
    %c0_i32_822 = arith.constant 0 : i32
    %675 = tpu.memref_slice %arg7[%c0_i32_821, %c0_i32_822] : memref<16x128xf32, #tpu.memory_space<any>> -> memref<1x128xf32, #tpu.memory_space<any>>
    %c0_i32_823 = arith.constant 0 : i32
    %c0_i32_824 = arith.constant 0 : i32
    %676 = tpu.memref_slice %arg9[%c1_i32_818, %c1_i32_819, %c0_i32_823, %c0_i32_824] : memref<4x2x8x128xf32, #tpu.memory_space<vmem>> -> memref<1x1x1x128xf32, #tpu.memory_space<vmem>>
    %677 = tpu.memref_squeeze %676 : memref<1x1x1x128xf32, #tpu.memory_space<vmem>> -> memref<1x128xf32, #tpu.memory_space<vmem>>
    %678 = tpu.memref_slice %arg10[%c1_i32_820] : memref<4x!tpu.dma_semaphore, #tpu.memory_space<semaphore_mem>> -> memref<1x!tpu.dma_semaphore, #tpu.memory_space<semaphore_mem>>
    %679 = tpu.memref_squeeze %678 : memref<1x!tpu.dma_semaphore, #tpu.memory_space<semaphore_mem>> -> memref<!tpu.dma_semaphore, #tpu.memory_space<semaphore_mem>>
    tpu.wait_dma2 semaphore(%679 : memref<!tpu.dma_semaphore, #tpu.memory_space<semaphore_mem>>) src(%675 : memref<1x128xf32, #tpu.memory_space<any>>) dst(%677 : memref<1x128xf32, #tpu.memory_space<vmem>>)
    %c1_i32_825 = arith.constant 1 : i32
    %c0_i32_826 = arith.constant 0 : i32
    %c1_i32_827 = arith.constant 1 : i32
    %c0_i32_828 = arith.constant 0 : i32
    %c0_i32_829 = arith.constant 0 : i32
    %680 = tpu.memref_slice %arg7[%c0_i32_828, %c0_i32_829] : memref<16x128xf32, #tpu.memory_space<any>> -> memref<1x128xf32, #tpu.memory_space<any>>
    %c1_i32_830 = arith.constant 1 : i32
    %c0_i32_831 = arith.constant 0 : i32
    %681 = tpu.memref_slice %arg9[%c1_i32_825, %c0_i32_826, %c1_i32_830, %c0_i32_831] : memref<4x2x8x128xf32, #tpu.memory_space<vmem>> -> memref<1x1x1x128xf32, #tpu.memory_space<vmem>>
    %682 = tpu.memref_squeeze %681 : memref<1x1x1x128xf32, #tpu.memory_space<vmem>> -> memref<1x128xf32, #tpu.memory_space<vmem>>
    %683 = tpu.memref_slice %arg10[%c1_i32_827] : memref<4x!tpu.dma_semaphore, #tpu.memory_space<semaphore_mem>> -> memref<1x!tpu.dma_semaphore, #tpu.memory_space<semaphore_mem>>
    %684 = tpu.memref_squeeze %683 : memref<1x!tpu.dma_semaphore, #tpu.memory_space<semaphore_mem>> -> memref<!tpu.dma_semaphore, #tpu.memory_space<semaphore_mem>>
    tpu.wait_dma2 semaphore(%684 : memref<!tpu.dma_semaphore, #tpu.memory_space<semaphore_mem>>) src(%680 : memref<1x128xf32, #tpu.memory_space<any>>) dst(%682 : memref<1x128xf32, #tpu.memory_space<vmem>>)
    %c1_i32_832 = arith.constant 1 : i32
    %c1_i32_833 = arith.constant 1 : i32
    %c1_i32_834 = arith.constant 1 : i32
    %c0_i32_835 = arith.constant 0 : i32
    %c0_i32_836 = arith.constant 0 : i32
    %685 = tpu.memref_slice %arg7[%c0_i32_835, %c0_i32_836] : memref<16x128xf32, #tpu.memory_space<any>> -> memref<1x128xf32, #tpu.memory_space<any>>
    %c1_i32_837 = arith.constant 1 : i32
    %c0_i32_838 = arith.constant 0 : i32
    %686 = tpu.memref_slice %arg9[%c1_i32_832, %c1_i32_833, %c1_i32_837, %c0_i32_838] : memref<4x2x8x128xf32, #tpu.memory_space<vmem>> -> memref<1x1x1x128xf32, #tpu.memory_space<vmem>>
    %687 = tpu.memref_squeeze %686 : memref<1x1x1x128xf32, #tpu.memory_space<vmem>> -> memref<1x128xf32, #tpu.memory_space<vmem>>
    %688 = tpu.memref_slice %arg10[%c1_i32_834] : memref<4x!tpu.dma_semaphore, #tpu.memory_space<semaphore_mem>> -> memref<1x!tpu.dma_semaphore, #tpu.memory_space<semaphore_mem>>
    %689 = tpu.memref_squeeze %688 : memref<1x!tpu.dma_semaphore, #tpu.memory_space<semaphore_mem>> -> memref<!tpu.dma_semaphore, #tpu.memory_space<semaphore_mem>>
    tpu.wait_dma2 semaphore(%689 : memref<!tpu.dma_semaphore, #tpu.memory_space<semaphore_mem>>) src(%685 : memref<1x128xf32, #tpu.memory_space<any>>) dst(%687 : memref<1x128xf32, #tpu.memory_space<vmem>>)
    %c1_i32_839 = arith.constant 1 : i32
    %c0_i32_840 = arith.constant 0 : i32
    %c1_i32_841 = arith.constant 1 : i32
    %c0_i32_842 = arith.constant 0 : i32
    %c0_i32_843 = arith.constant 0 : i32
    %690 = tpu.memref_slice %arg7[%c0_i32_842, %c0_i32_843] : memref<16x128xf32, #tpu.memory_space<any>> -> memref<1x128xf32, #tpu.memory_space<any>>
    %c2_i32_844 = arith.constant 2 : i32
    %c0_i32_845 = arith.constant 0 : i32
    %691 = tpu.memref_slice %arg9[%c1_i32_839, %c0_i32_840, %c2_i32_844, %c0_i32_845] : memref<4x2x8x128xf32, #tpu.memory_space<vmem>> -> memref<1x1x1x128xf32, #tpu.memory_space<vmem>>
    %692 = tpu.memref_squeeze %691 : memref<1x1x1x128xf32, #tpu.memory_space<vmem>> -> memref<1x128xf32, #tpu.memory_space<vmem>>
    %693 = tpu.memref_slice %arg10[%c1_i32_841] : memref<4x!tpu.dma_semaphore, #tpu.memory_space<semaphore_mem>> -> memref<1x!tpu.dma_semaphore, #tpu.memory_space<semaphore_mem>>
    %694 = tpu.memref_squeeze %693 : memref<1x!tpu.dma_semaphore, #tpu.memory_space<semaphore_mem>> -> memref<!tpu.dma_semaphore, #tpu.memory_space<semaphore_mem>>
    tpu.wait_dma2 semaphore(%694 : memref<!tpu.dma_semaphore, #tpu.memory_space<semaphore_mem>>) src(%690 : memref<1x128xf32, #tpu.memory_space<any>>) dst(%692 : memref<1x128xf32, #tpu.memory_space<vmem>>)
    %c1_i32_846 = arith.constant 1 : i32
    %c1_i32_847 = arith.constant 1 : i32
    %c1_i32_848 = arith.constant 1 : i32
    %c0_i32_849 = arith.constant 0 : i32
    %c0_i32_850 = arith.constant 0 : i32
    %695 = tpu.memref_slice %arg7[%c0_i32_849, %c0_i32_850] : memref<16x128xf32, #tpu.memory_space<any>> -> memref<1x128xf32, #tpu.memory_space<any>>
    %c2_i32_851 = arith.constant 2 : i32
    %c0_i32_852 = arith.constant 0 : i32
    %696 = tpu.memref_slice %arg9[%c1_i32_846, %c1_i32_847, %c2_i32_851, %c0_i32_852] : memref<4x2x8x128xf32, #tpu.memory_space<vmem>> -> memref<1x1x1x128xf32, #tpu.memory_space<vmem>>
    %697 = tpu.memref_squeeze %696 : memref<1x1x1x128xf32, #tpu.memory_space<vmem>> -> memref<1x128xf32, #tpu.memory_space<vmem>>
    %698 = tpu.memref_slice %arg10[%c1_i32_848] : memref<4x!tpu.dma_semaphore, #tpu.memory_space<semaphore_mem>> -> memref<1x!tpu.dma_semaphore, #tpu.memory_space<semaphore_mem>>
    %699 = tpu.memref_squeeze %698 : memref<1x!tpu.dma_semaphore, #tpu.memory_space<semaphore_mem>> -> memref<!tpu.dma_semaphore, #tpu.memory_space<semaphore_mem>>
    tpu.wait_dma2 semaphore(%699 : memref<!tpu.dma_semaphore, #tpu.memory_space<semaphore_mem>>) src(%695 : memref<1x128xf32, #tpu.memory_space<any>>) dst(%697 : memref<1x128xf32, #tpu.memory_space<vmem>>)
    %c1_i32_853 = arith.constant 1 : i32
    %c0_i32_854 = arith.constant 0 : i32
    %c1_i32_855 = arith.constant 1 : i32
    %c0_i32_856 = arith.constant 0 : i32
    %c0_i32_857 = arith.constant 0 : i32
    %700 = tpu.memref_slice %arg7[%c0_i32_856, %c0_i32_857] : memref<16x128xf32, #tpu.memory_space<any>> -> memref<1x128xf32, #tpu.memory_space<any>>
    %c3_i32_858 = arith.constant 3 : i32
    %c0_i32_859 = arith.constant 0 : i32
    %701 = tpu.memref_slice %arg9[%c1_i32_853, %c0_i32_854, %c3_i32_858, %c0_i32_859] : memref<4x2x8x128xf32, #tpu.memory_space<vmem>> -> memref<1x1x1x128xf32, #tpu.memory_space<vmem>>
    %702 = tpu.memref_squeeze %701 : memref<1x1x1x128xf32, #tpu.memory_space<vmem>> -> memref<1x128xf32, #tpu.memory_space<vmem>>
    %703 = tpu.memref_slice %arg10[%c1_i32_855] : memref<4x!tpu.dma_semaphore, #tpu.memory_space<semaphore_mem>> -> memref<1x!tpu.dma_semaphore, #tpu.memory_space<semaphore_mem>>
    %704 = tpu.memref_squeeze %703 : memref<1x!tpu.dma_semaphore, #tpu.memory_space<semaphore_mem>> -> memref<!tpu.dma_semaphore, #tpu.memory_space<semaphore_mem>>
    tpu.wait_dma2 semaphore(%704 : memref<!tpu.dma_semaphore, #tpu.memory_space<semaphore_mem>>) src(%700 : memref<1x128xf32, #tpu.memory_space<any>>) dst(%702 : memref<1x128xf32, #tpu.memory_space<vmem>>)
    %c1_i32_860 = arith.constant 1 : i32
    %c1_i32_861 = arith.constant 1 : i32
    %c1_i32_862 = arith.constant 1 : i32
    %c0_i32_863 = arith.constant 0 : i32
    %c0_i32_864 = arith.constant 0 : i32
    %705 = tpu.memref_slice %arg7[%c0_i32_863, %c0_i32_864] : memref<16x128xf32, #tpu.memory_space<any>> -> memref<1x128xf32, #tpu.memory_space<any>>
    %c3_i32_865 = arith.constant 3 : i32
    %c0_i32_866 = arith.constant 0 : i32
    %706 = tpu.memref_slice %arg9[%c1_i32_860, %c1_i32_861, %c3_i32_865, %c0_i32_866] : memref<4x2x8x128xf32, #tpu.memory_space<vmem>> -> memref<1x1x1x128xf32, #tpu.memory_space<vmem>>
    %707 = tpu.memref_squeeze %706 : memref<1x1x1x128xf32, #tpu.memory_space<vmem>> -> memref<1x128xf32, #tpu.memory_space<vmem>>
    %708 = tpu.memref_slice %arg10[%c1_i32_862] : memref<4x!tpu.dma_semaphore, #tpu.memory_space<semaphore_mem>> -> memref<1x!tpu.dma_semaphore, #tpu.memory_space<semaphore_mem>>
    %709 = tpu.memref_squeeze %708 : memref<1x!tpu.dma_semaphore, #tpu.memory_space<semaphore_mem>> -> memref<!tpu.dma_semaphore, #tpu.memory_space<semaphore_mem>>
    tpu.wait_dma2 semaphore(%709 : memref<!tpu.dma_semaphore, #tpu.memory_space<semaphore_mem>>) src(%705 : memref<1x128xf32, #tpu.memory_space<any>>) dst(%707 : memref<1x128xf32, #tpu.memory_space<vmem>>)
    %c1_i32_867 = arith.constant 1 : i32
    %c0_i32_868 = arith.constant 0 : i32
    %c1_i32_869 = arith.constant 1 : i32
    %c0_i32_870 = arith.constant 0 : i32
    %c0_i32_871 = arith.constant 0 : i32
    %710 = tpu.memref_slice %arg7[%c0_i32_870, %c0_i32_871] : memref<16x128xf32, #tpu.memory_space<any>> -> memref<1x128xf32, #tpu.memory_space<any>>
    %c4_i32_872 = arith.constant 4 : i32
    %c0_i32_873 = arith.constant 0 : i32
    %711 = tpu.memref_slice %arg9[%c1_i32_867, %c0_i32_868, %c4_i32_872, %c0_i32_873] : memref<4x2x8x128xf32, #tpu.memory_space<vmem>> -> memref<1x1x1x128xf32, #tpu.memory_space<vmem>>
    %712 = tpu.memref_squeeze %711 : memref<1x1x1x128xf32, #tpu.memory_space<vmem>> -> memref<1x128xf32, #tpu.memory_space<vmem>>
    %713 = tpu.memref_slice %arg10[%c1_i32_869] : memref<4x!tpu.dma_semaphore, #tpu.memory_space<semaphore_mem>> -> memref<1x!tpu.dma_semaphore, #tpu.memory_space<semaphore_mem>>
    %714 = tpu.memref_squeeze %713 : memref<1x!tpu.dma_semaphore, #tpu.memory_space<semaphore_mem>> -> memref<!tpu.dma_semaphore, #tpu.memory_space<semaphore_mem>>
    tpu.wait_dma2 semaphore(%714 : memref<!tpu.dma_semaphore, #tpu.memory_space<semaphore_mem>>) src(%710 : memref<1x128xf32, #tpu.memory_space<any>>) dst(%712 : memref<1x128xf32, #tpu.memory_space<vmem>>)
    %c1_i32_874 = arith.constant 1 : i32
    %c1_i32_875 = arith.constant 1 : i32
    %c1_i32_876 = arith.constant 1 : i32
    %c0_i32_877 = arith.constant 0 : i32
    %c0_i32_878 = arith.constant 0 : i32
    %715 = tpu.memref_slice %arg7[%c0_i32_877, %c0_i32_878] : memref<16x128xf32, #tpu.memory_space<any>> -> memref<1x128xf32, #tpu.memory_space<any>>
    %c4_i32_879 = arith.constant 4 : i32
    %c0_i32_880 = arith.constant 0 : i32
    %716 = tpu.memref_slice %arg9[%c1_i32_874, %c1_i32_875, %c4_i32_879, %c0_i32_880] : memref<4x2x8x128xf32, #tpu.memory_space<vmem>> -> memref<1x1x1x128xf32, #tpu.memory_space<vmem>>
    %717 = tpu.memref_squeeze %716 : memref<1x1x1x128xf32, #tpu.memory_space<vmem>> -> memref<1x128xf32, #tpu.memory_space<vmem>>
    %718 = tpu.memref_slice %arg10[%c1_i32_876] : memref<4x!tpu.dma_semaphore, #tpu.memory_space<semaphore_mem>> -> memref<1x!tpu.dma_semaphore, #tpu.memory_space<semaphore_mem>>
    %719 = tpu.memref_squeeze %718 : memref<1x!tpu.dma_semaphore, #tpu.memory_space<semaphore_mem>> -> memref<!tpu.dma_semaphore, #tpu.memory_space<semaphore_mem>>
    tpu.wait_dma2 semaphore(%719 : memref<!tpu.dma_semaphore, #tpu.memory_space<semaphore_mem>>) src(%715 : memref<1x128xf32, #tpu.memory_space<any>>) dst(%717 : memref<1x128xf32, #tpu.memory_space<vmem>>)
    %c1_i32_881 = arith.constant 1 : i32
    %c0_i32_882 = arith.constant 0 : i32
    %c1_i32_883 = arith.constant 1 : i32
    %c0_i32_884 = arith.constant 0 : i32
    %c0_i32_885 = arith.constant 0 : i32
    %720 = tpu.memref_slice %arg7[%c0_i32_884, %c0_i32_885] : memref<16x128xf32, #tpu.memory_space<any>> -> memref<1x128xf32, #tpu.memory_space<any>>
    %c5_i32_886 = arith.constant 5 : i32
    %c0_i32_887 = arith.constant 0 : i32
    %721 = tpu.memref_slice %arg9[%c1_i32_881, %c0_i32_882, %c5_i32_886, %c0_i32_887] : memref<4x2x8x128xf32, #tpu.memory_space<vmem>> -> memref<1x1x1x128xf32, #tpu.memory_space<vmem>>
    %722 = tpu.memref_squeeze %721 : memref<1x1x1x128xf32, #tpu.memory_space<vmem>> -> memref<1x128xf32, #tpu.memory_space<vmem>>
    %723 = tpu.memref_slice %arg10[%c1_i32_883] : memref<4x!tpu.dma_semaphore, #tpu.memory_space<semaphore_mem>> -> memref<1x!tpu.dma_semaphore, #tpu.memory_space<semaphore_mem>>
    %724 = tpu.memref_squeeze %723 : memref<1x!tpu.dma_semaphore, #tpu.memory_space<semaphore_mem>> -> memref<!tpu.dma_semaphore, #tpu.memory_space<semaphore_mem>>
    tpu.wait_dma2 semaphore(%724 : memref<!tpu.dma_semaphore, #tpu.memory_space<semaphore_mem>>) src(%720 : memref<1x128xf32, #tpu.memory_space<any>>) dst(%722 : memref<1x128xf32, #tpu.memory_space<vmem>>)
    %c1_i32_888 = arith.constant 1 : i32
    %c1_i32_889 = arith.constant 1 : i32
    %c1_i32_890 = arith.constant 1 : i32
    %c0_i32_891 = arith.constant 0 : i32
    %c0_i32_892 = arith.constant 0 : i32
    %725 = tpu.memref_slice %arg7[%c0_i32_891, %c0_i32_892] : memref<16x128xf32, #tpu.memory_space<any>> -> memref<1x128xf32, #tpu.memory_space<any>>
    %c5_i32_893 = arith.constant 5 : i32
    %c0_i32_894 = arith.constant 0 : i32
    %726 = tpu.memref_slice %arg9[%c1_i32_888, %c1_i32_889, %c5_i32_893, %c0_i32_894] : memref<4x2x8x128xf32, #tpu.memory_space<vmem>> -> memref<1x1x1x128xf32, #tpu.memory_space<vmem>>
    %727 = tpu.memref_squeeze %726 : memref<1x1x1x128xf32, #tpu.memory_space<vmem>> -> memref<1x128xf32, #tpu.memory_space<vmem>>
    %728 = tpu.memref_slice %arg10[%c1_i32_890] : memref<4x!tpu.dma_semaphore, #tpu.memory_space<semaphore_mem>> -> memref<1x!tpu.dma_semaphore, #tpu.memory_space<semaphore_mem>>
    %729 = tpu.memref_squeeze %728 : memref<1x!tpu.dma_semaphore, #tpu.memory_space<semaphore_mem>> -> memref<!tpu.dma_semaphore, #tpu.memory_space<semaphore_mem>>
    tpu.wait_dma2 semaphore(%729 : memref<!tpu.dma_semaphore, #tpu.memory_space<semaphore_mem>>) src(%725 : memref<1x128xf32, #tpu.memory_space<any>>) dst(%727 : memref<1x128xf32, #tpu.memory_space<vmem>>)
    %c1_i32_895 = arith.constant 1 : i32
    %c0_i32_896 = arith.constant 0 : i32
    %c1_i32_897 = arith.constant 1 : i32
    %c0_i32_898 = arith.constant 0 : i32
    %c0_i32_899 = arith.constant 0 : i32
    %730 = tpu.memref_slice %arg7[%c0_i32_898, %c0_i32_899] : memref<16x128xf32, #tpu.memory_space<any>> -> memref<1x128xf32, #tpu.memory_space<any>>
    %c6_i32_900 = arith.constant 6 : i32
    %c0_i32_901 = arith.constant 0 : i32
    %731 = tpu.memref_slice %arg9[%c1_i32_895, %c0_i32_896, %c6_i32_900, %c0_i32_901] : memref<4x2x8x128xf32, #tpu.memory_space<vmem>> -> memref<1x1x1x128xf32, #tpu.memory_space<vmem>>
    %732 = tpu.memref_squeeze %731 : memref<1x1x1x128xf32, #tpu.memory_space<vmem>> -> memref<1x128xf32, #tpu.memory_space<vmem>>
    %733 = tpu.memref_slice %arg10[%c1_i32_897] : memref<4x!tpu.dma_semaphore, #tpu.memory_space<semaphore_mem>> -> memref<1x!tpu.dma_semaphore, #tpu.memory_space<semaphore_mem>>
    %734 = tpu.memref_squeeze %733 : memref<1x!tpu.dma_semaphore, #tpu.memory_space<semaphore_mem>> -> memref<!tpu.dma_semaphore, #tpu.memory_space<semaphore_mem>>
    tpu.wait_dma2 semaphore(%734 : memref<!tpu.dma_semaphore, #tpu.memory_space<semaphore_mem>>) src(%730 : memref<1x128xf32, #tpu.memory_space<any>>) dst(%732 : memref<1x128xf32, #tpu.memory_space<vmem>>)
    %c1_i32_902 = arith.constant 1 : i32
    %c1_i32_903 = arith.constant 1 : i32
    %c1_i32_904 = arith.constant 1 : i32
    %c0_i32_905 = arith.constant 0 : i32
    %c0_i32_906 = arith.constant 0 : i32
    %735 = tpu.memref_slice %arg7[%c0_i32_905, %c0_i32_906] : memref<16x128xf32, #tpu.memory_space<any>> -> memref<1x128xf32, #tpu.memory_space<any>>
    %c6_i32_907 = arith.constant 6 : i32
    %c0_i32_908 = arith.constant 0 : i32
    %736 = tpu.memref_slice %arg9[%c1_i32_902, %c1_i32_903, %c6_i32_907, %c0_i32_908] : memref<4x2x8x128xf32, #tpu.memory_space<vmem>> -> memref<1x1x1x128xf32, #tpu.memory_space<vmem>>
    %737 = tpu.memref_squeeze %736 : memref<1x1x1x128xf32, #tpu.memory_space<vmem>> -> memref<1x128xf32, #tpu.memory_space<vmem>>
    %738 = tpu.memref_slice %arg10[%c1_i32_904] : memref<4x!tpu.dma_semaphore, #tpu.memory_space<semaphore_mem>> -> memref<1x!tpu.dma_semaphore, #tpu.memory_space<semaphore_mem>>
    %739 = tpu.memref_squeeze %738 : memref<1x!tpu.dma_semaphore, #tpu.memory_space<semaphore_mem>> -> memref<!tpu.dma_semaphore, #tpu.memory_space<semaphore_mem>>
    tpu.wait_dma2 semaphore(%739 : memref<!tpu.dma_semaphore, #tpu.memory_space<semaphore_mem>>) src(%735 : memref<1x128xf32, #tpu.memory_space<any>>) dst(%737 : memref<1x128xf32, #tpu.memory_space<vmem>>)
    %c1_i32_909 = arith.constant 1 : i32
    %c0_i32_910 = arith.constant 0 : i32
    %c1_i32_911 = arith.constant 1 : i32
    %c0_i32_912 = arith.constant 0 : i32
    %c0_i32_913 = arith.constant 0 : i32
    %740 = tpu.memref_slice %arg7[%c0_i32_912, %c0_i32_913] : memref<16x128xf32, #tpu.memory_space<any>> -> memref<1x128xf32, #tpu.memory_space<any>>
    %c7_i32_914 = arith.constant 7 : i32
    %c0_i32_915 = arith.constant 0 : i32
    %741 = tpu.memref_slice %arg9[%c1_i32_909, %c0_i32_910, %c7_i32_914, %c0_i32_915] : memref<4x2x8x128xf32, #tpu.memory_space<vmem>> -> memref<1x1x1x128xf32, #tpu.memory_space<vmem>>
    %742 = tpu.memref_squeeze %741 : memref<1x1x1x128xf32, #tpu.memory_space<vmem>> -> memref<1x128xf32, #tpu.memory_space<vmem>>
    %743 = tpu.memref_slice %arg10[%c1_i32_911] : memref<4x!tpu.dma_semaphore, #tpu.memory_space<semaphore_mem>> -> memref<1x!tpu.dma_semaphore, #tpu.memory_space<semaphore_mem>>
    %744 = tpu.memref_squeeze %743 : memref<1x!tpu.dma_semaphore, #tpu.memory_space<semaphore_mem>> -> memref<!tpu.dma_semaphore, #tpu.memory_space<semaphore_mem>>
    tpu.wait_dma2 semaphore(%744 : memref<!tpu.dma_semaphore, #tpu.memory_space<semaphore_mem>>) src(%740 : memref<1x128xf32, #tpu.memory_space<any>>) dst(%742 : memref<1x128xf32, #tpu.memory_space<vmem>>)
    %c1_i32_916 = arith.constant 1 : i32
    %c1_i32_917 = arith.constant 1 : i32
    %c1_i32_918 = arith.constant 1 : i32
    %c0_i32_919 = arith.constant 0 : i32
    %c0_i32_920 = arith.constant 0 : i32
    %745 = tpu.memref_slice %arg7[%c0_i32_919, %c0_i32_920] : memref<16x128xf32, #tpu.memory_space<any>> -> memref<1x128xf32, #tpu.memory_space<any>>
    %c7_i32_921 = arith.constant 7 : i32
    %c0_i32_922 = arith.constant 0 : i32
    %746 = tpu.memref_slice %arg9[%c1_i32_916, %c1_i32_917, %c7_i32_921, %c0_i32_922] : memref<4x2x8x128xf32, #tpu.memory_space<vmem>> -> memref<1x1x1x128xf32, #tpu.memory_space<vmem>>
    %747 = tpu.memref_squeeze %746 : memref<1x1x1x128xf32, #tpu.memory_space<vmem>> -> memref<1x128xf32, #tpu.memory_space<vmem>>
    %748 = tpu.memref_slice %arg10[%c1_i32_918] : memref<4x!tpu.dma_semaphore, #tpu.memory_space<semaphore_mem>> -> memref<1x!tpu.dma_semaphore, #tpu.memory_space<semaphore_mem>>
    %749 = tpu.memref_squeeze %748 : memref<1x!tpu.dma_semaphore, #tpu.memory_space<semaphore_mem>> -> memref<!tpu.dma_semaphore, #tpu.memory_space<semaphore_mem>>
    tpu.wait_dma2 semaphore(%749 : memref<!tpu.dma_semaphore, #tpu.memory_space<semaphore_mem>>) src(%745 : memref<1x128xf32, #tpu.memory_space<any>>) dst(%747 : memref<1x128xf32, #tpu.memory_space<vmem>>)
    %c1_923 = arith.constant 1 : index
    %c0_924 = arith.constant 0 : index
    %c0_925 = arith.constant 0 : index
    %c0_926 = arith.constant 0 : index
    %750 = vector.load %arg9[%c1_923, %c0_924, %c0_925, %c0_926] : memref<4x2x8x128xf32, #tpu.memory_space<vmem>>, vector<1x1x8x128xf32>
    %751 = vector.shape_cast %750 : vector<1x1x8x128xf32> to vector<8x128xf32>
    %c1_927 = arith.constant 1 : index
    %c1_928 = arith.constant 1 : index
    %c0_929 = arith.constant 0 : index
    %c0_930 = arith.constant 0 : index
    %752 = vector.load %arg9[%c1_927, %c1_928, %c0_929, %c0_930] : memref<4x2x8x128xf32, #tpu.memory_space<vmem>>, vector<1x1x8x128xf32>
    %753 = vector.shape_cast %752 : vector<1x1x8x128xf32> to vector<8x128xf32>
    %754 = arith.subf %751, %753 : vector<8x128xf32>
    %c8_931 = arith.constant 8 : index
    %c0_932 = arith.constant 0 : index
    %755 = vector.load %arg5[%c8_931, %c0_932] : memref<16x1xf32, #tpu.memory_space<vmem>>, vector<8x1xf32>
    %c0_933 = arith.constant 0 : index
    %c0_934 = arith.constant 0 : index
    %756 = vector.load %arg11[%c0_933, %c0_934] : memref<8x128xf32, #tpu.memory_space<vmem>>, vector<8x128xf32>
    %757 = arith.mulf %754, %754 : vector<8x128xf32>
    %758 = vector.broadcast %755 : vector<8x1xf32> to vector<8x128xf32>
    %759 = arith.mulf %758, %757 : vector<8x128xf32>
    %760 = arith.addf %756, %759 : vector<8x128xf32>
    %c0_935 = arith.constant 0 : index
    %c0_936 = arith.constant 0 : index
    %761 = vector.load %arg11[%c0_935, %c0_936] : memref<8x128xf32, #tpu.memory_space<vmem>>, vector<8x128xf32>
    tpu.vector_store %arg11[%c0_935, %c0_936], %760 {strides = array<i32>} : memref<8x128xf32, #tpu.memory_space<vmem>>, vector<8x128xf32>,
    %c0_937 = arith.constant 0 : index
    %c0_938 = arith.constant 0 : index
    %762 = vector.load %arg11[%c0_937, %c0_938] : memref<8x128xf32, #tpu.memory_space<vmem>>, vector<8x128xf32>
    %763 = vector.shape_cast %762 : vector<8x128xf32> to vector<1x8x128xf32>
    %cst_939 = arith.constant dense<0.000000e+00> : vector<1xf32>
    %764 = vector.multi_reduction <add>, %763, %cst_939 [1, 2] : vector<1x8x128xf32> to vector<1xf32>
    %765 = vector.shape_cast %764 : vector<1xf32> to vector<1x1x1xf32>
    %766 = vector.extract %765[0, 0, 0] : f32 from vector<1x1x1xf32>
    %cst_940 = arith.constant 6.250000e-02 : f32
    %767 = arith.mulf %766, %cst_940 : f32
    %768 = arith.addf %383, %767 : f32
    %c0_941 = arith.constant 0 : index
    %c0_942 = arith.constant 0 : index
    %769 = memref.load %arg8[%c0_941, %c0_942] : memref<1x1xf32, #tpu.memory_space<smem>>
    memref.store %768, %arg8[%c0_941, %c0_942] : memref<1x1xf32, #tpu.memory_space<smem>>
    return
  }
}

</mosaic_0001>

<llo_original>
// kernel: tpu_custom_call.1
$region0: #{tpu_custom_call.1}
  #allocation0 [shape = 'u32[]', space=smem, size = 0x4, offset = 0x4, fixed_abs, tag = 'smem constant byte address 0x4 - core index']
  #allocation1 [shape = 'u32[144,128]{1,0:T(1,128)}', space=vmem, size = 0x12000, scoped, tag = 'internal scratch']
  #allocation2 [shape = 'f32[4,2,8,128]{3,2,1,0:T(8,128)}', space=vmem, size = 0x8000, scoped, tag = 'scratch operand']
  #allocation3 [shape = 's32[4]{0}', space=sflag, size = 0x10, scoped, tag = 'scratch operand']
  #allocation4 [shape = 'f32[8,128]{1,0:T(8,128)}', space=vmem, size = 0x1000, scoped, tag = 'scratch operand']
  #allocation14 [shape = 's32[]', space=sflag, size = 0x4, offset = 0, fixed_abs, tag = 'sflag constant byte address 0x0 - dummy sync flag']
  #allocation15 [shape = 's32[]', space=sflag, size = 0x4, offset = 0, fixed_abs, tag = 'sflag constant byte address 0x0 - dummy sync flag']
  #allocation16 [shape = 's32[]', space=sflag, size = 0x4, offset = 0, fixed_abs, tag = 'sflag constant byte address 0x0 - dummy sync flag']
  #allocation17 [shape = 's32[]', space=sflag, size = 0x4, offset = 0, fixed_abs, tag = 'sflag constant byte address 0x0 - dummy sync flag']
  #allocation18 [shape = 's32[]', space=sflag, size = 0x4, offset = 0, fixed_abs, tag = 'sflag constant byte address 0x0 - dummy sync flag']
  #allocation19 [shape = 's32[]', space=sflag, size = 0x4, offset = 0, fixed_abs, tag = 'sflag constant byte address 0x0 - dummy sync flag']
  #allocation20 [shape = 's32[]', space=sflag, size = 0x4, offset = 0, fixed_abs, tag = 'sflag constant byte address 0x0 - dummy sync flag']
  #allocation21 [shape = 's32[]', space=sflag, size = 0x4, offset = 0, fixed_abs, tag = 'sflag constant byte address 0x0 - dummy sync flag']
  #allocation22 [shape = 's32[]', space=sflag, size = 0x4, offset = 0, fixed_abs, tag = 'sflag constant byte address 0x0 - dummy sync flag']
  #allocation23 [shape = 's32[]', space=sflag, size = 0x4, offset = 0, fixed_abs, tag = 'sflag constant byte address 0x0 - dummy sync flag']
  #allocation24 [shape = 's32[]', space=sflag, size = 0x4, offset = 0, fixed_abs, tag = 'sflag constant byte address 0x0 - dummy sync flag']
  #allocation25 [shape = 's32[]', space=sflag, size = 0x4, offset = 0, fixed_abs, tag = 'sflag constant byte address 0x0 - dummy sync flag']
  #allocation26 [shape = 's32[]', space=sflag, size = 0x4, offset = 0, fixed_abs, tag = 'sflag constant byte address 0x0 - dummy sync flag']
  #allocation27 [shape = 's32[]', space=sflag, size = 0x4, offset = 0, fixed_abs, tag = 'sflag constant byte address 0x0 - dummy sync flag']
  #allocation28 [shape = 's32[]', space=sflag, size = 0x4, offset = 0, fixed_abs, tag = 'sflag constant byte address 0x0 - dummy sync flag']
  #allocation29 [shape = 's32[]', space=sflag, size = 0x4, offset = 0, fixed_abs, tag = 'sflag constant byte address 0x0 - dummy sync flag']
  #allocation30 [shape = 's32[]', space=sflag, size = 0x4, offset = 0, fixed_abs, tag = 'sflag constant byte address 0x0 - dummy sync flag']
  #allocation31 [shape = 's32[]', space=sflag, size = 0x4, offset = 0, fixed_abs, tag = 'sflag constant byte address 0x0 - dummy sync flag']
  #allocation32 [shape = 's32[]', space=sflag, size = 0x4, offset = 0, fixed_abs, tag = 'sflag constant byte address 0x0 - dummy sync flag']
  #allocation33 [shape = 's32[]', space=sflag, size = 0x4, offset = 0, fixed_abs, tag = 'sflag constant byte address 0x0 - dummy sync flag']
  #allocation34 [shape = 's32[]', space=sflag, size = 0x4, offset = 0, fixed_abs, tag = 'sflag constant byte address 0x0 - dummy sync flag']
  #allocation35 [shape = 's32[]', space=sflag, size = 0x4, offset = 0, fixed_abs, tag = 'sflag constant byte address 0x0 - dummy sync flag']
  #allocation36 [shape = 's32[]', space=sflag, size = 0x4, offset = 0, fixed_abs, tag = 'sflag constant byte address 0x0 - dummy sync flag']
  #allocation37 [shape = 's32[]', space=sflag, size = 0x4, offset = 0, fixed_abs, tag = 'sflag constant byte address 0x0 - dummy sync flag']
  #allocation38 [shape = 's32[]', space=sflag, size = 0x4, offset = 0, fixed_abs, tag = 'sflag constant byte address 0x0 - dummy sync flag']
  #allocation39 [shape = 's32[]', space=sflag, size = 0x4, offset = 0, fixed_abs, tag = 'sflag constant byte address 0x0 - dummy sync flag']
  #allocation40 [shape = 's32[]', space=sflag, size = 0x4, offset = 0, fixed_abs, tag = 'sflag constant byte address 0x0 - dummy sync flag']
  #allocation41 [shape = 's32[]', space=sflag, size = 0x4, offset = 0, fixed_abs, tag = 'sflag constant byte address 0x0 - dummy sync flag']
  #allocation42 [shape = 's32[]', space=sflag, size = 0x4, offset = 0, fixed_abs, tag = 'sflag constant byte address 0x0 - dummy sync flag']
  #allocation43 [shape = 's32[]', space=sflag, size = 0x4, offset = 0, fixed_abs, tag = 'sflag constant byte address 0x0 - dummy sync flag']
  #allocation44 [shape = 's32[]', space=sflag, size = 0x4, offset = 0, fixed_abs, tag = 'sflag constant byte address 0x0 - dummy sync flag']
  #allocation45 [shape = 's32[]', space=sflag, size = 0x4, offset = 0, fixed_abs, tag = 'sflag constant byte address 0x0 - dummy sync flag']
  #allocation46 [shape = 's32[]', space=sflag, size = 0x4, offset = 0, fixed_abs, tag = 'sflag constant byte address 0x0 - dummy sync flag']
  #allocation47 [shape = 's32[]', space=sflag, size = 0x4, offset = 0, fixed_abs, tag = 'sflag constant byte address 0x0 - dummy sync flag']
  #allocation48 [shape = 'u32[]', space=smem, size = 0x4, offset = 0x44, fixed_abs, tag = 'smem constant byte address 0x44 - assertion arg 0']
  #allocation49 [shape = 'u32[]', space=smem, size = 0x4, offset = 0x48, fixed_abs, tag = 'smem constant byte address 0x48 - assertion arg 1']
  #allocation50 [shape = 's32[]', space=sflag, size = 0x4, offset = 0, fixed_abs, tag = 'sflag constant byte address 0x0 - dummy sync flag']
  #allocation51 [shape = 's32[]', space=sflag, size = 0x4, offset = 0, fixed_abs, tag = 'sflag constant byte address 0x0 - dummy sync flag']
  #allocation52 [shape = 's32[]', space=sflag, size = 0x4, offset = 0, fixed_abs, tag = 'sflag constant byte address 0x0 - dummy sync flag']
  #allocation53 [shape = 's32[]', space=sflag, size = 0x4, offset = 0, fixed_abs, tag = 'sflag constant byte address 0x0 - dummy sync flag']
  #allocation54 [shape = 's32[]', space=sflag, size = 0x4, offset = 0, fixed_abs, tag = 'sflag constant byte address 0x0 - dummy sync flag']
  #allocation55 [shape = 's32[]', space=sflag, size = 0x4, offset = 0, fixed_abs, tag = 'sflag constant byte address 0x0 - dummy sync flag']
  #allocation56 [shape = 's32[]', space=sflag, size = 0x4, offset = 0, fixed_abs, tag = 'sflag constant byte address 0x0 - dummy sync flag']
  #allocation57 [shape = 's32[]', space=sflag, size = 0x4, offset = 0, fixed_abs, tag = 'sflag constant byte address 0x0 - dummy sync flag']
  #allocation58 [shape = 's32[]', space=sflag, size = 0x4, offset = 0, fixed_abs, tag = 'sflag constant byte address 0x0 - dummy sync flag']
  #allocation59 [shape = 's32[]', space=sflag, size = 0x4, offset = 0, fixed_abs, tag = 'sflag constant byte address 0x0 - dummy sync flag']
  #allocation60 [shape = 's32[]', space=sflag, size = 0x4, offset = 0, fixed_abs, tag = 'sflag constant byte address 0x0 - dummy sync flag']
  #allocation61 [shape = 's32[]', space=sflag, size = 0x4, offset = 0, fixed_abs, tag = 'sflag constant byte address 0x0 - dummy sync flag']
  #allocation62 [shape = 's32[]', space=sflag, size = 0x4, offset = 0, fixed_abs, tag = 'sflag constant byte address 0x0 - dummy sync flag']
  #allocation63 [shape = 's32[]', space=sflag, size = 0x4, offset = 0, fixed_abs, tag = 'sflag constant byte address 0x0 - dummy sync flag']
  #allocation64 [shape = 's32[]', space=sflag, size = 0x4, offset = 0, fixed_abs, tag = 'sflag constant byte address 0x0 - dummy sync flag']
  #allocation65 [shape = 's32[]', space=sflag, size = 0x4, offset = 0, fixed_abs, tag = 'sflag constant byte address 0x0 - dummy sync flag']
  #allocation66 [shape = 's32[]', space=sflag, size = 0x4, offset = 0, fixed_abs, tag = 'sflag constant byte address 0x0 - dummy sync flag']
  #allocation67 [shape = 's32[]', space=sflag, size = 0x4, offset = 0, fixed_abs, tag = 'sflag constant byte address 0x0 - dummy sync flag']
  #allocation68 [shape = 's32[]', space=sflag, size = 0x4, offset = 0, fixed_abs, tag = 'sflag constant byte address 0x0 - dummy sync flag']
  #allocation69 [shape = 's32[]', space=sflag, size = 0x4, offset = 0, fixed_abs, tag = 'sflag constant byte address 0x0 - dummy sync flag']
  #allocation70 [shape = 's32[]', space=sflag, size = 0x4, offset = 0, fixed_abs, tag = 'sflag constant byte address 0x0 - dummy sync flag']
  #allocation71 [shape = 's32[]', space=sflag, size = 0x4, offset = 0, fixed_abs, tag = 'sflag constant byte address 0x0 - dummy sync flag']
  #allocation72 [shape = 's32[]', space=sflag, size = 0x4, offset = 0, fixed_abs, tag = 'sflag constant byte address 0x0 - dummy sync flag']
  #allocation73 [shape = 's32[]', space=sflag, size = 0x4, offset = 0, fixed_abs, tag = 'sflag constant byte address 0x0 - dummy sync flag']
  #allocation74 [shape = 's32[]', space=sflag, size = 0x4, offset = 0, fixed_abs, tag = 'sflag constant byte address 0x0 - dummy sync flag']
  #allocation75 [shape = 's32[]', space=sflag, size = 0x4, offset = 0, fixed_abs, tag = 'sflag constant byte address 0x0 - dummy sync flag']
  #allocation76 [shape = 's32[]', space=sflag, size = 0x4, offset = 0, fixed_abs, tag = 'sflag constant byte address 0x0 - dummy sync flag']
  #allocation77 [shape = 's32[]', space=sflag, size = 0x4, offset = 0, fixed_abs, tag = 'sflag constant byte address 0x0 - dummy sync flag']
  #allocation78 [shape = 's32[]', space=sflag, size = 0x4, offset = 0, fixed_abs, tag = 'sflag constant byte address 0x0 - dummy sync flag']
  #allocation79 [shape = 's32[]', space=sflag, size = 0x4, offset = 0, fixed_abs, tag = 'sflag constant byte address 0x0 - dummy sync flag']
  #allocation80 [shape = 's32[]', space=sflag, size = 0x4, offset = 0, fixed_abs, tag = 'sflag constant byte address 0x0 - dummy sync flag']
  #allocation81 [shape = 's32[]', space=sflag, size = 0x4, offset = 0, fixed_abs, tag = 'sflag constant byte address 0x0 - dummy sync flag']
  #allocation82 [shape = 's32[]', space=sflag, size = 0x4, offset = 0, fixed_abs, tag = 'sflag constant byte address 0x0 - dummy sync flag']
  #allocation83 [shape = 's32[]', space=sflag, size = 0x4, offset = 0, fixed_abs, tag = 'sflag constant byte address 0x0 - dummy sync flag']
  #allocation84 [shape = 's32[]', space=sflag, size = 0x4, offset = 0, fixed_abs, tag = 'sflag constant byte address 0x0 - dummy sync flag']
  #allocation85 [shape = 's32[]', space=sflag, size = 0x4, offset = 0, fixed_abs, tag = 'sflag constant byte address 0x0 - dummy sync flag']
  #allocation86 [shape = 's32[]', space=sflag, size = 0x4, offset = 0, fixed_abs, tag = 'sflag constant byte address 0x0 - dummy sync flag']
  #allocation87 [shape = 's32[]', space=sflag, size = 0x4, offset = 0, fixed_abs, tag = 'sflag constant byte address 0x0 - dummy sync flag']
  #allocation88 [shape = 's32[]', space=sflag, size = 0x4, offset = 0, fixed_abs, tag = 'sflag constant byte address 0x0 - dummy sync flag']
  #allocation89 [shape = 's32[]', space=sflag, size = 0x4, offset = 0, fixed_abs, tag = 'sflag constant byte address 0x0 - dummy sync flag']
  #allocation90 [shape = 's32[]', space=sflag, size = 0x4, offset = 0, fixed_abs, tag = 'sflag constant byte address 0x0 - dummy sync flag']
  #allocation91 [shape = 's32[]', space=sflag, size = 0x4, offset = 0, fixed_abs, tag = 'sflag constant byte address 0x0 - dummy sync flag']
  #allocation92 [shape = 's32[]', space=sflag, size = 0x4, offset = 0, fixed_abs, tag = 'sflag constant byte address 0x0 - dummy sync flag']
  #allocation93 [shape = 's32[]', space=sflag, size = 0x4, offset = 0, fixed_abs, tag = 'sflag constant byte address 0x0 - dummy sync flag']
  #allocation94 [shape = 's32[]', space=sflag, size = 0x4, offset = 0, fixed_abs, tag = 'sflag constant byte address 0x0 - dummy sync flag']
  #allocation95 [shape = 's32[]', space=sflag, size = 0x4, offset = 0, fixed_abs, tag = 'sflag constant byte address 0x0 - dummy sync flag']
  #allocation96 [shape = 's32[]', space=sflag, size = 0x4, offset = 0, fixed_abs, tag = 'sflag constant byte address 0x0 - dummy sync flag']
  #allocation97 [shape = 's32[]', space=sflag, size = 0x4, offset = 0, fixed_abs, tag = 'sflag constant byte address 0x0 - dummy sync flag']
  #allocation98 [shape = 's32[]', space=sflag, size = 0x4, offset = 0, fixed_abs, tag = 'sflag constant byte address 0x0 - dummy sync flag']
  #allocation99 [shape = 's32[]', space=sflag, size = 0x4, offset = 0, fixed_abs, tag = 'sflag constant byte address 0x0 - dummy sync flag']
  #allocation100 [shape = 's32[]', space=sflag, size = 0x4, offset = 0, fixed_abs, tag = 'sflag constant byte address 0x0 - dummy sync flag']
  #allocation101 [shape = 's32[]', space=sflag, size = 0x4, offset = 0, fixed_abs, tag = 'sflag constant byte address 0x0 - dummy sync flag']
  #allocation102 [shape = 's32[]', space=sflag, size = 0x4, offset = 0, fixed_abs, tag = 'sflag constant byte address 0x0 - dummy sync flag']
  #allocation103 [shape = 's32[]', space=sflag, size = 0x4, offset = 0, fixed_abs, tag = 'sflag constant byte address 0x0 - dummy sync flag']
  #allocation104 [shape = 's32[]', space=sflag, size = 0x4, offset = 0, fixed_abs, tag = 'sflag constant byte address 0x0 - dummy sync flag']
  #allocation105 [shape = 's32[]', space=sflag, size = 0x4, offset = 0, fixed_abs, tag = 'sflag constant byte address 0x0 - dummy sync flag']
  #allocation106 [shape = 's32[]', space=sflag, size = 0x4, offset = 0, fixed_abs, tag = 'sflag constant byte address 0x0 - dummy sync flag']
  #allocation107 [shape = 's32[]', space=sflag, size = 0x4, offset = 0, fixed_abs, tag = 'sflag constant byte address 0x0 - dummy sync flag']
  #allocation108 [shape = 's32[]', space=sflag, size = 0x4, offset = 0, fixed_abs, tag = 'sflag constant byte address 0x0 - dummy sync flag']
  #allocation109 [shape = 's32[]', space=sflag, size = 0x4, offset = 0, fixed_abs, tag = 'sflag constant byte address 0x0 - dummy sync flag']
  #allocation110 [shape = 's32[]', space=sflag, size = 0x4, offset = 0, fixed_abs, tag = 'sflag constant byte address 0x0 - dummy sync flag']
  #allocation111 [shape = 's32[]', space=sflag, size = 0x4, offset = 0, fixed_abs, tag = 'sflag constant byte address 0x0 - dummy sync flag']
  %s0 = inlined_call_operand.vmem [shape: s32[16], index: 0, kind: input, shape index: {}]
  %s1 = inlined_call_operand.vmem [shape: s32[16], index: 1, kind: input, shape index: {}]
  %s2 = inlined_call_operand.vmem [shape: f32[16,1], index: 2, kind: input, shape index: {}]
  %s3 = inlined_call_operand.vmem [shape: s32[16], index: 3, kind: input, shape index: {}]
  %s4 = inlined_call_operand.vmem [shape: s32[16], index: 4, kind: input, shape index: {}]
  %s5 = inlined_call_operand.vmem [shape: f32[16,1], index: 5, kind: input, shape index: {}]
  %s6 = inlined_call_operand.vmem [shape: f32[32,128], index: 6, kind: input, shape index: {}]
  %s7 = inlined_call_operand.hbm [shape: f32[16,128], index: 7, kind: input, shape index: {}]
  %s8 = inlined_call_operand.hbm [shape: f32[1,1], index: 8, kind: output, shape index: {}]
  %s9 = sld [smem:[#allocation0]]
  $region1138: #{tpu_custom_call.1} parent=0
    _
  %s11 = ssub.s32 1, %s9
  %s12 = scalar_select 0, %s11, %s9
  $region1: #{tpu_custom_call.1} parent=0
    #allocation5 [shape = 'u8[512]{0}', space=smem, size = 0x200, scoped, tag = 'input window, operand 0, single buffered']
    #allocation6 [shape = 's32[1]{0}', space=sflag, size = 0x4, scoped, tag = 'scoped memory for tpu_custom_call.1']
    #allocation7 [shape = 's32[1]{0}', space=sflag, size = 0x4, scoped, tag = 'scoped memory for tpu_custom_call.1']
    #allocation8 [shape = 'u8[512]{0}', space=smem, size = 0x200, scoped, tag = 'input window, operand 1, single buffered']
    #allocation9 [shape = 's32[1]{0}', space=sflag, size = 0x4, scoped, tag = 'scoped memory for tpu_custom_call.1']
    #allocation10 [shape = 'u8[512]{0}', space=smem, size = 0x200, scoped, tag = 'input window, operand 3, single buffered']
    #allocation11 [shape = 'u8[512]{0}', space=smem, size = 0x200, scoped, tag = 'input window, operand 4, single buffered']
    #allocation12 [shape = 's32[1]{0}', space=sflag, size = 0x4, scoped, tag = 'scoped memory for tpu_custom_call.1']
    #allocation13 [shape = 'u8[512]{0}', space=smem, size = 0x200, scoped, tag = 'output window, operand 0, single buffered']
    %13 = vsyncpa [#allocation7], 0
    %14 = vsyncpa [#allocation9], 0
    %15 = vsyncpa [#allocation12], 0
    %16 = vsyncpa [#allocation6], 0
    // Predicated region
    $region2: #{tpu_custom_call.1} parent=1 // pred_check
      _
    $region3: #{tpu_custom_call.1} parent=1 // pred_check_branch
      %18 = sbr.rel (0) target = $region5
    $region4: #{tpu_custom_call.1} parent=1 // pred_region
      %s20 = ssub.s32 16, 16
      %21 = vsyncadd [#allocation7], %s20
      %s23 = sshll.u32 %s0, 4
      %s24 = int_to_ptr.vmem [resolvable:$true] %s23
      %26 = dma.vmem_to_smem %s24, 16, [#allocation5], [#allocation7]
    $region5: #{tpu_custom_call.1} parent=1 // pred_fallthru
      _
    // Predicated region
    $region6: #{tpu_custom_call.1} parent=1 // pred_check
      _
    $region7: #{tpu_custom_call.1} parent=1 // pred_check_branch
      %28 = sbr.rel (0) target = $region9
    $region8: #{tpu_custom_call.1} parent=1 // pred_region
      %s30 = ssub.s32 16, 16
      %31 = vsyncadd [#allocation9], %s30
      %s33 = sshll.u32 %s1, 4
      %s34 = int_to_ptr.vmem [resolvable:$true] %s33
      %36 = dma.vmem_to_smem %s34, 16, [#allocation8], [#allocation9]
    $region9: #{tpu_custom_call.1} parent=1 // pred_fallthru
      _
    // Predicated region
    $region10: #{tpu_custom_call.1} parent=1 // pred_check
      _
    $region11: #{tpu_custom_call.1} parent=1 // pred_check_branch
      %38 = sbr.rel (0) target = $region13
    $region12: #{tpu_custom_call.1} parent=1 // pred_region
      _
    $region13: #{tpu_custom_call.1} parent=1 // pred_fallthru
      _
    // Predicated region
    $region14: #{tpu_custom_call.1} parent=1 // pred_check
      _
    $region15: #{tpu_custom_call.1} parent=1 // pred_check_branch
      %40 = sbr.rel (0) target = $region17
    $region16: #{tpu_custom_call.1} parent=1 // pred_region
      %s42 = ssub.s32 16, 16
      %43 = vsyncadd [#allocation9], %s42
      %s45 = sshll.u32 %s3, 4
      %s46 = int_to_ptr.vmem [resolvable:$true] %s45
      %48 = dma.vmem_to_smem %s46, 16, [#allocation10], [#allocation9]
    $region17: #{tpu_custom_call.1} parent=1 // pred_fallthru
      _
    // Predicated region
    $region18: #{tpu_custom_call.1} parent=1 // pred_check
      _
    $region19: #{tpu_custom_call.1} parent=1 // pred_check_branch
      %50 = sbr.rel (0) target = $region21
    $region20: #{tpu_custom_call.1} parent=1 // pred_region
      %s52 = ssub.s32 16, 16
      %53 = vsyncadd [#allocation12], %s52
      %s55 = sshll.u32 %s4, 4
      %s56 = int_to_ptr.vmem [resolvable:$true] %s55
      %58 = dma.vmem_to_smem %s56, 16, [#allocation11], [#allocation12]
    $region21: #{tpu_custom_call.1} parent=1 // pred_fallthru
      _
    // Predicated region
    $region22: #{tpu_custom_call.1} parent=1 // pred_check
      _
    $region23: #{tpu_custom_call.1} parent=1 // pred_check_branch
      %60 = sbr.rel (0) target = $region25
    $region24: #{tpu_custom_call.1} parent=1 // pred_region
      _
    $region25: #{tpu_custom_call.1} parent=1 // pred_fallthru
      _
    // Predicated region
    $region26: #{tpu_custom_call.1} parent=1 // pred_check
      _
    $region27: #{tpu_custom_call.1} parent=1 // pred_check_branch
      %62 = sbr.rel (0) target = $region29
    $region28: #{tpu_custom_call.1} parent=1 // pred_region
      %63 = dma.done [#allocation7], 16
    $region29: #{tpu_custom_call.1} parent=1 // pred_fallthru
      _
    // Predicated region
    $region30: #{tpu_custom_call.1} parent=1 // pred_check
      _
    $region31: #{tpu_custom_call.1} parent=1 // pred_check_branch
      %65 = sbr.rel (0) target = $region33
    $region32: #{tpu_custom_call.1} parent=1 // pred_region
      %66 = dma.done [#allocation9], 16
    $region33: #{tpu_custom_call.1} parent=1 // pred_fallthru
      _
    // Predicated region
    $region34: #{tpu_custom_call.1} parent=1 // pred_check
      _
    $region35: #{tpu_custom_call.1} parent=1 // pred_check_branch
      %68 = sbr.rel (0) target = $region37
    $region36: #{tpu_custom_call.1} parent=1 // pred_region
      %69 = dma.done [#allocation9], 16
    $region37: #{tpu_custom_call.1} parent=1 // pred_fallthru
      _
    // Predicated region
    $region38: #{tpu_custom_call.1} parent=1 // pred_check
      _
    $region39: #{tpu_custom_call.1} parent=1 // pred_check_branch
      %71 = sbr.rel (0) target = $region41
    $region40: #{tpu_custom_call.1} parent=1 // pred_region
      %72 = dma.done [#allocation12], 16
    $region41: #{tpu_custom_call.1} parent=1 // pred_fallthru
      _
    %73 = sfence
    %74 = vst [vmem:[#allocation4] sm:$0xff] 0.0
    %s75 = sld [smem:[#allocation5]]
    %s76 = sld [smem:[#allocation8]]
    %s77 = scalar_lea.vmem %s6, %s75
    %p79 = scmp.lt.u32.totalorder 1, 8
    %p80 = pneg %p79
    // Predicated region
    $region42: #{tpu_custom_call.1} parent=1 // pred_check
      _
    $region43: #{tpu_custom_call.1} parent=1 // pred_check_branch
      %82 = sbr.rel (%p79) target = $region45
    $region44: #{tpu_custom_call.1} parent=1 // pred_region
      %s98 = sand.u32 1, 7
      %p99 = scmp.eq.s32.totalorder %s98, 0
      %p100 = pneg %p99
      // Predicated region
      $region57: #{tpu_custom_call.1} parent=44 // pred_check
        _
      $region58: #{tpu_custom_call.1} parent=44 // pred_check_branch
        %102 = sbr.rel (%p99) target = $region60
      $region59: #{tpu_custom_call.1} parent=44 // pred_region
        %s103 = sand.u32 1, 7
        %s104 = ssub.s32 1, %s103
        %s105 = scalar_lea.vmem %s77, %s104
        %s106 = ssub.s32 1, %s103
        %s107 = scalar_lea.vmem [#allocation2], %s106
        %s108 = sshll.u32 1, %s103
        %s109 = ssub.s32 %s108, 1
        loop: start=0, step=1, limit=1
        $region61: #{tpu_custom_call.1} parent=59 // loop_pre_header
          _
        $region62: #{tpu_custom_call.1} parent=59 // loop_header
          %s111 = sphi 0, %s115
          %p112 = scmp.ge.s32.totalorder %s111, 1
          %s116 = sphi %s105, %s105
          %s117 = sphi %s107, %s107
        $region63: #{tpu_custom_call.1} parent=59 // loop_header_branch
          %114 = sbr.rel (%p112) target = $region67
        $region64: #{tpu_custom_call.1} parent=59 // loop_body
          %v118 = vld [vmem:[%s116] sm:%s109]
          %119 = vst [vmem:[%s117] sm:%s109] %v118
        $region65: #{tpu_custom_call.1} parent=59 // loop_footer
          %s115 = sadd.s32 1, %s111
        $region66: #{tpu_custom_call.1} parent=59 // loop_footer_branch
          %110 = sbr.rel target = $region62
        $region67: #{tpu_custom_call.1} parent=59 // loop_exit
          _
      $region60: #{tpu_custom_call.1} parent=44 // pred_fallthru
        _
    $region45: #{tpu_custom_call.1} parent=1 // pred_fallthru
      _
    // Predicated region
    $region46: #{tpu_custom_call.1} parent=1 // pred_check
      %p83 = pneg %p79
    $region47: #{tpu_custom_call.1} parent=1 // pred_check_branch
      %85 = sbr.rel (%p83) target = $region49
    $region48: #{tpu_custom_call.1} parent=1 // pred_region
      %s86 = sshll.u32 1, 1
      %s87 = ssub.s32 %s86, 1
      loop: start=0, step=1, limit=1
      $region50: #{tpu_custom_call.1} parent=48 // loop_pre_header
        _
      $region51: #{tpu_custom_call.1} parent=48 // loop_header
        %s89 = sphi 0, %s93
        %p90 = scmp.ge.s32.totalorder %s89, 1
        %s94 = sphi %s77, %s77
        %s95 = sphi [#allocation2], [#allocation2]
      $region52: #{tpu_custom_call.1} parent=48 // loop_header_branch
        %92 = sbr.rel (%p90) target = $region56
      $region53: #{tpu_custom_call.1} parent=48 // loop_body
        %v96 = vld [vmem:[%s94] sm:%s87]
        %97 = vst [vmem:[%s95] sm:%s87] %v96
      $region54: #{tpu_custom_call.1} parent=48 // loop_footer
        %s93 = sadd.s32 1, %s89
      $region55: #{tpu_custom_call.1} parent=48 // loop_footer_branch
        %88 = sbr.rel target = $region51
      $region56: #{tpu_custom_call.1} parent=48 // loop_exit
        _
    $region49: #{tpu_custom_call.1} parent=1 // pred_fallthru
      _
    // Predicated region
    $region68: #{tpu_custom_call.1} parent=1 // pred_check
      _
    $region69: #{tpu_custom_call.1} parent=1 // pred_check_branch
      %122 = sbr.rel (0) target = $region71
    $region70: #{tpu_custom_call.1} parent=1 // pred_region
      %123 = vsyncadd [#allocation3], 16
    $region71: #{tpu_custom_call.1} parent=1 // pred_fallthru
      _
    %s124 = scalar_lea.vmem %s6, %s76
    %s125 = scalar_lea.vmem [#allocation2], 8
    %p127 = scmp.lt.u32.totalorder 1, 8
    %p128 = pneg %p127
    // Predicated region
    $region72: #{tpu_custom_call.1} parent=1 // pred_check
      _
    $region73: #{tpu_custom_call.1} parent=1 // pred_check_branch
      %130 = sbr.rel (%p127) target = $region75
    $region74: #{tpu_custom_call.1} parent=1 // pred_region
      %s146 = sand.u32 1, 7
      %p147 = scmp.eq.s32.totalorder %s146, 0
      %p148 = pneg %p147
      // Predicated region
      $region87: #{tpu_custom_call.1} parent=74 // pred_check
        _
      $region88: #{tpu_custom_call.1} parent=74 // pred_check_branch
        %150 = sbr.rel (%p147) target = $region90
      $region89: #{tpu_custom_call.1} parent=74 // pred_region
        %s151 = sand.u32 1, 7
        %s152 = ssub.s32 1, %s151
        %s153 = scalar_lea.vmem %s124, %s152
        %s154 = ssub.s32 1, %s151
        %s155 = scalar_lea.vmem %s125, %s154 [#allocation2]
        %s156 = sshll.u32 1, %s151
        %s157 = ssub.s32 %s156, 1
        loop: start=0, step=1, limit=1
        $region91: #{tpu_custom_call.1} parent=89 // loop_pre_header
          _
        $region92: #{tpu_custom_call.1} parent=89 // loop_header
          %s159 = sphi 0, %s163
          %p160 = scmp.ge.s32.totalorder %s159, 1
          %s164 = sphi %s153, %s153
          %s165 = sphi %s155, %s155
        $region93: #{tpu_custom_call.1} parent=89 // loop_header_branch
          %162 = sbr.rel (%p160) target = $region97
        $region94: #{tpu_custom_call.1} parent=89 // loop_body
          %v166 = vld [vmem:[%s164] sm:%s157]
          %167 = vst [vmem:[%s165] sm:%s157] %v166
        $region95: #{tpu_custom_call.1} parent=89 // loop_footer
          %s163 = sadd.s32 1, %s159
        $region96: #{tpu_custom_call.1} parent=89 // loop_footer_branch
          %158 = sbr.rel target = $region92
        $region97: #{tpu_custom_call.1} parent=89 // loop_exit
          _
      $region90: #{tpu_custom_call.1} parent=74 // pred_fallthru
        _
    $region75: #{tpu_custom_call.1} parent=1 // pred_fallthru
      _
    // Predicated region
    $region76: #{tpu_custom_call.1} parent=1 // pred_check
      %p131 = pneg %p127
    $region77: #{tpu_custom_call.1} parent=1 // pred_check_branch
      %133 = sbr.rel (%p131) target = $region79
    $region78: #{tpu_custom_call.1} parent=1 // pred_region
      %s134 = sshll.u32 1, 1
      %s135 = ssub.s32 %s134, 1
      loop: start=0, step=1, limit=1
      $region80: #{tpu_custom_call.1} parent=78 // loop_pre_header
        _
      $region81: #{tpu_custom_call.1} parent=78 // loop_header
        %s137 = sphi 0, %s141
        %p138 = scmp.ge.s32.totalorder %s137, 1
        %s142 = sphi %s124, %s124
        %s143 = sphi %s125, %s125
      $region82: #{tpu_custom_call.1} parent=78 // loop_header_branch
        %140 = sbr.rel (%p138) target = $region86
      $region83: #{tpu_custom_call.1} parent=78 // loop_body
        %v144 = vld [vmem:[%s142] sm:%s135]
        %145 = vst [vmem:[%s143] sm:%s135] %v144
      $region84: #{tpu_custom_call.1} parent=78 // loop_footer
        %s141 = sadd.s32 1, %s137
      $region85: #{tpu_custom_call.1} parent=78 // loop_footer_branch
        %136 = sbr.rel target = $region81
      $region86: #{tpu_custom_call.1} parent=78 // loop_exit
        _
    $region79: #{tpu_custom_call.1} parent=1 // pred_fallthru
      _
    // Predicated region
    $region98: #{tpu_custom_call.1} parent=1 // pred_check
      _
    $region99: #{tpu_custom_call.1} parent=1 // pred_check_branch
      %170 = sbr.rel (0) target = $region101
    $region100: #{tpu_custom_call.1} parent=1 // pred_region
      %171 = vsyncadd [#allocation3], 16
    $region101: #{tpu_custom_call.1} parent=1 // pred_fallthru
      _
    %s172 = sld [smem:[#allocation5 + $0x1]]
    %s173 = sld [smem:[#allocation8 + $0x1]]
    %s174 = scalar_lea.vmem %s6, %s172
    %s175 = scalar_lea.vmem [#allocation2], 1
    %p177 = scmp.lt.u32.totalorder 1, 8
    %p178 = pneg %p177
    // Predicated region
    $region102: #{tpu_custom_call.1} parent=1 // pred_check
      _
    $region103: #{tpu_custom_call.1} parent=1 // pred_check_branch
      %180 = sbr.rel (%p177) target = $region105
    $region104: #{tpu_custom_call.1} parent=1 // pred_region
      %s196 = sand.u32 1, 7
      %p197 = scmp.eq.s32.totalorder %s196, 0
      %p198 = pneg %p197
      // Predicated region
      $region117: #{tpu_custom_call.1} parent=104 // pred_check
        _
      $region118: #{tpu_custom_call.1} parent=104 // pred_check_branch
        %200 = sbr.rel (%p197) target = $region120
      $region119: #{tpu_custom_call.1} parent=104 // pred_region
        %s201 = sand.u32 1, 7
        %s202 = ssub.s32 1, %s201
        %s203 = scalar_lea.vmem %s174, %s202
        %s204 = ssub.s32 1, %s201
        %s205 = scalar_lea.vmem %s175, %s204 [#allocation2]
        %s206 = sshll.u32 1, %s201
        %s207 = ssub.s32 %s206, 1
        loop: start=0, step=1, limit=1
        $region121: #{tpu_custom_call.1} parent=119 // loop_pre_header
          _
        $region122: #{tpu_custom_call.1} parent=119 // loop_header
          %s209 = sphi 0, %s213
          %p210 = scmp.ge.s32.totalorder %s209, 1
          %s214 = sphi %s203, %s203
          %s215 = sphi %s205, %s205
        $region123: #{tpu_custom_call.1} parent=119 // loop_header_branch
          %212 = sbr.rel (%p210) target = $region127
        $region124: #{tpu_custom_call.1} parent=119 // loop_body
          %v216 = vld [vmem:[%s214] sm:%s207]
          %217 = vst [vmem:[%s215] sm:%s207] %v216
        $region125: #{tpu_custom_call.1} parent=119 // loop_footer
          %s213 = sadd.s32 1, %s209
        $region126: #{tpu_custom_call.1} parent=119 // loop_footer_branch
          %208 = sbr.rel target = $region122
        $region127: #{tpu_custom_call.1} parent=119 // loop_exit
          _
      $region120: #{tpu_custom_call.1} parent=104 // pred_fallthru
        _
    $region105: #{tpu_custom_call.1} parent=1 // pred_fallthru
      _
    // Predicated region
    $region106: #{tpu_custom_call.1} parent=1 // pred_check
      %p181 = pneg %p177
    $region107: #{tpu_custom_call.1} parent=1 // pred_check_branch
      %183 = sbr.rel (%p181) target = $region109
    $region108: #{tpu_custom_call.1} parent=1 // pred_region
      %s184 = sshll.u32 1, 1
      %s185 = ssub.s32 %s184, 1
      loop: start=0, step=1, limit=1
      $region110: #{tpu_custom_call.1} parent=108 // loop_pre_header
        _
      $region111: #{tpu_custom_call.1} parent=108 // loop_header
        %s187 = sphi 0, %s191
        %p188 = scmp.ge.s32.totalorder %s187, 1
        %s192 = sphi %s174, %s174
        %s193 = sphi %s175, %s175
      $region112: #{tpu_custom_call.1} parent=108 // loop_header_branch
        %190 = sbr.rel (%p188) target = $region116
      $region113: #{tpu_custom_call.1} parent=108 // loop_body
        %v194 = vld [vmem:[%s192] sm:%s185]
        %195 = vst [vmem:[%s193] sm:%s185] %v194
      $region114: #{tpu_custom_call.1} parent=108 // loop_footer
        %s191 = sadd.s32 1, %s187
      $region115: #{tpu_custom_call.1} parent=108 // loop_footer_branch
        %186 = sbr.rel target = $region111
      $region116: #{tpu_custom_call.1} parent=108 // loop_exit
        _
    $region109: #{tpu_custom_call.1} parent=1 // pred_fallthru
      _
    // Predicated region
    $region128: #{tpu_custom_call.1} parent=1 // pred_check
      _
    $region129: #{tpu_custom_call.1} parent=1 // pred_check_branch
      %220 = sbr.rel (0) target = $region131
    $region130: #{tpu_custom_call.1} parent=1 // pred_region
      %221 = vsyncadd [#allocation3], 16
    $region131: #{tpu_custom_call.1} parent=1 // pred_fallthru
      _
    %s222 = scalar_lea.vmem %s6, %s173
    %s223 = scalar_lea.vmem [#allocation2], 9
    %p225 = scmp.lt.u32.totalorder 1, 8
    %p226 = pneg %p225
    // Predicated region
    $region132: #{tpu_custom_call.1} parent=1 // pred_check
      _
    $region133: #{tpu_custom_call.1} parent=1 // pred_check_branch
      %228 = sbr.rel (%p225) target = $region135
    $region134: #{tpu_custom_call.1} parent=1 // pred_region
      %s244 = sand.u32 1, 7
      %p245 = scmp.eq.s32.totalorder %s244, 0
      %p246 = pneg %p245
      // Predicated region
      $region147: #{tpu_custom_call.1} parent=134 // pred_check
        _
      $region148: #{tpu_custom_call.1} parent=134 // pred_check_branch
        %248 = sbr.rel (%p245) target = $region150
      $region149: #{tpu_custom_call.1} parent=134 // pred_region
        %s249 = sand.u32 1, 7
        %s250 = ssub.s32 1, %s249
        %s251 = scalar_lea.vmem %s222, %s250
        %s252 = ssub.s32 1, %s249
        %s253 = scalar_lea.vmem %s223, %s252 [#allocation2]
        %s254 = sshll.u32 1, %s249
        %s255 = ssub.s32 %s254, 1
        loop: start=0, step=1, limit=1
        $region151: #{tpu_custom_call.1} parent=149 // loop_pre_header
          _
        $region152: #{tpu_custom_call.1} parent=149 // loop_header
          %s257 = sphi 0, %s261
          %p258 = scmp.ge.s32.totalorder %s257, 1
          %s262 = sphi %s251, %s251
          %s263 = sphi %s253, %s253
        $region153: #{tpu_custom_call.1} parent=149 // loop_header_branch
          %260 = sbr.rel (%p258) target = $region157
        $region154: #{tpu_custom_call.1} parent=149 // loop_body
          %v264 = vld [vmem:[%s262] sm:%s255]
          %265 = vst [vmem:[%s263] sm:%s255] %v264
        $region155: #{tpu_custom_call.1} parent=149 // loop_footer
          %s261 = sadd.s32 1, %s257
        $region156: #{tpu_custom_call.1} parent=149 // loop_footer_branch
          %256 = sbr.rel target = $region152
        $region157: #{tpu_custom_call.1} parent=149 // loop_exit
          _
      $region150: #{tpu_custom_call.1} parent=134 // pred_fallthru
        _
    $region135: #{tpu_custom_call.1} parent=1 // pred_fallthru
      _
    // Predicated region
    $region136: #{tpu_custom_call.1} parent=1 // pred_check
      %p229 = pneg %p225
    $region137: #{tpu_custom_call.1} parent=1 // pred_check_branch
      %231 = sbr.rel (%p229) target = $region139
    $region138: #{tpu_custom_call.1} parent=1 // pred_region
      %s232 = sshll.u32 1, 1
      %s233 = ssub.s32 %s232, 1
      loop: start=0, step=1, limit=1
      $region140: #{tpu_custom_call.1} parent=138 // loop_pre_header
        _
      $region141: #{tpu_custom_call.1} parent=138 // loop_header
        %s235 = sphi 0, %s239
        %p236 = scmp.ge.s32.totalorder %s235, 1
        %s240 = sphi %s222, %s222
        %s241 = sphi %s223, %s223
      $region142: #{tpu_custom_call.1} parent=138 // loop_header_branch
        %238 = sbr.rel (%p236) target = $region146
      $region143: #{tpu_custom_call.1} parent=138 // loop_body
        %v242 = vld [vmem:[%s240] sm:%s233]
        %243 = vst [vmem:[%s241] sm:%s233] %v242
      $region144: #{tpu_custom_call.1} parent=138 // loop_footer
        %s239 = sadd.s32 1, %s235
      $region145: #{tpu_custom_call.1} parent=138 // loop_footer_branch
        %234 = sbr.rel target = $region141
      $region146: #{tpu_custom_call.1} parent=138 // loop_exit
        _
    $region139: #{tpu_custom_call.1} parent=1 // pred_fallthru
      _
    // Predicated region
    $region158: #{tpu_custom_call.1} parent=1 // pred_check
      _
    $region159: #{tpu_custom_call.1} parent=1 // pred_check_branch
      %268 = sbr.rel (0) target = $region161
    $region160: #{tpu_custom_call.1} parent=1 // pred_region
      %269 = vsyncadd [#allocation3], 16
    $region161: #{tpu_custom_call.1} parent=1 // pred_fallthru
      _
    %s270 = sld [smem:[#allocation5 + $0x2]]
    %s271 = sld [smem:[#allocation8 + $0x2]]
    %s272 = scalar_lea.vmem %s6, %s270
    %s273 = scalar_lea.vmem [#allocation2], 2
    %p275 = scmp.lt.u32.totalorder 1, 8
    %p276 = pneg %p275
    // Predicated region
    $region162: #{tpu_custom_call.1} parent=1 // pred_check
      _
    $region163: #{tpu_custom_call.1} parent=1 // pred_check_branch
      %278 = sbr.rel (%p275) target = $region165
    $region164: #{tpu_custom_call.1} parent=1 // pred_region
      %s294 = sand.u32 1, 7
      %p295 = scmp.eq.s32.totalorder %s294, 0
      %p296 = pneg %p295
      // Predicated region
      $region177: #{tpu_custom_call.1} parent=164 // pred_check
        _
      $region178: #{tpu_custom_call.1} parent=164 // pred_check_branch
        %298 = sbr.rel (%p295) target = $region180
      $region179: #{tpu_custom_call.1} parent=164 // pred_region
        %s299 = sand.u32 1, 7
        %s300 = ssub.s32 1, %s299
        %s301 = scalar_lea.vmem %s272, %s300
        %s302 = ssub.s32 1, %s299
        %s303 = scalar_lea.vmem %s273, %s302 [#allocation2]
        %s304 = sshll.u32 1, %s299
        %s305 = ssub.s32 %s304, 1
        loop: start=0, step=1, limit=1
        $region181: #{tpu_custom_call.1} parent=179 // loop_pre_header
          _
        $region182: #{tpu_custom_call.1} parent=179 // loop_header
          %s307 = sphi 0, %s311
          %p308 = scmp.ge.s32.totalorder %s307, 1
          %s312 = sphi %s301, %s301
          %s313 = sphi %s303, %s303
        $region183: #{tpu_custom_call.1} parent=179 // loop_header_branch
          %310 = sbr.rel (%p308) target = $region187
        $region184: #{tpu_custom_call.1} parent=179 // loop_body
          %v314 = vld [vmem:[%s312] sm:%s305]
          %315 = vst [vmem:[%s313] sm:%s305] %v314
        $region185: #{tpu_custom_call.1} parent=179 // loop_footer
          %s311 = sadd.s32 1, %s307
        $region186: #{tpu_custom_call.1} parent=179 // loop_footer_branch
          %306 = sbr.rel target = $region182
        $region187: #{tpu_custom_call.1} parent=179 // loop_exit
          _
      $region180: #{tpu_custom_call.1} parent=164 // pred_fallthru
        _
    $region165: #{tpu_custom_call.1} parent=1 // pred_fallthru
      _
    // Predicated region
    $region166: #{tpu_custom_call.1} parent=1 // pred_check
      %p279 = pneg %p275
    $region167: #{tpu_custom_call.1} parent=1 // pred_check_branch
      %281 = sbr.rel (%p279) target = $region169
    $region168: #{tpu_custom_call.1} parent=1 // pred_region
      %s282 = sshll.u32 1, 1
      %s283 = ssub.s32 %s282, 1
      loop: start=0, step=1, limit=1
      $region170: #{tpu_custom_call.1} parent=168 // loop_pre_header
        _
      $region171: #{tpu_custom_call.1} parent=168 // loop_header
        %s285 = sphi 0, %s289
        %p286 = scmp.ge.s32.totalorder %s285, 1
        %s290 = sphi %s272, %s272
        %s291 = sphi %s273, %s273
      $region172: #{tpu_custom_call.1} parent=168 // loop_header_branch
        %288 = sbr.rel (%p286) target = $region176
      $region173: #{tpu_custom_call.1} parent=168 // loop_body
        %v292 = vld [vmem:[%s290] sm:%s283]
        %293 = vst [vmem:[%s291] sm:%s283] %v292
      $region174: #{tpu_custom_call.1} parent=168 // loop_footer
        %s289 = sadd.s32 1, %s285
      $region175: #{tpu_custom_call.1} parent=168 // loop_footer_branch
        %284 = sbr.rel target = $region171
      $region176: #{tpu_custom_call.1} parent=168 // loop_exit
        _
    $region169: #{tpu_custom_call.1} parent=1 // pred_fallthru
      _
    // Predicated region
    $region188: #{tpu_custom_call.1} parent=1 // pred_check
      _
    $region189: #{tpu_custom_call.1} parent=1 // pred_check_branch
      %318 = sbr.rel (0) target = $region191
    $region190: #{tpu_custom_call.1} parent=1 // pred_region
      %319 = vsyncadd [#allocation3], 16
    $region191: #{tpu_custom_call.1} parent=1 // pred_fallthru
      _
    %s320 = scalar_lea.vmem %s6, %s271
    %s321 = scalar_lea.vmem [#allocation2], 10
    %p323 = scmp.lt.u32.totalorder 1, 8
    %p324 = pneg %p323
    // Predicated region
    $region192: #{tpu_custom_call.1} parent=1 // pred_check
      _
    $region193: #{tpu_custom_call.1} parent=1 // pred_check_branch
      %326 = sbr.rel (%p323) target = $region195
    $region194: #{tpu_custom_call.1} parent=1 // pred_region
      %s342 = sand.u32 1, 7
      %p343 = scmp.eq.s32.totalorder %s342, 0
      %p344 = pneg %p343
      // Predicated region
      $region207: #{tpu_custom_call.1} parent=194 // pred_check
        _
      $region208: #{tpu_custom_call.1} parent=194 // pred_check_branch
        %346 = sbr.rel (%p343) target = $region210
      $region209: #{tpu_custom_call.1} parent=194 // pred_region
        %s347 = sand.u32 1, 7
        %s348 = ssub.s32 1, %s347
        %s349 = scalar_lea.vmem %s320, %s348
        %s350 = ssub.s32 1, %s347
        %s351 = scalar_lea.vmem %s321, %s350 [#allocation2]
        %s352 = sshll.u32 1, %s347
        %s353 = ssub.s32 %s352, 1
        loop: start=0, step=1, limit=1
        $region211: #{tpu_custom_call.1} parent=209 // loop_pre_header
          _
        $region212: #{tpu_custom_call.1} parent=209 // loop_header
          %s355 = sphi 0, %s359
          %p356 = scmp.ge.s32.totalorder %s355, 1
          %s360 = sphi %s349, %s349
          %s361 = sphi %s351, %s351
        $region213: #{tpu_custom_call.1} parent=209 // loop_header_branch
          %358 = sbr.rel (%p356) target = $region217
        $region214: #{tpu_custom_call.1} parent=209 // loop_body
          %v362 = vld [vmem:[%s360] sm:%s353]
          %363 = vst [vmem:[%s361] sm:%s353] %v362
        $region215: #{tpu_custom_call.1} parent=209 // loop_footer
          %s359 = sadd.s32 1, %s355
        $region216: #{tpu_custom_call.1} parent=209 // loop_footer_branch
          %354 = sbr.rel target = $region212
        $region217: #{tpu_custom_call.1} parent=209 // loop_exit
          _
      $region210: #{tpu_custom_call.1} parent=194 // pred_fallthru
        _
    $region195: #{tpu_custom_call.1} parent=1 // pred_fallthru
      _
    // Predicated region
    $region196: #{tpu_custom_call.1} parent=1 // pred_check
      %p327 = pneg %p323
    $region197: #{tpu_custom_call.1} parent=1 // pred_check_branch
      %329 = sbr.rel (%p327) target = $region199
    $region198: #{tpu_custom_call.1} parent=1 // pred_region
      %s330 = sshll.u32 1, 1
      %s331 = ssub.s32 %s330, 1
      loop: start=0, step=1, limit=1
      $region200: #{tpu_custom_call.1} parent=198 // loop_pre_header
        _
      $region201: #{tpu_custom_call.1} parent=198 // loop_header
        %s333 = sphi 0, %s337
        %p334 = scmp.ge.s32.totalorder %s333, 1
        %s338 = sphi %s320, %s320
        %s339 = sphi %s321, %s321
      $region202: #{tpu_custom_call.1} parent=198 // loop_header_branch
        %336 = sbr.rel (%p334) target = $region206
      $region203: #{tpu_custom_call.1} parent=198 // loop_body
        %v340 = vld [vmem:[%s338] sm:%s331]
        %341 = vst [vmem:[%s339] sm:%s331] %v340
      $region204: #{tpu_custom_call.1} parent=198 // loop_footer
        %s337 = sadd.s32 1, %s333
      $region205: #{tpu_custom_call.1} parent=198 // loop_footer_branch
        %332 = sbr.rel target = $region201
      $region206: #{tpu_custom_call.1} parent=198 // loop_exit
        _
    $region199: #{tpu_custom_call.1} parent=1 // pred_fallthru
      _
    // Predicated region
    $region218: #{tpu_custom_call.1} parent=1 // pred_check
      _
    $region219: #{tpu_custom_call.1} parent=1 // pred_check_branch
      %366 = sbr.rel (0) target = $region221
    $region220: #{tpu_custom_call.1} parent=1 // pred_region
      %367 = vsyncadd [#allocation3], 16
    $region221: #{tpu_custom_call.1} parent=1 // pred_fallthru
      _
    %s368 = sld [smem:[#allocation5 + $0x3]]
    %s369 = sld [smem:[#allocation8 + $0x3]]
    %s370 = scalar_lea.vmem %s6, %s368
    %s371 = scalar_lea.vmem [#allocation2], 3
    %p373 = scmp.lt.u32.totalorder 1, 8
    %p374 = pneg %p373
    // Predicated region
    $region222: #{tpu_custom_call.1} parent=1 // pred_check
      _
    $region223: #{tpu_custom_call.1} parent=1 // pred_check_branch
      %376 = sbr.rel (%p373) target = $region225
    $region224: #{tpu_custom_call.1} parent=1 // pred_region
      %s392 = sand.u32 1, 7
      %p393 = scmp.eq.s32.totalorder %s392, 0
      %p394 = pneg %p393
      // Predicated region
      $region237: #{tpu_custom_call.1} parent=224 // pred_check
        _
      $region238: #{tpu_custom_call.1} parent=224 // pred_check_branch
        %396 = sbr.rel (%p393) target = $region240
      $region239: #{tpu_custom_call.1} parent=224 // pred_region
        %s397 = sand.u32 1, 7
        %s398 = ssub.s32 1, %s397
        %s399 = scalar_lea.vmem %s370, %s398
        %s400 = ssub.s32 1, %s397
        %s401 = scalar_lea.vmem %s371, %s400 [#allocation2]
        %s402 = sshll.u32 1, %s397
        %s403 = ssub.s32 %s402, 1
        loop: start=0, step=1, limit=1
        $region241: #{tpu_custom_call.1} parent=239 // loop_pre_header
          _
        $region242: #{tpu_custom_call.1} parent=239 // loop_header
          %s405 = sphi 0, %s409
          %p406 = scmp.ge.s32.totalorder %s405, 1
          %s410 = sphi %s399, %s399
          %s411 = sphi %s401, %s401
        $region243: #{tpu_custom_call.1} parent=239 // loop_header_branch
          %408 = sbr.rel (%p406) target = $region247
        $region244: #{tpu_custom_call.1} parent=239 // loop_body
          %v412 = vld [vmem:[%s410] sm:%s403]
          %413 = vst [vmem:[%s411] sm:%s403] %v412
        $region245: #{tpu_custom_call.1} parent=239 // loop_footer
          %s409 = sadd.s32 1, %s405
        $region246: #{tpu_custom_call.1} parent=239 // loop_footer_branch
          %404 = sbr.rel target = $region242
        $region247: #{tpu_custom_call.1} parent=239 // loop_exit
          _
      $region240: #{tpu_custom_call.1} parent=224 // pred_fallthru
        _
    $region225: #{tpu_custom_call.1} parent=1 // pred_fallthru
      _
    // Predicated region
    $region226: #{tpu_custom_call.1} parent=1 // pred_check
      %p377 = pneg %p373
    $region227: #{tpu_custom_call.1} parent=1 // pred_check_branch
      %379 = sbr.rel (%p377) target = $region229
    $region228: #{tpu_custom_call.1} parent=1 // pred_region
      %s380 = sshll.u32 1, 1
      %s381 = ssub.s32 %s380, 1
      loop: start=0, step=1, limit=1
      $region230: #{tpu_custom_call.1} parent=228 // loop_pre_header
        _
      $region231: #{tpu_custom_call.1} parent=228 // loop_header
        %s383 = sphi 0, %s387
        %p384 = scmp.ge.s32.totalorder %s383, 1
        %s388 = sphi %s370, %s370
        %s389 = sphi %s371, %s371
      $region232: #{tpu_custom_call.1} parent=228 // loop_header_branch
        %386 = sbr.rel (%p384) target = $region236
      $region233: #{tpu_custom_call.1} parent=228 // loop_body
        %v390 = vld [vmem:[%s388] sm:%s381]
        %391 = vst [vmem:[%s389] sm:%s381] %v390
      $region234: #{tpu_custom_call.1} parent=228 // loop_footer
        %s387 = sadd.s32 1, %s383
      $region235: #{tpu_custom_call.1} parent=228 // loop_footer_branch
        %382 = sbr.rel target = $region231
      $region236: #{tpu_custom_call.1} parent=228 // loop_exit
        _
    $region229: #{tpu_custom_call.1} parent=1 // pred_fallthru
      _
    // Predicated region
    $region248: #{tpu_custom_call.1} parent=1 // pred_check
      _
    $region249: #{tpu_custom_call.1} parent=1 // pred_check_branch
      %416 = sbr.rel (0) target = $region251
    $region250: #{tpu_custom_call.1} parent=1 // pred_region
      %417 = vsyncadd [#allocation3], 16
    $region251: #{tpu_custom_call.1} parent=1 // pred_fallthru
      _
    %s418 = scalar_lea.vmem %s6, %s369
    %s419 = scalar_lea.vmem [#allocation2], 11
    %p421 = scmp.lt.u32.totalorder 1, 8
    %p422 = pneg %p421
    // Predicated region
    $region252: #{tpu_custom_call.1} parent=1 // pred_check
      _
    $region253: #{tpu_custom_call.1} parent=1 // pred_check_branch
      %424 = sbr.rel (%p421) target = $region255
    $region254: #{tpu_custom_call.1} parent=1 // pred_region
      %s440 = sand.u32 1, 7
      %p441 = scmp.eq.s32.totalorder %s440, 0
      %p442 = pneg %p441
      // Predicated region
      $region267: #{tpu_custom_call.1} parent=254 // pred_check
        _
      $region268: #{tpu_custom_call.1} parent=254 // pred_check_branch
        %444 = sbr.rel (%p441) target = $region270
      $region269: #{tpu_custom_call.1} parent=254 // pred_region
        %s445 = sand.u32 1, 7
        %s446 = ssub.s32 1, %s445
        %s447 = scalar_lea.vmem %s418, %s446
        %s448 = ssub.s32 1, %s445
        %s449 = scalar_lea.vmem %s419, %s448 [#allocation2]
        %s450 = sshll.u32 1, %s445
        %s451 = ssub.s32 %s450, 1
        loop: start=0, step=1, limit=1
        $region271: #{tpu_custom_call.1} parent=269 // loop_pre_header
          _
        $region272: #{tpu_custom_call.1} parent=269 // loop_header
          %s453 = sphi 0, %s457
          %p454 = scmp.ge.s32.totalorder %s453, 1
          %s458 = sphi %s447, %s447
          %s459 = sphi %s449, %s449
        $region273: #{tpu_custom_call.1} parent=269 // loop_header_branch
          %456 = sbr.rel (%p454) target = $region277
        $region274: #{tpu_custom_call.1} parent=269 // loop_body
          %v460 = vld [vmem:[%s458] sm:%s451]
          %461 = vst [vmem:[%s459] sm:%s451] %v460
        $region275: #{tpu_custom_call.1} parent=269 // loop_footer
          %s457 = sadd.s32 1, %s453
        $region276: #{tpu_custom_call.1} parent=269 // loop_footer_branch
          %452 = sbr.rel target = $region272
        $region277: #{tpu_custom_call.1} parent=269 // loop_exit
          _
      $region270: #{tpu_custom_call.1} parent=254 // pred_fallthru
        _
    $region255: #{tpu_custom_call.1} parent=1 // pred_fallthru
      _
    // Predicated region
    $region256: #{tpu_custom_call.1} parent=1 // pred_check
      %p425 = pneg %p421
    $region257: #{tpu_custom_call.1} parent=1 // pred_check_branch
      %427 = sbr.rel (%p425) target = $region259
    $region258: #{tpu_custom_call.1} parent=1 // pred_region
      %s428 = sshll.u32 1, 1
      %s429 = ssub.s32 %s428, 1
      loop: start=0, step=1, limit=1
      $region260: #{tpu_custom_call.1} parent=258 // loop_pre_header
        _
      $region261: #{tpu_custom_call.1} parent=258 // loop_header
        %s431 = sphi 0, %s435
        %p432 = scmp.ge.s32.totalorder %s431, 1
        %s436 = sphi %s418, %s418
        %s437 = sphi %s419, %s419
      $region262: #{tpu_custom_call.1} parent=258 // loop_header_branch
        %434 = sbr.rel (%p432) target = $region266
      $region263: #{tpu_custom_call.1} parent=258 // loop_body
        %v438 = vld [vmem:[%s436] sm:%s429]
        %439 = vst [vmem:[%s437] sm:%s429] %v438
      $region264: #{tpu_custom_call.1} parent=258 // loop_footer
        %s435 = sadd.s32 1, %s431
      $region265: #{tpu_custom_call.1} parent=258 // loop_footer_branch
        %430 = sbr.rel target = $region261
      $region266: #{tpu_custom_call.1} parent=258 // loop_exit
        _
    $region259: #{tpu_custom_call.1} parent=1 // pred_fallthru
      _
    // Predicated region
    $region278: #{tpu_custom_call.1} parent=1 // pred_check
      _
    $region279: #{tpu_custom_call.1} parent=1 // pred_check_branch
      %464 = sbr.rel (0) target = $region281
    $region280: #{tpu_custom_call.1} parent=1 // pred_region
      %465 = vsyncadd [#allocation3], 16
    $region281: #{tpu_custom_call.1} parent=1 // pred_fallthru
      _
    %s466 = sld [smem:[#allocation5 + $0x4]]
    %s467 = sld [smem:[#allocation8 + $0x4]]
    %s468 = scalar_lea.vmem %s6, %s466
    %s469 = scalar_lea.vmem [#allocation2], 4
    %p471 = scmp.lt.u32.totalorder 1, 8
    %p472 = pneg %p471
    // Predicated region
    $region282: #{tpu_custom_call.1} parent=1 // pred_check
      _
    $region283: #{tpu_custom_call.1} parent=1 // pred_check_branch
      %474 = sbr.rel (%p471) target = $region285
    $region284: #{tpu_custom_call.1} parent=1 // pred_region
      %s490 = sand.u32 1, 7
      %p491 = scmp.eq.s32.totalorder %s490, 0
      %p492 = pneg %p491
      // Predicated region
      $region297: #{tpu_custom_call.1} parent=284 // pred_check
        _
      $region298: #{tpu_custom_call.1} parent=284 // pred_check_branch
        %494 = sbr.rel (%p491) target = $region300
      $region299: #{tpu_custom_call.1} parent=284 // pred_region
        %s495 = sand.u32 1, 7
        %s496 = ssub.s32 1, %s495
        %s497 = scalar_lea.vmem %s468, %s496
        %s498 = ssub.s32 1, %s495
        %s499 = scalar_lea.vmem %s469, %s498 [#allocation2]
        %s500 = sshll.u32 1, %s495
        %s501 = ssub.s32 %s500, 1
        loop: start=0, step=1, limit=1
        $region301: #{tpu_custom_call.1} parent=299 // loop_pre_header
          _
        $region302: #{tpu_custom_call.1} parent=299 // loop_header
          %s503 = sphi 0, %s507
          %p504 = scmp.ge.s32.totalorder %s503, 1
          %s508 = sphi %s497, %s497
          %s509 = sphi %s499, %s499
        $region303: #{tpu_custom_call.1} parent=299 // loop_header_branch
          %506 = sbr.rel (%p504) target = $region307
        $region304: #{tpu_custom_call.1} parent=299 // loop_body
          %v510 = vld [vmem:[%s508] sm:%s501]
          %511 = vst [vmem:[%s509] sm:%s501] %v510
        $region305: #{tpu_custom_call.1} parent=299 // loop_footer
          %s507 = sadd.s32 1, %s503
        $region306: #{tpu_custom_call.1} parent=299 // loop_footer_branch
          %502 = sbr.rel target = $region302
        $region307: #{tpu_custom_call.1} parent=299 // loop_exit
          _
      $region300: #{tpu_custom_call.1} parent=284 // pred_fallthru
        _
    $region285: #{tpu_custom_call.1} parent=1 // pred_fallthru
      _
    // Predicated region
    $region286: #{tpu_custom_call.1} parent=1 // pred_check
      %p475 = pneg %p471
    $region287: #{tpu_custom_call.1} parent=1 // pred_check_branch
      %477 = sbr.rel (%p475) target = $region289
    $region288: #{tpu_custom_call.1} parent=1 // pred_region
      %s478 = sshll.u32 1, 1
      %s479 = ssub.s32 %s478, 1
      loop: start=0, step=1, limit=1
      $region290: #{tpu_custom_call.1} parent=288 // loop_pre_header
        _
      $region291: #{tpu_custom_call.1} parent=288 // loop_header
        %s481 = sphi 0, %s485
        %p482 = scmp.ge.s32.totalorder %s481, 1
        %s486 = sphi %s468, %s468
        %s487 = sphi %s469, %s469
      $region292: #{tpu_custom_call.1} parent=288 // loop_header_branch
        %484 = sbr.rel (%p482) target = $region296
      $region293: #{tpu_custom_call.1} parent=288 // loop_body
        %v488 = vld [vmem:[%s486] sm:%s479]
        %489 = vst [vmem:[%s487] sm:%s479] %v488
      $region294: #{tpu_custom_call.1} parent=288 // loop_footer
        %s485 = sadd.s32 1, %s481
      $region295: #{tpu_custom_call.1} parent=288 // loop_footer_branch
        %480 = sbr.rel target = $region291
      $region296: #{tpu_custom_call.1} parent=288 // loop_exit
        _
    $region289: #{tpu_custom_call.1} parent=1 // pred_fallthru
      _
    // Predicated region
    $region308: #{tpu_custom_call.1} parent=1 // pred_check
      _
    $region309: #{tpu_custom_call.1} parent=1 // pred_check_branch
      %514 = sbr.rel (0) target = $region311
    $region310: #{tpu_custom_call.1} parent=1 // pred_region
      %515 = vsyncadd [#allocation3], 16
    $region311: #{tpu_custom_call.1} parent=1 // pred_fallthru
      _
    %s516 = scalar_lea.vmem %s6, %s467
    %s517 = scalar_lea.vmem [#allocation2], 12
    %p519 = scmp.lt.u32.totalorder 1, 8
    %p520 = pneg %p519
    // Predicated region
    $region312: #{tpu_custom_call.1} parent=1 // pred_check
      _
    $region313: #{tpu_custom_call.1} parent=1 // pred_check_branch
      %522 = sbr.rel (%p519) target = $region315
    $region314: #{tpu_custom_call.1} parent=1 // pred_region
      %s538 = sand.u32 1, 7
      %p539 = scmp.eq.s32.totalorder %s538, 0
      %p540 = pneg %p539
      // Predicated region
      $region327: #{tpu_custom_call.1} parent=314 // pred_check
        _
      $region328: #{tpu_custom_call.1} parent=314 // pred_check_branch
        %542 = sbr.rel (%p539) target = $region330
      $region329: #{tpu_custom_call.1} parent=314 // pred_region
        %s543 = sand.u32 1, 7
        %s544 = ssub.s32 1, %s543
        %s545 = scalar_lea.vmem %s516, %s544
        %s546 = ssub.s32 1, %s543
        %s547 = scalar_lea.vmem %s517, %s546 [#allocation2]
        %s548 = sshll.u32 1, %s543
        %s549 = ssub.s32 %s548, 1
        loop: start=0, step=1, limit=1
        $region331: #{tpu_custom_call.1} parent=329 // loop_pre_header
          _
        $region332: #{tpu_custom_call.1} parent=329 // loop_header
          %s551 = sphi 0, %s555
          %p552 = scmp.ge.s32.totalorder %s551, 1
          %s556 = sphi %s545, %s545
          %s557 = sphi %s547, %s547
        $region333: #{tpu_custom_call.1} parent=329 // loop_header_branch
          %554 = sbr.rel (%p552) target = $region337
        $region334: #{tpu_custom_call.1} parent=329 // loop_body
          %v558 = vld [vmem:[%s556] sm:%s549]
          %559 = vst [vmem:[%s557] sm:%s549] %v558
        $region335: #{tpu_custom_call.1} parent=329 // loop_footer
          %s555 = sadd.s32 1, %s551
        $region336: #{tpu_custom_call.1} parent=329 // loop_footer_branch
          %550 = sbr.rel target = $region332
        $region337: #{tpu_custom_call.1} parent=329 // loop_exit
          _
      $region330: #{tpu_custom_call.1} parent=314 // pred_fallthru
        _
    $region315: #{tpu_custom_call.1} parent=1 // pred_fallthru
      _
    // Predicated region
    $region316: #{tpu_custom_call.1} parent=1 // pred_check
      %p523 = pneg %p519
    $region317: #{tpu_custom_call.1} parent=1 // pred_check_branch
      %525 = sbr.rel (%p523) target = $region319
    $region318: #{tpu_custom_call.1} parent=1 // pred_region
      %s526 = sshll.u32 1, 1
      %s527 = ssub.s32 %s526, 1
      loop: start=0, step=1, limit=1
      $region320: #{tpu_custom_call.1} parent=318 // loop_pre_header
        _
      $region321: #{tpu_custom_call.1} parent=318 // loop_header
        %s529 = sphi 0, %s533
        %p530 = scmp.ge.s32.totalorder %s529, 1
        %s534 = sphi %s516, %s516
        %s535 = sphi %s517, %s517
      $region322: #{tpu_custom_call.1} parent=318 // loop_header_branch
        %532 = sbr.rel (%p530) target = $region326
      $region323: #{tpu_custom_call.1} parent=318 // loop_body
        %v536 = vld [vmem:[%s534] sm:%s527]
        %537 = vst [vmem:[%s535] sm:%s527] %v536
      $region324: #{tpu_custom_call.1} parent=318 // loop_footer
        %s533 = sadd.s32 1, %s529
      $region325: #{tpu_custom_call.1} parent=318 // loop_footer_branch
        %528 = sbr.rel target = $region321
      $region326: #{tpu_custom_call.1} parent=318 // loop_exit
        _
    $region319: #{tpu_custom_call.1} parent=1 // pred_fallthru
      _
    // Predicated region
    $region338: #{tpu_custom_call.1} parent=1 // pred_check
      _
    $region339: #{tpu_custom_call.1} parent=1 // pred_check_branch
      %562 = sbr.rel (0) target = $region341
    $region340: #{tpu_custom_call.1} parent=1 // pred_region
      %563 = vsyncadd [#allocation3], 16
    $region341: #{tpu_custom_call.1} parent=1 // pred_fallthru
      _
    %s564 = sld [smem:[#allocation5 + $0x5]]
    %s565 = sld [smem:[#allocation8 + $0x5]]
    %s566 = scalar_lea.vmem %s6, %s564
    %s567 = scalar_lea.vmem [#allocation2], 5
    %p569 = scmp.lt.u32.totalorder 1, 8
    %p570 = pneg %p569
    // Predicated region
    $region342: #{tpu_custom_call.1} parent=1 // pred_check
      _
    $region343: #{tpu_custom_call.1} parent=1 // pred_check_branch
      %572 = sbr.rel (%p569) target = $region345
    $region344: #{tpu_custom_call.1} parent=1 // pred_region
      %s588 = sand.u32 1, 7
      %p589 = scmp.eq.s32.totalorder %s588, 0
      %p590 = pneg %p589
      // Predicated region
      $region357: #{tpu_custom_call.1} parent=344 // pred_check
        _
      $region358: #{tpu_custom_call.1} parent=344 // pred_check_branch
        %592 = sbr.rel (%p589) target = $region360
      $region359: #{tpu_custom_call.1} parent=344 // pred_region
        %s593 = sand.u32 1, 7
        %s594 = ssub.s32 1, %s593
        %s595 = scalar_lea.vmem %s566, %s594
        %s596 = ssub.s32 1, %s593
        %s597 = scalar_lea.vmem %s567, %s596 [#allocation2]
        %s598 = sshll.u32 1, %s593
        %s599 = ssub.s32 %s598, 1
        loop: start=0, step=1, limit=1
        $region361: #{tpu_custom_call.1} parent=359 // loop_pre_header
          _
        $region362: #{tpu_custom_call.1} parent=359 // loop_header
          %s601 = sphi 0, %s605
          %p602 = scmp.ge.s32.totalorder %s601, 1
          %s606 = sphi %s595, %s595
          %s607 = sphi %s597, %s597
        $region363: #{tpu_custom_call.1} parent=359 // loop_header_branch
          %604 = sbr.rel (%p602) target = $region367
        $region364: #{tpu_custom_call.1} parent=359 // loop_body
          %v608 = vld [vmem:[%s606] sm:%s599]
          %609 = vst [vmem:[%s607] sm:%s599] %v608
        $region365: #{tpu_custom_call.1} parent=359 // loop_footer
          %s605 = sadd.s32 1, %s601
        $region366: #{tpu_custom_call.1} parent=359 // loop_footer_branch
          %600 = sbr.rel target = $region362
        $region367: #{tpu_custom_call.1} parent=359 // loop_exit
          _
      $region360: #{tpu_custom_call.1} parent=344 // pred_fallthru
        _
    $region345: #{tpu_custom_call.1} parent=1 // pred_fallthru
      _
    // Predicated region
    $region346: #{tpu_custom_call.1} parent=1 // pred_check
      %p573 = pneg %p569
    $region347: #{tpu_custom_call.1} parent=1 // pred_check_branch
      %575 = sbr.rel (%p573) target = $region349
    $region348: #{tpu_custom_call.1} parent=1 // pred_region
      %s576 = sshll.u32 1, 1
      %s577 = ssub.s32 %s576, 1
      loop: start=0, step=1, limit=1
      $region350: #{tpu_custom_call.1} parent=348 // loop_pre_header
        _
      $region351: #{tpu_custom_call.1} parent=348 // loop_header
        %s579 = sphi 0, %s583
        %p580 = scmp.ge.s32.totalorder %s579, 1
        %s584 = sphi %s566, %s566
        %s585 = sphi %s567, %s567
      $region352: #{tpu_custom_call.1} parent=348 // loop_header_branch
        %582 = sbr.rel (%p580) target = $region356
      $region353: #{tpu_custom_call.1} parent=348 // loop_body
        %v586 = vld [vmem:[%s584] sm:%s577]
        %587 = vst [vmem:[%s585] sm:%s577] %v586
      $region354: #{tpu_custom_call.1} parent=348 // loop_footer
        %s583 = sadd.s32 1, %s579
      $region355: #{tpu_custom_call.1} parent=348 // loop_footer_branch
        %578 = sbr.rel target = $region351
      $region356: #{tpu_custom_call.1} parent=348 // loop_exit
        _
    $region349: #{tpu_custom_call.1} parent=1 // pred_fallthru
      _
    // Predicated region
    $region368: #{tpu_custom_call.1} parent=1 // pred_check
      _
    $region369: #{tpu_custom_call.1} parent=1 // pred_check_branch
      %612 = sbr.rel (0) target = $region371
    $region370: #{tpu_custom_call.1} parent=1 // pred_region
      %613 = vsyncadd [#allocation3], 16
    $region371: #{tpu_custom_call.1} parent=1 // pred_fallthru
      _
    %s614 = scalar_lea.vmem %s6, %s565
    %s615 = scalar_lea.vmem [#allocation2], 13
    %p617 = scmp.lt.u32.totalorder 1, 8
    %p618 = pneg %p617
    // Predicated region
    $region372: #{tpu_custom_call.1} parent=1 // pred_check
      _
    $region373: #{tpu_custom_call.1} parent=1 // pred_check_branch
      %620 = sbr.rel (%p617) target = $region375
    $region374: #{tpu_custom_call.1} parent=1 // pred_region
      %s636 = sand.u32 1, 7
      %p637 = scmp.eq.s32.totalorder %s636, 0
      %p638 = pneg %p637
      // Predicated region
      $region387: #{tpu_custom_call.1} parent=374 // pred_check
        _
      $region388: #{tpu_custom_call.1} parent=374 // pred_check_branch
        %640 = sbr.rel (%p637) target = $region390
      $region389: #{tpu_custom_call.1} parent=374 // pred_region
        %s641 = sand.u32 1, 7
        %s642 = ssub.s32 1, %s641
        %s643 = scalar_lea.vmem %s614, %s642
        %s644 = ssub.s32 1, %s641
        %s645 = scalar_lea.vmem %s615, %s644 [#allocation2]
        %s646 = sshll.u32 1, %s641
        %s647 = ssub.s32 %s646, 1
        loop: start=0, step=1, limit=1
        $region391: #{tpu_custom_call.1} parent=389 // loop_pre_header
          _
        $region392: #{tpu_custom_call.1} parent=389 // loop_header
          %s649 = sphi 0, %s653
          %p650 = scmp.ge.s32.totalorder %s649, 1
          %s654 = sphi %s643, %s643
          %s655 = sphi %s645, %s645
        $region393: #{tpu_custom_call.1} parent=389 // loop_header_branch
          %652 = sbr.rel (%p650) target = $region397
        $region394: #{tpu_custom_call.1} parent=389 // loop_body
          %v656 = vld [vmem:[%s654] sm:%s647]
          %657 = vst [vmem:[%s655] sm:%s647] %v656
        $region395: #{tpu_custom_call.1} parent=389 // loop_footer
          %s653 = sadd.s32 1, %s649
        $region396: #{tpu_custom_call.1} parent=389 // loop_footer_branch
          %648 = sbr.rel target = $region392
        $region397: #{tpu_custom_call.1} parent=389 // loop_exit
          _
      $region390: #{tpu_custom_call.1} parent=374 // pred_fallthru
        _
    $region375: #{tpu_custom_call.1} parent=1 // pred_fallthru
      _
    // Predicated region
    $region376: #{tpu_custom_call.1} parent=1 // pred_check
      %p621 = pneg %p617
    $region377: #{tpu_custom_call.1} parent=1 // pred_check_branch
      %623 = sbr.rel (%p621) target = $region379
    $region378: #{tpu_custom_call.1} parent=1 // pred_region
      %s624 = sshll.u32 1, 1
      %s625 = ssub.s32 %s624, 1
      loop: start=0, step=1, limit=1
      $region380: #{tpu_custom_call.1} parent=378 // loop_pre_header
        _
      $region381: #{tpu_custom_call.1} parent=378 // loop_header
        %s627 = sphi 0, %s631
        %p628 = scmp.ge.s32.totalorder %s627, 1
        %s632 = sphi %s614, %s614
        %s633 = sphi %s615, %s615
      $region382: #{tpu_custom_call.1} parent=378 // loop_header_branch
        %630 = sbr.rel (%p628) target = $region386
      $region383: #{tpu_custom_call.1} parent=378 // loop_body
        %v634 = vld [vmem:[%s632] sm:%s625]
        %635 = vst [vmem:[%s633] sm:%s625] %v634
      $region384: #{tpu_custom_call.1} parent=378 // loop_footer
        %s631 = sadd.s32 1, %s627
      $region385: #{tpu_custom_call.1} parent=378 // loop_footer_branch
        %626 = sbr.rel target = $region381
      $region386: #{tpu_custom_call.1} parent=378 // loop_exit
        _
    $region379: #{tpu_custom_call.1} parent=1 // pred_fallthru
      _
    // Predicated region
    $region398: #{tpu_custom_call.1} parent=1 // pred_check
      _
    $region399: #{tpu_custom_call.1} parent=1 // pred_check_branch
      %660 = sbr.rel (0) target = $region401
    $region400: #{tpu_custom_call.1} parent=1 // pred_region
      %661 = vsyncadd [#allocation3], 16
    $region401: #{tpu_custom_call.1} parent=1 // pred_fallthru
      _
    %s662 = sld [smem:[#allocation5 + $0x6]]
    %s663 = sld [smem:[#allocation8 + $0x6]]
    %s664 = scalar_lea.vmem %s6, %s662
    %s665 = scalar_lea.vmem [#allocation2], 6
    %p667 = scmp.lt.u32.totalorder 1, 8
    %p668 = pneg %p667
    // Predicated region
    $region402: #{tpu_custom_call.1} parent=1 // pred_check
      _
    $region403: #{tpu_custom_call.1} parent=1 // pred_check_branch
      %670 = sbr.rel (%p667) target = $region405
    $region404: #{tpu_custom_call.1} parent=1 // pred_region
      %s686 = sand.u32 1, 7
      %p687 = scmp.eq.s32.totalorder %s686, 0
      %p688 = pneg %p687
      // Predicated region
      $region417: #{tpu_custom_call.1} parent=404 // pred_check
        _
      $region418: #{tpu_custom_call.1} parent=404 // pred_check_branch
        %690 = sbr.rel (%p687) target = $region420
      $region419: #{tpu_custom_call.1} parent=404 // pred_region
        %s691 = sand.u32 1, 7
        %s692 = ssub.s32 1, %s691
        %s693 = scalar_lea.vmem %s664, %s692
        %s694 = ssub.s32 1, %s691
        %s695 = scalar_lea.vmem %s665, %s694 [#allocation2]
        %s696 = sshll.u32 1, %s691
        %s697 = ssub.s32 %s696, 1
        loop: start=0, step=1, limit=1
        $region421: #{tpu_custom_call.1} parent=419 // loop_pre_header
          _
        $region422: #{tpu_custom_call.1} parent=419 // loop_header
          %s699 = sphi 0, %s703
          %p700 = scmp.ge.s32.totalorder %s699, 1
          %s704 = sphi %s693, %s693
          %s705 = sphi %s695, %s695
        $region423: #{tpu_custom_call.1} parent=419 // loop_header_branch
          %702 = sbr.rel (%p700) target = $region427
        $region424: #{tpu_custom_call.1} parent=419 // loop_body
          %v706 = vld [vmem:[%s704] sm:%s697]
          %707 = vst [vmem:[%s705] sm:%s697] %v706
        $region425: #{tpu_custom_call.1} parent=419 // loop_footer
          %s703 = sadd.s32 1, %s699
        $region426: #{tpu_custom_call.1} parent=419 // loop_footer_branch
          %698 = sbr.rel target = $region422
        $region427: #{tpu_custom_call.1} parent=419 // loop_exit
          _
      $region420: #{tpu_custom_call.1} parent=404 // pred_fallthru
        _
    $region405: #{tpu_custom_call.1} parent=1 // pred_fallthru
      _
    // Predicated region
    $region406: #{tpu_custom_call.1} parent=1 // pred_check
      %p671 = pneg %p667
    $region407: #{tpu_custom_call.1} parent=1 // pred_check_branch
      %673 = sbr.rel (%p671) target = $region409
    $region408: #{tpu_custom_call.1} parent=1 // pred_region
      %s674 = sshll.u32 1, 1
      %s675 = ssub.s32 %s674, 1
      loop: start=0, step=1, limit=1
      $region410: #{tpu_custom_call.1} parent=408 // loop_pre_header
        _
      $region411: #{tpu_custom_call.1} parent=408 // loop_header
        %s677 = sphi 0, %s681
        %p678 = scmp.ge.s32.totalorder %s677, 1
        %s682 = sphi %s664, %s664
        %s683 = sphi %s665, %s665
      $region412: #{tpu_custom_call.1} parent=408 // loop_header_branch
        %680 = sbr.rel (%p678) target = $region416
      $region413: #{tpu_custom_call.1} parent=408 // loop_body
        %v684 = vld [vmem:[%s682] sm:%s675]
        %685 = vst [vmem:[%s683] sm:%s675] %v684
      $region414: #{tpu_custom_call.1} parent=408 // loop_footer
        %s681 = sadd.s32 1, %s677
      $region415: #{tpu_custom_call.1} parent=408 // loop_footer_branch
        %676 = sbr.rel target = $region411
      $region416: #{tpu_custom_call.1} parent=408 // loop_exit
        _
    $region409: #{tpu_custom_call.1} parent=1 // pred_fallthru
      _
    // Predicated region
    $region428: #{tpu_custom_call.1} parent=1 // pred_check
      _
    $region429: #{tpu_custom_call.1} parent=1 // pred_check_branch
      %710 = sbr.rel (0) target = $region431
    $region430: #{tpu_custom_call.1} parent=1 // pred_region
      %711 = vsyncadd [#allocation3], 16
    $region431: #{tpu_custom_call.1} parent=1 // pred_fallthru
      _
    %s712 = scalar_lea.vmem %s6, %s663
    %s713 = scalar_lea.vmem [#allocation2], 14
    %p715 = scmp.lt.u32.totalorder 1, 8
    %p716 = pneg %p715
    // Predicated region
    $region432: #{tpu_custom_call.1} parent=1 // pred_check
      _
    $region433: #{tpu_custom_call.1} parent=1 // pred_check_branch
      %718 = sbr.rel (%p715) target = $region435
    $region434: #{tpu_custom_call.1} parent=1 // pred_region
      %s734 = sand.u32 1, 7
      %p735 = scmp.eq.s32.totalorder %s734, 0
      %p736 = pneg %p735
      // Predicated region
      $region447: #{tpu_custom_call.1} parent=434 // pred_check
        _
      $region448: #{tpu_custom_call.1} parent=434 // pred_check_branch
        %738 = sbr.rel (%p735) target = $region450
      $region449: #{tpu_custom_call.1} parent=434 // pred_region
        %s739 = sand.u32 1, 7
        %s740 = ssub.s32 1, %s739
        %s741 = scalar_lea.vmem %s712, %s740
        %s742 = ssub.s32 1, %s739
        %s743 = scalar_lea.vmem %s713, %s742 [#allocation2]
        %s744 = sshll.u32 1, %s739
        %s745 = ssub.s32 %s744, 1
        loop: start=0, step=1, limit=1
        $region451: #{tpu_custom_call.1} parent=449 // loop_pre_header
          _
        $region452: #{tpu_custom_call.1} parent=449 // loop_header
          %s747 = sphi 0, %s751
          %p748 = scmp.ge.s32.totalorder %s747, 1
          %s752 = sphi %s741, %s741
          %s753 = sphi %s743, %s743
        $region453: #{tpu_custom_call.1} parent=449 // loop_header_branch
          %750 = sbr.rel (%p748) target = $region457
        $region454: #{tpu_custom_call.1} parent=449 // loop_body
          %v754 = vld [vmem:[%s752] sm:%s745]
          %755 = vst [vmem:[%s753] sm:%s745] %v754
        $region455: #{tpu_custom_call.1} parent=449 // loop_footer
          %s751 = sadd.s32 1, %s747
        $region456: #{tpu_custom_call.1} parent=449 // loop_footer_branch
          %746 = sbr.rel target = $region452
        $region457: #{tpu_custom_call.1} parent=449 // loop_exit
          _
      $region450: #{tpu_custom_call.1} parent=434 // pred_fallthru
        _
    $region435: #{tpu_custom_call.1} parent=1 // pred_fallthru
      _
    // Predicated region
    $region436: #{tpu_custom_call.1} parent=1 // pred_check
      %p719 = pneg %p715
    $region437: #{tpu_custom_call.1} parent=1 // pred_check_branch
      %721 = sbr.rel (%p719) target = $region439
    $region438: #{tpu_custom_call.1} parent=1 // pred_region
      %s722 = sshll.u32 1, 1
      %s723 = ssub.s32 %s722, 1
      loop: start=0, step=1, limit=1
      $region440: #{tpu_custom_call.1} parent=438 // loop_pre_header
        _
      $region441: #{tpu_custom_call.1} parent=438 // loop_header
        %s725 = sphi 0, %s729
        %p726 = scmp.ge.s32.totalorder %s725, 1
        %s730 = sphi %s712, %s712
        %s731 = sphi %s713, %s713
      $region442: #{tpu_custom_call.1} parent=438 // loop_header_branch
        %728 = sbr.rel (%p726) target = $region446
      $region443: #{tpu_custom_call.1} parent=438 // loop_body
        %v732 = vld [vmem:[%s730] sm:%s723]
        %733 = vst [vmem:[%s731] sm:%s723] %v732
      $region444: #{tpu_custom_call.1} parent=438 // loop_footer
        %s729 = sadd.s32 1, %s725
      $region445: #{tpu_custom_call.1} parent=438 // loop_footer_branch
        %724 = sbr.rel target = $region441
      $region446: #{tpu_custom_call.1} parent=438 // loop_exit
        _
    $region439: #{tpu_custom_call.1} parent=1 // pred_fallthru
      _
    // Predicated region
    $region458: #{tpu_custom_call.1} parent=1 // pred_check
      _
    $region459: #{tpu_custom_call.1} parent=1 // pred_check_branch
      %758 = sbr.rel (0) target = $region461
    $region460: #{tpu_custom_call.1} parent=1 // pred_region
      %759 = vsyncadd [#allocation3], 16
    $region461: #{tpu_custom_call.1} parent=1 // pred_fallthru
      _
    %s760 = sld [smem:[#allocation5 + $0x7]]
    %s761 = sld [smem:[#allocation8 + $0x7]]
    %s762 = scalar_lea.vmem %s6, %s760
    %s763 = scalar_lea.vmem [#allocation2], 7
    %p765 = scmp.lt.u32.totalorder 1, 8
    %p766 = pneg %p765
    // Predicated region
    $region462: #{tpu_custom_call.1} parent=1 // pred_check
      _
    $region463: #{tpu_custom_call.1} parent=1 // pred_check_branch
      %768 = sbr.rel (%p765) target = $region465
    $region464: #{tpu_custom_call.1} parent=1 // pred_region
      %s784 = sand.u32 1, 7
      %p785 = scmp.eq.s32.totalorder %s784, 0
      %p786 = pneg %p785
      // Predicated region
      $region477: #{tpu_custom_call.1} parent=464 // pred_check
        _
      $region478: #{tpu_custom_call.1} parent=464 // pred_check_branch
        %788 = sbr.rel (%p785) target = $region480
      $region479: #{tpu_custom_call.1} parent=464 // pred_region
        %s789 = sand.u32 1, 7
        %s790 = ssub.s32 1, %s789
        %s791 = scalar_lea.vmem %s762, %s790
        %s792 = ssub.s32 1, %s789
        %s793 = scalar_lea.vmem %s763, %s792 [#allocation2]
        %s794 = sshll.u32 1, %s789
        %s795 = ssub.s32 %s794, 1
        loop: start=0, step=1, limit=1
        $region481: #{tpu_custom_call.1} parent=479 // loop_pre_header
          _
        $region482: #{tpu_custom_call.1} parent=479 // loop_header
          %s797 = sphi 0, %s801
          %p798 = scmp.ge.s32.totalorder %s797, 1
          %s802 = sphi %s791, %s791
          %s803 = sphi %s793, %s793
        $region483: #{tpu_custom_call.1} parent=479 // loop_header_branch
          %800 = sbr.rel (%p798) target = $region487
        $region484: #{tpu_custom_call.1} parent=479 // loop_body
          %v804 = vld [vmem:[%s802] sm:%s795]
          %805 = vst [vmem:[%s803] sm:%s795] %v804
        $region485: #{tpu_custom_call.1} parent=479 // loop_footer
          %s801 = sadd.s32 1, %s797
        $region486: #{tpu_custom_call.1} parent=479 // loop_footer_branch
          %796 = sbr.rel target = $region482
        $region487: #{tpu_custom_call.1} parent=479 // loop_exit
          _
      $region480: #{tpu_custom_call.1} parent=464 // pred_fallthru
        _
    $region465: #{tpu_custom_call.1} parent=1 // pred_fallthru
      _
    // Predicated region
    $region466: #{tpu_custom_call.1} parent=1 // pred_check
      %p769 = pneg %p765
    $region467: #{tpu_custom_call.1} parent=1 // pred_check_branch
      %771 = sbr.rel (%p769) target = $region469
    $region468: #{tpu_custom_call.1} parent=1 // pred_region
      %s772 = sshll.u32 1, 1
      %s773 = ssub.s32 %s772, 1
      loop: start=0, step=1, limit=1
      $region470: #{tpu_custom_call.1} parent=468 // loop_pre_header
        _
      $region471: #{tpu_custom_call.1} parent=468 // loop_header
        %s775 = sphi 0, %s779
        %p776 = scmp.ge.s32.totalorder %s775, 1
        %s780 = sphi %s762, %s762
        %s781 = sphi %s763, %s763
      $region472: #{tpu_custom_call.1} parent=468 // loop_header_branch
        %778 = sbr.rel (%p776) target = $region476
      $region473: #{tpu_custom_call.1} parent=468 // loop_body
        %v782 = vld [vmem:[%s780] sm:%s773]
        %783 = vst [vmem:[%s781] sm:%s773] %v782
      $region474: #{tpu_custom_call.1} parent=468 // loop_footer
        %s779 = sadd.s32 1, %s775
      $region475: #{tpu_custom_call.1} parent=468 // loop_footer_branch
        %774 = sbr.rel target = $region471
      $region476: #{tpu_custom_call.1} parent=468 // loop_exit
        _
    $region469: #{tpu_custom_call.1} parent=1 // pred_fallthru
      _
    // Predicated region
    $region488: #{tpu_custom_call.1} parent=1 // pred_check
      _
    $region489: #{tpu_custom_call.1} parent=1 // pred_check_branch
      %808 = sbr.rel (0) target = $region491
    $region490: #{tpu_custom_call.1} parent=1 // pred_region
      %809 = vsyncadd [#allocation3], 16
    $region491: #{tpu_custom_call.1} parent=1 // pred_fallthru
      _
    %s810 = scalar_lea.vmem %s6, %s761
    %s811 = scalar_lea.vmem [#allocation2], 15
    %p813 = scmp.lt.u32.totalorder 1, 8
    %p814 = pneg %p813
    // Predicated region
    $region492: #{tpu_custom_call.1} parent=1 // pred_check
      _
    $region493: #{tpu_custom_call.1} parent=1 // pred_check_branch
      %816 = sbr.rel (%p813) target = $region495
    $region494: #{tpu_custom_call.1} parent=1 // pred_region
      %s832 = sand.u32 1, 7
      %p833 = scmp.eq.s32.totalorder %s832, 0
      %p834 = pneg %p833
      // Predicated region
      $region507: #{tpu_custom_call.1} parent=494 // pred_check
        _
      $region508: #{tpu_custom_call.1} parent=494 // pred_check_branch
        %836 = sbr.rel (%p833) target = $region510
      $region509: #{tpu_custom_call.1} parent=494 // pred_region
        %s837 = sand.u32 1, 7
        %s838 = ssub.s32 1, %s837
        %s839 = scalar_lea.vmem %s810, %s838
        %s840 = ssub.s32 1, %s837
        %s841 = scalar_lea.vmem %s811, %s840 [#allocation2]
        %s842 = sshll.u32 1, %s837
        %s843 = ssub.s32 %s842, 1
        loop: start=0, step=1, limit=1
        $region511: #{tpu_custom_call.1} parent=509 // loop_pre_header
          _
        $region512: #{tpu_custom_call.1} parent=509 // loop_header
          %s845 = sphi 0, %s849
          %p846 = scmp.ge.s32.totalorder %s845, 1
          %s850 = sphi %s839, %s839
          %s851 = sphi %s841, %s841
        $region513: #{tpu_custom_call.1} parent=509 // loop_header_branch
          %848 = sbr.rel (%p846) target = $region517
        $region514: #{tpu_custom_call.1} parent=509 // loop_body
          %v852 = vld [vmem:[%s850] sm:%s843]
          %853 = vst [vmem:[%s851] sm:%s843] %v852
        $region515: #{tpu_custom_call.1} parent=509 // loop_footer
          %s849 = sadd.s32 1, %s845
        $region516: #{tpu_custom_call.1} parent=509 // loop_footer_branch
          %844 = sbr.rel target = $region512
        $region517: #{tpu_custom_call.1} parent=509 // loop_exit
          _
      $region510: #{tpu_custom_call.1} parent=494 // pred_fallthru
        _
    $region495: #{tpu_custom_call.1} parent=1 // pred_fallthru
      _
    // Predicated region
    $region496: #{tpu_custom_call.1} parent=1 // pred_check
      %p817 = pneg %p813
    $region497: #{tpu_custom_call.1} parent=1 // pred_check_branch
      %819 = sbr.rel (%p817) target = $region499
    $region498: #{tpu_custom_call.1} parent=1 // pred_region
      %s820 = sshll.u32 1, 1
      %s821 = ssub.s32 %s820, 1
      loop: start=0, step=1, limit=1
      $region500: #{tpu_custom_call.1} parent=498 // loop_pre_header
        _
      $region501: #{tpu_custom_call.1} parent=498 // loop_header
        %s823 = sphi 0, %s827
        %p824 = scmp.ge.s32.totalorder %s823, 1
        %s828 = sphi %s810, %s810
        %s829 = sphi %s811, %s811
      $region502: #{tpu_custom_call.1} parent=498 // loop_header_branch
        %826 = sbr.rel (%p824) target = $region506
      $region503: #{tpu_custom_call.1} parent=498 // loop_body
        %v830 = vld [vmem:[%s828] sm:%s821]
        %831 = vst [vmem:[%s829] sm:%s821] %v830
      $region504: #{tpu_custom_call.1} parent=498 // loop_footer
        %s827 = sadd.s32 1, %s823
      $region505: #{tpu_custom_call.1} parent=498 // loop_footer_branch
        %822 = sbr.rel target = $region501
      $region506: #{tpu_custom_call.1} parent=498 // loop_exit
        _
    $region499: #{tpu_custom_call.1} parent=1 // pred_fallthru
      _
    // Predicated region
    $region518: #{tpu_custom_call.1} parent=1 // pred_check
      _
    $region519: #{tpu_custom_call.1} parent=1 // pred_check_branch
      %856 = sbr.rel (0) target = $region521
    $region520: #{tpu_custom_call.1} parent=1 // pred_region
      %857 = vsyncadd [#allocation3], 16
    $region521: #{tpu_custom_call.1} parent=1 // pred_fallthru
      _
    %s858 = sld [smem:[#allocation5 + $0x8]]
    %s859 = sld [smem:[#allocation8 + $0x8]]
    %s860 = scalar_lea.vmem %s6, %s858
    %s861 = scalar_lea.vmem [#allocation2], 16
    %s862 = scalar_lea.sflag [#allocation3], 1
    %p864 = scmp.lt.u32.totalorder 1, 8
    %p865 = pneg %p864
    // Predicated region
    $region522: #{tpu_custom_call.1} parent=1 // pred_check
      _
    $region523: #{tpu_custom_call.1} parent=1 // pred_check_branch
      %867 = sbr.rel (%p864) target = $region525
    $region524: #{tpu_custom_call.1} parent=1 // pred_region
      %s883 = sand.u32 1, 7
      %p884 = scmp.eq.s32.totalorder %s883, 0
      %p885 = pneg %p884
      // Predicated region
      $region537: #{tpu_custom_call.1} parent=524 // pred_check
        _
      $region538: #{tpu_custom_call.1} parent=524 // pred_check_branch
        %887 = sbr.rel (%p884) target = $region540
      $region539: #{tpu_custom_call.1} parent=524 // pred_region
        %s888 = sand.u32 1, 7
        %s889 = ssub.s32 1, %s888
        %s890 = scalar_lea.vmem %s860, %s889
        %s891 = ssub.s32 1, %s888
        %s892 = scalar_lea.vmem %s861, %s891 [#allocation2]
        %s893 = sshll.u32 1, %s888
        %s894 = ssub.s32 %s893, 1
        loop: start=0, step=1, limit=1
        $region541: #{tpu_custom_call.1} parent=539 // loop_pre_header
          _
        $region542: #{tpu_custom_call.1} parent=539 // loop_header
          %s896 = sphi 0, %s900
          %p897 = scmp.ge.s32.totalorder %s896, 1
          %s901 = sphi %s890, %s890
          %s902 = sphi %s892, %s892
        $region543: #{tpu_custom_call.1} parent=539 // loop_header_branch
          %899 = sbr.rel (%p897) target = $region547
        $region544: #{tpu_custom_call.1} parent=539 // loop_body
          %v903 = vld [vmem:[%s901] sm:%s894]
          %904 = vst [vmem:[%s902] sm:%s894] %v903
        $region545: #{tpu_custom_call.1} parent=539 // loop_footer
          %s900 = sadd.s32 1, %s896
        $region546: #{tpu_custom_call.1} parent=539 // loop_footer_branch
          %895 = sbr.rel target = $region542
        $region547: #{tpu_custom_call.1} parent=539 // loop_exit
          _
      $region540: #{tpu_custom_call.1} parent=524 // pred_fallthru
        _
    $region525: #{tpu_custom_call.1} parent=1 // pred_fallthru
      _
    // Predicated region
    $region526: #{tpu_custom_call.1} parent=1 // pred_check
      %p868 = pneg %p864
    $region527: #{tpu_custom_call.1} parent=1 // pred_check_branch
      %870 = sbr.rel (%p868) target = $region529
    $region528: #{tpu_custom_call.1} parent=1 // pred_region
      %s871 = sshll.u32 1, 1
      %s872 = ssub.s32 %s871, 1
      loop: start=0, step=1, limit=1
      $region530: #{tpu_custom_call.1} parent=528 // loop_pre_header
        _
      $region531: #{tpu_custom_call.1} parent=528 // loop_header
        %s874 = sphi 0, %s878
        %p875 = scmp.ge.s32.totalorder %s874, 1
        %s879 = sphi %s860, %s860
        %s880 = sphi %s861, %s861
      $region532: #{tpu_custom_call.1} parent=528 // loop_header_branch
        %877 = sbr.rel (%p875) target = $region536
      $region533: #{tpu_custom_call.1} parent=528 // loop_body
        %v881 = vld [vmem:[%s879] sm:%s872]
        %882 = vst [vmem:[%s880] sm:%s872] %v881
      $region534: #{tpu_custom_call.1} parent=528 // loop_footer
        %s878 = sadd.s32 1, %s874
      $region535: #{tpu_custom_call.1} parent=528 // loop_footer_branch
        %873 = sbr.rel target = $region531
      $region536: #{tpu_custom_call.1} parent=528 // loop_exit
        _
    $region529: #{tpu_custom_call.1} parent=1 // pred_fallthru
      _
    // Predicated region
    $region548: #{tpu_custom_call.1} parent=1 // pred_check
      _
    $region549: #{tpu_custom_call.1} parent=1 // pred_check_branch
      %907 = sbr.rel (0) target = $region551
    $region550: #{tpu_custom_call.1} parent=1 // pred_region
      %908 = vsyncadd %s862, 16
    $region551: #{tpu_custom_call.1} parent=1 // pred_fallthru
      _
    %s909 = scalar_lea.vmem %s6, %s859
    %s910 = scalar_lea.vmem [#allocation2], 24
    %p912 = scmp.lt.u32.totalorder 1, 8
    %p913 = pneg %p912
    // Predicated region
    $region552: #{tpu_custom_call.1} parent=1 // pred_check
      _
    $region553: #{tpu_custom_call.1} parent=1 // pred_check_branch
      %915 = sbr.rel (%p912) target = $region555
    $region554: #{tpu_custom_call.1} parent=1 // pred_region
      %s931 = sand.u32 1, 7
      %p932 = scmp.eq.s32.totalorder %s931, 0
      %p933 = pneg %p932
      // Predicated region
      $region567: #{tpu_custom_call.1} parent=554 // pred_check
        _
      $region568: #{tpu_custom_call.1} parent=554 // pred_check_branch
        %935 = sbr.rel (%p932) target = $region570
      $region569: #{tpu_custom_call.1} parent=554 // pred_region
        %s936 = sand.u32 1, 7
        %s937 = ssub.s32 1, %s936
        %s938 = scalar_lea.vmem %s909, %s937
        %s939 = ssub.s32 1, %s936
        %s940 = scalar_lea.vmem %s910, %s939 [#allocation2]
        %s941 = sshll.u32 1, %s936
        %s942 = ssub.s32 %s941, 1
        loop: start=0, step=1, limit=1
        $region571: #{tpu_custom_call.1} parent=569 // loop_pre_header
          _
        $region572: #{tpu_custom_call.1} parent=569 // loop_header
          %s944 = sphi 0, %s948
          %p945 = scmp.ge.s32.totalorder %s944, 1
          %s949 = sphi %s938, %s938
          %s950 = sphi %s940, %s940
        $region573: #{tpu_custom_call.1} parent=569 // loop_header_branch
          %947 = sbr.rel (%p945) target = $region577
        $region574: #{tpu_custom_call.1} parent=569 // loop_body
          %v951 = vld [vmem:[%s949] sm:%s942]
          %952 = vst [vmem:[%s950] sm:%s942] %v951
        $region575: #{tpu_custom_call.1} parent=569 // loop_footer
          %s948 = sadd.s32 1, %s944
        $region576: #{tpu_custom_call.1} parent=569 // loop_footer_branch
          %943 = sbr.rel target = $region572
        $region577: #{tpu_custom_call.1} parent=569 // loop_exit
          _
      $region570: #{tpu_custom_call.1} parent=554 // pred_fallthru
        _
    $region555: #{tpu_custom_call.1} parent=1 // pred_fallthru
      _
    // Predicated region
    $region556: #{tpu_custom_call.1} parent=1 // pred_check
      %p916 = pneg %p912
    $region557: #{tpu_custom_call.1} parent=1 // pred_check_branch
      %918 = sbr.rel (%p916) target = $region559
    $region558: #{tpu_custom_call.1} parent=1 // pred_region
      %s919 = sshll.u32 1, 1
      %s920 = ssub.s32 %s919, 1
      loop: start=0, step=1, limit=1
      $region560: #{tpu_custom_call.1} parent=558 // loop_pre_header
        _
      $region561: #{tpu_custom_call.1} parent=558 // loop_header
        %s922 = sphi 0, %s926
        %p923 = scmp.ge.s32.totalorder %s922, 1
        %s927 = sphi %s909, %s909
        %s928 = sphi %s910, %s910
      $region562: #{tpu_custom_call.1} parent=558 // loop_header_branch
        %925 = sbr.rel (%p923) target = $region566
      $region563: #{tpu_custom_call.1} parent=558 // loop_body
        %v929 = vld [vmem:[%s927] sm:%s920]
        %930 = vst [vmem:[%s928] sm:%s920] %v929
      $region564: #{tpu_custom_call.1} parent=558 // loop_footer
        %s926 = sadd.s32 1, %s922
      $region565: #{tpu_custom_call.1} parent=558 // loop_footer_branch
        %921 = sbr.rel target = $region561
      $region566: #{tpu_custom_call.1} parent=558 // loop_exit
        _
    $region559: #{tpu_custom_call.1} parent=1 // pred_fallthru
      _
    // Predicated region
    $region578: #{tpu_custom_call.1} parent=1 // pred_check
      _
    $region579: #{tpu_custom_call.1} parent=1 // pred_check_branch
      %955 = sbr.rel (0) target = $region581
    $region580: #{tpu_custom_call.1} parent=1 // pred_region
      %956 = vsyncadd %s862, 16
    $region581: #{tpu_custom_call.1} parent=1 // pred_fallthru
      _
    %s957 = sld [smem:[#allocation5 + $0x9]]
    %s958 = sld [smem:[#allocation8 + $0x9]]
    %s959 = scalar_lea.vmem %s6, %s957
    %s960 = scalar_lea.vmem [#allocation2], 17
    %p962 = scmp.lt.u32.totalorder 1, 8
    %p963 = pneg %p962
    // Predicated region
    $region582: #{tpu_custom_call.1} parent=1 // pred_check
      _
    $region583: #{tpu_custom_call.1} parent=1 // pred_check_branch
      %965 = sbr.rel (%p962) target = $region585
    $region584: #{tpu_custom_call.1} parent=1 // pred_region
      %s981 = sand.u32 1, 7
      %p982 = scmp.eq.s32.totalorder %s981, 0
      %p983 = pneg %p982
      // Predicated region
      $region597: #{tpu_custom_call.1} parent=584 // pred_check
        _
      $region598: #{tpu_custom_call.1} parent=584 // pred_check_branch
        %985 = sbr.rel (%p982) target = $region600
      $region599: #{tpu_custom_call.1} parent=584 // pred_region
        %s986 = sand.u32 1, 7
        %s987 = ssub.s32 1, %s986
        %s988 = scalar_lea.vmem %s959, %s987
        %s989 = ssub.s32 1, %s986
        %s990 = scalar_lea.vmem %s960, %s989 [#allocation2]
        %s991 = sshll.u32 1, %s986
        %s992 = ssub.s32 %s991, 1
        loop: start=0, step=1, limit=1
        $region601: #{tpu_custom_call.1} parent=599 // loop_pre_header
          _
        $region602: #{tpu_custom_call.1} parent=599 // loop_header
          %s994 = sphi 0, %s998
          %p995 = scmp.ge.s32.totalorder %s994, 1
          %s999 = sphi %s988, %s988
          %s1000 = sphi %s990, %s990
        $region603: #{tpu_custom_call.1} parent=599 // loop_header_branch
          %997 = sbr.rel (%p995) target = $region607
        $region604: #{tpu_custom_call.1} parent=599 // loop_body
          %v1001 = vld [vmem:[%s999] sm:%s992]
          %1002 = vst [vmem:[%s1000] sm:%s992] %v1001
        $region605: #{tpu_custom_call.1} parent=599 // loop_footer
          %s998 = sadd.s32 1, %s994
        $region606: #{tpu_custom_call.1} parent=599 // loop_footer_branch
          %993 = sbr.rel target = $region602
        $region607: #{tpu_custom_call.1} parent=599 // loop_exit
          _
      $region600: #{tpu_custom_call.1} parent=584 // pred_fallthru
        _
    $region585: #{tpu_custom_call.1} parent=1 // pred_fallthru
      _
    // Predicated region
    $region586: #{tpu_custom_call.1} parent=1 // pred_check
      %p966 = pneg %p962
    $region587: #{tpu_custom_call.1} parent=1 // pred_check_branch
      %968 = sbr.rel (%p966) target = $region589
    $region588: #{tpu_custom_call.1} parent=1 // pred_region
      %s969 = sshll.u32 1, 1
      %s970 = ssub.s32 %s969, 1
      loop: start=0, step=1, limit=1
      $region590: #{tpu_custom_call.1} parent=588 // loop_pre_header
        _
      $region591: #{tpu_custom_call.1} parent=588 // loop_header
        %s972 = sphi 0, %s976
        %p973 = scmp.ge.s32.totalorder %s972, 1
        %s977 = sphi %s959, %s959
        %s978 = sphi %s960, %s960
      $region592: #{tpu_custom_call.1} parent=588 // loop_header_branch
        %975 = sbr.rel (%p973) target = $region596
      $region593: #{tpu_custom_call.1} parent=588 // loop_body
        %v979 = vld [vmem:[%s977] sm:%s970]
        %980 = vst [vmem:[%s978] sm:%s970] %v979
      $region594: #{tpu_custom_call.1} parent=588 // loop_footer
        %s976 = sadd.s32 1, %s972
      $region595: #{tpu_custom_call.1} parent=588 // loop_footer_branch
        %971 = sbr.rel target = $region591
      $region596: #{tpu_custom_call.1} parent=588 // loop_exit
        _
    $region589: #{tpu_custom_call.1} parent=1 // pred_fallthru
      _
    // Predicated region
    $region608: #{tpu_custom_call.1} parent=1 // pred_check
      _
    $region609: #{tpu_custom_call.1} parent=1 // pred_check_branch
      %1005 = sbr.rel (0) target = $region611
    $region610: #{tpu_custom_call.1} parent=1 // pred_region
      %1006 = vsyncadd %s862, 16
    $region611: #{tpu_custom_call.1} parent=1 // pred_fallthru
      _
    %s1007 = scalar_lea.vmem %s6, %s958
    %s1008 = scalar_lea.vmem [#allocation2], 25
    %p1010 = scmp.lt.u32.totalorder 1, 8
    %p1011 = pneg %p1010
    // Predicated region
    $region612: #{tpu_custom_call.1} parent=1 // pred_check
      _
    $region613: #{tpu_custom_call.1} parent=1 // pred_check_branch
      %1013 = sbr.rel (%p1010) target = $region615
    $region614: #{tpu_custom_call.1} parent=1 // pred_region
      %s1029 = sand.u32 1, 7
      %p1030 = scmp.eq.s32.totalorder %s1029, 0
      %p1031 = pneg %p1030
      // Predicated region
      $region627: #{tpu_custom_call.1} parent=614 // pred_check
        _
      $region628: #{tpu_custom_call.1} parent=614 // pred_check_branch
        %1033 = sbr.rel (%p1030) target = $region630
      $region629: #{tpu_custom_call.1} parent=614 // pred_region
        %s1034 = sand.u32 1, 7
        %s1035 = ssub.s32 1, %s1034
        %s1036 = scalar_lea.vmem %s1007, %s1035
        %s1037 = ssub.s32 1, %s1034
        %s1038 = scalar_lea.vmem %s1008, %s1037 [#allocation2]
        %s1039 = sshll.u32 1, %s1034
        %s1040 = ssub.s32 %s1039, 1
        loop: start=0, step=1, limit=1
        $region631: #{tpu_custom_call.1} parent=629 // loop_pre_header
          _
        $region632: #{tpu_custom_call.1} parent=629 // loop_header
          %s1042 = sphi 0, %s1046
          %p1043 = scmp.ge.s32.totalorder %s1042, 1
          %s1047 = sphi %s1036, %s1036
          %s1048 = sphi %s1038, %s1038
        $region633: #{tpu_custom_call.1} parent=629 // loop_header_branch
          %1045 = sbr.rel (%p1043) target = $region637
        $region634: #{tpu_custom_call.1} parent=629 // loop_body
          %v1049 = vld [vmem:[%s1047] sm:%s1040]
          %1050 = vst [vmem:[%s1048] sm:%s1040] %v1049
        $region635: #{tpu_custom_call.1} parent=629 // loop_footer
          %s1046 = sadd.s32 1, %s1042
        $region636: #{tpu_custom_call.1} parent=629 // loop_footer_branch
          %1041 = sbr.rel target = $region632
        $region637: #{tpu_custom_call.1} parent=629 // loop_exit
          _
      $region630: #{tpu_custom_call.1} parent=614 // pred_fallthru
        _
    $region615: #{tpu_custom_call.1} parent=1 // pred_fallthru
      _
    // Predicated region
    $region616: #{tpu_custom_call.1} parent=1 // pred_check
      %p1014 = pneg %p1010
    $region617: #{tpu_custom_call.1} parent=1 // pred_check_branch
      %1016 = sbr.rel (%p1014) target = $region619
    $region618: #{tpu_custom_call.1} parent=1 // pred_region
      %s1017 = sshll.u32 1, 1
      %s1018 = ssub.s32 %s1017, 1
      loop: start=0, step=1, limit=1
      $region620: #{tpu_custom_call.1} parent=618 // loop_pre_header
        _
      $region621: #{tpu_custom_call.1} parent=618 // loop_header
        %s1020 = sphi 0, %s1024
        %p1021 = scmp.ge.s32.totalorder %s1020, 1
        %s1025 = sphi %s1007, %s1007
        %s1026 = sphi %s1008, %s1008
      $region622: #{tpu_custom_call.1} parent=618 // loop_header_branch
        %1023 = sbr.rel (%p1021) target = $region626
      $region623: #{tpu_custom_call.1} parent=618 // loop_body
        %v1027 = vld [vmem:[%s1025] sm:%s1018]
        %1028 = vst [vmem:[%s1026] sm:%s1018] %v1027
      $region624: #{tpu_custom_call.1} parent=618 // loop_footer
        %s1024 = sadd.s32 1, %s1020
      $region625: #{tpu_custom_call.1} parent=618 // loop_footer_branch
        %1019 = sbr.rel target = $region621
      $region626: #{tpu_custom_call.1} parent=618 // loop_exit
        _
    $region619: #{tpu_custom_call.1} parent=1 // pred_fallthru
      _
    // Predicated region
    $region638: #{tpu_custom_call.1} parent=1 // pred_check
      _
    $region639: #{tpu_custom_call.1} parent=1 // pred_check_branch
      %1053 = sbr.rel (0) target = $region641
    $region640: #{tpu_custom_call.1} parent=1 // pred_region
      %1054 = vsyncadd %s862, 16
    $region641: #{tpu_custom_call.1} parent=1 // pred_fallthru
      _
    %s1055 = sld [smem:[#allocation5 + $0xa]]
    %s1056 = sld [smem:[#allocation8 + $0xa]]
    %s1057 = scalar_lea.vmem %s6, %s1055
    %s1058 = scalar_lea.vmem [#allocation2], 18
    %p1060 = scmp.lt.u32.totalorder 1, 8
    %p1061 = pneg %p1060
    // Predicated region
    $region642: #{tpu_custom_call.1} parent=1 // pred_check
      _
    $region643: #{tpu_custom_call.1} parent=1 // pred_check_branch
      %1063 = sbr.rel (%p1060) target = $region645
    $region644: #{tpu_custom_call.1} parent=1 // pred_region
      %s1079 = sand.u32 1, 7
      %p1080 = scmp.eq.s32.totalorder %s1079, 0
      %p1081 = pneg %p1080
      // Predicated region
      $region657: #{tpu_custom_call.1} parent=644 // pred_check
        _
      $region658: #{tpu_custom_call.1} parent=644 // pred_check_branch
        %1083 = sbr.rel (%p1080) target = $region660
      $region659: #{tpu_custom_call.1} parent=644 // pred_region
        %s1084 = sand.u32 1, 7
        %s1085 = ssub.s32 1, %s1084
        %s1086 = scalar_lea.vmem %s1057, %s1085
        %s1087 = ssub.s32 1, %s1084
        %s1088 = scalar_lea.vmem %s1058, %s1087 [#allocation2]
        %s1089 = sshll.u32 1, %s1084
        %s1090 = ssub.s32 %s1089, 1
        loop: start=0, step=1, limit=1
        $region661: #{tpu_custom_call.1} parent=659 // loop_pre_header
          _
        $region662: #{tpu_custom_call.1} parent=659 // loop_header
          %s1092 = sphi 0, %s1096
          %p1093 = scmp.ge.s32.totalorder %s1092, 1
          %s1097 = sphi %s1086, %s1086
          %s1098 = sphi %s1088, %s1088
        $region663: #{tpu_custom_call.1} parent=659 // loop_header_branch
          %1095 = sbr.rel (%p1093) target = $region667
        $region664: #{tpu_custom_call.1} parent=659 // loop_body
          %v1099 = vld [vmem:[%s1097] sm:%s1090]
          %1100 = vst [vmem:[%s1098] sm:%s1090] %v1099
        $region665: #{tpu_custom_call.1} parent=659 // loop_footer
          %s1096 = sadd.s32 1, %s1092
        $region666: #{tpu_custom_call.1} parent=659 // loop_footer_branch
          %1091 = sbr.rel target = $region662
        $region667: #{tpu_custom_call.1} parent=659 // loop_exit
          _
      $region660: #{tpu_custom_call.1} parent=644 // pred_fallthru
        _
    $region645: #{tpu_custom_call.1} parent=1 // pred_fallthru
      _
    // Predicated region
    $region646: #{tpu_custom_call.1} parent=1 // pred_check
      %p1064 = pneg %p1060
    $region647: #{tpu_custom_call.1} parent=1 // pred_check_branch
      %1066 = sbr.rel (%p1064) target = $region649
    $region648: #{tpu_custom_call.1} parent=1 // pred_region
      %s1067 = sshll.u32 1, 1
      %s1068 = ssub.s32 %s1067, 1
      loop: start=0, step=1, limit=1
      $region650: #{tpu_custom_call.1} parent=648 // loop_pre_header
        _
      $region651: #{tpu_custom_call.1} parent=648 // loop_header
        %s1070 = sphi 0, %s1074
        %p1071 = scmp.ge.s32.totalorder %s1070, 1
        %s1075 = sphi %s1057, %s1057
        %s1076 = sphi %s1058, %s1058
      $region652: #{tpu_custom_call.1} parent=648 // loop_header_branch
        %1073 = sbr.rel (%p1071) target = $region656
      $region653: #{tpu_custom_call.1} parent=648 // loop_body
        %v1077 = vld [vmem:[%s1075] sm:%s1068]
        %1078 = vst [vmem:[%s1076] sm:%s1068] %v1077
      $region654: #{tpu_custom_call.1} parent=648 // loop_footer
        %s1074 = sadd.s32 1, %s1070
      $region655: #{tpu_custom_call.1} parent=648 // loop_footer_branch
        %1069 = sbr.rel target = $region651
      $region656: #{tpu_custom_call.1} parent=648 // loop_exit
        _
    $region649: #{tpu_custom_call.1} parent=1 // pred_fallthru
      _
    // Predicated region
    $region668: #{tpu_custom_call.1} parent=1 // pred_check
      _
    $region669: #{tpu_custom_call.1} parent=1 // pred_check_branch
      %1103 = sbr.rel (0) target = $region671
    $region670: #{tpu_custom_call.1} parent=1 // pred_region
      %1104 = vsyncadd %s862, 16
    $region671: #{tpu_custom_call.1} parent=1 // pred_fallthru
      _
    %s1105 = scalar_lea.vmem %s6, %s1056
    %s1106 = scalar_lea.vmem [#allocation2], 26
    %p1108 = scmp.lt.u32.totalorder 1, 8
    %p1109 = pneg %p1108
    // Predicated region
    $region672: #{tpu_custom_call.1} parent=1 // pred_check
      _
    $region673: #{tpu_custom_call.1} parent=1 // pred_check_branch
      %1111 = sbr.rel (%p1108) target = $region675
    $region674: #{tpu_custom_call.1} parent=1 // pred_region
      %s1127 = sand.u32 1, 7
      %p1128 = scmp.eq.s32.totalorder %s1127, 0
      %p1129 = pneg %p1128
      // Predicated region
      $region687: #{tpu_custom_call.1} parent=674 // pred_check
        _
      $region688: #{tpu_custom_call.1} parent=674 // pred_check_branch
        %1131 = sbr.rel (%p1128) target = $region690
      $region689: #{tpu_custom_call.1} parent=674 // pred_region
        %s1132 = sand.u32 1, 7
        %s1133 = ssub.s32 1, %s1132
        %s1134 = scalar_lea.vmem %s1105, %s1133
        %s1135 = ssub.s32 1, %s1132
        %s1136 = scalar_lea.vmem %s1106, %s1135 [#allocation2]
        %s1137 = sshll.u32 1, %s1132
        %s1138 = ssub.s32 %s1137, 1
        loop: start=0, step=1, limit=1
        $region691: #{tpu_custom_call.1} parent=689 // loop_pre_header
          _
        $region692: #{tpu_custom_call.1} parent=689 // loop_header
          %s1140 = sphi 0, %s1144
          %p1141 = scmp.ge.s32.totalorder %s1140, 1
          %s1145 = sphi %s1134, %s1134
          %s1146 = sphi %s1136, %s1136
        $region693: #{tpu_custom_call.1} parent=689 // loop_header_branch
          %1143 = sbr.rel (%p1141) target = $region697
        $region694: #{tpu_custom_call.1} parent=689 // loop_body
          %v1147 = vld [vmem:[%s1145] sm:%s1138]
          %1148 = vst [vmem:[%s1146] sm:%s1138] %v1147
        $region695: #{tpu_custom_call.1} parent=689 // loop_footer
          %s1144 = sadd.s32 1, %s1140
        $region696: #{tpu_custom_call.1} parent=689 // loop_footer_branch
          %1139 = sbr.rel target = $region692
        $region697: #{tpu_custom_call.1} parent=689 // loop_exit
          _
      $region690: #{tpu_custom_call.1} parent=674 // pred_fallthru
        _
    $region675: #{tpu_custom_call.1} parent=1 // pred_fallthru
      _
    // Predicated region
    $region676: #{tpu_custom_call.1} parent=1 // pred_check
      %p1112 = pneg %p1108
    $region677: #{tpu_custom_call.1} parent=1 // pred_check_branch
      %1114 = sbr.rel (%p1112) target = $region679
    $region678: #{tpu_custom_call.1} parent=1 // pred_region
      %s1115 = sshll.u32 1, 1
      %s1116 = ssub.s32 %s1115, 1
      loop: start=0, step=1, limit=1
      $region680: #{tpu_custom_call.1} parent=678 // loop_pre_header
        _
      $region681: #{tpu_custom_call.1} parent=678 // loop_header
        %s1118 = sphi 0, %s1122
        %p1119 = scmp.ge.s32.totalorder %s1118, 1
        %s1123 = sphi %s1105, %s1105
        %s1124 = sphi %s1106, %s1106
      $region682: #{tpu_custom_call.1} parent=678 // loop_header_branch
        %1121 = sbr.rel (%p1119) target = $region686
      $region683: #{tpu_custom_call.1} parent=678 // loop_body
        %v1125 = vld [vmem:[%s1123] sm:%s1116]
        %1126 = vst [vmem:[%s1124] sm:%s1116] %v1125
      $region684: #{tpu_custom_call.1} parent=678 // loop_footer
        %s1122 = sadd.s32 1, %s1118
      $region685: #{tpu_custom_call.1} parent=678 // loop_footer_branch
        %1117 = sbr.rel target = $region681
      $region686: #{tpu_custom_call.1} parent=678 // loop_exit
        _
    $region679: #{tpu_custom_call.1} parent=1 // pred_fallthru
      _
    // Predicated region
    $region698: #{tpu_custom_call.1} parent=1 // pred_check
      _
    $region699: #{tpu_custom_call.1} parent=1 // pred_check_branch
      %1151 = sbr.rel (0) target = $region701
    $region700: #{tpu_custom_call.1} parent=1 // pred_region
      %1152 = vsyncadd %s862, 16
    $region701: #{tpu_custom_call.1} parent=1 // pred_fallthru
      _
    %s1153 = sld [smem:[#allocation5 + $0xb]]
    %s1154 = sld [smem:[#allocation8 + $0xb]]
    %s1155 = scalar_lea.vmem %s6, %s1153
    %s1156 = scalar_lea.vmem [#allocation2], 19
    %p1158 = scmp.lt.u32.totalorder 1, 8
    %p1159 = pneg %p1158
    // Predicated region
    $region702: #{tpu_custom_call.1} parent=1 // pred_check
      _
    $region703: #{tpu_custom_call.1} parent=1 // pred_check_branch
      %1161 = sbr.rel (%p1158) target = $region705
    $region704: #{tpu_custom_call.1} parent=1 // pred_region
      %s1177 = sand.u32 1, 7
      %p1178 = scmp.eq.s32.totalorder %s1177, 0
      %p1179 = pneg %p1178
      // Predicated region
      $region717: #{tpu_custom_call.1} parent=704 // pred_check
        _
      $region718: #{tpu_custom_call.1} parent=704 // pred_check_branch
        %1181 = sbr.rel (%p1178) target = $region720
      $region719: #{tpu_custom_call.1} parent=704 // pred_region
        %s1182 = sand.u32 1, 7
        %s1183 = ssub.s32 1, %s1182
        %s1184 = scalar_lea.vmem %s1155, %s1183
        %s1185 = ssub.s32 1, %s1182
        %s1186 = scalar_lea.vmem %s1156, %s1185 [#allocation2]
        %s1187 = sshll.u32 1, %s1182
        %s1188 = ssub.s32 %s1187, 1
        loop: start=0, step=1, limit=1
        $region721: #{tpu_custom_call.1} parent=719 // loop_pre_header
          _
        $region722: #{tpu_custom_call.1} parent=719 // loop_header
          %s1190 = sphi 0, %s1194
          %p1191 = scmp.ge.s32.totalorder %s1190, 1
          %s1195 = sphi %s1184, %s1184
          %s1196 = sphi %s1186, %s1186
        $region723: #{tpu_custom_call.1} parent=719 // loop_header_branch
          %1193 = sbr.rel (%p1191) target = $region727
        $region724: #{tpu_custom_call.1} parent=719 // loop_body
          %v1197 = vld [vmem:[%s1195] sm:%s1188]
          %1198 = vst [vmem:[%s1196] sm:%s1188] %v1197
        $region725: #{tpu_custom_call.1} parent=719 // loop_footer
          %s1194 = sadd.s32 1, %s1190
        $region726: #{tpu_custom_call.1} parent=719 // loop_footer_branch
          %1189 = sbr.rel target = $region722
        $region727: #{tpu_custom_call.1} parent=719 // loop_exit
          _
      $region720: #{tpu_custom_call.1} parent=704 // pred_fallthru
        _
    $region705: #{tpu_custom_call.1} parent=1 // pred_fallthru
      _
    // Predicated region
    $region706: #{tpu_custom_call.1} parent=1 // pred_check
      %p1162 = pneg %p1158
    $region707: #{tpu_custom_call.1} parent=1 // pred_check_branch
      %1164 = sbr.rel (%p1162) target = $region709
    $region708: #{tpu_custom_call.1} parent=1 // pred_region
      %s1165 = sshll.u32 1, 1
      %s1166 = ssub.s32 %s1165, 1
      loop: start=0, step=1, limit=1
      $region710: #{tpu_custom_call.1} parent=708 // loop_pre_header
        _
      $region711: #{tpu_custom_call.1} parent=708 // loop_header
        %s1168 = sphi 0, %s1172
        %p1169 = scmp.ge.s32.totalorder %s1168, 1
        %s1173 = sphi %s1155, %s1155
        %s1174 = sphi %s1156, %s1156
      $region712: #{tpu_custom_call.1} parent=708 // loop_header_branch
        %1171 = sbr.rel (%p1169) target = $region716
      $region713: #{tpu_custom_call.1} parent=708 // loop_body
        %v1175 = vld [vmem:[%s1173] sm:%s1166]
        %1176 = vst [vmem:[%s1174] sm:%s1166] %v1175
      $region714: #{tpu_custom_call.1} parent=708 // loop_footer
        %s1172 = sadd.s32 1, %s1168
      $region715: #{tpu_custom_call.1} parent=708 // loop_footer_branch
        %1167 = sbr.rel target = $region711
      $region716: #{tpu_custom_call.1} parent=708 // loop_exit
        _
    $region709: #{tpu_custom_call.1} parent=1 // pred_fallthru
      _
    // Predicated region
    $region728: #{tpu_custom_call.1} parent=1 // pred_check
      _
    $region729: #{tpu_custom_call.1} parent=1 // pred_check_branch
      %1201 = sbr.rel (0) target = $region731
    $region730: #{tpu_custom_call.1} parent=1 // pred_region
      %1202 = vsyncadd %s862, 16
    $region731: #{tpu_custom_call.1} parent=1 // pred_fallthru
      _
    %s1203 = scalar_lea.vmem %s6, %s1154
    %s1204 = scalar_lea.vmem [#allocation2], 27
    %p1206 = scmp.lt.u32.totalorder 1, 8
    %p1207 = pneg %p1206
    // Predicated region
    $region732: #{tpu_custom_call.1} parent=1 // pred_check
      _
    $region733: #{tpu_custom_call.1} parent=1 // pred_check_branch
      %1209 = sbr.rel (%p1206) target = $region735
    $region734: #{tpu_custom_call.1} parent=1 // pred_region
      %s1225 = sand.u32 1, 7
      %p1226 = scmp.eq.s32.totalorder %s1225, 0
      %p1227 = pneg %p1226
      // Predicated region
      $region747: #{tpu_custom_call.1} parent=734 // pred_check
        _
      $region748: #{tpu_custom_call.1} parent=734 // pred_check_branch
        %1229 = sbr.rel (%p1226) target = $region750
      $region749: #{tpu_custom_call.1} parent=734 // pred_region
        %s1230 = sand.u32 1, 7
        %s1231 = ssub.s32 1, %s1230
        %s1232 = scalar_lea.vmem %s1203, %s1231
        %s1233 = ssub.s32 1, %s1230
        %s1234 = scalar_lea.vmem %s1204, %s1233 [#allocation2]
        %s1235 = sshll.u32 1, %s1230
        %s1236 = ssub.s32 %s1235, 1
        loop: start=0, step=1, limit=1
        $region751: #{tpu_custom_call.1} parent=749 // loop_pre_header
          _
        $region752: #{tpu_custom_call.1} parent=749 // loop_header
          %s1238 = sphi 0, %s1242
          %p1239 = scmp.ge.s32.totalorder %s1238, 1
          %s1243 = sphi %s1232, %s1232
          %s1244 = sphi %s1234, %s1234
        $region753: #{tpu_custom_call.1} parent=749 // loop_header_branch
          %1241 = sbr.rel (%p1239) target = $region757
        $region754: #{tpu_custom_call.1} parent=749 // loop_body
          %v1245 = vld [vmem:[%s1243] sm:%s1236]
          %1246 = vst [vmem:[%s1244] sm:%s1236] %v1245
        $region755: #{tpu_custom_call.1} parent=749 // loop_footer
          %s1242 = sadd.s32 1, %s1238
        $region756: #{tpu_custom_call.1} parent=749 // loop_footer_branch
          %1237 = sbr.rel target = $region752
        $region757: #{tpu_custom_call.1} parent=749 // loop_exit
          _
      $region750: #{tpu_custom_call.1} parent=734 // pred_fallthru
        _
    $region735: #{tpu_custom_call.1} parent=1 // pred_fallthru
      _
    // Predicated region
    $region736: #{tpu_custom_call.1} parent=1 // pred_check
      %p1210 = pneg %p1206
    $region737: #{tpu_custom_call.1} parent=1 // pred_check_branch
      %1212 = sbr.rel (%p1210) target = $region739
    $region738: #{tpu_custom_call.1} parent=1 // pred_region
      %s1213 = sshll.u32 1, 1
      %s1214 = ssub.s32 %s1213, 1
      loop: start=0, step=1, limit=1
      $region740: #{tpu_custom_call.1} parent=738 // loop_pre_header
        _
      $region741: #{tpu_custom_call.1} parent=738 // loop_header
        %s1216 = sphi 0, %s1220
        %p1217 = scmp.ge.s32.totalorder %s1216, 1
        %s1221 = sphi %s1203, %s1203
        %s1222 = sphi %s1204, %s1204
      $region742: #{tpu_custom_call.1} parent=738 // loop_header_branch
        %1219 = sbr.rel (%p1217) target = $region746
      $region743: #{tpu_custom_call.1} parent=738 // loop_body
        %v1223 = vld [vmem:[%s1221] sm:%s1214]
        %1224 = vst [vmem:[%s1222] sm:%s1214] %v1223
      $region744: #{tpu_custom_call.1} parent=738 // loop_footer
        %s1220 = sadd.s32 1, %s1216
      $region745: #{tpu_custom_call.1} parent=738 // loop_footer_branch
        %1215 = sbr.rel target = $region741
      $region746: #{tpu_custom_call.1} parent=738 // loop_exit
        _
    $region739: #{tpu_custom_call.1} parent=1 // pred_fallthru
      _
    // Predicated region
    $region758: #{tpu_custom_call.1} parent=1 // pred_check
      _
    $region759: #{tpu_custom_call.1} parent=1 // pred_check_branch
      %1249 = sbr.rel (0) target = $region761
    $region760: #{tpu_custom_call.1} parent=1 // pred_region
      %1250 = vsyncadd %s862, 16
    $region761: #{tpu_custom_call.1} parent=1 // pred_fallthru
      _
    %s1251 = sld [smem:[#allocation5 + $0xc]]
    %s1252 = sld [smem:[#allocation8 + $0xc]]
    %s1253 = scalar_lea.vmem %s6, %s1251
    %s1254 = scalar_lea.vmem [#allocation2], 20
    %p1256 = scmp.lt.u32.totalorder 1, 8
    %p1257 = pneg %p1256
    // Predicated region
    $region762: #{tpu_custom_call.1} parent=1 // pred_check
      _
    $region763: #{tpu_custom_call.1} parent=1 // pred_check_branch
      %1259 = sbr.rel (%p1256) target = $region765
    $region764: #{tpu_custom_call.1} parent=1 // pred_region
      %s1275 = sand.u32 1, 7
      %p1276 = scmp.eq.s32.totalorder %s1275, 0
      %p1277 = pneg %p1276
      // Predicated region
      $region777: #{tpu_custom_call.1} parent=764 // pred_check
        _
      $region778: #{tpu_custom_call.1} parent=764 // pred_check_branch
        %1279 = sbr.rel (%p1276) target = $region780
      $region779: #{tpu_custom_call.1} parent=764 // pred_region
        %s1280 = sand.u32 1, 7
        %s1281 = ssub.s32 1, %s1280
        %s1282 = scalar_lea.vmem %s1253, %s1281
        %s1283 = ssub.s32 1, %s1280
        %s1284 = scalar_lea.vmem %s1254, %s1283 [#allocation2]
        %s1285 = sshll.u32 1, %s1280
        %s1286 = ssub.s32 %s1285, 1
        loop: start=0, step=1, limit=1
        $region781: #{tpu_custom_call.1} parent=779 // loop_pre_header
          _
        $region782: #{tpu_custom_call.1} parent=779 // loop_header
          %s1288 = sphi 0, %s1292
          %p1289 = scmp.ge.s32.totalorder %s1288, 1
          %s1293 = sphi %s1282, %s1282
          %s1294 = sphi %s1284, %s1284
        $region783: #{tpu_custom_call.1} parent=779 // loop_header_branch
          %1291 = sbr.rel (%p1289) target = $region787
        $region784: #{tpu_custom_call.1} parent=779 // loop_body
          %v1295 = vld [vmem:[%s1293] sm:%s1286]
          %1296 = vst [vmem:[%s1294] sm:%s1286] %v1295
        $region785: #{tpu_custom_call.1} parent=779 // loop_footer
          %s1292 = sadd.s32 1, %s1288
        $region786: #{tpu_custom_call.1} parent=779 // loop_footer_branch
          %1287 = sbr.rel target = $region782
        $region787: #{tpu_custom_call.1} parent=779 // loop_exit
          _
      $region780: #{tpu_custom_call.1} parent=764 // pred_fallthru
        _
    $region765: #{tpu_custom_call.1} parent=1 // pred_fallthru
      _
    // Predicated region
    $region766: #{tpu_custom_call.1} parent=1 // pred_check
      %p1260 = pneg %p1256
    $region767: #{tpu_custom_call.1} parent=1 // pred_check_branch
      %1262 = sbr.rel (%p1260) target = $region769
    $region768: #{tpu_custom_call.1} parent=1 // pred_region
      %s1263 = sshll.u32 1, 1
      %s1264 = ssub.s32 %s1263, 1
      loop: start=0, step=1, limit=1
      $region770: #{tpu_custom_call.1} parent=768 // loop_pre_header
        _
      $region771: #{tpu_custom_call.1} parent=768 // loop_header
        %s1266 = sphi 0, %s1270
        %p1267 = scmp.ge.s32.totalorder %s1266, 1
        %s1271 = sphi %s1253, %s1253
        %s1272 = sphi %s1254, %s1254
      $region772: #{tpu_custom_call.1} parent=768 // loop_header_branch
        %1269 = sbr.rel (%p1267) target = $region776
      $region773: #{tpu_custom_call.1} parent=768 // loop_body
        %v1273 = vld [vmem:[%s1271] sm:%s1264]
        %1274 = vst [vmem:[%s1272] sm:%s1264] %v1273
      $region774: #{tpu_custom_call.1} parent=768 // loop_footer
        %s1270 = sadd.s32 1, %s1266
      $region775: #{tpu_custom_call.1} parent=768 // loop_footer_branch
        %1265 = sbr.rel target = $region771
      $region776: #{tpu_custom_call.1} parent=768 // loop_exit
        _
    $region769: #{tpu_custom_call.1} parent=1 // pred_fallthru
      _
    // Predicated region
    $region788: #{tpu_custom_call.1} parent=1 // pred_check
      _
    $region789: #{tpu_custom_call.1} parent=1 // pred_check_branch
      %1299 = sbr.rel (0) target = $region791
    $region790: #{tpu_custom_call.1} parent=1 // pred_region
      %1300 = vsyncadd %s862, 16
    $region791: #{tpu_custom_call.1} parent=1 // pred_fallthru
      _
    %s1301 = scalar_lea.vmem %s6, %s1252
    %s1302 = scalar_lea.vmem [#allocation2], 28
    %p1304 = scmp.lt.u32.totalorder 1, 8
    %p1305 = pneg %p1304
    // Predicated region
    $region792: #{tpu_custom_call.1} parent=1 // pred_check
      _
    $region793: #{tpu_custom_call.1} parent=1 // pred_check_branch
      %1307 = sbr.rel (%p1304) target = $region795
    $region794: #{tpu_custom_call.1} parent=1 // pred_region
      %s1323 = sand.u32 1, 7
      %p1324 = scmp.eq.s32.totalorder %s1323, 0
      %p1325 = pneg %p1324
      // Predicated region
      $region807: #{tpu_custom_call.1} parent=794 // pred_check
        _
      $region808: #{tpu_custom_call.1} parent=794 // pred_check_branch
        %1327 = sbr.rel (%p1324) target = $region810
      $region809: #{tpu_custom_call.1} parent=794 // pred_region
        %s1328 = sand.u32 1, 7
        %s1329 = ssub.s32 1, %s1328
        %s1330 = scalar_lea.vmem %s1301, %s1329
        %s1331 = ssub.s32 1, %s1328
        %s1332 = scalar_lea.vmem %s1302, %s1331 [#allocation2]
        %s1333 = sshll.u32 1, %s1328
        %s1334 = ssub.s32 %s1333, 1
        loop: start=0, step=1, limit=1
        $region811: #{tpu_custom_call.1} parent=809 // loop_pre_header
          _
        $region812: #{tpu_custom_call.1} parent=809 // loop_header
          %s1336 = sphi 0, %s1340
          %p1337 = scmp.ge.s32.totalorder %s1336, 1
          %s1341 = sphi %s1330, %s1330
          %s1342 = sphi %s1332, %s1332
        $region813: #{tpu_custom_call.1} parent=809 // loop_header_branch
          %1339 = sbr.rel (%p1337) target = $region817
        $region814: #{tpu_custom_call.1} parent=809 // loop_body
          %v1343 = vld [vmem:[%s1341] sm:%s1334]
          %1344 = vst [vmem:[%s1342] sm:%s1334] %v1343
        $region815: #{tpu_custom_call.1} parent=809 // loop_footer
          %s1340 = sadd.s32 1, %s1336
        $region816: #{tpu_custom_call.1} parent=809 // loop_footer_branch
          %1335 = sbr.rel target = $region812
        $region817: #{tpu_custom_call.1} parent=809 // loop_exit
          _
      $region810: #{tpu_custom_call.1} parent=794 // pred_fallthru
        _
    $region795: #{tpu_custom_call.1} parent=1 // pred_fallthru
      _
    // Predicated region
    $region796: #{tpu_custom_call.1} parent=1 // pred_check
      %p1308 = pneg %p1304
    $region797: #{tpu_custom_call.1} parent=1 // pred_check_branch
      %1310 = sbr.rel (%p1308) target = $region799
    $region798: #{tpu_custom_call.1} parent=1 // pred_region
      %s1311 = sshll.u32 1, 1
      %s1312 = ssub.s32 %s1311, 1
      loop: start=0, step=1, limit=1
      $region800: #{tpu_custom_call.1} parent=798 // loop_pre_header
        _
      $region801: #{tpu_custom_call.1} parent=798 // loop_header
        %s1314 = sphi 0, %s1318
        %p1315 = scmp.ge.s32.totalorder %s1314, 1
        %s1319 = sphi %s1301, %s1301
        %s1320 = sphi %s1302, %s1302
      $region802: #{tpu_custom_call.1} parent=798 // loop_header_branch
        %1317 = sbr.rel (%p1315) target = $region806
      $region803: #{tpu_custom_call.1} parent=798 // loop_body
        %v1321 = vld [vmem:[%s1319] sm:%s1312]
        %1322 = vst [vmem:[%s1320] sm:%s1312] %v1321
      $region804: #{tpu_custom_call.1} parent=798 // loop_footer
        %s1318 = sadd.s32 1, %s1314
      $region805: #{tpu_custom_call.1} parent=798 // loop_footer_branch
        %1313 = sbr.rel target = $region801
      $region806: #{tpu_custom_call.1} parent=798 // loop_exit
        _
    $region799: #{tpu_custom_call.1} parent=1 // pred_fallthru
      _
    // Predicated region
    $region818: #{tpu_custom_call.1} parent=1 // pred_check
      _
    $region819: #{tpu_custom_call.1} parent=1 // pred_check_branch
      %1347 = sbr.rel (0) target = $region821
    $region820: #{tpu_custom_call.1} parent=1 // pred_region
      %1348 = vsyncadd %s862, 16
    $region821: #{tpu_custom_call.1} parent=1 // pred_fallthru
      _
    %s1349 = sld [smem:[#allocation5 + $0xd]]
    %s1350 = sld [smem:[#allocation8 + $0xd]]
    %s1351 = scalar_lea.vmem %s6, %s1349
    %s1352 = scalar_lea.vmem [#allocation2], 21
    %p1354 = scmp.lt.u32.totalorder 1, 8
    %p1355 = pneg %p1354
    // Predicated region
    $region822: #{tpu_custom_call.1} parent=1 // pred_check
      _
    $region823: #{tpu_custom_call.1} parent=1 // pred_check_branch
      %1357 = sbr.rel (%p1354) target = $region825
    $region824: #{tpu_custom_call.1} parent=1 // pred_region
      %s1373 = sand.u32 1, 7
      %p1374 = scmp.eq.s32.totalorder %s1373, 0
      %p1375 = pneg %p1374
      // Predicated region
      $region837: #{tpu_custom_call.1} parent=824 // pred_check
        _
      $region838: #{tpu_custom_call.1} parent=824 // pred_check_branch
        %1377 = sbr.rel (%p1374) target = $region840
      $region839: #{tpu_custom_call.1} parent=824 // pred_region
        %s1378 = sand.u32 1, 7
        %s1379 = ssub.s32 1, %s1378
        %s1380 = scalar_lea.vmem %s1351, %s1379
        %s1381 = ssub.s32 1, %s1378
        %s1382 = scalar_lea.vmem %s1352, %s1381 [#allocation2]
        %s1383 = sshll.u32 1, %s1378
        %s1384 = ssub.s32 %s1383, 1
        loop: start=0, step=1, limit=1
        $region841: #{tpu_custom_call.1} parent=839 // loop_pre_header
          _
        $region842: #{tpu_custom_call.1} parent=839 // loop_header
          %s1386 = sphi 0, %s1390
          %p1387 = scmp.ge.s32.totalorder %s1386, 1
          %s1391 = sphi %s1380, %s1380
          %s1392 = sphi %s1382, %s1382
        $region843: #{tpu_custom_call.1} parent=839 // loop_header_branch
          %1389 = sbr.rel (%p1387) target = $region847
        $region844: #{tpu_custom_call.1} parent=839 // loop_body
          %v1393 = vld [vmem:[%s1391] sm:%s1384]
          %1394 = vst [vmem:[%s1392] sm:%s1384] %v1393
        $region845: #{tpu_custom_call.1} parent=839 // loop_footer
          %s1390 = sadd.s32 1, %s1386
        $region846: #{tpu_custom_call.1} parent=839 // loop_footer_branch
          %1385 = sbr.rel target = $region842
        $region847: #{tpu_custom_call.1} parent=839 // loop_exit
          _
      $region840: #{tpu_custom_call.1} parent=824 // pred_fallthru
        _
    $region825: #{tpu_custom_call.1} parent=1 // pred_fallthru
      _
    // Predicated region
    $region826: #{tpu_custom_call.1} parent=1 // pred_check
      %p1358 = pneg %p1354
    $region827: #{tpu_custom_call.1} parent=1 // pred_check_branch
      %1360 = sbr.rel (%p1358) target = $region829
    $region828: #{tpu_custom_call.1} parent=1 // pred_region
      %s1361 = sshll.u32 1, 1
      %s1362 = ssub.s32 %s1361, 1
      loop: start=0, step=1, limit=1
      $region830: #{tpu_custom_call.1} parent=828 // loop_pre_header
        _
      $region831: #{tpu_custom_call.1} parent=828 // loop_header
        %s1364 = sphi 0, %s1368
        %p1365 = scmp.ge.s32.totalorder %s1364, 1
        %s1369 = sphi %s1351, %s1351
        %s1370 = sphi %s1352, %s1352
      $region832: #{tpu_custom_call.1} parent=828 // loop_header_branch
        %1367 = sbr.rel (%p1365) target = $region836
      $region833: #{tpu_custom_call.1} parent=828 // loop_body
        %v1371 = vld [vmem:[%s1369] sm:%s1362]
        %1372 = vst [vmem:[%s1370] sm:%s1362] %v1371
      $region834: #{tpu_custom_call.1} parent=828 // loop_footer
        %s1368 = sadd.s32 1, %s1364
      $region835: #{tpu_custom_call.1} parent=828 // loop_footer_branch
        %1363 = sbr.rel target = $region831
      $region836: #{tpu_custom_call.1} parent=828 // loop_exit
        _
    $region829: #{tpu_custom_call.1} parent=1 // pred_fallthru
      _
    // Predicated region
    $region848: #{tpu_custom_call.1} parent=1 // pred_check
      _
    $region849: #{tpu_custom_call.1} parent=1 // pred_check_branch
      %1397 = sbr.rel (0) target = $region851
    $region850: #{tpu_custom_call.1} parent=1 // pred_region
      %1398 = vsyncadd %s862, 16
    $region851: #{tpu_custom_call.1} parent=1 // pred_fallthru
      _
    %s1399 = scalar_lea.vmem %s6, %s1350
    %s1400 = scalar_lea.vmem [#allocation2], 29
    %p1402 = scmp.lt.u32.totalorder 1, 8
    %p1403 = pneg %p1402
    // Predicated region
    $region852: #{tpu_custom_call.1} parent=1 // pred_check
      _
    $region853: #{tpu_custom_call.1} parent=1 // pred_check_branch
      %1405 = sbr.rel (%p1402) target = $region855
    $region854: #{tpu_custom_call.1} parent=1 // pred_region
      %s1421 = sand.u32 1, 7
      %p1422 = scmp.eq.s32.totalorder %s1421, 0
      %p1423 = pneg %p1422
      // Predicated region
      $region867: #{tpu_custom_call.1} parent=854 // pred_check
        _
      $region868: #{tpu_custom_call.1} parent=854 // pred_check_branch
        %1425 = sbr.rel (%p1422) target = $region870
      $region869: #{tpu_custom_call.1} parent=854 // pred_region
        %s1426 = sand.u32 1, 7
        %s1427 = ssub.s32 1, %s1426
        %s1428 = scalar_lea.vmem %s1399, %s1427
        %s1429 = ssub.s32 1, %s1426
        %s1430 = scalar_lea.vmem %s1400, %s1429 [#allocation2]
        %s1431 = sshll.u32 1, %s1426
        %s1432 = ssub.s32 %s1431, 1
        loop: start=0, step=1, limit=1
        $region871: #{tpu_custom_call.1} parent=869 // loop_pre_header
          _
        $region872: #{tpu_custom_call.1} parent=869 // loop_header
          %s1434 = sphi 0, %s1438
          %p1435 = scmp.ge.s32.totalorder %s1434, 1
          %s1439 = sphi %s1428, %s1428
          %s1440 = sphi %s1430, %s1430
        $region873: #{tpu_custom_call.1} parent=869 // loop_header_branch
          %1437 = sbr.rel (%p1435) target = $region877
        $region874: #{tpu_custom_call.1} parent=869 // loop_body
          %v1441 = vld [vmem:[%s1439] sm:%s1432]
          %1442 = vst [vmem:[%s1440] sm:%s1432] %v1441
        $region875: #{tpu_custom_call.1} parent=869 // loop_footer
          %s1438 = sadd.s32 1, %s1434
        $region876: #{tpu_custom_call.1} parent=869 // loop_footer_branch
          %1433 = sbr.rel target = $region872
        $region877: #{tpu_custom_call.1} parent=869 // loop_exit
          _
      $region870: #{tpu_custom_call.1} parent=854 // pred_fallthru
        _
    $region855: #{tpu_custom_call.1} parent=1 // pred_fallthru
      _
    // Predicated region
    $region856: #{tpu_custom_call.1} parent=1 // pred_check
      %p1406 = pneg %p1402
    $region857: #{tpu_custom_call.1} parent=1 // pred_check_branch
      %1408 = sbr.rel (%p1406) target = $region859
    $region858: #{tpu_custom_call.1} parent=1 // pred_region
      %s1409 = sshll.u32 1, 1
      %s1410 = ssub.s32 %s1409, 1
      loop: start=0, step=1, limit=1
      $region860: #{tpu_custom_call.1} parent=858 // loop_pre_header
        _
      $region861: #{tpu_custom_call.1} parent=858 // loop_header
        %s1412 = sphi 0, %s1416
        %p1413 = scmp.ge.s32.totalorder %s1412, 1
        %s1417 = sphi %s1399, %s1399
        %s1418 = sphi %s1400, %s1400
      $region862: #{tpu_custom_call.1} parent=858 // loop_header_branch
        %1415 = sbr.rel (%p1413) target = $region866
      $region863: #{tpu_custom_call.1} parent=858 // loop_body
        %v1419 = vld [vmem:[%s1417] sm:%s1410]
        %1420 = vst [vmem:[%s1418] sm:%s1410] %v1419
      $region864: #{tpu_custom_call.1} parent=858 // loop_footer
        %s1416 = sadd.s32 1, %s1412
      $region865: #{tpu_custom_call.1} parent=858 // loop_footer_branch
        %1411 = sbr.rel target = $region861
      $region866: #{tpu_custom_call.1} parent=858 // loop_exit
        _
    $region859: #{tpu_custom_call.1} parent=1 // pred_fallthru
      _
    // Predicated region
    $region878: #{tpu_custom_call.1} parent=1 // pred_check
      _
    $region879: #{tpu_custom_call.1} parent=1 // pred_check_branch
      %1445 = sbr.rel (0) target = $region881
    $region880: #{tpu_custom_call.1} parent=1 // pred_region
      %1446 = vsyncadd %s862, 16
    $region881: #{tpu_custom_call.1} parent=1 // pred_fallthru
      _
    %s1447 = sld [smem:[#allocation5 + $0xe]]
    %s1448 = sld [smem:[#allocation8 + $0xe]]
    %s1449 = scalar_lea.vmem %s6, %s1447
    %s1450 = scalar_lea.vmem [#allocation2], 22
    %p1452 = scmp.lt.u32.totalorder 1, 8
    %p1453 = pneg %p1452
    // Predicated region
    $region882: #{tpu_custom_call.1} parent=1 // pred_check
      _
    $region883: #{tpu_custom_call.1} parent=1 // pred_check_branch
      %1455 = sbr.rel (%p1452) target = $region885
    $region884: #{tpu_custom_call.1} parent=1 // pred_region
      %s1471 = sand.u32 1, 7
      %p1472 = scmp.eq.s32.totalorder %s1471, 0
      %p1473 = pneg %p1472
      // Predicated region
      $region897: #{tpu_custom_call.1} parent=884 // pred_check
        _
      $region898: #{tpu_custom_call.1} parent=884 // pred_check_branch
        %1475 = sbr.rel (%p1472) target = $region900
      $region899: #{tpu_custom_call.1} parent=884 // pred_region
        %s1476 = sand.u32 1, 7
        %s1477 = ssub.s32 1, %s1476
        %s1478 = scalar_lea.vmem %s1449, %s1477
        %s1479 = ssub.s32 1, %s1476
        %s1480 = scalar_lea.vmem %s1450, %s1479 [#allocation2]
        %s1481 = sshll.u32 1, %s1476
        %s1482 = ssub.s32 %s1481, 1
        loop: start=0, step=1, limit=1
        $region901: #{tpu_custom_call.1} parent=899 // loop_pre_header
          _
        $region902: #{tpu_custom_call.1} parent=899 // loop_header
          %s1484 = sphi 0, %s1488
          %p1485 = scmp.ge.s32.totalorder %s1484, 1
          %s1489 = sphi %s1478, %s1478
          %s1490 = sphi %s1480, %s1480
        $region903: #{tpu_custom_call.1} parent=899 // loop_header_branch
          %1487 = sbr.rel (%p1485) target = $region907
        $region904: #{tpu_custom_call.1} parent=899 // loop_body
          %v1491 = vld [vmem:[%s1489] sm:%s1482]
          %1492 = vst [vmem:[%s1490] sm:%s1482] %v1491
        $region905: #{tpu_custom_call.1} parent=899 // loop_footer
          %s1488 = sadd.s32 1, %s1484
        $region906: #{tpu_custom_call.1} parent=899 // loop_footer_branch
          %1483 = sbr.rel target = $region902
        $region907: #{tpu_custom_call.1} parent=899 // loop_exit
          _
      $region900: #{tpu_custom_call.1} parent=884 // pred_fallthru
        _
    $region885: #{tpu_custom_call.1} parent=1 // pred_fallthru
      _
    // Predicated region
    $region886: #{tpu_custom_call.1} parent=1 // pred_check
      %p1456 = pneg %p1452
    $region887: #{tpu_custom_call.1} parent=1 // pred_check_branch
      %1458 = sbr.rel (%p1456) target = $region889
    $region888: #{tpu_custom_call.1} parent=1 // pred_region
      %s1459 = sshll.u32 1, 1
      %s1460 = ssub.s32 %s1459, 1
      loop: start=0, step=1, limit=1
      $region890: #{tpu_custom_call.1} parent=888 // loop_pre_header
        _
      $region891: #{tpu_custom_call.1} parent=888 // loop_header
        %s1462 = sphi 0, %s1466
        %p1463 = scmp.ge.s32.totalorder %s1462, 1
        %s1467 = sphi %s1449, %s1449
        %s1468 = sphi %s1450, %s1450
      $region892: #{tpu_custom_call.1} parent=888 // loop_header_branch
        %1465 = sbr.rel (%p1463) target = $region896
      $region893: #{tpu_custom_call.1} parent=888 // loop_body
        %v1469 = vld [vmem:[%s1467] sm:%s1460]
        %1470 = vst [vmem:[%s1468] sm:%s1460] %v1469
      $region894: #{tpu_custom_call.1} parent=888 // loop_footer
        %s1466 = sadd.s32 1, %s1462
      $region895: #{tpu_custom_call.1} parent=888 // loop_footer_branch
        %1461 = sbr.rel target = $region891
      $region896: #{tpu_custom_call.1} parent=888 // loop_exit
        _
    $region889: #{tpu_custom_call.1} parent=1 // pred_fallthru
      _
    // Predicated region
    $region908: #{tpu_custom_call.1} parent=1 // pred_check
      _
    $region909: #{tpu_custom_call.1} parent=1 // pred_check_branch
      %1495 = sbr.rel (0) target = $region911
    $region910: #{tpu_custom_call.1} parent=1 // pred_region
      %1496 = vsyncadd %s862, 16
    $region911: #{tpu_custom_call.1} parent=1 // pred_fallthru
      _
    %s1497 = scalar_lea.vmem %s6, %s1448
    %s1498 = scalar_lea.vmem [#allocation2], 30
    %p1500 = scmp.lt.u32.totalorder 1, 8
    %p1501 = pneg %p1500
    // Predicated region
    $region912: #{tpu_custom_call.1} parent=1 // pred_check
      _
    $region913: #{tpu_custom_call.1} parent=1 // pred_check_branch
      %1503 = sbr.rel (%p1500) target = $region915
    $region914: #{tpu_custom_call.1} parent=1 // pred_region
      %s1519 = sand.u32 1, 7
      %p1520 = scmp.eq.s32.totalorder %s1519, 0
      %p1521 = pneg %p1520
      // Predicated region
      $region927: #{tpu_custom_call.1} parent=914 // pred_check
        _
      $region928: #{tpu_custom_call.1} parent=914 // pred_check_branch
        %1523 = sbr.rel (%p1520) target = $region930
      $region929: #{tpu_custom_call.1} parent=914 // pred_region
        %s1524 = sand.u32 1, 7
        %s1525 = ssub.s32 1, %s1524
        %s1526 = scalar_lea.vmem %s1497, %s1525
        %s1527 = ssub.s32 1, %s1524
        %s1528 = scalar_lea.vmem %s1498, %s1527 [#allocation2]
        %s1529 = sshll.u32 1, %s1524
        %s1530 = ssub.s32 %s1529, 1
        loop: start=0, step=1, limit=1
        $region931: #{tpu_custom_call.1} parent=929 // loop_pre_header
          _
        $region932: #{tpu_custom_call.1} parent=929 // loop_header
          %s1532 = sphi 0, %s1536
          %p1533 = scmp.ge.s32.totalorder %s1532, 1
          %s1537 = sphi %s1526, %s1526
          %s1538 = sphi %s1528, %s1528
        $region933: #{tpu_custom_call.1} parent=929 // loop_header_branch
          %1535 = sbr.rel (%p1533) target = $region937
        $region934: #{tpu_custom_call.1} parent=929 // loop_body
          %v1539 = vld [vmem:[%s1537] sm:%s1530]
          %1540 = vst [vmem:[%s1538] sm:%s1530] %v1539
        $region935: #{tpu_custom_call.1} parent=929 // loop_footer
          %s1536 = sadd.s32 1, %s1532
        $region936: #{tpu_custom_call.1} parent=929 // loop_footer_branch
          %1531 = sbr.rel target = $region932
        $region937: #{tpu_custom_call.1} parent=929 // loop_exit
          _
      $region930: #{tpu_custom_call.1} parent=914 // pred_fallthru
        _
    $region915: #{tpu_custom_call.1} parent=1 // pred_fallthru
      _
    // Predicated region
    $region916: #{tpu_custom_call.1} parent=1 // pred_check
      %p1504 = pneg %p1500
    $region917: #{tpu_custom_call.1} parent=1 // pred_check_branch
      %1506 = sbr.rel (%p1504) target = $region919
    $region918: #{tpu_custom_call.1} parent=1 // pred_region
      %s1507 = sshll.u32 1, 1
      %s1508 = ssub.s32 %s1507, 1
      loop: start=0, step=1, limit=1
      $region920: #{tpu_custom_call.1} parent=918 // loop_pre_header
        _
      $region921: #{tpu_custom_call.1} parent=918 // loop_header
        %s1510 = sphi 0, %s1514
        %p1511 = scmp.ge.s32.totalorder %s1510, 1
        %s1515 = sphi %s1497, %s1497
        %s1516 = sphi %s1498, %s1498
      $region922: #{tpu_custom_call.1} parent=918 // loop_header_branch
        %1513 = sbr.rel (%p1511) target = $region926
      $region923: #{tpu_custom_call.1} parent=918 // loop_body
        %v1517 = vld [vmem:[%s1515] sm:%s1508]
        %1518 = vst [vmem:[%s1516] sm:%s1508] %v1517
      $region924: #{tpu_custom_call.1} parent=918 // loop_footer
        %s1514 = sadd.s32 1, %s1510
      $region925: #{tpu_custom_call.1} parent=918 // loop_footer_branch
        %1509 = sbr.rel target = $region921
      $region926: #{tpu_custom_call.1} parent=918 // loop_exit
        _
    $region919: #{tpu_custom_call.1} parent=1 // pred_fallthru
      _
    // Predicated region
    $region938: #{tpu_custom_call.1} parent=1 // pred_check
      _
    $region939: #{tpu_custom_call.1} parent=1 // pred_check_branch
      %1543 = sbr.rel (0) target = $region941
    $region940: #{tpu_custom_call.1} parent=1 // pred_region
      %1544 = vsyncadd %s862, 16
    $region941: #{tpu_custom_call.1} parent=1 // pred_fallthru
      _
    %s1545 = sld [smem:[#allocation5 + $0xf]]
    %s1546 = sld [smem:[#allocation8 + $0xf]]
    %s1547 = scalar_lea.vmem %s6, %s1545
    %s1548 = scalar_lea.vmem [#allocation2], 23
    %p1550 = scmp.lt.u32.totalorder 1, 8
    %p1551 = pneg %p1550
    // Predicated region
    $region942: #{tpu_custom_call.1} parent=1 // pred_check
      _
    $region943: #{tpu_custom_call.1} parent=1 // pred_check_branch
      %1553 = sbr.rel (%p1550) target = $region945
    $region944: #{tpu_custom_call.1} parent=1 // pred_region
      %s1569 = sand.u32 1, 7
      %p1570 = scmp.eq.s32.totalorder %s1569, 0
      %p1571 = pneg %p1570
      // Predicated region
      $region957: #{tpu_custom_call.1} parent=944 // pred_check
        _
      $region958: #{tpu_custom_call.1} parent=944 // pred_check_branch
        %1573 = sbr.rel (%p1570) target = $region960
      $region959: #{tpu_custom_call.1} parent=944 // pred_region
        %s1574 = sand.u32 1, 7
        %s1575 = ssub.s32 1, %s1574
        %s1576 = scalar_lea.vmem %s1547, %s1575
        %s1577 = ssub.s32 1, %s1574
        %s1578 = scalar_lea.vmem %s1548, %s1577 [#allocation2]
        %s1579 = sshll.u32 1, %s1574
        %s1580 = ssub.s32 %s1579, 1
        loop: start=0, step=1, limit=1
        $region961: #{tpu_custom_call.1} parent=959 // loop_pre_header
          _
        $region962: #{tpu_custom_call.1} parent=959 // loop_header
          %s1582 = sphi 0, %s1586
          %p1583 = scmp.ge.s32.totalorder %s1582, 1
          %s1587 = sphi %s1576, %s1576
          %s1588 = sphi %s1578, %s1578
        $region963: #{tpu_custom_call.1} parent=959 // loop_header_branch
          %1585 = sbr.rel (%p1583) target = $region967
        $region964: #{tpu_custom_call.1} parent=959 // loop_body
          %v1589 = vld [vmem:[%s1587] sm:%s1580]
          %1590 = vst [vmem:[%s1588] sm:%s1580] %v1589
        $region965: #{tpu_custom_call.1} parent=959 // loop_footer
          %s1586 = sadd.s32 1, %s1582
        $region966: #{tpu_custom_call.1} parent=959 // loop_footer_branch
          %1581 = sbr.rel target = $region962
        $region967: #{tpu_custom_call.1} parent=959 // loop_exit
          _
      $region960: #{tpu_custom_call.1} parent=944 // pred_fallthru
        _
    $region945: #{tpu_custom_call.1} parent=1 // pred_fallthru
      _
    // Predicated region
    $region946: #{tpu_custom_call.1} parent=1 // pred_check
      %p1554 = pneg %p1550
    $region947: #{tpu_custom_call.1} parent=1 // pred_check_branch
      %1556 = sbr.rel (%p1554) target = $region949
    $region948: #{tpu_custom_call.1} parent=1 // pred_region
      %s1557 = sshll.u32 1, 1
      %s1558 = ssub.s32 %s1557, 1
      loop: start=0, step=1, limit=1
      $region950: #{tpu_custom_call.1} parent=948 // loop_pre_header
        _
      $region951: #{tpu_custom_call.1} parent=948 // loop_header
        %s1560 = sphi 0, %s1564
        %p1561 = scmp.ge.s32.totalorder %s1560, 1
        %s1565 = sphi %s1547, %s1547
        %s1566 = sphi %s1548, %s1548
      $region952: #{tpu_custom_call.1} parent=948 // loop_header_branch
        %1563 = sbr.rel (%p1561) target = $region956
      $region953: #{tpu_custom_call.1} parent=948 // loop_body
        %v1567 = vld [vmem:[%s1565] sm:%s1558]
        %1568 = vst [vmem:[%s1566] sm:%s1558] %v1567
      $region954: #{tpu_custom_call.1} parent=948 // loop_footer
        %s1564 = sadd.s32 1, %s1560
      $region955: #{tpu_custom_call.1} parent=948 // loop_footer_branch
        %1559 = sbr.rel target = $region951
      $region956: #{tpu_custom_call.1} parent=948 // loop_exit
        _
    $region949: #{tpu_custom_call.1} parent=1 // pred_fallthru
      _
    // Predicated region
    $region968: #{tpu_custom_call.1} parent=1 // pred_check
      _
    $region969: #{tpu_custom_call.1} parent=1 // pred_check_branch
      %1593 = sbr.rel (0) target = $region971
    $region970: #{tpu_custom_call.1} parent=1 // pred_region
      %1594 = vsyncadd %s862, 16
    $region971: #{tpu_custom_call.1} parent=1 // pred_fallthru
      _
    %s1595 = scalar_lea.vmem %s6, %s1546
    %s1596 = scalar_lea.vmem [#allocation2], 31
    %p1598 = scmp.lt.u32.totalorder 1, 8
    %p1599 = pneg %p1598
    // Predicated region
    $region972: #{tpu_custom_call.1} parent=1 // pred_check
      _
    $region973: #{tpu_custom_call.1} parent=1 // pred_check_branch
      %1601 = sbr.rel (%p1598) target = $region975
    $region974: #{tpu_custom_call.1} parent=1 // pred_region
      %s1617 = sand.u32 1, 7
      %p1618 = scmp.eq.s32.totalorder %s1617, 0
      %p1619 = pneg %p1618
      // Predicated region
      $region987: #{tpu_custom_call.1} parent=974 // pred_check
        _
      $region988: #{tpu_custom_call.1} parent=974 // pred_check_branch
        %1621 = sbr.rel (%p1618) target = $region990
      $region989: #{tpu_custom_call.1} parent=974 // pred_region
        %s1622 = sand.u32 1, 7
        %s1623 = ssub.s32 1, %s1622
        %s1624 = scalar_lea.vmem %s1595, %s1623
        %s1625 = ssub.s32 1, %s1622
        %s1626 = scalar_lea.vmem %s1596, %s1625 [#allocation2]
        %s1627 = sshll.u32 1, %s1622
        %s1628 = ssub.s32 %s1627, 1
        loop: start=0, step=1, limit=1
        $region991: #{tpu_custom_call.1} parent=989 // loop_pre_header
          _
        $region992: #{tpu_custom_call.1} parent=989 // loop_header
          %s1630 = sphi 0, %s1634
          %p1631 = scmp.ge.s32.totalorder %s1630, 1
          %s1635 = sphi %s1624, %s1624
          %s1636 = sphi %s1626, %s1626
        $region993: #{tpu_custom_call.1} parent=989 // loop_header_branch
          %1633 = sbr.rel (%p1631) target = $region997
        $region994: #{tpu_custom_call.1} parent=989 // loop_body
          %v1637 = vld [vmem:[%s1635] sm:%s1628]
          %1638 = vst [vmem:[%s1636] sm:%s1628] %v1637
        $region995: #{tpu_custom_call.1} parent=989 // loop_footer
          %s1634 = sadd.s32 1, %s1630
        $region996: #{tpu_custom_call.1} parent=989 // loop_footer_branch
          %1629 = sbr.rel target = $region992
        $region997: #{tpu_custom_call.1} parent=989 // loop_exit
          _
      $region990: #{tpu_custom_call.1} parent=974 // pred_fallthru
        _
    $region975: #{tpu_custom_call.1} parent=1 // pred_fallthru
      _
    // Predicated region
    $region976: #{tpu_custom_call.1} parent=1 // pred_check
      %p1602 = pneg %p1598
    $region977: #{tpu_custom_call.1} parent=1 // pred_check_branch
      %1604 = sbr.rel (%p1602) target = $region979
    $region978: #{tpu_custom_call.1} parent=1 // pred_region
      %s1605 = sshll.u32 1, 1
      %s1606 = ssub.s32 %s1605, 1
      loop: start=0, step=1, limit=1
      $region980: #{tpu_custom_call.1} parent=978 // loop_pre_header
        _
      $region981: #{tpu_custom_call.1} parent=978 // loop_header
        %s1608 = sphi 0, %s1612
        %p1609 = scmp.ge.s32.totalorder %s1608, 1
        %s1613 = sphi %s1595, %s1595
        %s1614 = sphi %s1596, %s1596
      $region982: #{tpu_custom_call.1} parent=978 // loop_header_branch
        %1611 = sbr.rel (%p1609) target = $region986
      $region983: #{tpu_custom_call.1} parent=978 // loop_body
        %v1615 = vld [vmem:[%s1613] sm:%s1606]
        %1616 = vst [vmem:[%s1614] sm:%s1606] %v1615
      $region984: #{tpu_custom_call.1} parent=978 // loop_footer
        %s1612 = sadd.s32 1, %s1608
      $region985: #{tpu_custom_call.1} parent=978 // loop_footer_branch
        %1607 = sbr.rel target = $region981
      $region986: #{tpu_custom_call.1} parent=978 // loop_exit
        _
    $region979: #{tpu_custom_call.1} parent=1 // pred_fallthru
      _
    // Predicated region
    $region998: #{tpu_custom_call.1} parent=1 // pred_check
      _
    $region999: #{tpu_custom_call.1} parent=1 // pred_check_branch
      %1641 = sbr.rel (0) target = $region1001
    $region1000: #{tpu_custom_call.1} parent=1 // pred_region
      %1642 = vsyncadd %s862, 16
    $region1001: #{tpu_custom_call.1} parent=1 // pred_fallthru
      _
    %s1643 = smul.u32 1, 1
    %s1644 = sshll.u32 %s1643, 4
    %1645 = dma.done [#allocation3], %s1644
    %s1646 = sshll.u32 %s1643, 4
    %1647 = dma.done [#allocation3], %s1646
    %s1648 = sshll.u32 %s1643, 4
    %1649 = dma.done [#allocation3], %s1648
    %s1650 = sshll.u32 %s1643, 4
    %1651 = dma.done [#allocation3], %s1650
    %s1652 = sshll.u32 %s1643, 4
    %1653 = dma.done [#allocation3], %s1652
    %s1654 = sshll.u32 %s1643, 4
    %1655 = dma.done [#allocation3], %s1654
    %s1656 = sshll.u32 %s1643, 4
    %1657 = dma.done [#allocation3], %s1656
    %s1658 = sshll.u32 %s1643, 4
    %1659 = dma.done [#allocation3], %s1658
    %s1660 = sshll.u32 %s1643, 4
    %1661 = dma.done [#allocation3], %s1660
    %s1662 = sshll.u32 %s1643, 4
    %1663 = dma.done [#allocation3], %s1662
    %s1664 = sshll.u32 %s1643, 4
    %1665 = dma.done [#allocation3], %s1664
    %s1666 = sshll.u32 %s1643, 4
    %1667 = dma.done [#allocation3], %s1666
    %s1668 = sshll.u32 %s1643, 4
    %1669 = dma.done [#allocation3], %s1668
    %s1670 = sshll.u32 %s1643, 4
    %1671 = dma.done [#allocation3], %s1670
    %s1672 = sshll.u32 %s1643, 4
    %1673 = dma.done [#allocation3], %s1672
    %s1674 = sshll.u32 %s1643, 4
    %1675 = dma.done [#allocation3], %s1674
    %v1676 = vld [vmem:[#allocation2] sm:$0xff]
    %v1677 = vld [vmem:[%s125] sm:$0xff]
    %v1678 = vsub.f32 %v1676, %v1677
    %v1679 = vld [vmem:[%s2] sm:$0xff]
    %v1680 = vld [vmem:[#allocation4] sm:$0xff]
    %v1681 = vmul.f32 %v1678, %v1678
    %1683 = vset.pattern.permute.xlu0 0
    %1684 = vperm.xlu0 %1683, %v1679
    %v1685 = vpop.permute.xlu0 %1684
    %v1687 = vmul.f32 %v1685, %v1681
    %v1688 = vadd.f32 %v1680, %v1687
    %1689 = vst [vmem:[#allocation4] sm:$0xff] %v1688
    %s1690 = sshll.u32 %s1643, 4
    %1691 = dma.done %s862, %s1690
    %s1692 = sshll.u32 %s1643, 4
    %1693 = dma.done %s862, %s1692
    %s1694 = sshll.u32 %s1643, 4
    %1695 = dma.done %s862, %s1694
    %s1696 = sshll.u32 %s1643, 4
    %1697 = dma.done %s862, %s1696
    %s1698 = sshll.u32 %s1643, 4
    %1699 = dma.done %s862, %s1698
    %s1700 = sshll.u32 %s1643, 4
    %1701 = dma.done %s862, %s1700
    %s1702 = sshll.u32 %s1643, 4
    %1703 = dma.done %s862, %s1702
    %s1704 = sshll.u32 %s1643, 4
    %1705 = dma.done %s862, %s1704
    %s1706 = sshll.u32 %s1643, 4
    %1707 = dma.done %s862, %s1706
    %s1708 = sshll.u32 %s1643, 4
    %1709 = dma.done %s862, %s1708
    %s1710 = sshll.u32 %s1643, 4
    %1711 = dma.done %s862, %s1710
    %s1712 = sshll.u32 %s1643, 4
    %1713 = dma.done %s862, %s1712
    %s1714 = sshll.u32 %s1643, 4
    %1715 = dma.done %s862, %s1714
    %s1716 = sshll.u32 %s1643, 4
    %1717 = dma.done %s862, %s1716
    %s1718 = sshll.u32 %s1643, 4
    %1719 = dma.done %s862, %s1718
    %s1720 = sshll.u32 %s1643, 4
    %1721 = dma.done %s862, %s1720
    %v1722 = vld [vmem:[%s861] sm:$0xff]
    %v1723 = vld [vmem:[%s910] sm:$0xff]
    %v1724 = vsub.f32 %v1722, %v1723
    %v1725 = vld [vmem:[%s2 + $0x8] sm:$0xff]
    %v1726 = vld [vmem:[#allocation4] sm:$0xff]
    %v1727 = vmul.f32 %v1724, %v1724
    %1729 = vset.pattern.permute.xlu0 0
    %1730 = vperm.xlu0 %1729, %v1725
    %v1731 = vpop.permute.xlu0 %1730
    %v1733 = vmul.f32 %v1731, %v1727
    %v1734 = vadd.f32 %v1726, %v1733
    %1735 = vst [vmem:[#allocation4] sm:$0xff] %v1734
    %v1736 = vld [vmem:[#allocation4] sm:$0xff]
    %1737 = vadd.xlane.f32.xlu0 %v1736
    %v1738 = vpop.xlane.xlu0 %1737
    %v1739 = vrot.slane %v1738, 4
    %v1740 = vadd.f32 %v1738, %v1739
    %v1741 = vrot.slane %v1740, 2
    %v1742 = vadd.f32 %v1740, %v1741
    %v1743 = vrot.slane %v1742, 1
    %v1744 = vadd.f32 %v1742, %v1743
    %s1745 = vtos %v1744
    %s1746 = smul.f32 %s1745, 0.0625
    %1747 = vst [vmem:[#allocation4] sm:$0xff] 0.0
    %s1748 = sld [smem:[#allocation10]]
    %s1749 = sld [smem:[#allocation11]]
    %s1750 = smul.addr %s1748, 16
    %s1751 = scalar_lea.hbm %s7, %s1750
    // Predicated region
    $region1002: #{tpu_custom_call.1} parent=1 // pred_check
      _
    $region1003: #{tpu_custom_call.1} parent=1 // pred_check_branch
      %1753 = sbr.rel target = $region1005
    $region1004: #{tpu_custom_call.1} parent=1 // pred_region
      %1754 = sst [smem:[#allocation48]] [#allocation47]
      %1755 = sst [smem:[#allocation49]] [#allocation46]
    $region1005: #{tpu_custom_call.1} parent=1 // pred_fallthru
      _
    %1757 = shalt.err (0)
    %s1759 = sshll.u32 [#allocation2], 4
    %s1760 = int_to_ptr.vmem [resolvable:$true] %s1759
    %1762 = dma.hbm_to_vmem [thread:$0]  %s1751, 16, %s1760, [#allocation3]
    %s1763 = smul.addr %s1749, 16
    %s1764 = scalar_lea.hbm %s7, %s1763
    // Predicated region
    $region1006: #{tpu_custom_call.1} parent=1 // pred_check
      _
    $region1007: #{tpu_custom_call.1} parent=1 // pred_check_branch
      %1766 = sbr.rel target = $region1009
    $region1008: #{tpu_custom_call.1} parent=1 // pred_region
      %1767 = sst [smem:[#allocation48]] [#allocation51]
      %1768 = sst [smem:[#allocation49]] [#allocation50]
    $region1009: #{tpu_custom_call.1} parent=1 // pred_fallthru
      _
    %1770 = shalt.err (0)
    %s1772 = sshll.u32 %s125, 4
    %s1773 = int_to_ptr.vmem [resolvable:$true] %s1772
    %1775 = dma.hbm_to_vmem [thread:$0]  %s1764, 16, %s1773, [#allocation3]
    %s1776 = sld [smem:[#allocation10 + $0x1]]
    %s1777 = sld [smem:[#allocation11 + $0x1]]
    %s1778 = smul.addr %s1776, 16
    %s1779 = scalar_lea.hbm %s7, %s1778
    // Predicated region
    $region1010: #{tpu_custom_call.1} parent=1 // pred_check
      _
    $region1011: #{tpu_custom_call.1} parent=1 // pred_check_branch
      %1781 = sbr.rel target = $region1013
    $region1012: #{tpu_custom_call.1} parent=1 // pred_region
      %1782 = sst [smem:[#allocation48]] [#allocation53]
      %1783 = sst [smem:[#allocation49]] [#allocation52]
    $region1013: #{tpu_custom_call.1} parent=1 // pred_fallthru
      _
    %1785 = shalt.err (0)
    %s1787 = sshll.u32 %s175, 4
    %s1788 = int_to_ptr.vmem [resolvable:$true] %s1787
    %1790 = dma.hbm_to_vmem [thread:$0]  %s1779, 16, %s1788, [#allocation3]
    %s1791 = smul.addr %s1777, 16
    %s1792 = scalar_lea.hbm %s7, %s1791
    // Predicated region
    $region1014: #{tpu_custom_call.1} parent=1 // pred_check
      _
    $region1015: #{tpu_custom_call.1} parent=1 // pred_check_branch
      %1794 = sbr.rel target = $region1017
    $region1016: #{tpu_custom_call.1} parent=1 // pred_region
      %1795 = sst [smem:[#allocation48]] [#allocation55]
      %1796 = sst [smem:[#allocation49]] [#allocation54]
    $region1017: #{tpu_custom_call.1} parent=1 // pred_fallthru
      _
    %1798 = shalt.err (0)
    %s1800 = sshll.u32 %s223, 4
    %s1801 = int_to_ptr.vmem [resolvable:$true] %s1800
    %1803 = dma.hbm_to_vmem [thread:$0]  %s1792, 16, %s1801, [#allocation3]
    %s1804 = sld [smem:[#allocation10 + $0x2]]
    %s1805 = sld [smem:[#allocation11 + $0x2]]
    %s1806 = smul.addr %s1804, 16
    %s1807 = scalar_lea.hbm %s7, %s1806
    // Predicated region
    $region1018: #{tpu_custom_call.1} parent=1 // pred_check
      _
    $region1019: #{tpu_custom_call.1} parent=1 // pred_check_branch
      %1809 = sbr.rel target = $region1021
    $region1020: #{tpu_custom_call.1} parent=1 // pred_region
      %1810 = sst [smem:[#allocation48]] [#allocation57]
      %1811 = sst [smem:[#allocation49]] [#allocation56]
    $region1021: #{tpu_custom_call.1} parent=1 // pred_fallthru
      _
    %1813 = shalt.err (0)
    %s1815 = sshll.u32 %s273, 4
    %s1816 = int_to_ptr.vmem [resolvable:$true] %s1815
    %1818 = dma.hbm_to_vmem [thread:$0]  %s1807, 16, %s1816, [#allocation3]
    %s1819 = smul.addr %s1805, 16
    %s1820 = scalar_lea.hbm %s7, %s1819
    // Predicated region
    $region1022: #{tpu_custom_call.1} parent=1 // pred_check
      _
    $region1023: #{tpu_custom_call.1} parent=1 // pred_check_branch
      %1822 = sbr.rel target = $region1025
    $region1024: #{tpu_custom_call.1} parent=1 // pred_region
      %1823 = sst [smem:[#allocation48]] [#allocation59]
      %1824 = sst [smem:[#allocation49]] [#allocation58]
    $region1025: #{tpu_custom_call.1} parent=1 // pred_fallthru
      _
    %1826 = shalt.err (0)
    %s1828 = sshll.u32 %s321, 4
    %s1829 = int_to_ptr.vmem [resolvable:$true] %s1828
    %1831 = dma.hbm_to_vmem [thread:$0]  %s1820, 16, %s1829, [#allocation3]
    %s1832 = sld [smem:[#allocation10 + $0x3]]
    %s1833 = sld [smem:[#allocation11 + $0x3]]
    %s1834 = smul.addr %s1832, 16
    %s1835 = scalar_lea.hbm %s7, %s1834
    // Predicated region
    $region1026: #{tpu_custom_call.1} parent=1 // pred_check
      _
    $region1027: #{tpu_custom_call.1} parent=1 // pred_check_branch
      %1837 = sbr.rel target = $region1029
    $region1028: #{tpu_custom_call.1} parent=1 // pred_region
      %1838 = sst [smem:[#allocation48]] [#allocation61]
      %1839 = sst [smem:[#allocation49]] [#allocation60]
    $region1029: #{tpu_custom_call.1} parent=1 // pred_fallthru
      _
    %1841 = shalt.err (0)
    %s1843 = sshll.u32 %s371, 4
    %s1844 = int_to_ptr.vmem [resolvable:$true] %s1843
    %1846 = dma.hbm_to_vmem [thread:$0]  %s1835, 16, %s1844, [#allocation3]
    %s1847 = smul.addr %s1833, 16
    %s1848 = scalar_lea.hbm %s7, %s1847
    // Predicated region
    $region1030: #{tpu_custom_call.1} parent=1 // pred_check
      _
    $region1031: #{tpu_custom_call.1} parent=1 // pred_check_branch
      %1850 = sbr.rel target = $region1033
    $region1032: #{tpu_custom_call.1} parent=1 // pred_region
      %1851 = sst [smem:[#allocation48]] [#allocation63]
      %1852 = sst [smem:[#allocation49]] [#allocation62]
    $region1033: #{tpu_custom_call.1} parent=1 // pred_fallthru
      _
    %1854 = shalt.err (0)
    %s1856 = sshll.u32 %s419, 4
    %s1857 = int_to_ptr.vmem [resolvable:$true] %s1856
    %1859 = dma.hbm_to_vmem [thread:$0]  %s1848, 16, %s1857, [#allocation3]
    %s1860 = sld [smem:[#allocation10 + $0x4]]
    %s1861 = sld [smem:[#allocation11 + $0x4]]
    %s1862 = smul.addr %s1860, 16
    %s1863 = scalar_lea.hbm %s7, %s1862
    // Predicated region
    $region1034: #{tpu_custom_call.1} parent=1 // pred_check
      _
    $region1035: #{tpu_custom_call.1} parent=1 // pred_check_branch
      %1865 = sbr.rel target = $region1037
    $region1036: #{tpu_custom_call.1} parent=1 // pred_region
      %1866 = sst [smem:[#allocation48]] [#allocation65]
      %1867 = sst [smem:[#allocation49]] [#allocation64]
    $region1037: #{tpu_custom_call.1} parent=1 // pred_fallthru
      _
    %1869 = shalt.err (0)
    %s1871 = sshll.u32 %s469, 4
    %s1872 = int_to_ptr.vmem [resolvable:$true] %s1871
    %1874 = dma.hbm_to_vmem [thread:$0]  %s1863, 16, %s1872, [#allocation3]
    %s1875 = smul.addr %s1861, 16
    %s1876 = scalar_lea.hbm %s7, %s1875
    // Predicated region
    $region1038: #{tpu_custom_call.1} parent=1 // pred_check
      _
    $region1039: #{tpu_custom_call.1} parent=1 // pred_check_branch
      %1878 = sbr.rel target = $region1041
    $region1040: #{tpu_custom_call.1} parent=1 // pred_region
      %1879 = sst [smem:[#allocation48]] [#allocation67]
      %1880 = sst [smem:[#allocation49]] [#allocation66]
    $region1041: #{tpu_custom_call.1} parent=1 // pred_fallthru
      _
    %1882 = shalt.err (0)
    %s1884 = sshll.u32 %s517, 4
    %s1885 = int_to_ptr.vmem [resolvable:$true] %s1884
    %1887 = dma.hbm_to_vmem [thread:$0]  %s1876, 16, %s1885, [#allocation3]
    %s1888 = sld [smem:[#allocation10 + $0x5]]
    %s1889 = sld [smem:[#allocation11 + $0x5]]
    %s1890 = smul.addr %s1888, 16
    %s1891 = scalar_lea.hbm %s7, %s1890
    // Predicated region
    $region1042: #{tpu_custom_call.1} parent=1 // pred_check
      _
    $region1043: #{tpu_custom_call.1} parent=1 // pred_check_branch
      %1893 = sbr.rel target = $region1045
    $region1044: #{tpu_custom_call.1} parent=1 // pred_region
      %1894 = sst [smem:[#allocation48]] [#allocation69]
      %1895 = sst [smem:[#allocation49]] [#allocation68]
    $region1045: #{tpu_custom_call.1} parent=1 // pred_fallthru
      _
    %1897 = shalt.err (0)
    %s1899 = sshll.u32 %s567, 4
    %s1900 = int_to_ptr.vmem [resolvable:$true] %s1899
    %1902 = dma.hbm_to_vmem [thread:$0]  %s1891, 16, %s1900, [#allocation3]
    %s1903 = smul.addr %s1889, 16
    %s1904 = scalar_lea.hbm %s7, %s1903
    // Predicated region
    $region1046: #{tpu_custom_call.1} parent=1 // pred_check
      _
    $region1047: #{tpu_custom_call.1} parent=1 // pred_check_branch
      %1906 = sbr.rel target = $region1049
    $region1048: #{tpu_custom_call.1} parent=1 // pred_region
      %1907 = sst [smem:[#allocation48]] [#allocation71]
      %1908 = sst [smem:[#allocation49]] [#allocation70]
    $region1049: #{tpu_custom_call.1} parent=1 // pred_fallthru
      _
    %1910 = shalt.err (0)
    %s1912 = sshll.u32 %s615, 4
    %s1913 = int_to_ptr.vmem [resolvable:$true] %s1912
    %1915 = dma.hbm_to_vmem [thread:$0]  %s1904, 16, %s1913, [#allocation3]
    %s1916 = sld [smem:[#allocation10 + $0x6]]
    %s1917 = sld [smem:[#allocation11 + $0x6]]
    %s1918 = smul.addr %s1916, 16
    %s1919 = scalar_lea.hbm %s7, %s1918
    // Predicated region
    $region1050: #{tpu_custom_call.1} parent=1 // pred_check
      _
    $region1051: #{tpu_custom_call.1} parent=1 // pred_check_branch
      %1921 = sbr.rel target = $region1053
    $region1052: #{tpu_custom_call.1} parent=1 // pred_region
      %1922 = sst [smem:[#allocation48]] [#allocation73]
      %1923 = sst [smem:[#allocation49]] [#allocation72]
    $region1053: #{tpu_custom_call.1} parent=1 // pred_fallthru
      _
    %1925 = shalt.err (0)
    %s1927 = sshll.u32 %s665, 4
    %s1928 = int_to_ptr.vmem [resolvable:$true] %s1927
    %1930 = dma.hbm_to_vmem [thread:$0]  %s1919, 16, %s1928, [#allocation3]
    %s1931 = smul.addr %s1917, 16
    %s1932 = scalar_lea.hbm %s7, %s1931
    // Predicated region
    $region1054: #{tpu_custom_call.1} parent=1 // pred_check
      _
    $region1055: #{tpu_custom_call.1} parent=1 // pred_check_branch
      %1934 = sbr.rel target = $region1057
    $region1056: #{tpu_custom_call.1} parent=1 // pred_region
      %1935 = sst [smem:[#allocation48]] [#allocation75]
      %1936 = sst [smem:[#allocation49]] [#allocation74]
    $region1057: #{tpu_custom_call.1} parent=1 // pred_fallthru
      _
    %1938 = shalt.err (0)
    %s1940 = sshll.u32 %s713, 4
    %s1941 = int_to_ptr.vmem [resolvable:$true] %s1940
    %1943 = dma.hbm_to_vmem [thread:$0]  %s1932, 16, %s1941, [#allocation3]
    %s1944 = sld [smem:[#allocation10 + $0x7]]
    %s1945 = sld [smem:[#allocation11 + $0x7]]
    %s1946 = smul.addr %s1944, 16
    %s1947 = scalar_lea.hbm %s7, %s1946
    // Predicated region
    $region1058: #{tpu_custom_call.1} parent=1 // pred_check
      _
    $region1059: #{tpu_custom_call.1} parent=1 // pred_check_branch
      %1949 = sbr.rel target = $region1061
    $region1060: #{tpu_custom_call.1} parent=1 // pred_region
      %1950 = sst [smem:[#allocation48]] [#allocation77]
      %1951 = sst [smem:[#allocation49]] [#allocation76]
    $region1061: #{tpu_custom_call.1} parent=1 // pred_fallthru
      _
    %1953 = shalt.err (0)
    %s1955 = sshll.u32 %s763, 4
    %s1956 = int_to_ptr.vmem [resolvable:$true] %s1955
    %1958 = dma.hbm_to_vmem [thread:$0]  %s1947, 16, %s1956, [#allocation3]
    %s1959 = smul.addr %s1945, 16
    %s1960 = scalar_lea.hbm %s7, %s1959
    // Predicated region
    $region1062: #{tpu_custom_call.1} parent=1 // pred_check
      _
    $region1063: #{tpu_custom_call.1} parent=1 // pred_check_branch
      %1962 = sbr.rel target = $region1065
    $region1064: #{tpu_custom_call.1} parent=1 // pred_region
      %1963 = sst [smem:[#allocation48]] [#allocation79]
      %1964 = sst [smem:[#allocation49]] [#allocation78]
    $region1065: #{tpu_custom_call.1} parent=1 // pred_fallthru
      _
    %1966 = shalt.err (0)
    %s1968 = sshll.u32 %s811, 4
    %s1969 = int_to_ptr.vmem [resolvable:$true] %s1968
    %1971 = dma.hbm_to_vmem [thread:$0]  %s1960, 16, %s1969, [#allocation3]
    %s1972 = sld [smem:[#allocation10 + $0x8]]
    %s1973 = sld [smem:[#allocation11 + $0x8]]
    %s1974 = smul.addr %s1972, 16
    %s1975 = scalar_lea.hbm %s7, %s1974
    // Predicated region
    $region1066: #{tpu_custom_call.1} parent=1 // pred_check
      _
    $region1067: #{tpu_custom_call.1} parent=1 // pred_check_branch
      %1977 = sbr.rel target = $region1069
    $region1068: #{tpu_custom_call.1} parent=1 // pred_region
      %1978 = sst [smem:[#allocation48]] [#allocation81]
      %1979 = sst [smem:[#allocation49]] [#allocation80]
    $region1069: #{tpu_custom_call.1} parent=1 // pred_fallthru
      _
    %1981 = shalt.err (0)
    %s1983 = sshll.u32 %s861, 4
    %s1984 = int_to_ptr.vmem [resolvable:$true] %s1983
    %1986 = dma.hbm_to_vmem [thread:$0]  %s1975, 16, %s1984, %s862
    %s1987 = smul.addr %s1973, 16
    %s1988 = scalar_lea.hbm %s7, %s1987
    // Predicated region
    $region1070: #{tpu_custom_call.1} parent=1 // pred_check
      _
    $region1071: #{tpu_custom_call.1} parent=1 // pred_check_branch
      %1990 = sbr.rel target = $region1073
    $region1072: #{tpu_custom_call.1} parent=1 // pred_region
      %1991 = sst [smem:[#allocation48]] [#allocation83]
      %1992 = sst [smem:[#allocation49]] [#allocation82]
    $region1073: #{tpu_custom_call.1} parent=1 // pred_fallthru
      _
    %1994 = shalt.err (0)
    %s1996 = sshll.u32 %s910, 4
    %s1997 = int_to_ptr.vmem [resolvable:$true] %s1996
    %1999 = dma.hbm_to_vmem [thread:$0]  %s1988, 16, %s1997, %s862
    %s2000 = sld [smem:[#allocation10 + $0x9]]
    %s2001 = sld [smem:[#allocation11 + $0x9]]
    %s2002 = smul.addr %s2000, 16
    %s2003 = scalar_lea.hbm %s7, %s2002
    // Predicated region
    $region1074: #{tpu_custom_call.1} parent=1 // pred_check
      _
    $region1075: #{tpu_custom_call.1} parent=1 // pred_check_branch
      %2005 = sbr.rel target = $region1077
    $region1076: #{tpu_custom_call.1} parent=1 // pred_region
      %2006 = sst [smem:[#allocation48]] [#allocation85]
      %2007 = sst [smem:[#allocation49]] [#allocation84]
    $region1077: #{tpu_custom_call.1} parent=1 // pred_fallthru
      _
    %2009 = shalt.err (0)
    %s2011 = sshll.u32 %s960, 4
    %s2012 = int_to_ptr.vmem [resolvable:$true] %s2011
    %2014 = dma.hbm_to_vmem [thread:$0]  %s2003, 16, %s2012, %s862
    %s2015 = smul.addr %s2001, 16
    %s2016 = scalar_lea.hbm %s7, %s2015
    // Predicated region
    $region1078: #{tpu_custom_call.1} parent=1 // pred_check
      _
    $region1079: #{tpu_custom_call.1} parent=1 // pred_check_branch
      %2018 = sbr.rel target = $region1081
    $region1080: #{tpu_custom_call.1} parent=1 // pred_region
      %2019 = sst [smem:[#allocation48]] [#allocation87]
      %2020 = sst [smem:[#allocation49]] [#allocation86]
    $region1081: #{tpu_custom_call.1} parent=1 // pred_fallthru
      _
    %2022 = shalt.err (0)
    %s2024 = sshll.u32 %s1008, 4
    %s2025 = int_to_ptr.vmem [resolvable:$true] %s2024
    %2027 = dma.hbm_to_vmem [thread:$0]  %s2016, 16, %s2025, %s862
    %s2028 = sld [smem:[#allocation10 + $0xa]]
    %s2029 = sld [smem:[#allocation11 + $0xa]]
    %s2030 = smul.addr %s2028, 16
    %s2031 = scalar_lea.hbm %s7, %s2030
    // Predicated region
    $region1082: #{tpu_custom_call.1} parent=1 // pred_check
      _
    $region1083: #{tpu_custom_call.1} parent=1 // pred_check_branch
      %2033 = sbr.rel target = $region1085
    $region1084: #{tpu_custom_call.1} parent=1 // pred_region
      %2034 = sst [smem:[#allocation48]] [#allocation89]
      %2035 = sst [smem:[#allocation49]] [#allocation88]
    $region1085: #{tpu_custom_call.1} parent=1 // pred_fallthru
      _
    %2037 = shalt.err (0)
    %s2039 = sshll.u32 %s1058, 4
    %s2040 = int_to_ptr.vmem [resolvable:$true] %s2039
    %2042 = dma.hbm_to_vmem [thread:$0]  %s2031, 16, %s2040, %s862
    %s2043 = smul.addr %s2029, 16
    %s2044 = scalar_lea.hbm %s7, %s2043
    // Predicated region
    $region1086: #{tpu_custom_call.1} parent=1 // pred_check
      _
    $region1087: #{tpu_custom_call.1} parent=1 // pred_check_branch
      %2046 = sbr.rel target = $region1089
    $region1088: #{tpu_custom_call.1} parent=1 // pred_region
      %2047 = sst [smem:[#allocation48]] [#allocation91]
      %2048 = sst [smem:[#allocation49]] [#allocation90]
    $region1089: #{tpu_custom_call.1} parent=1 // pred_fallthru
      _
    %2050 = shalt.err (0)
    %s2052 = sshll.u32 %s1106, 4
    %s2053 = int_to_ptr.vmem [resolvable:$true] %s2052
    %2055 = dma.hbm_to_vmem [thread:$0]  %s2044, 16, %s2053, %s862
    %s2056 = sld [smem:[#allocation10 + $0xb]]
    %s2057 = sld [smem:[#allocation11 + $0xb]]
    %s2058 = smul.addr %s2056, 16
    %s2059 = scalar_lea.hbm %s7, %s2058
    // Predicated region
    $region1090: #{tpu_custom_call.1} parent=1 // pred_check
      _
    $region1091: #{tpu_custom_call.1} parent=1 // pred_check_branch
      %2061 = sbr.rel target = $region1093
    $region1092: #{tpu_custom_call.1} parent=1 // pred_region
      %2062 = sst [smem:[#allocation48]] [#allocation93]
      %2063 = sst [smem:[#allocation49]] [#allocation92]
    $region1093: #{tpu_custom_call.1} parent=1 // pred_fallthru
      _
    %2065 = shalt.err (0)
    %s2067 = sshll.u32 %s1156, 4
    %s2068 = int_to_ptr.vmem [resolvable:$true] %s2067
    %2070 = dma.hbm_to_vmem [thread:$0]  %s2059, 16, %s2068, %s862
    %s2071 = smul.addr %s2057, 16
    %s2072 = scalar_lea.hbm %s7, %s2071
    // Predicated region
    $region1094: #{tpu_custom_call.1} parent=1 // pred_check
      _
    $region1095: #{tpu_custom_call.1} parent=1 // pred_check_branch
      %2074 = sbr.rel target = $region1097
    $region1096: #{tpu_custom_call.1} parent=1 // pred_region
      %2075 = sst [smem:[#allocation48]] [#allocation95]
      %2076 = sst [smem:[#allocation49]] [#allocation94]
    $region1097: #{tpu_custom_call.1} parent=1 // pred_fallthru
      _
    %2078 = shalt.err (0)
    %s2080 = sshll.u32 %s1204, 4
    %s2081 = int_to_ptr.vmem [resolvable:$true] %s2080
    %2083 = dma.hbm_to_vmem [thread:$0]  %s2072, 16, %s2081, %s862
    %s2084 = sld [smem:[#allocation10 + $0xc]]
    %s2085 = sld [smem:[#allocation11 + $0xc]]
    %s2086 = smul.addr %s2084, 16
    %s2087 = scalar_lea.hbm %s7, %s2086
    // Predicated region
    $region1098: #{tpu_custom_call.1} parent=1 // pred_check
      _
    $region1099: #{tpu_custom_call.1} parent=1 // pred_check_branch
      %2089 = sbr.rel target = $region1101
    $region1100: #{tpu_custom_call.1} parent=1 // pred_region
      %2090 = sst [smem:[#allocation48]] [#allocation97]
      %2091 = sst [smem:[#allocation49]] [#allocation96]
    $region1101: #{tpu_custom_call.1} parent=1 // pred_fallthru
      _
    %2093 = shalt.err (0)
    %s2095 = sshll.u32 %s1254, 4
    %s2096 = int_to_ptr.vmem [resolvable:$true] %s2095
    %2098 = dma.hbm_to_vmem [thread:$0]  %s2087, 16, %s2096, %s862
    %s2099 = smul.addr %s2085, 16
    %s2100 = scalar_lea.hbm %s7, %s2099
    // Predicated region
    $region1102: #{tpu_custom_call.1} parent=1 // pred_check
      _
    $region1103: #{tpu_custom_call.1} parent=1 // pred_check_branch
      %2102 = sbr.rel target = $region1105
    $region1104: #{tpu_custom_call.1} parent=1 // pred_region
      %2103 = sst [smem:[#allocation48]] [#allocation99]
      %2104 = sst [smem:[#allocation49]] [#allocation98]
    $region1105: #{tpu_custom_call.1} parent=1 // pred_fallthru
      _
    %2106 = shalt.err (0)
    %s2108 = sshll.u32 %s1302, 4
    %s2109 = int_to_ptr.vmem [resolvable:$true] %s2108
    %2111 = dma.hbm_to_vmem [thread:$0]  %s2100, 16, %s2109, %s862
    %s2112 = sld [smem:[#allocation10 + $0xd]]
    %s2113 = sld [smem:[#allocation11 + $0xd]]
    %s2114 = smul.addr %s2112, 16
    %s2115 = scalar_lea.hbm %s7, %s2114
    // Predicated region
    $region1106: #{tpu_custom_call.1} parent=1 // pred_check
      _
    $region1107: #{tpu_custom_call.1} parent=1 // pred_check_branch
      %2117 = sbr.rel target = $region1109
    $region1108: #{tpu_custom_call.1} parent=1 // pred_region
      %2118 = sst [smem:[#allocation48]] [#allocation101]
      %2119 = sst [smem:[#allocation49]] [#allocation100]
    $region1109: #{tpu_custom_call.1} parent=1 // pred_fallthru
      _
    %2121 = shalt.err (0)
    %s2123 = sshll.u32 %s1352, 4
    %s2124 = int_to_ptr.vmem [resolvable:$true] %s2123
    %2126 = dma.hbm_to_vmem [thread:$0]  %s2115, 16, %s2124, %s862
    %s2127 = smul.addr %s2113, 16
    %s2128 = scalar_lea.hbm %s7, %s2127
    // Predicated region
    $region1110: #{tpu_custom_call.1} parent=1 // pred_check
      _
    $region1111: #{tpu_custom_call.1} parent=1 // pred_check_branch
      %2130 = sbr.rel target = $region1113
    $region1112: #{tpu_custom_call.1} parent=1 // pred_region
      %2131 = sst [smem:[#allocation48]] [#allocation103]
      %2132 = sst [smem:[#allocation49]] [#allocation102]
    $region1113: #{tpu_custom_call.1} parent=1 // pred_fallthru
      _
    %2134 = shalt.err (0)
    %s2136 = sshll.u32 %s1400, 4
    %s2137 = int_to_ptr.vmem [resolvable:$true] %s2136
    %2139 = dma.hbm_to_vmem [thread:$0]  %s2128, 16, %s2137, %s862
    %s2140 = sld [smem:[#allocation10 + $0xe]]
    %s2141 = sld [smem:[#allocation11 + $0xe]]
    %s2142 = smul.addr %s2140, 16
    %s2143 = scalar_lea.hbm %s7, %s2142
    // Predicated region
    $region1114: #{tpu_custom_call.1} parent=1 // pred_check
      _
    $region1115: #{tpu_custom_call.1} parent=1 // pred_check_branch
      %2145 = sbr.rel target = $region1117
    $region1116: #{tpu_custom_call.1} parent=1 // pred_region
      %2146 = sst [smem:[#allocation48]] [#allocation105]
      %2147 = sst [smem:[#allocation49]] [#allocation104]
    $region1117: #{tpu_custom_call.1} parent=1 // pred_fallthru
      _
    %2149 = shalt.err (0)
    %s2151 = sshll.u32 %s1450, 4
    %s2152 = int_to_ptr.vmem [resolvable:$true] %s2151
    %2154 = dma.hbm_to_vmem [thread:$0]  %s2143, 16, %s2152, %s862
    %s2155 = smul.addr %s2141, 16
    %s2156 = scalar_lea.hbm %s7, %s2155
    // Predicated region
    $region1118: #{tpu_custom_call.1} parent=1 // pred_check
      _
    $region1119: #{tpu_custom_call.1} parent=1 // pred_check_branch
      %2158 = sbr.rel target = $region1121
    $region1120: #{tpu_custom_call.1} parent=1 // pred_region
      %2159 = sst [smem:[#allocation48]] [#allocation107]
      %2160 = sst [smem:[#allocation49]] [#allocation106]
    $region1121: #{tpu_custom_call.1} parent=1 // pred_fallthru
      _
    %2162 = shalt.err (0)
    %s2164 = sshll.u32 %s1498, 4
    %s2165 = int_to_ptr.vmem [resolvable:$true] %s2164
    %2167 = dma.hbm_to_vmem [thread:$0]  %s2156, 16, %s2165, %s862
    %s2168 = sld [smem:[#allocation10 + $0xf]]
    %s2169 = sld [smem:[#allocation11 + $0xf]]
    %s2170 = smul.addr %s2168, 16
    %s2171 = scalar_lea.hbm %s7, %s2170
    // Predicated region
    $region1122: #{tpu_custom_call.1} parent=1 // pred_check
      _
    $region1123: #{tpu_custom_call.1} parent=1 // pred_check_branch
      %2173 = sbr.rel target = $region1125
    $region1124: #{tpu_custom_call.1} parent=1 // pred_region
      %2174 = sst [smem:[#allocation48]] [#allocation109]
      %2175 = sst [smem:[#allocation49]] [#allocation108]
    $region1125: #{tpu_custom_call.1} parent=1 // pred_fallthru
      _
    %2177 = shalt.err (0)
    %s2179 = sshll.u32 %s1548, 4
    %s2180 = int_to_ptr.vmem [resolvable:$true] %s2179
    %2182 = dma.hbm_to_vmem [thread:$0]  %s2171, 16, %s2180, %s862
    %s2183 = smul.addr %s2169, 16
    %s2184 = scalar_lea.hbm %s7, %s2183
    // Predicated region
    $region1126: #{tpu_custom_call.1} parent=1 // pred_check
      _
    $region1127: #{tpu_custom_call.1} parent=1 // pred_check_branch
      %2186 = sbr.rel target = $region1129
    $region1128: #{tpu_custom_call.1} parent=1 // pred_region
      %2187 = sst [smem:[#allocation48]] [#allocation111]
      %2188 = sst [smem:[#allocation49]] [#allocation110]
    $region1129: #{tpu_custom_call.1} parent=1 // pred_fallthru
      _
    %2190 = shalt.err (0)
    %s2192 = sshll.u32 %s1596, 4
    %s2193 = int_to_ptr.vmem [resolvable:$true] %s2192
    %2195 = dma.hbm_to_vmem [thread:$0]  %s2184, 16, %s2193, %s862
    %s2196 = sshll.u32 %s1643, 4
    %2197 = dma.done [#allocation3], %s2196
    %s2198 = sshll.u32 %s1643, 4
    %2199 = dma.done [#allocation3], %s2198
    %s2200 = sshll.u32 %s1643, 4
    %2201 = dma.done [#allocation3], %s2200
    %s2202 = sshll.u32 %s1643, 4
    %2203 = dma.done [#allocation3], %s2202
    %s2204 = sshll.u32 %s1643, 4
    %2205 = dma.done [#allocation3], %s2204
    %s2206 = sshll.u32 %s1643, 4
    %2207 = dma.done [#allocation3], %s2206
    %s2208 = sshll.u32 %s1643, 4
    %2209 = dma.done [#allocation3], %s2208
    %s2210 = sshll.u32 %s1643, 4
    %2211 = dma.done [#allocation3], %s2210
    %s2212 = sshll.u32 %s1643, 4
    %2213 = dma.done [#allocation3], %s2212
    %s2214 = sshll.u32 %s1643, 4
    %2215 = dma.done [#allocation3], %s2214
    %s2216 = sshll.u32 %s1643, 4
    %2217 = dma.done [#allocation3], %s2216
    %s2218 = sshll.u32 %s1643, 4
    %2219 = dma.done [#allocation3], %s2218
    %s2220 = sshll.u32 %s1643, 4
    %2221 = dma.done [#allocation3], %s2220
    %s2222 = sshll.u32 %s1643, 4
    %2223 = dma.done [#allocation3], %s2222
    %s2224 = sshll.u32 %s1643, 4
    %2225 = dma.done [#allocation3], %s2224
    %s2226 = sshll.u32 %s1643, 4
    %2227 = dma.done [#allocation3], %s2226
    %v2228 = vld [vmem:[#allocation2] sm:$0xff]
    %v2229 = vld [vmem:[%s125] sm:$0xff]
    %v2230 = vsub.f32 %v2228, %v2229
    %v2231 = vld [vmem:[%s5] sm:$0xff]
    %v2232 = vld [vmem:[#allocation4] sm:$0xff]
    %v2233 = vmul.f32 %v2230, %v2230
    %2235 = vset.pattern.permute.xlu0 0
    %2236 = vperm.xlu0 %2235, %v2231
    %v2237 = vpop.permute.xlu0 %2236
    %v2239 = vmul.f32 %v2237, %v2233
    %v2240 = vadd.f32 %v2232, %v2239
    %2241 = vst [vmem:[#allocation4] sm:$0xff] %v2240
    %s2242 = sshll.u32 %s1643, 4
    %2243 = dma.done %s862, %s2242
    %s2244 = sshll.u32 %s1643, 4
    %2245 = dma.done %s862, %s2244
    %s2246 = sshll.u32 %s1643, 4
    %2247 = dma.done %s862, %s2246
    %s2248 = sshll.u32 %s1643, 4
    %2249 = dma.done %s862, %s2248
    %s2250 = sshll.u32 %s1643, 4
    %2251 = dma.done %s862, %s2250
    %s2252 = sshll.u32 %s1643, 4
    %2253 = dma.done %s862, %s2252
    %s2254 = sshll.u32 %s1643, 4
    %2255 = dma.done %s862, %s2254
    %s2256 = sshll.u32 %s1643, 4
    %2257 = dma.done %s862, %s2256
    %s2258 = sshll.u32 %s1643, 4
    %2259 = dma.done %s862, %s2258
    %s2260 = sshll.u32 %s1643, 4
    %2261 = dma.done %s862, %s2260
    %s2262 = sshll.u32 %s1643, 4
    %2263 = dma.done %s862, %s2262
    %s2264 = sshll.u32 %s1643, 4
    %2265 = dma.done %s862, %s2264
    %s2266 = sshll.u32 %s1643, 4
    %2267 = dma.done %s862, %s2266
    %s2268 = sshll.u32 %s1643, 4
    %2269 = dma.done %s862, %s2268
    %s2270 = sshll.u32 %s1643, 4
    %2271 = dma.done %s862, %s2270
    %s2272 = sshll.u32 %s1643, 4
    %2273 = dma.done %s862, %s2272
    %v2274 = vld [vmem:[%s861] sm:$0xff]
    %v2275 = vld [vmem:[%s910] sm:$0xff]
    %v2276 = vsub.f32 %v2274, %v2275
    %v2277 = vld [vmem:[%s5 + $0x8] sm:$0xff]
    %v2278 = vld [vmem:[#allocation4] sm:$0xff]
    %v2279 = vmul.f32 %v2276, %v2276
    %2281 = vset.pattern.permute.xlu0 0
    %2282 = vperm.xlu0 %2281, %v2277
    %v2283 = vpop.permute.xlu0 %2282
    %v2285 = vmul.f32 %v2283, %v2279
    %v2286 = vadd.f32 %v2278, %v2285
    %2287 = vst [vmem:[#allocation4] sm:$0xff] %v2286
    %v2288 = vld [vmem:[#allocation4] sm:$0xff]
    %2289 = vadd.xlane.f32.xlu0 %v2288
    %v2290 = vpop.xlane.xlu0 %2289
    %v2291 = vrot.slane %v2290, 4
    %v2292 = vadd.f32 %v2290, %v2291
    %v2293 = vrot.slane %v2292, 2
    %v2294 = vadd.f32 %v2292, %v2293
    %v2295 = vrot.slane %v2294, 1
    %v2296 = vadd.f32 %v2294, %v2295
    %s2297 = vtos %v2296
    %s2298 = smul.f32 %s2297, 0.0625
    %s2299 = sadd.f32 %s1746, %s2298
    %s2300 = scalar_lea.smem [#allocation13], 0
    %2301 = sst [smem:[%s2300]] %s2299
    // Predicated region
    $region1130: #{tpu_custom_call.1} parent=1 // pred_check
      _
    $region1131: #{tpu_custom_call.1} parent=1 // pred_check_branch
      %2303 = sbr.rel (0) target = $region1133
    $region1132: #{tpu_custom_call.1} parent=1 // pred_region
      %s2305 = ssub.s32 16, 16
      %2306 = vsyncadd [#allocation6], %s2305
      %2309 = dma.smem_to_hbm [#allocation13], 16, %s8, [#allocation6]
    $region1133: #{tpu_custom_call.1} parent=1 // pred_fallthru
      _
    // Predicated region
    $region1134: #{tpu_custom_call.1} parent=1 // pred_check
      _
    $region1135: #{tpu_custom_call.1} parent=1 // pred_check_branch
      %2311 = sbr.rel (0) target = $region1137
    $region1136: #{tpu_custom_call.1} parent=1 // pred_region
      %2312 = dma.done [#allocation6], 16
    $region1137: #{tpu_custom_call.1} parent=1 // pred_fallthru
      _
    %2313 = sfence
    %2314 = vsyncpa [#allocation6], 1
    %2315 = vsyncpa [#allocation7], 1
    %2316 = vsyncpa [#allocation9], 1
    %2317 = vsyncpa [#allocation12], 1
  %2318 = vsyncmov [#allocation3]
  %s2319 = vpop.sfrf %2318
  %p2320 = scmp.eq.s32.totalorder %s2319, 0
  %p2321 = pneg %p2320
  %2323 = shalt.err (%p2321)
  %s2324 = scalar_lea.sflag [#allocation3], 1
  %2325 = vsyncmov %s2324
  %s2326 = vpop.sfrf %2325
  %p2327 = scmp.eq.s32.totalorder %s2326, 0
  %p2328 = pneg %p2327
  %2330 = shalt.err (%p2328)
  %s2331 = scalar_lea.sflag [#allocation3], 2
  %2332 = vsyncmov %s2331
  %s2333 = vpop.sfrf %2332
  %p2334 = scmp.eq.s32.totalorder %s2333, 0
  %p2335 = pneg %p2334
  %2337 = shalt.err (%p2335)
  %s2338 = scalar_lea.sflag [#allocation3], 3
  %2339 = vsyncmov %s2338
  %s2340 = vpop.sfrf %2339
  %p2341 = scmp.eq.s32.totalorder %s2340, 0
  %p2342 = pneg %p2341
  %2344 = shalt.err (%p2342)

</llo_original>
